<compile_context>
chip_gen: v6e
topology: v6e:2x2x1
jax: 0.10.0
libtpu: 0.0.40
codegen_flags: <defaults>
</compile_context>

<pallas_src>
import math
from functools import partial

import jax
import jax.numpy as jnp
from jax.experimental import pallas as pl
from jax.experimental.pallas import tpu as pltpu


# ---------------------------------------------------------------------------
# Fused Pallas kernel
# ---------------------------------------------------------------------------
def _force_block_kernel(x_ref, win_ref, bin_ref,
                        wqkv_ref, bqkv_ref, wo_ref, bo_ref,
                        ln1g_ref, ln1b_ref,
                        w1_ref, b1_ref, w2_ref, b2_ref,
                        ln2g_ref, ln2b_ref,
                        o_ref, *, num_layers, num_heads):
    # x_ref : (TN, S, Cin)  block of TN independent items; S = attention sequence axis (=B)
    # o_ref : (TN, S, E)
    TN, S, cin = x_ref.shape
    E = win_ref.shape[1]
    Dh = E // num_heads
    M = TN * S
    scale = 1.0 / math.sqrt(Dh)

    def layer_norm(v, g, b):
        mu = jnp.mean(v, axis=-1, keepdims=True)
        d = v - mu
        var = jnp.mean(d * d, axis=-1, keepdims=True)
        return d * jax.lax.rsqrt(var + 1e-5) * g + b

    # ---- input Linear + ReLU (weights already VMEM-resident) ----
    x2d = x_ref[...].reshape(M, cin)
    x = jnp.maximum(
        jnp.dot(x2d, win_ref[...], preferred_element_type=jnp.float32) + bin_ref[...],
        0.0)

    # TODO(synk): dropout (p=0.1 on attn weights / FFN / residuals) is eval-mode identity
    #             here; training-mode stochastic dropout is not reproduced.
    for l in range(num_layers):
        # ---------------- self-attention block (post-norm) ----------------
        qkv = jnp.dot(x, wqkv_ref[l], preferred_element_type=jnp.float32) + bqkv_ref[l]
        qkv3 = qkv.reshape(TN, S, 3 * E)
        wo = wo_ref[l]
        sa = jnp.zeros((M, E), jnp.float32)
        for h in range(num_heads):
            qh = qkv3[:, :, h * Dh:(h + 1) * Dh]
            kh = qkv3[:, :, E + h * Dh:E + (h + 1) * Dh]
            vh = qkv3[:, :, 2 * E + h * Dh:2 * E + (h + 1) * Dh]
            s = jnp.einsum('nsd,ntd->nst', qh, kh,
                           preferred_element_type=jnp.float32) * scale
            s = s - jnp.max(s, axis=-1, keepdims=True)
            p = jnp.exp(s)
            p = p / jnp.sum(p, axis=-1, keepdims=True)
            oh = jnp.einsum('nst,ntd->nsd', p, vh,
                            preferred_element_type=jnp.float32)
            # concat-of-heads @ Wo  ==  sum_h ( o_h @ Wo[h*Dh:(h+1)*Dh, :] )
            sa = sa + jnp.dot(oh.reshape(M, Dh), wo[h * Dh:(h + 1) * Dh, :],
                              preferred_element_type=jnp.float32)
        sa = sa + bo_ref[l]
        x = layer_norm(x + sa, ln1g_ref[l], ln1b_ref[l])

        # ---------------- feed-forward block (post-norm) ------------------
        hdn = jnp.maximum(
            jnp.dot(x, w1_ref[l], preferred_element_type=jnp.float32) + b1_ref[l], 0.0)
        ff = jnp.dot(hdn, w2_ref[l], preferred_element_type=jnp.float32) + b2_ref[l]
        x = layer_norm(x + ff, ln2g_ref[l], ln2b_ref[l])

    o_ref[...] = x.reshape(TN, S, E)


# ---------------------------------------------------------------------------
# Wrapper
# ---------------------------------------------------------------------------
def _pick_block_t(T):
    """Largest divisor of T <= 128, then prefer >= 2 grid steps (megacore)."""
    block_t = 1
    for d in range(1, min(T, 128) + 1):
        if T % d == 0:
            block_t = d
    if block_t == T and T % 2 == 0 and T > 1:
        block_t = T // 2
    return block_t


def force_block_forward(x, params, *, num_heads=4, block_t=None):
    """x: [B, T, in_channels] (PyTorch layout) -> [B, T, out_channels]."""
    B, T, cin = x.shape
    E = params['w_in'].shape[1]
    L = params['w_qkv'].shape[0]

    # batch_first=False => B is the attention sequence axis, T is the independent axis.
    # Kernel layout: (independent tokens = T, sequence = B, channels); grid tiles T.
    xt = jnp.transpose(x, (1, 0, 2))               # [T, B, Cin]
    if block_t is None:
        block_t = _pick_block_t(T)
    assert T % block_t == 0
    grid = (T // block_t,)

    def full(arr):                                  # whole-array block, constant index
        n = arr.ndim
        return pl.BlockSpec(arr.shape, lambda i, n=n: (0,) * n)

    out = pl.pallas_call(
        partial(_force_block_kernel, num_layers=L, num_heads=num_heads),
        out_shape=jax.ShapeDtypeStruct((T, B, E), jnp.float32),
        grid_spec=pltpu.PrefetchScalarGridSpec(
            num_scalar_prefetch=0,
            grid=grid,
            in_specs=[
                pl.BlockSpec((block_t, B, cin), lambda i: (i, 0, 0)),
                full(params['w_in']), full(params['b_in']),
                full(params['w_qkv']), full(params['b_qkv']),
                full(params['w_o']), full(params['b_o']),
                full(params['ln1_g']), full(params['ln1_b']),
                full(params['w1']), full(params['b1']),
                full(params['w2']), full(params['b2']),
                full(params['ln2_g']), full(params['ln2_b']),
            ],
            out_specs=pl.BlockSpec((block_t, B, E), lambda i: (i, 0, 0)),
        ),
        compiler_params=pltpu.CompilerParams(
            dimension_semantics=("parallel",)),
    )(xt,
      params['w_in'], params['b_in'],
      params['w_qkv'], params['b_qkv'], params['w_o'], params['b_o'],
      params['ln1_g'], params['ln1_b'],
      params['w1'], params['b1'], params['w2'], params['b2'],
      params['ln2_g'], params['ln2_b'])
    return jnp.transpose(out, (1, 0, 2))            # back to [B, T, E]


# ---------------------------------------------------------------------------
# Pure-JAX reference (for correctness check)
# ---------------------------------------------------------------------------
def force_block_reference(x, params, *, num_heads=4):
    hp = jax.lax.Precision.HIGHEST
    E = params['w_in'].shape[1]
    Dh = E // num_heads
    L = params['w_qkv'].shape[0]

    def dot(a, w):
        return jnp.einsum('...i,ij->...j', a, w, precision=hp)

    def ln(v, g, b):
        mu = jnp.mean(v, axis=-1, keepdims=True)
        var = jnp.mean((v - mu) ** 2, axis=-1, keepdims=True)
        return (v - mu) / jnp.sqrt(var + 1e-5) * g + b

    y = jax.nn.relu(dot(x, params['w_in']) + params['b_in'][0])    # [B, T, E]
    S, N = y.shape[0], y.shape[1]                                  # seq=B, batch=T
    for l in range(L):
        qkv = dot(y, params['w_qkv'][l]) + params['b_qkv'][l][0]
        q, k, v = qkv[..., :E], qkv[..., E:2 * E], qkv[..., 2 * E:]
        qh = q.reshape(S, N, num_heads, Dh)
        kh = k.reshape(S, N, num_heads, Dh)
        vh = v.reshape(S, N, num_heads, Dh)
        s = jnp.einsum('snhd,tnhd->nhst', qh, kh, precision=hp) / math.sqrt(Dh)
        p = jax.nn.softmax(s, axis=-1)
        o = jnp.einsum('nhst,tnhd->snhd', p, vh, precision=hp).reshape(S, N, E)
        sa = dot(o, params['w_o'][l]) + params['b_o'][l][0]
        y = ln(y + sa, params['ln1_g'][l][0], params['ln1_b'][l][0])
        ff = dot(jax.nn.relu(dot(y, params['w1'][l]) + params['b1'][l][0]),
                 params['w2'][l]) + params['b2'][l][0]
        y = ln(y + ff, params['ln2_g'][l][0], params['ln2_b'][l][0])
    return y


# ---------------------------------------------------------------------------
# Parameter init (PyTorch-like distributions, already in [in, out] layout)
# ---------------------------------------------------------------------------
def init_force_block_params(key, in_channels, out_channels, num_layers=2,
                            dim_feedforward=2048):
    E, F, L = out_channels, dim_feedforward, num_layers
    keys = list(jax.random.split(key, 2 + 6 * L))

    def uni(k, shape, fan_in):
        b = 1.0 / math.sqrt(fan_in)
        return jax.random.uniform(k, shape, jnp.float32, -b, b)

    p = {
        'w_in': uni(keys[0], (in_channels, E), in_channels),
        'b_in': uni(keys[1], (1, E), in_channels),
    }
    wqkv, wo, w1, b1, w2, b2 = [], [], [], [], [], []
    for l in range(L):
        k0, k1, k2, k3, k4, k5 = keys[2 + 6 * l: 8 + 6 * l]
        xb = math.sqrt(6.0 / (E + 3 * E))                      # xavier-uniform (MHA in-proj)
        wqkv.append(jax.random.uniform(k0, (E, 3 * E), jnp.float32, -xb, xb))
        wo.append(uni(k1, (E, E), E))
        w1.append(uni(k2, (E, F), E))
        b1.append(uni(k3, (1, F), E))
        w2.append(uni(k4, (F, E), F))
        b2.append(uni(k5, (1, E), F))
    p['w_qkv'] = jnp.stack(wqkv)
    p['b_qkv'] = jnp.zeros((L, 1, 3 * E), jnp.float32)         # PyTorch MHA bias init = 0
    p['w_o'] = jnp.stack(wo)
    p['b_o'] = jnp.zeros((L, 1, E), jnp.float32)
    p['ln1_g'] = jnp.ones((L, 1, E), jnp.float32)
    p['ln1_b'] = jnp.zeros((L, 1, E), jnp.float32)
    p['w1'] = jnp.stack(w1)
    p['b1'] = jnp.stack(b1)
    p['w2'] = jnp.stack(w2)
    p['b2'] = jnp.stack(b2)
    p['ln2_g'] = jnp.ones((L, 1, E), jnp.float32)
    p['ln2_b'] = jnp.zeros((L, 1, E), jnp.float32)
    return p


# ---------------------------------------------------------------------------
if __name__ == "__main__":
    in_channels, out_channels, num_layers, num_heads = 4, 32, 2, 4
    B, T = 2, 8

    key = jax.random.PRNGKey(0)
    kp, kx = jax.random.split(key)
    params = init_force_block_params(kp, in_channels, out_channels, num_layers)
    X = jax.random.normal(kx, (B, T, in_channels), jnp.float32)

    fwd = jax.jit(partial(force_block_forward, num_heads=num_heads))
    Y = jax.block_until_ready(fwd(X, params))

    assert Y.shape == (B, T, out_channels), Y.shape
    assert bool(jnp.all(jnp.isfinite(Y)))

    Y_ref = force_block_reference(X, params, num_heads=num_heads)
    max_err = float(jnp.max(jnp.abs(Y - Y_ref)))
    assert bool(jnp.allclose(Y, Y_ref, atol=2e-2, rtol=2e-2)), max_err

    print("KERNEL_OK")
</pallas_src>

<mosaic_0001>
module attributes {stable_mosaic.version = 11 : i64} {
  func.func @_force_block_kernel(%arg0: i32, %arg1: memref<4x2x4xf32, #tpu.memory_space<vmem>>, %arg2: memref<4x32xf32, #tpu.memory_space<vmem>>, %arg3: memref<1x32xf32, #tpu.memory_space<vmem>>, %arg4: memref<2x32x96xf32, #tpu.memory_space<vmem>>, %arg5: memref<2x1x96xf32, #tpu.memory_space<vmem>>, %arg6: memref<2x32x32xf32, #tpu.memory_space<vmem>>, %arg7: memref<2x1x32xf32, #tpu.memory_space<vmem>>, %arg8: memref<2x1x32xf32, #tpu.memory_space<vmem>>, %arg9: memref<2x1x32xf32, #tpu.memory_space<vmem>>, %arg10: memref<2x32x2048xf32, #tpu.memory_space<vmem>>, %arg11: memref<2x1x2048xf32, #tpu.memory_space<vmem>>, %arg12: memref<2x2048x32xf32, #tpu.memory_space<vmem>>, %arg13: memref<2x1x32xf32, #tpu.memory_space<vmem>>, %arg14: memref<2x1x32xf32, #tpu.memory_space<vmem>>, %arg15: memref<2x1x32xf32, #tpu.memory_space<vmem>>, %arg16: memref<4x2x32xf32, #tpu.memory_space<vmem>>) attributes {dimension_semantics = [#tpu.dimension_semantics<parallel>], iteration_bounds = array<i64: 2>, scalar_prefetch = 0 : i64, scratch_operands = 0 : i64, tpu.core_type = #tpu.core_type<tc>, window_params = [{transform_indices = @transform_0, window_bounds = array<i64: 4, 2, 4>}, {pipeline_mode = #tpu.pipeline_mode<synchronous>, transform_indices = @transform_1, window_bounds = array<i64: 4, 32>}, {pipeline_mode = #tpu.pipeline_mode<synchronous>, transform_indices = @transform_2, window_bounds = array<i64: 1, 32>}, {pipeline_mode = #tpu.pipeline_mode<synchronous>, transform_indices = @transform_3, window_bounds = array<i64: 2, 32, 96>}, {pipeline_mode = #tpu.pipeline_mode<synchronous>, transform_indices = @transform_4, window_bounds = array<i64: 2, 1, 96>}, {pipeline_mode = #tpu.pipeline_mode<synchronous>, transform_indices = @transform_5, window_bounds = array<i64: 2, 32, 32>}, {pipeline_mode = #tpu.pipeline_mode<synchronous>, transform_indices = @transform_6, window_bounds = array<i64: 2, 1, 32>}, {pipeline_mode = #tpu.pipeline_mode<synchronous>, transform_indices = @transform_7, window_bounds = array<i64: 2, 1, 32>}, {pipeline_mode = #tpu.pipeline_mode<synchronous>, transform_indices = @transform_8, window_bounds = array<i64: 2, 1, 32>}, {pipeline_mode = #tpu.pipeline_mode<synchronous>, transform_indices = @transform_9, window_bounds = array<i64: 2, 32, 2048>}, {pipeline_mode = #tpu.pipeline_mode<synchronous>, transform_indices = @transform_10, window_bounds = array<i64: 2, 1, 2048>}, {pipeline_mode = #tpu.pipeline_mode<synchronous>, transform_indices = @transform_11, window_bounds = array<i64: 2, 2048, 32>}, {pipeline_mode = #tpu.pipeline_mode<synchronous>, transform_indices = @transform_12, window_bounds = array<i64: 2, 1, 32>}, {pipeline_mode = #tpu.pipeline_mode<synchronous>, transform_indices = @transform_13, window_bounds = array<i64: 2, 1, 32>}, {pipeline_mode = #tpu.pipeline_mode<synchronous>, transform_indices = @transform_14, window_bounds = array<i64: 2, 1, 32>}, {transform_indices = @transform_15, window_bounds = array<i64: 4, 2, 32>}]} {
    %c0 = arith.constant 0 : index
    %c0_0 = arith.constant 0 : index
    %c0_1 = arith.constant 0 : index
    %0 = vector.load %arg1[%c0, %c0_0, %c0_1] : memref<4x2x4xf32, #tpu.memory_space<vmem>>, vector<4x2x4xf32>
    %1 = vector.shape_cast %0 : vector<4x2x4xf32> to vector<8x4xf32>
    %c0_2 = arith.constant 0 : index
    %c0_3 = arith.constant 0 : index
    %2 = vector.load %arg2[%c0_2, %c0_3] : memref<4x32xf32, #tpu.memory_space<vmem>>, vector<4x32xf32>
    %cst = arith.constant dense<0.000000e+00> : vector<8x32xf32>
    %3 = tpu.matmul %1, %2, %cst {dimension_numbers = #tpu.dot_dimension_numbers<[1], [0], [0], [1], [0, 0, 1, 1], [], []>} : vector<8x4xf32>, vector<4x32xf32>, vector<8x32xf32> -> vector<8x32xf32>
    %c0_4 = arith.constant 0 : index
    %c0_5 = arith.constant 0 : index
    %4 = vector.load %arg3[%c0_4, %c0_5] : memref<1x32xf32, #tpu.memory_space<vmem>>, vector<1x32xf32>
    %5 = vector.broadcast %4 : vector<1x32xf32> to vector<8x32xf32>
    %6 = arith.addf %3, %5 : vector<8x32xf32>
    %cst_6 = arith.constant 0.000000e+00 : f32
    %7 = vector.broadcast %cst_6 : f32 to vector<8x32xf32>
    %8 = arith.maximumf %6, %7 : vector<8x32xf32>
    %c0_7 = arith.constant 0 : index
    %c0_8 = arith.constant 0 : index
    %c0_9 = arith.constant 0 : index
    %9 = vector.load %arg4[%c0_7, %c0_8, %c0_9] : memref<2x32x96xf32, #tpu.memory_space<vmem>>, vector<1x32x96xf32>
    %10 = vector.shape_cast %9 : vector<1x32x96xf32> to vector<32x96xf32>
    %cst_10 = arith.constant dense<0.000000e+00> : vector<8x96xf32>
    %11 = tpu.matmul %8, %10, %cst_10 {dimension_numbers = #tpu.dot_dimension_numbers<[1], [0], [0], [1], [0, 0, 1, 1], [], []>} : vector<8x32xf32>, vector<32x96xf32>, vector<8x96xf32> -> vector<8x96xf32>
    %c0_11 = arith.constant 0 : index
    %c0_12 = arith.constant 0 : index
    %c0_13 = arith.constant 0 : index
    %12 = vector.load %arg5[%c0_11, %c0_12, %c0_13] : memref<2x1x96xf32, #tpu.memory_space<vmem>>, vector<1x1x96xf32>
    %13 = vector.shape_cast %12 : vector<1x1x96xf32> to vector<1x96xf32>
    %14 = vector.broadcast %13 : vector<1x96xf32> to vector<8x96xf32>
    %15 = arith.addf %11, %14 : vector<8x96xf32>
    %16 = vector.shape_cast %15 : vector<8x96xf32> to vector<4x2x96xf32>
    %c0_14 = arith.constant 0 : index
    %c0_15 = arith.constant 0 : index
    %c0_16 = arith.constant 0 : index
    %17 = vector.load %arg6[%c0_14, %c0_15, %c0_16] : memref<2x32x32xf32, #tpu.memory_space<vmem>>, vector<1x32x32xf32>
    %18 = vector.shape_cast %17 : vector<1x32x32xf32> to vector<32x32xf32>
    %cst_17 = arith.constant 0.000000e+00 : f32
    %19 = vector.broadcast %cst_17 : f32 to vector<8x32xf32>
    %20 = vector.extract_strided_slice %16 {offsets = [0, 0, 0], sizes = [4, 2, 8], strides = [1, 1, 1]} : vector<4x2x96xf32> to vector<4x2x8xf32>
    %21 = vector.extract_strided_slice %16 {offsets = [0, 0, 32], sizes = [4, 2, 8], strides = [1, 1, 1]} : vector<4x2x96xf32> to vector<4x2x8xf32>
    %22 = vector.extract_strided_slice %16 {offsets = [0, 0, 64], sizes = [4, 2, 8], strides = [1, 1, 1]} : vector<4x2x96xf32> to vector<4x2x8xf32>
    "tpu.trace_start"() <{level = 10 : i32, message = "nsd,ntd->nst"}> : () -> ()
    %cst_18 = arith.constant dense<0.000000e+00> : vector<4x2x2xf32>
    %23 = tpu.matmul %20, %21, %cst_18 {dimension_numbers = #tpu.dot_dimension_numbers<[2], [2], [1], [1], [0, 0, 0, 1, 1, 1], [0], [0]>} : vector<4x2x8xf32>, vector<4x2x8xf32>, vector<4x2x2xf32> -> vector<4x2x2xf32>
    "tpu.trace_stop"() : () -> ()
    %cst_19 = arith.constant 0.353553385 : f32
    %24 = vector.broadcast %cst_19 : f32 to vector<4x2x2xf32>
    %25 = arith.mulf %23, %24 : vector<4x2x2xf32>
    %cst_20 = arith.constant dense<0xFF800000> : vector<4x2xf32>
    %26 = vector.multi_reduction <maximumf>, %25, %cst_20 [2] : vector<4x2x2xf32> to vector<4x2xf32>
    %27 = vector.shape_cast %26 : vector<4x2xf32> to vector<4x2x1xf32>
    %28 = vector.broadcast %27 : vector<4x2x1xf32> to vector<4x2x2xf32>
    %29 = arith.subf %25, %28 : vector<4x2x2xf32>
    %30 = math.exp %29 : vector<4x2x2xf32>
    %cst_21 = arith.constant dense<0.000000e+00> : vector<4x2xf32>
    %31 = vector.multi_reduction <add>, %30, %cst_21 [2] : vector<4x2x2xf32> to vector<4x2xf32>
    %32 = vector.shape_cast %31 : vector<4x2xf32> to vector<4x2x1xf32>
    %33 = vector.broadcast %32 : vector<4x2x1xf32> to vector<4x2x2xf32>
    %34 = arith.divf %30, %33 : vector<4x2x2xf32>
    "tpu.trace_start"() <{level = 10 : i32, message = "nst,ntd->nsd"}> : () -> ()
    %cst_22 = arith.constant dense<0.000000e+00> : vector<4x2x8xf32>
    %35 = tpu.matmul %34, %22, %cst_22 {dimension_numbers = #tpu.dot_dimension_numbers<[2], [1], [1], [2], [0, 0, 0, 1, 1, 2], [0], [0]>} : vector<4x2x2xf32>, vector<4x2x8xf32>, vector<4x2x8xf32> -> vector<4x2x8xf32>
    "tpu.trace_stop"() : () -> ()
    %36 = vector.shape_cast %35 : vector<4x2x8xf32> to vector<8x8xf32>
    %37 = vector.extract_strided_slice %18 {offsets = [0, 0], sizes = [8, 32], strides = [1, 1]} : vector<32x32xf32> to vector<8x32xf32>
    %cst_23 = arith.constant dense<0.000000e+00> : vector<8x32xf32>
    %38 = tpu.matmul %36, %37, %cst_23 {dimension_numbers = #tpu.dot_dimension_numbers<[1], [0], [0], [1], [0, 0, 1, 1], [], []>} : vector<8x8xf32>, vector<8x32xf32>, vector<8x32xf32> -> vector<8x32xf32>
    %39 = arith.addf %19, %38 : vector<8x32xf32>
    %40 = vector.extract_strided_slice %16 {offsets = [0, 0, 8], sizes = [4, 2, 8], strides = [1, 1, 1]} : vector<4x2x96xf32> to vector<4x2x8xf32>
    %41 = vector.extract_strided_slice %16 {offsets = [0, 0, 40], sizes = [4, 2, 8], strides = [1, 1, 1]} : vector<4x2x96xf32> to vector<4x2x8xf32>
    %42 = vector.extract_strided_slice %16 {offsets = [0, 0, 72], sizes = [4, 2, 8], strides = [1, 1, 1]} : vector<4x2x96xf32> to vector<4x2x8xf32>
    "tpu.trace_start"() <{level = 10 : i32, message = "nsd,ntd->nst"}> : () -> ()
    %cst_24 = arith.constant dense<0.000000e+00> : vector<4x2x2xf32>
    %43 = tpu.matmul %40, %41, %cst_24 {dimension_numbers = #tpu.dot_dimension_numbers<[2], [2], [1], [1], [0, 0, 0, 1, 1, 1], [0], [0]>} : vector<4x2x8xf32>, vector<4x2x8xf32>, vector<4x2x2xf32> -> vector<4x2x2xf32>
    "tpu.trace_stop"() : () -> ()
    %cst_25 = arith.constant 0.353553385 : f32
    %44 = vector.broadcast %cst_25 : f32 to vector<4x2x2xf32>
    %45 = arith.mulf %43, %44 : vector<4x2x2xf32>
    %cst_26 = arith.constant dense<0xFF800000> : vector<4x2xf32>
    %46 = vector.multi_reduction <maximumf>, %45, %cst_26 [2] : vector<4x2x2xf32> to vector<4x2xf32>
    %47 = vector.shape_cast %46 : vector<4x2xf32> to vector<4x2x1xf32>
    %48 = vector.broadcast %47 : vector<4x2x1xf32> to vector<4x2x2xf32>
    %49 = arith.subf %45, %48 : vector<4x2x2xf32>
    %50 = math.exp %49 : vector<4x2x2xf32>
    %cst_27 = arith.constant dense<0.000000e+00> : vector<4x2xf32>
    %51 = vector.multi_reduction <add>, %50, %cst_27 [2] : vector<4x2x2xf32> to vector<4x2xf32>
    %52 = vector.shape_cast %51 : vector<4x2xf32> to vector<4x2x1xf32>
    %53 = vector.broadcast %52 : vector<4x2x1xf32> to vector<4x2x2xf32>
    %54 = arith.divf %50, %53 : vector<4x2x2xf32>
    "tpu.trace_start"() <{level = 10 : i32, message = "nst,ntd->nsd"}> : () -> ()
    %cst_28 = arith.constant dense<0.000000e+00> : vector<4x2x8xf32>
    %55 = tpu.matmul %54, %42, %cst_28 {dimension_numbers = #tpu.dot_dimension_numbers<[2], [1], [1], [2], [0, 0, 0, 1, 1, 2], [0], [0]>} : vector<4x2x2xf32>, vector<4x2x8xf32>, vector<4x2x8xf32> -> vector<4x2x8xf32>
    "tpu.trace_stop"() : () -> ()
    %56 = vector.shape_cast %55 : vector<4x2x8xf32> to vector<8x8xf32>
    %57 = vector.extract_strided_slice %18 {offsets = [8, 0], sizes = [8, 32], strides = [1, 1]} : vector<32x32xf32> to vector<8x32xf32>
    %cst_29 = arith.constant dense<0.000000e+00> : vector<8x32xf32>
    %58 = tpu.matmul %56, %57, %cst_29 {dimension_numbers = #tpu.dot_dimension_numbers<[1], [0], [0], [1], [0, 0, 1, 1], [], []>} : vector<8x8xf32>, vector<8x32xf32>, vector<8x32xf32> -> vector<8x32xf32>
    %59 = arith.addf %39, %58 : vector<8x32xf32>
    %60 = vector.extract_strided_slice %16 {offsets = [0, 0, 16], sizes = [4, 2, 8], strides = [1, 1, 1]} : vector<4x2x96xf32> to vector<4x2x8xf32>
    %61 = vector.extract_strided_slice %16 {offsets = [0, 0, 48], sizes = [4, 2, 8], strides = [1, 1, 1]} : vector<4x2x96xf32> to vector<4x2x8xf32>
    %62 = vector.extract_strided_slice %16 {offsets = [0, 0, 80], sizes = [4, 2, 8], strides = [1, 1, 1]} : vector<4x2x96xf32> to vector<4x2x8xf32>
    "tpu.trace_start"() <{level = 10 : i32, message = "nsd,ntd->nst"}> : () -> ()
    %cst_30 = arith.constant dense<0.000000e+00> : vector<4x2x2xf32>
    %63 = tpu.matmul %60, %61, %cst_30 {dimension_numbers = #tpu.dot_dimension_numbers<[2], [2], [1], [1], [0, 0, 0, 1, 1, 1], [0], [0]>} : vector<4x2x8xf32>, vector<4x2x8xf32>, vector<4x2x2xf32> -> vector<4x2x2xf32>
    "tpu.trace_stop"() : () -> ()
    %cst_31 = arith.constant 0.353553385 : f32
    %64 = vector.broadcast %cst_31 : f32 to vector<4x2x2xf32>
    %65 = arith.mulf %63, %64 : vector<4x2x2xf32>
    %cst_32 = arith.constant dense<0xFF800000> : vector<4x2xf32>
    %66 = vector.multi_reduction <maximumf>, %65, %cst_32 [2] : vector<4x2x2xf32> to vector<4x2xf32>
    %67 = vector.shape_cast %66 : vector<4x2xf32> to vector<4x2x1xf32>
    %68 = vector.broadcast %67 : vector<4x2x1xf32> to vector<4x2x2xf32>
    %69 = arith.subf %65, %68 : vector<4x2x2xf32>
    %70 = math.exp %69 : vector<4x2x2xf32>
    %cst_33 = arith.constant dense<0.000000e+00> : vector<4x2xf32>
    %71 = vector.multi_reduction <add>, %70, %cst_33 [2] : vector<4x2x2xf32> to vector<4x2xf32>
    %72 = vector.shape_cast %71 : vector<4x2xf32> to vector<4x2x1xf32>
    %73 = vector.broadcast %72 : vector<4x2x1xf32> to vector<4x2x2xf32>
    %74 = arith.divf %70, %73 : vector<4x2x2xf32>
    "tpu.trace_start"() <{level = 10 : i32, message = "nst,ntd->nsd"}> : () -> ()
    %cst_34 = arith.constant dense<0.000000e+00> : vector<4x2x8xf32>
    %75 = tpu.matmul %74, %62, %cst_34 {dimension_numbers = #tpu.dot_dimension_numbers<[2], [1], [1], [2], [0, 0, 0, 1, 1, 2], [0], [0]>} : vector<4x2x2xf32>, vector<4x2x8xf32>, vector<4x2x8xf32> -> vector<4x2x8xf32>
    "tpu.trace_stop"() : () -> ()
    %76 = vector.shape_cast %75 : vector<4x2x8xf32> to vector<8x8xf32>
    %77 = vector.extract_strided_slice %18 {offsets = [16, 0], sizes = [8, 32], strides = [1, 1]} : vector<32x32xf32> to vector<8x32xf32>
    %cst_35 = arith.constant dense<0.000000e+00> : vector<8x32xf32>
    %78 = tpu.matmul %76, %77, %cst_35 {dimension_numbers = #tpu.dot_dimension_numbers<[1], [0], [0], [1], [0, 0, 1, 1], [], []>} : vector<8x8xf32>, vector<8x32xf32>, vector<8x32xf32> -> vector<8x32xf32>
    %79 = arith.addf %59, %78 : vector<8x32xf32>
    %80 = vector.extract_strided_slice %16 {offsets = [0, 0, 24], sizes = [4, 2, 8], strides = [1, 1, 1]} : vector<4x2x96xf32> to vector<4x2x8xf32>
    %81 = vector.extract_strided_slice %16 {offsets = [0, 0, 56], sizes = [4, 2, 8], strides = [1, 1, 1]} : vector<4x2x96xf32> to vector<4x2x8xf32>
    %82 = vector.extract_strided_slice %16 {offsets = [0, 0, 88], sizes = [4, 2, 8], strides = [1, 1, 1]} : vector<4x2x96xf32> to vector<4x2x8xf32>
    "tpu.trace_start"() <{level = 10 : i32, message = "nsd,ntd->nst"}> : () -> ()
    %cst_36 = arith.constant dense<0.000000e+00> : vector<4x2x2xf32>
    %83 = tpu.matmul %80, %81, %cst_36 {dimension_numbers = #tpu.dot_dimension_numbers<[2], [2], [1], [1], [0, 0, 0, 1, 1, 1], [0], [0]>} : vector<4x2x8xf32>, vector<4x2x8xf32>, vector<4x2x2xf32> -> vector<4x2x2xf32>
    "tpu.trace_stop"() : () -> ()
    %cst_37 = arith.constant 0.353553385 : f32
    %84 = vector.broadcast %cst_37 : f32 to vector<4x2x2xf32>
    %85 = arith.mulf %83, %84 : vector<4x2x2xf32>
    %cst_38 = arith.constant dense<0xFF800000> : vector<4x2xf32>
    %86 = vector.multi_reduction <maximumf>, %85, %cst_38 [2] : vector<4x2x2xf32> to vector<4x2xf32>
    %87 = vector.shape_cast %86 : vector<4x2xf32> to vector<4x2x1xf32>
    %88 = vector.broadcast %87 : vector<4x2x1xf32> to vector<4x2x2xf32>
    %89 = arith.subf %85, %88 : vector<4x2x2xf32>
    %90 = math.exp %89 : vector<4x2x2xf32>
    %cst_39 = arith.constant dense<0.000000e+00> : vector<4x2xf32>
    %91 = vector.multi_reduction <add>, %90, %cst_39 [2] : vector<4x2x2xf32> to vector<4x2xf32>
    %92 = vector.shape_cast %91 : vector<4x2xf32> to vector<4x2x1xf32>
    %93 = vector.broadcast %92 : vector<4x2x1xf32> to vector<4x2x2xf32>
    %94 = arith.divf %90, %93 : vector<4x2x2xf32>
    "tpu.trace_start"() <{level = 10 : i32, message = "nst,ntd->nsd"}> : () -> ()
    %cst_40 = arith.constant dense<0.000000e+00> : vector<4x2x8xf32>
    %95 = tpu.matmul %94, %82, %cst_40 {dimension_numbers = #tpu.dot_dimension_numbers<[2], [1], [1], [2], [0, 0, 0, 1, 1, 2], [0], [0]>} : vector<4x2x2xf32>, vector<4x2x8xf32>, vector<4x2x8xf32> -> vector<4x2x8xf32>
    "tpu.trace_stop"() : () -> ()
    %96 = vector.shape_cast %95 : vector<4x2x8xf32> to vector<8x8xf32>
    %97 = vector.extract_strided_slice %18 {offsets = [24, 0], sizes = [8, 32], strides = [1, 1]} : vector<32x32xf32> to vector<8x32xf32>
    %cst_41 = arith.constant dense<0.000000e+00> : vector<8x32xf32>
    %98 = tpu.matmul %96, %97, %cst_41 {dimension_numbers = #tpu.dot_dimension_numbers<[1], [0], [0], [1], [0, 0, 1, 1], [], []>} : vector<8x8xf32>, vector<8x32xf32>, vector<8x32xf32> -> vector<8x32xf32>
    %99 = arith.addf %79, %98 : vector<8x32xf32>
    %c0_42 = arith.constant 0 : index
    %c0_43 = arith.constant 0 : index
    %c0_44 = arith.constant 0 : index
    %100 = vector.load %arg7[%c0_42, %c0_43, %c0_44] : memref<2x1x32xf32, #tpu.memory_space<vmem>>, vector<1x1x32xf32>
    %101 = vector.shape_cast %100 : vector<1x1x32xf32> to vector<1x32xf32>
    %102 = vector.broadcast %101 : vector<1x32xf32> to vector<8x32xf32>
    %103 = arith.addf %99, %102 : vector<8x32xf32>
    %104 = arith.addf %8, %103 : vector<8x32xf32>
    %c0_45 = arith.constant 0 : index
    %c0_46 = arith.constant 0 : index
    %c0_47 = arith.constant 0 : index
    %105 = vector.load %arg8[%c0_45, %c0_46, %c0_47] : memref<2x1x32xf32, #tpu.memory_space<vmem>>, vector<1x1x32xf32>
    %106 = vector.shape_cast %105 : vector<1x1x32xf32> to vector<1x32xf32>
    %c0_48 = arith.constant 0 : index
    %c0_49 = arith.constant 0 : index
    %c0_50 = arith.constant 0 : index
    %107 = vector.load %arg9[%c0_48, %c0_49, %c0_50] : memref<2x1x32xf32, #tpu.memory_space<vmem>>, vector<1x1x32xf32>
    %108 = vector.shape_cast %107 : vector<1x1x32xf32> to vector<1x32xf32>
    %cst_51 = arith.constant dense<0.000000e+00> : vector<8xf32>
    %109 = vector.multi_reduction <add>, %104, %cst_51 [1] : vector<8x32xf32> to vector<8xf32>
    %110 = vector.shape_cast %109 : vector<8xf32> to vector<8x1xf32>
    %cst_52 = arith.constant 3.200000e+01 : f32
    %111 = vector.broadcast %cst_52 : f32 to vector<8x1xf32>
    %112 = arith.divf %110, %111 : vector<8x1xf32>
    %113 = vector.broadcast %112 : vector<8x1xf32> to vector<8x32xf32>
    %114 = arith.subf %104, %113 : vector<8x32xf32>
    %115 = arith.mulf %114, %114 : vector<8x32xf32>
    %cst_53 = arith.constant dense<0.000000e+00> : vector<8xf32>
    %116 = vector.multi_reduction <add>, %115, %cst_53 [1] : vector<8x32xf32> to vector<8xf32>
    %117 = vector.shape_cast %116 : vector<8xf32> to vector<8x1xf32>
    %cst_54 = arith.constant 3.200000e+01 : f32
    %118 = vector.broadcast %cst_54 : f32 to vector<8x1xf32>
    %119 = arith.divf %117, %118 : vector<8x1xf32>
    %cst_55 = arith.constant 9.99999974E-6 : f32
    %120 = vector.broadcast %cst_55 : f32 to vector<8x1xf32>
    %121 = arith.addf %119, %120 : vector<8x1xf32>
    %122 = math.rsqrt %121 : vector<8x1xf32>
    %123 = vector.broadcast %122 : vector<8x1xf32> to vector<8x32xf32>
    %124 = arith.mulf %114, %123 : vector<8x32xf32>
    %125 = vector.broadcast %106 : vector<1x32xf32> to vector<8x32xf32>
    %126 = arith.mulf %124, %125 : vector<8x32xf32>
    %127 = vector.broadcast %108 : vector<1x32xf32> to vector<8x32xf32>
    %128 = arith.addf %126, %127 : vector<8x32xf32>
    %c0_56 = arith.constant 0 : index
    %c0_57 = arith.constant 0 : index
    %c0_58 = arith.constant 0 : index
    %129 = vector.load %arg10[%c0_56, %c0_57, %c0_58] : memref<2x32x2048xf32, #tpu.memory_space<vmem>>, vector<1x32x2048xf32>
    %130 = vector.shape_cast %129 : vector<1x32x2048xf32> to vector<32x2048xf32>
    %cst_59 = arith.constant dense<0.000000e+00> : vector<8x2048xf32>
    %131 = tpu.matmul %128, %130, %cst_59 {dimension_numbers = #tpu.dot_dimension_numbers<[1], [0], [0], [1], [0, 0, 1, 1], [], []>} : vector<8x32xf32>, vector<32x2048xf32>, vector<8x2048xf32> -> vector<8x2048xf32>
    %c0_60 = arith.constant 0 : index
    %c0_61 = arith.constant 0 : index
    %c0_62 = arith.constant 0 : index
    %132 = vector.load %arg11[%c0_60, %c0_61, %c0_62] : memref<2x1x2048xf32, #tpu.memory_space<vmem>>, vector<1x1x2048xf32>
    %133 = vector.shape_cast %132 : vector<1x1x2048xf32> to vector<1x2048xf32>
    %134 = vector.broadcast %133 : vector<1x2048xf32> to vector<8x2048xf32>
    %135 = arith.addf %131, %134 : vector<8x2048xf32>
    %cst_63 = arith.constant 0.000000e+00 : f32
    %136 = vector.broadcast %cst_63 : f32 to vector<8x2048xf32>
    %137 = arith.maximumf %135, %136 : vector<8x2048xf32>
    %c0_64 = arith.constant 0 : index
    %c0_65 = arith.constant 0 : index
    %c0_66 = arith.constant 0 : index
    %138 = vector.load %arg12[%c0_64, %c0_65, %c0_66] : memref<2x2048x32xf32, #tpu.memory_space<vmem>>, vector<1x2048x32xf32>
    %139 = vector.shape_cast %138 : vector<1x2048x32xf32> to vector<2048x32xf32>
    %cst_67 = arith.constant dense<0.000000e+00> : vector<8x32xf32>
    %140 = tpu.matmul %137, %139, %cst_67 {dimension_numbers = #tpu.dot_dimension_numbers<[1], [0], [0], [1], [0, 0, 1, 1], [], []>} : vector<8x2048xf32>, vector<2048x32xf32>, vector<8x32xf32> -> vector<8x32xf32>
    %c0_68 = arith.constant 0 : index
    %c0_69 = arith.constant 0 : index
    %c0_70 = arith.constant 0 : index
    %141 = vector.load %arg13[%c0_68, %c0_69, %c0_70] : memref<2x1x32xf32, #tpu.memory_space<vmem>>, vector<1x1x32xf32>
    %142 = vector.shape_cast %141 : vector<1x1x32xf32> to vector<1x32xf32>
    %143 = vector.broadcast %142 : vector<1x32xf32> to vector<8x32xf32>
    %144 = arith.addf %140, %143 : vector<8x32xf32>
    %145 = arith.addf %128, %144 : vector<8x32xf32>
    %c0_71 = arith.constant 0 : index
    %c0_72 = arith.constant 0 : index
    %c0_73 = arith.constant 0 : index
    %146 = vector.load %arg14[%c0_71, %c0_72, %c0_73] : memref<2x1x32xf32, #tpu.memory_space<vmem>>, vector<1x1x32xf32>
    %147 = vector.shape_cast %146 : vector<1x1x32xf32> to vector<1x32xf32>
    %c0_74 = arith.constant 0 : index
    %c0_75 = arith.constant 0 : index
    %c0_76 = arith.constant 0 : index
    %148 = vector.load %arg15[%c0_74, %c0_75, %c0_76] : memref<2x1x32xf32, #tpu.memory_space<vmem>>, vector<1x1x32xf32>
    %149 = vector.shape_cast %148 : vector<1x1x32xf32> to vector<1x32xf32>
    %cst_77 = arith.constant dense<0.000000e+00> : vector<8xf32>
    %150 = vector.multi_reduction <add>, %145, %cst_77 [1] : vector<8x32xf32> to vector<8xf32>
    %151 = vector.shape_cast %150 : vector<8xf32> to vector<8x1xf32>
    %cst_78 = arith.constant 3.200000e+01 : f32
    %152 = vector.broadcast %cst_78 : f32 to vector<8x1xf32>
    %153 = arith.divf %151, %152 : vector<8x1xf32>
    %154 = vector.broadcast %153 : vector<8x1xf32> to vector<8x32xf32>
    %155 = arith.subf %145, %154 : vector<8x32xf32>
    %156 = arith.mulf %155, %155 : vector<8x32xf32>
    %cst_79 = arith.constant dense<0.000000e+00> : vector<8xf32>
    %157 = vector.multi_reduction <add>, %156, %cst_79 [1] : vector<8x32xf32> to vector<8xf32>
    %158 = vector.shape_cast %157 : vector<8xf32> to vector<8x1xf32>
    %cst_80 = arith.constant 3.200000e+01 : f32
    %159 = vector.broadcast %cst_80 : f32 to vector<8x1xf32>
    %160 = arith.divf %158, %159 : vector<8x1xf32>
    %cst_81 = arith.constant 9.99999974E-6 : f32
    %161 = vector.broadcast %cst_81 : f32 to vector<8x1xf32>
    %162 = arith.addf %160, %161 : vector<8x1xf32>
    %163 = math.rsqrt %162 : vector<8x1xf32>
    %164 = vector.broadcast %163 : vector<8x1xf32> to vector<8x32xf32>
    %165 = arith.mulf %155, %164 : vector<8x32xf32>
    %166 = vector.broadcast %147 : vector<1x32xf32> to vector<8x32xf32>
    %167 = arith.mulf %165, %166 : vector<8x32xf32>
    %168 = vector.broadcast %149 : vector<1x32xf32> to vector<8x32xf32>
    %169 = arith.addf %167, %168 : vector<8x32xf32>
    %c1 = arith.constant 1 : index
    %c0_82 = arith.constant 0 : index
    %c0_83 = arith.constant 0 : index
    %170 = vector.load %arg4[%c1, %c0_82, %c0_83] : memref<2x32x96xf32, #tpu.memory_space<vmem>>, vector<1x32x96xf32>
    %171 = vector.shape_cast %170 : vector<1x32x96xf32> to vector<32x96xf32>
    %cst_84 = arith.constant dense<0.000000e+00> : vector<8x96xf32>
    %172 = tpu.matmul %169, %171, %cst_84 {dimension_numbers = #tpu.dot_dimension_numbers<[1], [0], [0], [1], [0, 0, 1, 1], [], []>} : vector<8x32xf32>, vector<32x96xf32>, vector<8x96xf32> -> vector<8x96xf32>
    %c1_85 = arith.constant 1 : index
    %c0_86 = arith.constant 0 : index
    %c0_87 = arith.constant 0 : index
    %173 = vector.load %arg5[%c1_85, %c0_86, %c0_87] : memref<2x1x96xf32, #tpu.memory_space<vmem>>, vector<1x1x96xf32>
    %174 = vector.shape_cast %173 : vector<1x1x96xf32> to vector<1x96xf32>
    %175 = vector.broadcast %174 : vector<1x96xf32> to vector<8x96xf32>
    %176 = arith.addf %172, %175 : vector<8x96xf32>
    %177 = vector.shape_cast %176 : vector<8x96xf32> to vector<4x2x96xf32>
    %c1_88 = arith.constant 1 : index
    %c0_89 = arith.constant 0 : index
    %c0_90 = arith.constant 0 : index
    %178 = vector.load %arg6[%c1_88, %c0_89, %c0_90] : memref<2x32x32xf32, #tpu.memory_space<vmem>>, vector<1x32x32xf32>
    %179 = vector.shape_cast %178 : vector<1x32x32xf32> to vector<32x32xf32>
    %cst_91 = arith.constant 0.000000e+00 : f32
    %180 = vector.broadcast %cst_91 : f32 to vector<8x32xf32>
    %181 = vector.extract_strided_slice %177 {offsets = [0, 0, 0], sizes = [4, 2, 8], strides = [1, 1, 1]} : vector<4x2x96xf32> to vector<4x2x8xf32>
    %182 = vector.extract_strided_slice %177 {offsets = [0, 0, 32], sizes = [4, 2, 8], strides = [1, 1, 1]} : vector<4x2x96xf32> to vector<4x2x8xf32>
    %183 = vector.extract_strided_slice %177 {offsets = [0, 0, 64], sizes = [4, 2, 8], strides = [1, 1, 1]} : vector<4x2x96xf32> to vector<4x2x8xf32>
    "tpu.trace_start"() <{level = 10 : i32, message = "nsd,ntd->nst"}> : () -> ()
    %cst_92 = arith.constant dense<0.000000e+00> : vector<4x2x2xf32>
    %184 = tpu.matmul %181, %182, %cst_92 {dimension_numbers = #tpu.dot_dimension_numbers<[2], [2], [1], [1], [0, 0, 0, 1, 1, 1], [0], [0]>} : vector<4x2x8xf32>, vector<4x2x8xf32>, vector<4x2x2xf32> -> vector<4x2x2xf32>
    "tpu.trace_stop"() : () -> ()
    %cst_93 = arith.constant 0.353553385 : f32
    %185 = vector.broadcast %cst_93 : f32 to vector<4x2x2xf32>
    %186 = arith.mulf %184, %185 : vector<4x2x2xf32>
    %cst_94 = arith.constant dense<0xFF800000> : vector<4x2xf32>
    %187 = vector.multi_reduction <maximumf>, %186, %cst_94 [2] : vector<4x2x2xf32> to vector<4x2xf32>
    %188 = vector.shape_cast %187 : vector<4x2xf32> to vector<4x2x1xf32>
    %189 = vector.broadcast %188 : vector<4x2x1xf32> to vector<4x2x2xf32>
    %190 = arith.subf %186, %189 : vector<4x2x2xf32>
    %191 = math.exp %190 : vector<4x2x2xf32>
    %cst_95 = arith.constant dense<0.000000e+00> : vector<4x2xf32>
    %192 = vector.multi_reduction <add>, %191, %cst_95 [2] : vector<4x2x2xf32> to vector<4x2xf32>
    %193 = vector.shape_cast %192 : vector<4x2xf32> to vector<4x2x1xf32>
    %194 = vector.broadcast %193 : vector<4x2x1xf32> to vector<4x2x2xf32>
    %195 = arith.divf %191, %194 : vector<4x2x2xf32>
    "tpu.trace_start"() <{level = 10 : i32, message = "nst,ntd->nsd"}> : () -> ()
    %cst_96 = arith.constant dense<0.000000e+00> : vector<4x2x8xf32>
    %196 = tpu.matmul %195, %183, %cst_96 {dimension_numbers = #tpu.dot_dimension_numbers<[2], [1], [1], [2], [0, 0, 0, 1, 1, 2], [0], [0]>} : vector<4x2x2xf32>, vector<4x2x8xf32>, vector<4x2x8xf32> -> vector<4x2x8xf32>
    "tpu.trace_stop"() : () -> ()
    %197 = vector.shape_cast %196 : vector<4x2x8xf32> to vector<8x8xf32>
    %198 = vector.extract_strided_slice %179 {offsets = [0, 0], sizes = [8, 32], strides = [1, 1]} : vector<32x32xf32> to vector<8x32xf32>
    %cst_97 = arith.constant dense<0.000000e+00> : vector<8x32xf32>
    %199 = tpu.matmul %197, %198, %cst_97 {dimension_numbers = #tpu.dot_dimension_numbers<[1], [0], [0], [1], [0, 0, 1, 1], [], []>} : vector<8x8xf32>, vector<8x32xf32>, vector<8x32xf32> -> vector<8x32xf32>
    %200 = arith.addf %180, %199 : vector<8x32xf32>
    %201 = vector.extract_strided_slice %177 {offsets = [0, 0, 8], sizes = [4, 2, 8], strides = [1, 1, 1]} : vector<4x2x96xf32> to vector<4x2x8xf32>
    %202 = vector.extract_strided_slice %177 {offsets = [0, 0, 40], sizes = [4, 2, 8], strides = [1, 1, 1]} : vector<4x2x96xf32> to vector<4x2x8xf32>
    %203 = vector.extract_strided_slice %177 {offsets = [0, 0, 72], sizes = [4, 2, 8], strides = [1, 1, 1]} : vector<4x2x96xf32> to vector<4x2x8xf32>
    "tpu.trace_start"() <{level = 10 : i32, message = "nsd,ntd->nst"}> : () -> ()
    %cst_98 = arith.constant dense<0.000000e+00> : vector<4x2x2xf32>
    %204 = tpu.matmul %201, %202, %cst_98 {dimension_numbers = #tpu.dot_dimension_numbers<[2], [2], [1], [1], [0, 0, 0, 1, 1, 1], [0], [0]>} : vector<4x2x8xf32>, vector<4x2x8xf32>, vector<4x2x2xf32> -> vector<4x2x2xf32>
    "tpu.trace_stop"() : () -> ()
    %cst_99 = arith.constant 0.353553385 : f32
    %205 = vector.broadcast %cst_99 : f32 to vector<4x2x2xf32>
    %206 = arith.mulf %204, %205 : vector<4x2x2xf32>
    %cst_100 = arith.constant dense<0xFF800000> : vector<4x2xf32>
    %207 = vector.multi_reduction <maximumf>, %206, %cst_100 [2] : vector<4x2x2xf32> to vector<4x2xf32>
    %208 = vector.shape_cast %207 : vector<4x2xf32> to vector<4x2x1xf32>
    %209 = vector.broadcast %208 : vector<4x2x1xf32> to vector<4x2x2xf32>
    %210 = arith.subf %206, %209 : vector<4x2x2xf32>
    %211 = math.exp %210 : vector<4x2x2xf32>
    %cst_101 = arith.constant dense<0.000000e+00> : vector<4x2xf32>
    %212 = vector.multi_reduction <add>, %211, %cst_101 [2] : vector<4x2x2xf32> to vector<4x2xf32>
    %213 = vector.shape_cast %212 : vector<4x2xf32> to vector<4x2x1xf32>
    %214 = vector.broadcast %213 : vector<4x2x1xf32> to vector<4x2x2xf32>
    %215 = arith.divf %211, %214 : vector<4x2x2xf32>
    "tpu.trace_start"() <{level = 10 : i32, message = "nst,ntd->nsd"}> : () -> ()
    %cst_102 = arith.constant dense<0.000000e+00> : vector<4x2x8xf32>
    %216 = tpu.matmul %215, %203, %cst_102 {dimension_numbers = #tpu.dot_dimension_numbers<[2], [1], [1], [2], [0, 0, 0, 1, 1, 2], [0], [0]>} : vector<4x2x2xf32>, vector<4x2x8xf32>, vector<4x2x8xf32> -> vector<4x2x8xf32>
    "tpu.trace_stop"() : () -> ()
    %217 = vector.shape_cast %216 : vector<4x2x8xf32> to vector<8x8xf32>
    %218 = vector.extract_strided_slice %179 {offsets = [8, 0], sizes = [8, 32], strides = [1, 1]} : vector<32x32xf32> to vector<8x32xf32>
    %cst_103 = arith.constant dense<0.000000e+00> : vector<8x32xf32>
    %219 = tpu.matmul %217, %218, %cst_103 {dimension_numbers = #tpu.dot_dimension_numbers<[1], [0], [0], [1], [0, 0, 1, 1], [], []>} : vector<8x8xf32>, vector<8x32xf32>, vector<8x32xf32> -> vector<8x32xf32>
    %220 = arith.addf %200, %219 : vector<8x32xf32>
    %221 = vector.extract_strided_slice %177 {offsets = [0, 0, 16], sizes = [4, 2, 8], strides = [1, 1, 1]} : vector<4x2x96xf32> to vector<4x2x8xf32>
    %222 = vector.extract_strided_slice %177 {offsets = [0, 0, 48], sizes = [4, 2, 8], strides = [1, 1, 1]} : vector<4x2x96xf32> to vector<4x2x8xf32>
    %223 = vector.extract_strided_slice %177 {offsets = [0, 0, 80], sizes = [4, 2, 8], strides = [1, 1, 1]} : vector<4x2x96xf32> to vector<4x2x8xf32>
    "tpu.trace_start"() <{level = 10 : i32, message = "nsd,ntd->nst"}> : () -> ()
    %cst_104 = arith.constant dense<0.000000e+00> : vector<4x2x2xf32>
    %224 = tpu.matmul %221, %222, %cst_104 {dimension_numbers = #tpu.dot_dimension_numbers<[2], [2], [1], [1], [0, 0, 0, 1, 1, 1], [0], [0]>} : vector<4x2x8xf32>, vector<4x2x8xf32>, vector<4x2x2xf32> -> vector<4x2x2xf32>
    "tpu.trace_stop"() : () -> ()
    %cst_105 = arith.constant 0.353553385 : f32
    %225 = vector.broadcast %cst_105 : f32 to vector<4x2x2xf32>
    %226 = arith.mulf %224, %225 : vector<4x2x2xf32>
    %cst_106 = arith.constant dense<0xFF800000> : vector<4x2xf32>
    %227 = vector.multi_reduction <maximumf>, %226, %cst_106 [2] : vector<4x2x2xf32> to vector<4x2xf32>
    %228 = vector.shape_cast %227 : vector<4x2xf32> to vector<4x2x1xf32>
    %229 = vector.broadcast %228 : vector<4x2x1xf32> to vector<4x2x2xf32>
    %230 = arith.subf %226, %229 : vector<4x2x2xf32>
    %231 = math.exp %230 : vector<4x2x2xf32>
    %cst_107 = arith.constant dense<0.000000e+00> : vector<4x2xf32>
    %232 = vector.multi_reduction <add>, %231, %cst_107 [2] : vector<4x2x2xf32> to vector<4x2xf32>
    %233 = vector.shape_cast %232 : vector<4x2xf32> to vector<4x2x1xf32>
    %234 = vector.broadcast %233 : vector<4x2x1xf32> to vector<4x2x2xf32>
    %235 = arith.divf %231, %234 : vector<4x2x2xf32>
    "tpu.trace_start"() <{level = 10 : i32, message = "nst,ntd->nsd"}> : () -> ()
    %cst_108 = arith.constant dense<0.000000e+00> : vector<4x2x8xf32>
    %236 = tpu.matmul %235, %223, %cst_108 {dimension_numbers = #tpu.dot_dimension_numbers<[2], [1], [1], [2], [0, 0, 0, 1, 1, 2], [0], [0]>} : vector<4x2x2xf32>, vector<4x2x8xf32>, vector<4x2x8xf32> -> vector<4x2x8xf32>
    "tpu.trace_stop"() : () -> ()
    %237 = vector.shape_cast %236 : vector<4x2x8xf32> to vector<8x8xf32>
    %238 = vector.extract_strided_slice %179 {offsets = [16, 0], sizes = [8, 32], strides = [1, 1]} : vector<32x32xf32> to vector<8x32xf32>
    %cst_109 = arith.constant dense<0.000000e+00> : vector<8x32xf32>
    %239 = tpu.matmul %237, %238, %cst_109 {dimension_numbers = #tpu.dot_dimension_numbers<[1], [0], [0], [1], [0, 0, 1, 1], [], []>} : vector<8x8xf32>, vector<8x32xf32>, vector<8x32xf32> -> vector<8x32xf32>
    %240 = arith.addf %220, %239 : vector<8x32xf32>
    %241 = vector.extract_strided_slice %177 {offsets = [0, 0, 24], sizes = [4, 2, 8], strides = [1, 1, 1]} : vector<4x2x96xf32> to vector<4x2x8xf32>
    %242 = vector.extract_strided_slice %177 {offsets = [0, 0, 56], sizes = [4, 2, 8], strides = [1, 1, 1]} : vector<4x2x96xf32> to vector<4x2x8xf32>
    %243 = vector.extract_strided_slice %177 {offsets = [0, 0, 88], sizes = [4, 2, 8], strides = [1, 1, 1]} : vector<4x2x96xf32> to vector<4x2x8xf32>
    "tpu.trace_start"() <{level = 10 : i32, message = "nsd,ntd->nst"}> : () -> ()
    %cst_110 = arith.constant dense<0.000000e+00> : vector<4x2x2xf32>
    %244 = tpu.matmul %241, %242, %cst_110 {dimension_numbers = #tpu.dot_dimension_numbers<[2], [2], [1], [1], [0, 0, 0, 1, 1, 1], [0], [0]>} : vector<4x2x8xf32>, vector<4x2x8xf32>, vector<4x2x2xf32> -> vector<4x2x2xf32>
    "tpu.trace_stop"() : () -> ()
    %cst_111 = arith.constant 0.353553385 : f32
    %245 = vector.broadcast %cst_111 : f32 to vector<4x2x2xf32>
    %246 = arith.mulf %244, %245 : vector<4x2x2xf32>
    %cst_112 = arith.constant dense<0xFF800000> : vector<4x2xf32>
    %247 = vector.multi_reduction <maximumf>, %246, %cst_112 [2] : vector<4x2x2xf32> to vector<4x2xf32>
    %248 = vector.shape_cast %247 : vector<4x2xf32> to vector<4x2x1xf32>
    %249 = vector.broadcast %248 : vector<4x2x1xf32> to vector<4x2x2xf32>
    %250 = arith.subf %246, %249 : vector<4x2x2xf32>
    %251 = math.exp %250 : vector<4x2x2xf32>
    %cst_113 = arith.constant dense<0.000000e+00> : vector<4x2xf32>
    %252 = vector.multi_reduction <add>, %251, %cst_113 [2] : vector<4x2x2xf32> to vector<4x2xf32>
    %253 = vector.shape_cast %252 : vector<4x2xf32> to vector<4x2x1xf32>
    %254 = vector.broadcast %253 : vector<4x2x1xf32> to vector<4x2x2xf32>
    %255 = arith.divf %251, %254 : vector<4x2x2xf32>
    "tpu.trace_start"() <{level = 10 : i32, message = "nst,ntd->nsd"}> : () -> ()
    %cst_114 = arith.constant dense<0.000000e+00> : vector<4x2x8xf32>
    %256 = tpu.matmul %255, %243, %cst_114 {dimension_numbers = #tpu.dot_dimension_numbers<[2], [1], [1], [2], [0, 0, 0, 1, 1, 2], [0], [0]>} : vector<4x2x2xf32>, vector<4x2x8xf32>, vector<4x2x8xf32> -> vector<4x2x8xf32>
    "tpu.trace_stop"() : () -> ()
    %257 = vector.shape_cast %256 : vector<4x2x8xf32> to vector<8x8xf32>
    %258 = vector.extract_strided_slice %179 {offsets = [24, 0], sizes = [8, 32], strides = [1, 1]} : vector<32x32xf32> to vector<8x32xf32>
    %cst_115 = arith.constant dense<0.000000e+00> : vector<8x32xf32>
    %259 = tpu.matmul %257, %258, %cst_115 {dimension_numbers = #tpu.dot_dimension_numbers<[1], [0], [0], [1], [0, 0, 1, 1], [], []>} : vector<8x8xf32>, vector<8x32xf32>, vector<8x32xf32> -> vector<8x32xf32>
    %260 = arith.addf %240, %259 : vector<8x32xf32>
    %c1_116 = arith.constant 1 : index
    %c0_117 = arith.constant 0 : index
    %c0_118 = arith.constant 0 : index
    %261 = vector.load %arg7[%c1_116, %c0_117, %c0_118] : memref<2x1x32xf32, #tpu.memory_space<vmem>>, vector<1x1x32xf32>
    %262 = vector.shape_cast %261 : vector<1x1x32xf32> to vector<1x32xf32>
    %263 = vector.broadcast %262 : vector<1x32xf32> to vector<8x32xf32>
    %264 = arith.addf %260, %263 : vector<8x32xf32>
    %265 = arith.addf %169, %264 : vector<8x32xf32>
    %c1_119 = arith.constant 1 : index
    %c0_120 = arith.constant 0 : index
    %c0_121 = arith.constant 0 : index
    %266 = vector.load %arg8[%c1_119, %c0_120, %c0_121] : memref<2x1x32xf32, #tpu.memory_space<vmem>>, vector<1x1x32xf32>
    %267 = vector.shape_cast %266 : vector<1x1x32xf32> to vector<1x32xf32>
    %c1_122 = arith.constant 1 : index
    %c0_123 = arith.constant 0 : index
    %c0_124 = arith.constant 0 : index
    %268 = vector.load %arg9[%c1_122, %c0_123, %c0_124] : memref<2x1x32xf32, #tpu.memory_space<vmem>>, vector<1x1x32xf32>
    %269 = vector.shape_cast %268 : vector<1x1x32xf32> to vector<1x32xf32>
    %cst_125 = arith.constant dense<0.000000e+00> : vector<8xf32>
    %270 = vector.multi_reduction <add>, %265, %cst_125 [1] : vector<8x32xf32> to vector<8xf32>
    %271 = vector.shape_cast %270 : vector<8xf32> to vector<8x1xf32>
    %cst_126 = arith.constant 3.200000e+01 : f32
    %272 = vector.broadcast %cst_126 : f32 to vector<8x1xf32>
    %273 = arith.divf %271, %272 : vector<8x1xf32>
    %274 = vector.broadcast %273 : vector<8x1xf32> to vector<8x32xf32>
    %275 = arith.subf %265, %274 : vector<8x32xf32>
    %276 = arith.mulf %275, %275 : vector<8x32xf32>
    %cst_127 = arith.constant dense<0.000000e+00> : vector<8xf32>
    %277 = vector.multi_reduction <add>, %276, %cst_127 [1] : vector<8x32xf32> to vector<8xf32>
    %278 = vector.shape_cast %277 : vector<8xf32> to vector<8x1xf32>
    %cst_128 = arith.constant 3.200000e+01 : f32
    %279 = vector.broadcast %cst_128 : f32 to vector<8x1xf32>
    %280 = arith.divf %278, %279 : vector<8x1xf32>
    %cst_129 = arith.constant 9.99999974E-6 : f32
    %281 = vector.broadcast %cst_129 : f32 to vector<8x1xf32>
    %282 = arith.addf %280, %281 : vector<8x1xf32>
    %283 = math.rsqrt %282 : vector<8x1xf32>
    %284 = vector.broadcast %283 : vector<8x1xf32> to vector<8x32xf32>
    %285 = arith.mulf %275, %284 : vector<8x32xf32>
    %286 = vector.broadcast %267 : vector<1x32xf32> to vector<8x32xf32>
    %287 = arith.mulf %285, %286 : vector<8x32xf32>
    %288 = vector.broadcast %269 : vector<1x32xf32> to vector<8x32xf32>
    %289 = arith.addf %287, %288 : vector<8x32xf32>
    %c1_130 = arith.constant 1 : index
    %c0_131 = arith.constant 0 : index
    %c0_132 = arith.constant 0 : index
    %290 = vector.load %arg10[%c1_130, %c0_131, %c0_132] : memref<2x32x2048xf32, #tpu.memory_space<vmem>>, vector<1x32x2048xf32>
    %291 = vector.shape_cast %290 : vector<1x32x2048xf32> to vector<32x2048xf32>
    %cst_133 = arith.constant dense<0.000000e+00> : vector<8x2048xf32>
    %292 = tpu.matmul %289, %291, %cst_133 {dimension_numbers = #tpu.dot_dimension_numbers<[1], [0], [0], [1], [0, 0, 1, 1], [], []>} : vector<8x32xf32>, vector<32x2048xf32>, vector<8x2048xf32> -> vector<8x2048xf32>
    %c1_134 = arith.constant 1 : index
    %c0_135 = arith.constant 0 : index
    %c0_136 = arith.constant 0 : index
    %293 = vector.load %arg11[%c1_134, %c0_135, %c0_136] : memref<2x1x2048xf32, #tpu.memory_space<vmem>>, vector<1x1x2048xf32>
    %294 = vector.shape_cast %293 : vector<1x1x2048xf32> to vector<1x2048xf32>
    %295 = vector.broadcast %294 : vector<1x2048xf32> to vector<8x2048xf32>
    %296 = arith.addf %292, %295 : vector<8x2048xf32>
    %cst_137 = arith.constant 0.000000e+00 : f32
    %297 = vector.broadcast %cst_137 : f32 to vector<8x2048xf32>
    %298 = arith.maximumf %296, %297 : vector<8x2048xf32>
    %c1_138 = arith.constant 1 : index
    %c0_139 = arith.constant 0 : index
    %c0_140 = arith.constant 0 : index
    %299 = vector.load %arg12[%c1_138, %c0_139, %c0_140] : memref<2x2048x32xf32, #tpu.memory_space<vmem>>, vector<1x2048x32xf32>
    %300 = vector.shape_cast %299 : vector<1x2048x32xf32> to vector<2048x32xf32>
    %cst_141 = arith.constant dense<0.000000e+00> : vector<8x32xf32>
    %301 = tpu.matmul %298, %300, %cst_141 {dimension_numbers = #tpu.dot_dimension_numbers<[1], [0], [0], [1], [0, 0, 1, 1], [], []>} : vector<8x2048xf32>, vector<2048x32xf32>, vector<8x32xf32> -> vector<8x32xf32>
    %c1_142 = arith.constant 1 : index
    %c0_143 = arith.constant 0 : index
    %c0_144 = arith.constant 0 : index
    %302 = vector.load %arg13[%c1_142, %c0_143, %c0_144] : memref<2x1x32xf32, #tpu.memory_space<vmem>>, vector<1x1x32xf32>
    %303 = vector.shape_cast %302 : vector<1x1x32xf32> to vector<1x32xf32>
    %304 = vector.broadcast %303 : vector<1x32xf32> to vector<8x32xf32>
    %305 = arith.addf %301, %304 : vector<8x32xf32>
    %306 = arith.addf %289, %305 : vector<8x32xf32>
    %c1_145 = arith.constant 1 : index
    %c0_146 = arith.constant 0 : index
    %c0_147 = arith.constant 0 : index
    %307 = vector.load %arg14[%c1_145, %c0_146, %c0_147] : memref<2x1x32xf32, #tpu.memory_space<vmem>>, vector<1x1x32xf32>
    %308 = vector.shape_cast %307 : vector<1x1x32xf32> to vector<1x32xf32>
    %c1_148 = arith.constant 1 : index
    %c0_149 = arith.constant 0 : index
    %c0_150 = arith.constant 0 : index
    %309 = vector.load %arg15[%c1_148, %c0_149, %c0_150] : memref<2x1x32xf32, #tpu.memory_space<vmem>>, vector<1x1x32xf32>
    %310 = vector.shape_cast %309 : vector<1x1x32xf32> to vector<1x32xf32>
    %cst_151 = arith.constant dense<0.000000e+00> : vector<8xf32>
    %311 = vector.multi_reduction <add>, %306, %cst_151 [1] : vector<8x32xf32> to vector<8xf32>
    %312 = vector.shape_cast %311 : vector<8xf32> to vector<8x1xf32>
    %cst_152 = arith.constant 3.200000e+01 : f32
    %313 = vector.broadcast %cst_152 : f32 to vector<8x1xf32>
    %314 = arith.divf %312, %313 : vector<8x1xf32>
    %315 = vector.broadcast %314 : vector<8x1xf32> to vector<8x32xf32>
    %316 = arith.subf %306, %315 : vector<8x32xf32>
    %317 = arith.mulf %316, %316 : vector<8x32xf32>
    %cst_153 = arith.constant dense<0.000000e+00> : vector<8xf32>
    %318 = vector.multi_reduction <add>, %317, %cst_153 [1] : vector<8x32xf32> to vector<8xf32>
    %319 = vector.shape_cast %318 : vector<8xf32> to vector<8x1xf32>
    %cst_154 = arith.constant 3.200000e+01 : f32
    %320 = vector.broadcast %cst_154 : f32 to vector<8x1xf32>
    %321 = arith.divf %319, %320 : vector<8x1xf32>
    %cst_155 = arith.constant 9.99999974E-6 : f32
    %322 = vector.broadcast %cst_155 : f32 to vector<8x1xf32>
    %323 = arith.addf %321, %322 : vector<8x1xf32>
    %324 = math.rsqrt %323 : vector<8x1xf32>
    %325 = vector.broadcast %324 : vector<8x1xf32> to vector<8x32xf32>
    %326 = arith.mulf %316, %325 : vector<8x32xf32>
    %327 = vector.broadcast %308 : vector<1x32xf32> to vector<8x32xf32>
    %328 = arith.mulf %326, %327 : vector<8x32xf32>
    %329 = vector.broadcast %310 : vector<1x32xf32> to vector<8x32xf32>
    %330 = arith.addf %328, %329 : vector<8x32xf32>
    %331 = vector.shape_cast %330 : vector<8x32xf32> to vector<4x2x32xf32>
    %c0_156 = arith.constant 0 : index
    %c0_157 = arith.constant 0 : index
    %c0_158 = arith.constant 0 : index
    %332 = vector.load %arg16[%c0_156, %c0_157, %c0_158] : memref<4x2x32xf32, #tpu.memory_space<vmem>>, vector<4x2x32xf32>
    tpu.vector_store %arg16[%c0_156, %c0_157, %c0_158], %331 {strides = array<i32>} : memref<4x2x32xf32, #tpu.memory_space<vmem>>, vector<4x2x32xf32>,
    return
  }
  func.func @transform_0(%arg0: i32) -> (i32, i32, i32) {
    %c0_i32 = arith.constant 0 : i32
    %c0_i32_0 = arith.constant 0 : i32
    %c0_i32_1 = arith.constant 0 : i32
    return %arg0, %c0_i32, %c0_i32_0 : i32, i32, i32
  }
  func.func @transform_1(%arg0: i32) -> (i32, i32) {
    %c0_i32 = arith.constant 0 : i32
    %c0_i32_0 = arith.constant 0 : i32
    %c0_i32_1 = arith.constant 0 : i32
    return %c0_i32, %c0_i32_0 : i32, i32
  }
  func.func @transform_2(%arg0: i32) -> (i32, i32) {
    %c0_i32 = arith.constant 0 : i32
    %c0_i32_0 = arith.constant 0 : i32
    %c0_i32_1 = arith.constant 0 : i32
    return %c0_i32, %c0_i32_0 : i32, i32
  }
  func.func @transform_3(%arg0: i32) -> (i32, i32, i32) {
    %c0_i32 = arith.constant 0 : i32
    %c0_i32_0 = arith.constant 0 : i32
    %c0_i32_1 = arith.constant 0 : i32
    %c0_i32_2 = arith.constant 0 : i32
    return %c0_i32, %c0_i32_0, %c0_i32_1 : i32, i32, i32
  }
  func.func @transform_4(%arg0: i32) -> (i32, i32, i32) {
    %c0_i32 = arith.constant 0 : i32
    %c0_i32_0 = arith.constant 0 : i32
    %c0_i32_1 = arith.constant 0 : i32
    %c0_i32_2 = arith.constant 0 : i32
    return %c0_i32, %c0_i32_0, %c0_i32_1 : i32, i32, i32
  }
  func.func @transform_5(%arg0: i32) -> (i32, i32, i32) {
    %c0_i32 = arith.constant 0 : i32
    %c0_i32_0 = arith.constant 0 : i32
    %c0_i32_1 = arith.constant 0 : i32
    %c0_i32_2 = arith.constant 0 : i32
    return %c0_i32, %c0_i32_0, %c0_i32_1 : i32, i32, i32
  }
  func.func @transform_6(%arg0: i32) -> (i32, i32, i32) {
    %c0_i32 = arith.constant 0 : i32
    %c0_i32_0 = arith.constant 0 : i32
    %c0_i32_1 = arith.constant 0 : i32
    %c0_i32_2 = arith.constant 0 : i32
    return %c0_i32, %c0_i32_0, %c0_i32_1 : i32, i32, i32
  }
  func.func @transform_7(%arg0: i32) -> (i32, i32, i32) {
    %c0_i32 = arith.constant 0 : i32
    %c0_i32_0 = arith.constant 0 : i32
    %c0_i32_1 = arith.constant 0 : i32
    %c0_i32_2 = arith.constant 0 : i32
    return %c0_i32, %c0_i32_0, %c0_i32_1 : i32, i32, i32
  }
  func.func @transform_8(%arg0: i32) -> (i32, i32, i32) {
    %c0_i32 = arith.constant 0 : i32
    %c0_i32_0 = arith.constant 0 : i32
    %c0_i32_1 = arith.constant 0 : i32
    %c0_i32_2 = arith.constant 0 : i32
    return %c0_i32, %c0_i32_0, %c0_i32_1 : i32, i32, i32
  }
  func.func @transform_9(%arg0: i32) -> (i32, i32, i32) {
    %c0_i32 = arith.constant 0 : i32
    %c0_i32_0 = arith.constant 0 : i32
    %c0_i32_1 = arith.constant 0 : i32
    %c0_i32_2 = arith.constant 0 : i32
    return %c0_i32, %c0_i32_0, %c0_i32_1 : i32, i32, i32
  }
  func.func @transform_10(%arg0: i32) -> (i32, i32, i32) {
    %c0_i32 = arith.constant 0 : i32
    %c0_i32_0 = arith.constant 0 : i32
    %c0_i32_1 = arith.constant 0 : i32
    %c0_i32_2 = arith.constant 0 : i32
    return %c0_i32, %c0_i32_0, %c0_i32_1 : i32, i32, i32
  }
  func.func @transform_11(%arg0: i32) -> (i32, i32, i32) {
    %c0_i32 = arith.constant 0 : i32
    %c0_i32_0 = arith.constant 0 : i32
    %c0_i32_1 = arith.constant 0 : i32
    %c0_i32_2 = arith.constant 0 : i32
    return %c0_i32, %c0_i32_0, %c0_i32_1 : i32, i32, i32
  }
  func.func @transform_12(%arg0: i32) -> (i32, i32, i32) {
    %c0_i32 = arith.constant 0 : i32
    %c0_i32_0 = arith.constant 0 : i32
    %c0_i32_1 = arith.constant 0 : i32
    %c0_i32_2 = arith.constant 0 : i32
    return %c0_i32, %c0_i32_0, %c0_i32_1 : i32, i32, i32
  }
  func.func @transform_13(%arg0: i32) -> (i32, i32, i32) {
    %c0_i32 = arith.constant 0 : i32
    %c0_i32_0 = arith.constant 0 : i32
    %c0_i32_1 = arith.constant 0 : i32
    %c0_i32_2 = arith.constant 0 : i32
    return %c0_i32, %c0_i32_0, %c0_i32_1 : i32, i32, i32
  }
  func.func @transform_14(%arg0: i32) -> (i32, i32, i32) {
    %c0_i32 = arith.constant 0 : i32
    %c0_i32_0 = arith.constant 0 : i32
    %c0_i32_1 = arith.constant 0 : i32
    %c0_i32_2 = arith.constant 0 : i32
    return %c0_i32, %c0_i32_0, %c0_i32_1 : i32, i32, i32
  }
  func.func @transform_15(%arg0: i32) -> (i32, i32, i32) {
    %c0_i32 = arith.constant 0 : i32
    %c0_i32_0 = arith.constant 0 : i32
    %c0_i32_1 = arith.constant 0 : i32
    return %arg0, %c0_i32, %c0_i32_0 : i32, i32, i32
  }
}

</mosaic_0001>

<llo_original>
// kernel: force_block_forward.1
$region0: #{force_block_forward.1}
  #allocation0 [shape = 'u32[]', space=smem, size = 0x4, offset = 0x4, fixed_abs, tag = 'smem constant byte address 0x4 - core index']
  #allocation1 [shape = 'u32[144,128]{1,0:T(1,128)}', space=vmem, size = 0x12000, scoped, tag = 'internal scratch']
  %s0 = inlined_call_operand.vmem [shape: f32[8,2,4], index: 0, kind: input, shape index: {}]
  %s1 = inlined_call_operand.vmem [shape: f32[4,32], index: 1, kind: input, shape index: {}]
  %s2 = inlined_call_operand.vmem [shape: f32[1,32], index: 2, kind: input, shape index: {}]
  %s3 = inlined_call_operand.vmem [shape: f32[2,32,96], index: 3, kind: input, shape index: {}]
  %s4 = inlined_call_operand.vmem [shape: f32[2,1,96], index: 4, kind: input, shape index: {}]
  %s5 = inlined_call_operand.vmem [shape: f32[2,32,32], index: 5, kind: input, shape index: {}]
  %s6 = inlined_call_operand.vmem [shape: f32[2,1,32], index: 6, kind: input, shape index: {}]
  %s7 = inlined_call_operand.vmem [shape: f32[2,1,32], index: 7, kind: input, shape index: {}]
  %s8 = inlined_call_operand.vmem [shape: f32[2,1,32], index: 8, kind: input, shape index: {}]
  %s9 = inlined_call_operand.vmem [shape: f32[2,32,2048], index: 9, kind: input, shape index: {}]
  %s10 = inlined_call_operand.vmem [shape: f32[2,1,2048], index: 10, kind: input, shape index: {}]
  %s11 = inlined_call_operand.vmem [shape: f32[2,2048,32], index: 11, kind: input, shape index: {}]
  %s12 = inlined_call_operand.vmem [shape: f32[2,1,32], index: 12, kind: input, shape index: {}]
  %s13 = inlined_call_operand.vmem [shape: f32[2,1,32], index: 13, kind: input, shape index: {}]
  %s14 = inlined_call_operand.vmem [shape: f32[2,1,32], index: 14, kind: input, shape index: {}]
  %s15 = inlined_call_operand.vmem [shape: f32[8,2,32], index: 15, kind: output, shape index: {}]
  %s16 = sld [smem:[#allocation0]]
  $region93: #{force_block_forward.1} parent=0
    _
  %s18 = ssub.s32 1, %s16
  %s19 = scalar_select 0, %s18, %s16
  loop: start=0, step=1, limit=4
  $region2: #{force_block_forward.1} parent=0 // loop_pre_header
    _
  $region3: #{force_block_forward.1} parent=0 // loop_header
    %s21 = sphi 0, %s25
    %p22 = scmp.ge.s32.totalorder %s21, 4
    %s31 = sphi 0, %s33
    %s34 = sphi 0, %s31
    %s35 = sphi 0, %s34
    %s51 = sphi 0, %s35
    %s55 = sphi 0, %s55
    %s57 = sphi 0, %s55
    %s58 = sphi 0, %s57
    %s72 = sphi 0, %s58
    %s76 = sphi 0, %s76
    %s78 = sphi 0, %s76
    %s79 = sphi 0, %s78
    %s93 = sphi 0, %s79
    %s97 = sphi 0, %s97
    %s99 = sphi 0, %s97
    %s100 = sphi 0, %s99
    %s114 = sphi 0, %s100
    %s118 = sphi 0, %s118
    %s120 = sphi 0, %s118
    %s121 = sphi 0, %s120
    %s135 = sphi 0, %s121
    %s139 = sphi 0, %s139
    %s141 = sphi 0, %s139
    %s142 = sphi 0, %s141
    %s156 = sphi 0, %s142
    %s160 = sphi 0, %s160
    %s162 = sphi 0, %s160
    %s163 = sphi 0, %s162
    %s177 = sphi 0, %s163
    %s181 = sphi 0, %s181
    %s183 = sphi 0, %s181
    %s184 = sphi 0, %s183
    %s198 = sphi 0, %s184
    %s202 = sphi 0, %s202
    %s204 = sphi 0, %s202
    %s205 = sphi 0, %s204
    %s219 = sphi 0, %s205
    %s223 = sphi 0, %s223
    %s225 = sphi 0, %s223
    %s226 = sphi 0, %s225
    %s240 = sphi 0, %s226
    %s244 = sphi 0, %s244
    %s246 = sphi 0, %s244
    %s247 = sphi 0, %s246
    %s261 = sphi 0, %s247
    %s265 = sphi 0, %s265
    %s267 = sphi 0, %s265
    %s268 = sphi 0, %s267
    %s282 = sphi 0, %s268
    %s286 = sphi 0, %s286
    %s288 = sphi 0, %s286
    %s289 = sphi 0, %s288
    %s303 = sphi 0, %s289
    %s307 = sphi 0, %s307
    %s309 = sphi 0, %s307
    %s310 = sphi 0, %s309
    %s324 = sphi 0, %s310
    %s328 = sphi 0, %s328
    %s330 = sphi 0, %s328
    %s331 = sphi 0, %s330
    %s345 = sphi 0, %s331
    %s351 = sphi 0, %s353
    %s354 = sphi 0, %s351
    %s355 = sphi 0, %s354
    %s371 = sphi 0, %s355
  $region4: #{force_block_forward.1} parent=0 // loop_header_branch
    %24 = sbr.rel (%p22) target = $region8
  $region5: #{force_block_forward.1} parent=0 // loop_body
    %s26 = ssub.s32 %s21, 1
    %s27 = ssub.s32 %s21, 2
    %s28 = sadd.s32 %s21, 1
    %s29 = ssub.s32 %s21, %s28
    %p30 = scmp.eq.s32.totalorder %s29, 0
    %s32 = sadd.s32 %s31, 1
    %s33 = scalar_select %p30, %s31, %s32
    %p36 = pneg %p30
    %p37 = scmp.eq.s32.totalorder %s21, 1
    %p38 = por %p36, %p37
    %p39 = scmp.ne.s32.totalorder %s31, %s34
    %p40 = scmp.eq.s32.totalorder %s21, 0
    %p41 = por %p39, %p40
    %p42 = scmp.ne.s32.totalorder %s31, %s34
    %p43 = scmp.eq.s32.totalorder %s26, 1
    %p44 = por %p42, %p43
    %p45 = scmp.ne.s32.totalorder %s34, %s35
    %p46 = scmp.eq.s32.totalorder %s26, 0
    %p47 = por %p45, %p46
    %p48 = scmp.ne.s32.totalorder %s34, %s35
    %p49 = scmp.eq.s32.totalorder %s27, 1
    %p50 = por %p48, %p49
    %p52 = scmp.ne.s32.totalorder %s35, %s51
    %p53 = scmp.eq.s32.totalorder %s27, 0
    %p54 = por %p52, %p53
    %s56 = sadd.s32 %s55, 1
    %p59 = scmp.eq.s32.totalorder %s21, 1
    %p60 = scmp.ne.s32.totalorder %s55, %s57
    %p61 = scmp.eq.s32.totalorder %s21, 0
    %p62 = por %p60, %p61
    %p63 = scmp.ne.s32.totalorder %s55, %s57
    %p64 = scmp.eq.s32.totalorder %s26, 1
    %p65 = por %p63, %p64
    %p66 = scmp.ne.s32.totalorder %s57, %s58
    %p67 = scmp.eq.s32.totalorder %s26, 0
    %p68 = por %p66, %p67
    %p69 = scmp.ne.s32.totalorder %s57, %s58
    %p70 = scmp.eq.s32.totalorder %s27, 1
    %p71 = por %p69, %p70
    %p73 = scmp.ne.s32.totalorder %s58, %s72
    %p74 = scmp.eq.s32.totalorder %s27, 0
    %p75 = por %p73, %p74
    %s77 = sadd.s32 %s76, 1
    %p80 = scmp.eq.s32.totalorder %s21, 1
    %p81 = scmp.ne.s32.totalorder %s76, %s78
    %p82 = scmp.eq.s32.totalorder %s21, 0
    %p83 = por %p81, %p82
    %p84 = scmp.ne.s32.totalorder %s76, %s78
    %p85 = scmp.eq.s32.totalorder %s26, 1
    %p86 = por %p84, %p85
    %p87 = scmp.ne.s32.totalorder %s78, %s79
    %p88 = scmp.eq.s32.totalorder %s26, 0
    %p89 = por %p87, %p88
    %p90 = scmp.ne.s32.totalorder %s78, %s79
    %p91 = scmp.eq.s32.totalorder %s27, 1
    %p92 = por %p90, %p91
    %p94 = scmp.ne.s32.totalorder %s79, %s93
    %p95 = scmp.eq.s32.totalorder %s27, 0
    %p96 = por %p94, %p95
    %s98 = sadd.s32 %s97, 1
    %p101 = scmp.eq.s32.totalorder %s21, 1
    %p102 = scmp.ne.s32.totalorder %s97, %s99
    %p103 = scmp.eq.s32.totalorder %s21, 0
    %p104 = por %p102, %p103
    %p105 = scmp.ne.s32.totalorder %s97, %s99
    %p106 = scmp.eq.s32.totalorder %s26, 1
    %p107 = por %p105, %p106
    %p108 = scmp.ne.s32.totalorder %s99, %s100
    %p109 = scmp.eq.s32.totalorder %s26, 0
    %p110 = por %p108, %p109
    %p111 = scmp.ne.s32.totalorder %s99, %s100
    %p112 = scmp.eq.s32.totalorder %s27, 1
    %p113 = por %p111, %p112
    %p115 = scmp.ne.s32.totalorder %s100, %s114
    %p116 = scmp.eq.s32.totalorder %s27, 0
    %p117 = por %p115, %p116
    %s119 = sadd.s32 %s118, 1
    %p122 = scmp.eq.s32.totalorder %s21, 1
    %p123 = scmp.ne.s32.totalorder %s118, %s120
    %p124 = scmp.eq.s32.totalorder %s21, 0
    %p125 = por %p123, %p124
    %p126 = scmp.ne.s32.totalorder %s118, %s120
    %p127 = scmp.eq.s32.totalorder %s26, 1
    %p128 = por %p126, %p127
    %p129 = scmp.ne.s32.totalorder %s120, %s121
    %p130 = scmp.eq.s32.totalorder %s26, 0
    %p131 = por %p129, %p130
    %p132 = scmp.ne.s32.totalorder %s120, %s121
    %p133 = scmp.eq.s32.totalorder %s27, 1
    %p134 = por %p132, %p133
    %p136 = scmp.ne.s32.totalorder %s121, %s135
    %p137 = scmp.eq.s32.totalorder %s27, 0
    %p138 = por %p136, %p137
    %s140 = sadd.s32 %s139, 1
    %p143 = scmp.eq.s32.totalorder %s21, 1
    %p144 = scmp.ne.s32.totalorder %s139, %s141
    %p145 = scmp.eq.s32.totalorder %s21, 0
    %p146 = por %p144, %p145
    %p147 = scmp.ne.s32.totalorder %s139, %s141
    %p148 = scmp.eq.s32.totalorder %s26, 1
    %p149 = por %p147, %p148
    %p150 = scmp.ne.s32.totalorder %s141, %s142
    %p151 = scmp.eq.s32.totalorder %s26, 0
    %p152 = por %p150, %p151
    %p153 = scmp.ne.s32.totalorder %s141, %s142
    %p154 = scmp.eq.s32.totalorder %s27, 1
    %p155 = por %p153, %p154
    %p157 = scmp.ne.s32.totalorder %s142, %s156
    %p158 = scmp.eq.s32.totalorder %s27, 0
    %p159 = por %p157, %p158
    %s161 = sadd.s32 %s160, 1
    %p164 = scmp.eq.s32.totalorder %s21, 1
    %p165 = scmp.ne.s32.totalorder %s160, %s162
    %p166 = scmp.eq.s32.totalorder %s21, 0
    %p167 = por %p165, %p166
    %p168 = scmp.ne.s32.totalorder %s160, %s162
    %p169 = scmp.eq.s32.totalorder %s26, 1
    %p170 = por %p168, %p169
    %p171 = scmp.ne.s32.totalorder %s162, %s163
    %p172 = scmp.eq.s32.totalorder %s26, 0
    %p173 = por %p171, %p172
    %p174 = scmp.ne.s32.totalorder %s162, %s163
    %p175 = scmp.eq.s32.totalorder %s27, 1
    %p176 = por %p174, %p175
    %p178 = scmp.ne.s32.totalorder %s163, %s177
    %p179 = scmp.eq.s32.totalorder %s27, 0
    %p180 = por %p178, %p179
    %s182 = sadd.s32 %s181, 1
    %p185 = scmp.eq.s32.totalorder %s21, 1
    %p186 = scmp.ne.s32.totalorder %s181, %s183
    %p187 = scmp.eq.s32.totalorder %s21, 0
    %p188 = por %p186, %p187
    %p189 = scmp.ne.s32.totalorder %s181, %s183
    %p190 = scmp.eq.s32.totalorder %s26, 1
    %p191 = por %p189, %p190
    %p192 = scmp.ne.s32.totalorder %s183, %s184
    %p193 = scmp.eq.s32.totalorder %s26, 0
    %p194 = por %p192, %p193
    %p195 = scmp.ne.s32.totalorder %s183, %s184
    %p196 = scmp.eq.s32.totalorder %s27, 1
    %p197 = por %p195, %p196
    %p199 = scmp.ne.s32.totalorder %s184, %s198
    %p200 = scmp.eq.s32.totalorder %s27, 0
    %p201 = por %p199, %p200
    %s203 = sadd.s32 %s202, 1
    %p206 = scmp.eq.s32.totalorder %s21, 1
    %p207 = scmp.ne.s32.totalorder %s202, %s204
    %p208 = scmp.eq.s32.totalorder %s21, 0
    %p209 = por %p207, %p208
    %p210 = scmp.ne.s32.totalorder %s202, %s204
    %p211 = scmp.eq.s32.totalorder %s26, 1
    %p212 = por %p210, %p211
    %p213 = scmp.ne.s32.totalorder %s204, %s205
    %p214 = scmp.eq.s32.totalorder %s26, 0
    %p215 = por %p213, %p214
    %p216 = scmp.ne.s32.totalorder %s204, %s205
    %p217 = scmp.eq.s32.totalorder %s27, 1
    %p218 = por %p216, %p217
    %p220 = scmp.ne.s32.totalorder %s205, %s219
    %p221 = scmp.eq.s32.totalorder %s27, 0
    %p222 = por %p220, %p221
    %s224 = sadd.s32 %s223, 1
    %p227 = scmp.eq.s32.totalorder %s21, 1
    %p228 = scmp.ne.s32.totalorder %s223, %s225
    %p229 = scmp.eq.s32.totalorder %s21, 0
    %p230 = por %p228, %p229
    %p231 = scmp.ne.s32.totalorder %s223, %s225
    %p232 = scmp.eq.s32.totalorder %s26, 1
    %p233 = por %p231, %p232
    %p234 = scmp.ne.s32.totalorder %s225, %s226
    %p235 = scmp.eq.s32.totalorder %s26, 0
    %p236 = por %p234, %p235
    %p237 = scmp.ne.s32.totalorder %s225, %s226
    %p238 = scmp.eq.s32.totalorder %s27, 1
    %p239 = por %p237, %p238
    %p241 = scmp.ne.s32.totalorder %s226, %s240
    %p242 = scmp.eq.s32.totalorder %s27, 0
    %p243 = por %p241, %p242
    %s245 = sadd.s32 %s244, 1
    %p248 = scmp.eq.s32.totalorder %s21, 1
    %p249 = scmp.ne.s32.totalorder %s244, %s246
    %p250 = scmp.eq.s32.totalorder %s21, 0
    %p251 = por %p249, %p250
    %p252 = scmp.ne.s32.totalorder %s244, %s246
    %p253 = scmp.eq.s32.totalorder %s26, 1
    %p254 = por %p252, %p253
    %p255 = scmp.ne.s32.totalorder %s246, %s247
    %p256 = scmp.eq.s32.totalorder %s26, 0
    %p257 = por %p255, %p256
    %p258 = scmp.ne.s32.totalorder %s246, %s247
    %p259 = scmp.eq.s32.totalorder %s27, 1
    %p260 = por %p258, %p259
    %p262 = scmp.ne.s32.totalorder %s247, %s261
    %p263 = scmp.eq.s32.totalorder %s27, 0
    %p264 = por %p262, %p263
    %s266 = sadd.s32 %s265, 1
    %p269 = scmp.eq.s32.totalorder %s21, 1
    %p270 = scmp.ne.s32.totalorder %s265, %s267
    %p271 = scmp.eq.s32.totalorder %s21, 0
    %p272 = por %p270, %p271
    %p273 = scmp.ne.s32.totalorder %s265, %s267
    %p274 = scmp.eq.s32.totalorder %s26, 1
    %p275 = por %p273, %p274
    %p276 = scmp.ne.s32.totalorder %s267, %s268
    %p277 = scmp.eq.s32.totalorder %s26, 0
    %p278 = por %p276, %p277
    %p279 = scmp.ne.s32.totalorder %s267, %s268
    %p280 = scmp.eq.s32.totalorder %s27, 1
    %p281 = por %p279, %p280
    %p283 = scmp.ne.s32.totalorder %s268, %s282
    %p284 = scmp.eq.s32.totalorder %s27, 0
    %p285 = por %p283, %p284
    %s287 = sadd.s32 %s286, 1
    %p290 = scmp.eq.s32.totalorder %s21, 1
    %p291 = scmp.ne.s32.totalorder %s286, %s288
    %p292 = scmp.eq.s32.totalorder %s21, 0
    %p293 = por %p291, %p292
    %p294 = scmp.ne.s32.totalorder %s286, %s288
    %p295 = scmp.eq.s32.totalorder %s26, 1
    %p296 = por %p294, %p295
    %p297 = scmp.ne.s32.totalorder %s288, %s289
    %p298 = scmp.eq.s32.totalorder %s26, 0
    %p299 = por %p297, %p298
    %p300 = scmp.ne.s32.totalorder %s288, %s289
    %p301 = scmp.eq.s32.totalorder %s27, 1
    %p302 = por %p300, %p301
    %p304 = scmp.ne.s32.totalorder %s289, %s303
    %p305 = scmp.eq.s32.totalorder %s27, 0
    %p306 = por %p304, %p305
    %s308 = sadd.s32 %s307, 1
    %p311 = scmp.eq.s32.totalorder %s21, 1
    %p312 = scmp.ne.s32.totalorder %s307, %s309
    %p313 = scmp.eq.s32.totalorder %s21, 0
    %p314 = por %p312, %p313
    %p315 = scmp.ne.s32.totalorder %s307, %s309
    %p316 = scmp.eq.s32.totalorder %s26, 1
    %p317 = por %p315, %p316
    %p318 = scmp.ne.s32.totalorder %s309, %s310
    %p319 = scmp.eq.s32.totalorder %s26, 0
    %p320 = por %p318, %p319
    %p321 = scmp.ne.s32.totalorder %s309, %s310
    %p322 = scmp.eq.s32.totalorder %s27, 1
    %p323 = por %p321, %p322
    %p325 = scmp.ne.s32.totalorder %s310, %s324
    %p326 = scmp.eq.s32.totalorder %s27, 0
    %p327 = por %p325, %p326
    %s329 = sadd.s32 %s328, 1
    %p332 = scmp.eq.s32.totalorder %s21, 1
    %p333 = scmp.ne.s32.totalorder %s328, %s330
    %p334 = scmp.eq.s32.totalorder %s21, 0
    %p335 = por %p333, %p334
    %p336 = scmp.ne.s32.totalorder %s328, %s330
    %p337 = scmp.eq.s32.totalorder %s26, 1
    %p338 = por %p336, %p337
    %p339 = scmp.ne.s32.totalorder %s330, %s331
    %p340 = scmp.eq.s32.totalorder %s26, 0
    %p341 = por %p339, %p340
    %p342 = scmp.ne.s32.totalorder %s330, %s331
    %p343 = scmp.eq.s32.totalorder %s27, 1
    %p344 = por %p342, %p343
    %p346 = scmp.ne.s32.totalorder %s331, %s345
    %p347 = scmp.eq.s32.totalorder %s27, 0
    %p348 = por %p346, %p347
    %s349 = ssub.s32 %s21, %s28
    %p350 = scmp.eq.s32.totalorder %s349, 0
    %s352 = sadd.s32 %s351, 1
    %s353 = scalar_select %p350, %s351, %s352
    %p356 = pneg %p350
    %p357 = scmp.eq.s32.totalorder %s21, 1
    %p358 = por %p356, %p357
    %p359 = scmp.ne.s32.totalorder %s351, %s354
    %p360 = scmp.eq.s32.totalorder %s21, 0
    %p361 = por %p359, %p360
    %p362 = scmp.ne.s32.totalorder %s351, %s354
    %p363 = scmp.eq.s32.totalorder %s26, 1
    %p364 = por %p362, %p363
    %p365 = scmp.ne.s32.totalorder %s354, %s355
    %p366 = scmp.eq.s32.totalorder %s26, 0
    %p367 = por %p365, %p366
    %p368 = scmp.ne.s32.totalorder %s354, %s355
    %p369 = scmp.eq.s32.totalorder %s27, 1
    %p370 = por %p368, %p369
    %p372 = scmp.ne.s32.totalorder %s355, %s371
    %p373 = scmp.eq.s32.totalorder %s27, 0
    %p374 = por %p372, %p373
    %p375 = scmp.le.s32.totalorder 1, %s21
    %p376 = scmp.lt.s32.totalorder %s21, 3
    %p377 = pnand %p375, %p376
    %p378 = pneg %p377
    // Predicated region
    $region9: #{force_block_forward.1} parent=5 // pred_check
      _
    $region10: #{force_block_forward.1} parent=5 // pred_check_branch
      %380 = sbr.rel (%p377) target = $region12
    $region11: #{force_block_forward.1} parent=5 // pred_region
      %s381 = ssub.s32 %s21, 1
      // Predicated region
      $region13: #{force_block_forward.1} parent=11 // pred_check
        %p382 = pneg %p68
      $region14: #{force_block_forward.1} parent=11 // pred_check_branch
        %384 = sbr.rel (%p382) target = $region16
      $region15: #{force_block_forward.1} parent=11 // pred_region
        _
      $region16: #{force_block_forward.1} parent=11 // pred_fallthru
        _
      // Predicated region
      $region17: #{force_block_forward.1} parent=11 // pred_check
        %p385 = pneg %p89
      $region18: #{force_block_forward.1} parent=11 // pred_check_branch
        %387 = sbr.rel (%p385) target = $region20
      $region19: #{force_block_forward.1} parent=11 // pred_region
        _
      $region20: #{force_block_forward.1} parent=11 // pred_fallthru
        _
      // Predicated region
      $region21: #{force_block_forward.1} parent=11 // pred_check
        %p388 = pneg %p110
      $region22: #{force_block_forward.1} parent=11 // pred_check_branch
        %390 = sbr.rel (%p388) target = $region24
      $region23: #{force_block_forward.1} parent=11 // pred_region
        _
      $region24: #{force_block_forward.1} parent=11 // pred_fallthru
        _
      // Predicated region
      $region25: #{force_block_forward.1} parent=11 // pred_check
        %p391 = pneg %p131
      $region26: #{force_block_forward.1} parent=11 // pred_check_branch
        %393 = sbr.rel (%p391) target = $region28
      $region27: #{force_block_forward.1} parent=11 // pred_region
        _
      $region28: #{force_block_forward.1} parent=11 // pred_fallthru
        _
      // Predicated region
      $region29: #{force_block_forward.1} parent=11 // pred_check
        %p394 = pneg %p152
      $region30: #{force_block_forward.1} parent=11 // pred_check_branch
        %396 = sbr.rel (%p394) target = $region32
      $region31: #{force_block_forward.1} parent=11 // pred_region
        _
      $region32: #{force_block_forward.1} parent=11 // pred_fallthru
        _
      // Predicated region
      $region33: #{force_block_forward.1} parent=11 // pred_check
        %p397 = pneg %p173
      $region34: #{force_block_forward.1} parent=11 // pred_check_branch
        %399 = sbr.rel (%p397) target = $region36
      $region35: #{force_block_forward.1} parent=11 // pred_region
        _
      $region36: #{force_block_forward.1} parent=11 // pred_fallthru
        _
      // Predicated region
      $region37: #{force_block_forward.1} parent=11 // pred_check
        %p400 = pneg %p194
      $region38: #{force_block_forward.1} parent=11 // pred_check_branch
        %402 = sbr.rel (%p400) target = $region40
      $region39: #{force_block_forward.1} parent=11 // pred_region
        _
      $region40: #{force_block_forward.1} parent=11 // pred_fallthru
        _
      // Predicated region
      $region41: #{force_block_forward.1} parent=11 // pred_check
        %p403 = pneg %p215
      $region42: #{force_block_forward.1} parent=11 // pred_check_branch
        %405 = sbr.rel (%p403) target = $region44
      $region43: #{force_block_forward.1} parent=11 // pred_region
        _
      $region44: #{force_block_forward.1} parent=11 // pred_fallthru
        _
      // Predicated region
      $region45: #{force_block_forward.1} parent=11 // pred_check
        %p406 = pneg %p236
      $region46: #{force_block_forward.1} parent=11 // pred_check_branch
        %408 = sbr.rel (%p406) target = $region48
      $region47: #{force_block_forward.1} parent=11 // pred_region
        _
      $region48: #{force_block_forward.1} parent=11 // pred_fallthru
        _
      // Predicated region
      $region49: #{force_block_forward.1} parent=11 // pred_check
        %p409 = pneg %p257
      $region50: #{force_block_forward.1} parent=11 // pred_check_branch
        %411 = sbr.rel (%p409) target = $region52
      $region51: #{force_block_forward.1} parent=11 // pred_region
        _
      $region52: #{force_block_forward.1} parent=11 // pred_fallthru
        _
      // Predicated region
      $region53: #{force_block_forward.1} parent=11 // pred_check
        %p412 = pneg %p278
      $region54: #{force_block_forward.1} parent=11 // pred_check_branch
        %414 = sbr.rel (%p412) target = $region56
      $region55: #{force_block_forward.1} parent=11 // pred_region
        _
      $region56: #{force_block_forward.1} parent=11 // pred_fallthru
        _
      // Predicated region
      $region57: #{force_block_forward.1} parent=11 // pred_check
        %p415 = pneg %p299
      $region58: #{force_block_forward.1} parent=11 // pred_check_branch
        %417 = sbr.rel (%p415) target = $region60
      $region59: #{force_block_forward.1} parent=11 // pred_region
        _
      $region60: #{force_block_forward.1} parent=11 // pred_fallthru
        _
      // Predicated region
      $region61: #{force_block_forward.1} parent=11 // pred_check
        %p418 = pneg %p320
      $region62: #{force_block_forward.1} parent=11 // pred_check_branch
        %420 = sbr.rel (%p418) target = $region64
      $region63: #{force_block_forward.1} parent=11 // pred_region
        _
      $region64: #{force_block_forward.1} parent=11 // pred_fallthru
        _
      // Predicated region
      $region65: #{force_block_forward.1} parent=11 // pred_check
        %p421 = pneg %p341
      $region66: #{force_block_forward.1} parent=11 // pred_check_branch
        %423 = sbr.rel (%p421) target = $region68
      $region67: #{force_block_forward.1} parent=11 // pred_region
        _
      $region68: #{force_block_forward.1} parent=11 // pred_fallthru
        _
    $region12: #{force_block_forward.1} parent=5 // pred_fallthru
      _
    %p424 = scmp.lt.s32.totalorder %s21, 2
    // Predicated region
    $region69: #{force_block_forward.1} parent=5 // pred_check
      %p425 = pneg %p424
    $region70: #{force_block_forward.1} parent=5 // pred_check_branch
      %427 = sbr.rel (%p425) target = $region72
    $region71: #{force_block_forward.1} parent=5 // pred_region
      // Predicated region
      $region73: #{force_block_forward.1} parent=71 // pred_check
        %p428 = pneg %p41
      $region74: #{force_block_forward.1} parent=71 // pred_check_branch
        %430 = sbr.rel (%p428) target = $region76
      $region75: #{force_block_forward.1} parent=71 // pred_region
        %s431 = smul.u32 4, %s21
        %p432 = scmp.lt.s32.totalorder %s431, 7
        %s433 = scalar_select %p432, %s431, 7
        %s434 = smul.addr %s433, 2
        %s435 = scalar_lea.vmem %s0, %s434
        %s436 = smul.u32 4, %s21
      $region76: #{force_block_forward.1} parent=71 // pred_fallthru
        _
    $region72: #{force_block_forward.1} parent=5 // pred_fallthru
      _
    %p437 = scmp.le.s32.totalorder 1, %s21
    %p438 = scmp.lt.s32.totalorder %s21, 3
    %p439 = pnand %p437, %p438
    %p440 = pneg %p439
    // Predicated region
    $region77: #{force_block_forward.1} parent=5 // pred_check
      _
    $region78: #{force_block_forward.1} parent=5 // pred_check_branch
      %442 = sbr.rel (%p439) target = $region80
    $region79: #{force_block_forward.1} parent=5 // pred_region
      %s443 = ssub.s32 %s21, 1
      %s444 = smul.u32 4, %s26
      %p445 = scmp.lt.s32.totalorder %s444, 7
      %s446 = scalar_select %p445, %s444, 7
      %s447 = smul.addr %s446, 2
      %s448 = scalar_lea.vmem %s0, %s447
      %p449 = pneg %p47
      %p450 = pneg %p44
      %p451 = pneg %p68
      %p452 = pneg %p65
      %p453 = pneg %p89
      %p454 = pneg %p86
      %p455 = pneg %p110
      %p456 = pneg %p107
      %p457 = pneg %p131
      %p458 = pneg %p128
      %p459 = pneg %p152
      %p460 = pneg %p149
      %p461 = pneg %p173
      %p462 = pneg %p170
      %p463 = pneg %p194
      %p464 = pneg %p191
      %p465 = pneg %p215
      %p466 = pneg %p212
      %p467 = pneg %p236
      %p468 = pneg %p233
      %p469 = pneg %p257
      %p470 = pneg %p254
      %p471 = pneg %p278
      %p472 = pneg %p275
      %p473 = pneg %p299
      %p474 = pneg %p296
      %p475 = pneg %p320
      %p476 = pneg %p317
      %p477 = pneg %p341
      %p478 = pneg %p338
      %p479 = pneg %p367
      %p480 = pneg %p364
      %s481 = smul.u32 4, %s26
      %p482 = scmp.lt.s32.totalorder %s481, 7
      %s483 = scalar_select %p482, %s481, 7
      %s484 = smul.addr %s483, 2
      %s485 = scalar_lea.vmem %s15, %s484
      %s486 = smul.u32 4, %s26
      %p487 = scmp.lt.s32.totalorder %s486, 7
      %s488 = scalar_select %p487, %s486, 7
      %s489 = smul.addr %s488, 2
      %s490 = scalar_lea.vmem %s0, %s489
      %s491 = smul.u32 4, %s26
      %s492 = smul.u32 4, %s26
      %p493 = scmp.lt.s32.totalorder %s492, 7
      %s494 = scalar_select %p493, %s492, 7
      %s495 = smul.addr %s494, 2
      %s496 = scalar_lea.vmem %s15, %s495
      %s497 = smul.u32 4, %s26
      %v498 = vld [vmem:[%s490] sm:$0x3]
      %v499 = vld [vmem:[%s490 + $0x2] sm:$0x3]
      %v500 = vld [vmem:[%s490 + $0x4] sm:$0x3]
      %v501 = vld [vmem:[%s490 + $0x6] sm:$0x3]
      %v502 = vld [vmem:[%s1] sm:$0xf]
      %v503 = vld [vmem:[%s2] sm:$0x1]
      %v505 = vlaneseq
      %v506 = vshrl.u32 %v505, 7
      %v507 = vsub.s32 0, %v506
      %v508 = vrot.slane %v503, %v507
      %v514 = vcombine.low %v498, %v499
      %v515 = vcombine.low %v500, %v501
      %v517 = vunpack.c.l.s4 1983009808
      %v518 = vunpack.c.0.s8 %v517
      %v519 = vlaneseq
      %v520 = vshrl.u32 %v519, 7
      %v521 = vsub.s32 %v518, %v520
      %v522 = vrot.slane %v514, %v521
      %v524 = vunpack.c.l.s4 1983009808
      %v525 = vunpack.c.0.s8 %v524
      %v526 = vlaneseq
      %v527 = vshrl.u32 %v526, 7
      %v528 = vsub.s32 %v525, %v527
      %v529 = vrot.slane %v515, %v528
      %v530 = vcombine.low %v522, %v529
      %vm531 = vcmask 31744
      %v532 = vsel %vm531, %v530, 0
      %vm534 = vcmask 1043456
      %v536 = vsel %vm534, %v502, 0
      %538 = vmatprep.subr.mxu0 0.0
      %539 = vmatpush1.msra.mxu0 0.0
      %540 = vmatprep.subr.mxu0 0.0
      %541 = vmatpush1.msra.mxu0 0.0
      %542 = vmatprep.subr.mxu0 0.0
      %543 = vmatpush1.msra.mxu0 0.0
      %544 = vmatprep.subr.mxu0 0.0
      %545 = vmatpush1.msra.mxu0 0.0
      %546 = vmatprep.subr.mxu0 0.0
      %547 = vmatpush1.msra.mxu0 0.0
      %548 = vmatprep.subr.mxu0 0.0
      %549 = vmatpush1.msra.mxu0 0.0
      %550 = vmatprep.subr.mxu0 0.0
      %551 = vmatpush1.msra.mxu0 0.0
      %552 = vmatprep.subr.mxu0 0.0
      %553 = vmatpush1.msra.mxu0 0.0
      %554 = vmatprep.subr.mxu0 0.0
      %555 = vmatpush1.msra.mxu0 0.0
      %556 = vmatprep.subr.mxu0 0.0
      %557 = vmatpush1.msra.mxu0 0.0
      %558 = vmatprep.subr.mxu0 0.0
      %559 = vmatpush1.msra.mxu0 0.0
      %560 = vmatprep.subr.mxu0 0.0
      %561 = vmatpush1.msra.mxu0 0.0
      %562 = vmatprep.subr.mxu0 0.0
      %563 = vmatpush1.msra.mxu0 0.0
      %564 = vmatprep.subr.mxu0 0.0
      %565 = vmatpush1.msra.mxu0 0.0
      %566 = vmatprep.subr.mxu0 0.0
      %567 = vmatpush1.msra.mxu0 0.0
      %568 = vmatprep.subr.mxu0 0.0
      %569 = vmatpush1.msra.mxu0 %v536
      %570 = vmatprep.subr.mxu0 0.0
      %571 = vmatpush2.msra.mxu0 0.0
      %572 = vmatprep.subr.mxu0 0.0
      %573 = vmatpush2.msra.mxu0 0.0
      %574 = vmatprep.subr.mxu0 0.0
      %575 = vmatpush2.msra.mxu0 0.0
      %576 = vmatprep.subr.mxu0 0.0
      %577 = vmatpush2.msra.mxu0 0.0
      %578 = vmatprep.subr.mxu0 0.0
      %579 = vmatpush2.msra.mxu0 0.0
      %580 = vmatprep.subr.mxu0 0.0
      %581 = vmatpush2.msra.mxu0 0.0
      %582 = vmatprep.subr.mxu0 0.0
      %583 = vmatpush2.msra.mxu0 0.0
      %584 = vmatprep.subr.mxu0 0.0
      %585 = vmatpush2.msra.mxu0 0.0
      %586 = vmatprep.subr.mxu0 0.0
      %587 = vmatpush2.msra.mxu0 0.0
      %588 = vmatprep.subr.mxu0 0.0
      %589 = vmatpush2.msra.mxu0 0.0
      %590 = vmatprep.subr.mxu0 0.0
      %591 = vmatpush2.msra.mxu0 0.0
      %592 = vmatprep.subr.mxu0 0.0
      %593 = vmatpush2.msra.mxu0 0.0
      %594 = vmatprep.subr.mxu0 0.0
      %595 = vmatpush2.msra.mxu0 0.0
      %596 = vmatprep.subr.mxu0 0.0
      %597 = vmatpush2.msra.mxu0 0.0
      %598 = vmatprep.subr.mxu0 0.0
      %599 = vmatpush2.msra.mxu0 0.0
      %600 = vmatprep.subr.mxu0 0.0
      %601 = vmatpush2.msra.mxu0 0.0
      %602 = vmatprep.mubr.f32.mxu0 0.0
      %603 = vmatmul.mubr.f32.gmra.mxu0 %v532
      %v604 = vpop.f32.mrf.mxu0
      %v605 = vadd.f32 %v508, %v604
      %v606 = vpop.f32.mrf.mxu0
      %607 = vdwg.mxu0
      %v608 = vmax.f32 %v605, 0.0
      %v609 = vld [vmem:[%s3] sm:$0xff]
      %v610 = vld [vmem:[%s3 + $0x8] sm:$0xff]
      %v611 = vld [vmem:[%s3 + $0x10] sm:$0xff]
      %v612 = vld [vmem:[%s3 + $0x18] sm:$0xff]
      %v613 = vld [vmem:[%s4] sm:$0x1]
      %v615 = vlaneseq
      %v616 = vshrl.u32 %v615, 7
      %v617 = vsub.s32 0, %v616
      %v618 = vrot.slane %v613, %v617
      %vm620 = vcmask 261120
      %v622 = vsel %vm620, %v608, 0
      %624 = vmatprep.subr.mxu0 0.0
      %625 = vmatpush1.msra.mxu0 0.0
      %626 = vmatprep.subr.mxu0 0.0
      %627 = vmatpush1.msra.mxu0 0.0
      %628 = vmatprep.subr.mxu0 0.0
      %629 = vmatpush1.msra.mxu0 0.0
      %630 = vmatprep.subr.mxu0 0.0
      %631 = vmatpush1.msra.mxu0 0.0
      %632 = vmatprep.subr.mxu0 0.0
      %633 = vmatpush1.msra.mxu0 0.0
      %634 = vmatprep.subr.mxu0 0.0
      %635 = vmatpush1.msra.mxu0 0.0
      %636 = vmatprep.subr.mxu0 0.0
      %637 = vmatpush1.msra.mxu0 0.0
      %638 = vmatprep.subr.mxu0 0.0
      %639 = vmatpush1.msra.mxu0 0.0
      %640 = vmatprep.subr.mxu0 0.0
      %641 = vmatpush1.msra.mxu0 0.0
      %642 = vmatprep.subr.mxu0 0.0
      %643 = vmatpush1.msra.mxu0 0.0
      %644 = vmatprep.subr.mxu0 0.0
      %645 = vmatpush1.msra.mxu0 0.0
      %646 = vmatprep.subr.mxu0 0.0
      %647 = vmatpush1.msra.mxu0 0.0
      %648 = vmatprep.subr.mxu0 0.0
      %649 = vmatpush1.msra.mxu0 %v612
      %650 = vmatprep.subr.mxu0 0.0
      %651 = vmatpush1.msra.mxu0 %v611
      %652 = vmatprep.subr.mxu0 0.0
      %653 = vmatpush1.msra.mxu0 %v610
      %654 = vmatprep.subr.mxu0 0.0
      %655 = vmatpush1.msra.mxu0 %v609
      %656 = vmatprep.subr.mxu0 0.0
      %657 = vmatpush2.msra.mxu0 0.0
      %658 = vmatprep.subr.mxu0 0.0
      %659 = vmatpush2.msra.mxu0 0.0
      %660 = vmatprep.subr.mxu0 0.0
      %661 = vmatpush2.msra.mxu0 0.0
      %662 = vmatprep.subr.mxu0 0.0
      %663 = vmatpush2.msra.mxu0 0.0
      %664 = vmatprep.subr.mxu0 0.0
      %665 = vmatpush2.msra.mxu0 0.0
      %666 = vmatprep.subr.mxu0 0.0
      %667 = vmatpush2.msra.mxu0 0.0
      %668 = vmatprep.subr.mxu0 0.0
      %669 = vmatpush2.msra.mxu0 0.0
      %670 = vmatprep.subr.mxu0 0.0
      %671 = vmatpush2.msra.mxu0 0.0
      %672 = vmatprep.subr.mxu0 0.0
      %673 = vmatpush2.msra.mxu0 0.0
      %674 = vmatprep.subr.mxu0 0.0
      %675 = vmatpush2.msra.mxu0 0.0
      %676 = vmatprep.subr.mxu0 0.0
      %677 = vmatpush2.msra.mxu0 0.0
      %678 = vmatprep.subr.mxu0 0.0
      %679 = vmatpush2.msra.mxu0 0.0
      %680 = vmatprep.subr.mxu0 0.0
      %681 = vmatpush2.msra.mxu0 0.0
      %682 = vmatprep.subr.mxu0 0.0
      %683 = vmatpush2.msra.mxu0 0.0
      %684 = vmatprep.subr.mxu0 0.0
      %685 = vmatpush2.msra.mxu0 0.0
      %686 = vmatprep.subr.mxu0 0.0
      %687 = vmatpush2.msra.mxu0 0.0
      %688 = vmatprep.mubr.f32.mxu0 0.0
      %689 = vmatmul.mubr.f32.gmra.mxu0 %v622
      %v690 = vpop.f32.mrf.mxu0
      %v691 = vadd.f32 %v618, %v690
      %v692 = vpop.f32.mrf.mxu0
      %693 = vdwg.mxu0
      %v695 = vcombine.high %v691, %v691
      %v697 = vunpack.c.l.s4 1983009808
      %v698 = vunpack.c.0.s8 %v697
      %v699 = vlaneseq
      %v700 = vshrl.u32 %v699, 7
      %v701 = vsub.s32 %v698, %v700
      %v702 = vrot.slane %v691, %v701
      %v704 = vunpack.c.l.s4 1983009808
      %v705 = vunpack.c.0.s8 %v704
      %v706 = vlaneseq
      %v707 = vshrl.u32 %v706, 7
      %v708 = vsub.s32 %v705, %v707
      %v709 = vrot.slane %v695, %v708
      %v710 = vcombine.high %v702, %v702
      %v711 = vcombine.high %v709, %v709
      %v712 = vld [vmem:[%s5] sm:$0xff]
      %v713 = vld [vmem:[%s5 + $0x8] sm:$0xff]
      %v714 = vld [vmem:[%s5 + $0x10] sm:$0xff]
      %v715 = vld [vmem:[%s5 + $0x18] sm:$0xff]
      %v717 = vunpack.c.l.s4 1983009808
      %v718 = vunpack.c.0.s8 %v717
      %v719 = vlaneseq
      %v720 = vshrl.u32 %v719, 7
      %v721 = vsub.s32 %v718, %v720
      %v722 = vrot.slane %v702, %v721
      %723 = vrot.lane.b32.xlu0 %v722, 96
      %v724 = vpop.permute.xlu0 %723
      %vm725 = vcmask 64512
      %v726 = vsel %vm725, %v702, 0
      %v728 = vsel %vm725, %v724, 0
      %730 = vmatprep.subr.mxu0 0.0
      %731 = vmatpush1.xpose.msra.mxu0 0.0
      %732 = vmatprep.subr.mxu0 0.0
      %733 = vmatpush1.xpose.msra.mxu0 0.0
      %734 = vmatprep.subr.mxu0 0.0
      %735 = vmatpush1.xpose.msra.mxu0 0.0
      %736 = vmatprep.subr.mxu0 0.0
      %737 = vmatpush1.xpose.msra.mxu0 0.0
      %738 = vmatprep.subr.mxu0 0.0
      %739 = vmatpush1.xpose.msra.mxu0 0.0
      %740 = vmatprep.subr.mxu0 0.0
      %741 = vmatpush1.xpose.msra.mxu0 0.0
      %742 = vmatprep.subr.mxu0 0.0
      %743 = vmatpush1.xpose.msra.mxu0 0.0
      %744 = vmatprep.subr.mxu0 0.0
      %745 = vmatpush1.xpose.msra.mxu0 0.0
      %746 = vmatprep.subr.mxu0 0.0
      %747 = vmatpush1.xpose.msra.mxu0 0.0
      %748 = vmatprep.subr.mxu0 0.0
      %749 = vmatpush1.xpose.msra.mxu0 0.0
      %750 = vmatprep.subr.mxu0 0.0
      %751 = vmatpush1.xpose.msra.mxu0 0.0
      %752 = vmatprep.subr.mxu0 0.0
      %753 = vmatpush1.xpose.msra.mxu0 0.0
      %754 = vmatprep.subr.mxu0 0.0
      %755 = vmatpush1.xpose.msra.mxu0 0.0
      %756 = vmatprep.subr.mxu0 0.0
      %757 = vmatpush1.xpose.msra.mxu0 0.0
      %758 = vmatprep.subr.mxu0 0.0
      %759 = vmatpush1.xpose.msra.mxu0 0.0
      %760 = vmatprep.subr.mxu0 0.0
      %761 = vmatpush1.xpose.msra.mxu0 %v728
      %762 = vmatprep.subr.mxu0 0.0
      %763 = vmatpush2.xpose.msra.mxu0 0.0
      %764 = vmatprep.subr.mxu0 0.0
      %765 = vmatpush2.xpose.msra.mxu0 0.0
      %766 = vmatprep.subr.mxu0 0.0
      %767 = vmatpush2.xpose.msra.mxu0 0.0
      %768 = vmatprep.subr.mxu0 0.0
      %769 = vmatpush2.xpose.msra.mxu0 0.0
      %770 = vmatprep.subr.mxu0 0.0
      %771 = vmatpush2.xpose.msra.mxu0 0.0
      %772 = vmatprep.subr.mxu0 0.0
      %773 = vmatpush2.xpose.msra.mxu0 0.0
      %774 = vmatprep.subr.mxu0 0.0
      %775 = vmatpush2.xpose.msra.mxu0 0.0
      %776 = vmatprep.subr.mxu0 0.0
      %777 = vmatpush2.xpose.msra.mxu0 0.0
      %778 = vmatprep.subr.mxu0 0.0
      %779 = vmatpush2.xpose.msra.mxu0 0.0
      %780 = vmatprep.subr.mxu0 0.0
      %781 = vmatpush2.xpose.msra.mxu0 0.0
      %782 = vmatprep.subr.mxu0 0.0
      %783 = vmatpush2.xpose.msra.mxu0 0.0
      %784 = vmatprep.subr.mxu0 0.0
      %785 = vmatpush2.xpose.msra.mxu0 0.0
      %786 = vmatprep.subr.mxu0 0.0
      %787 = vmatpush2.xpose.msra.mxu0 0.0
      %788 = vmatprep.subr.mxu0 0.0
      %789 = vmatpush2.xpose.msra.mxu0 0.0
      %790 = vmatprep.subr.mxu0 0.0
      %791 = vmatpush2.xpose.msra.mxu0 0.0
      %792 = vmatprep.subr.mxu0 0.0
      %793 = vmatpush2.xpose.msra.mxu0 0.0
      %794 = vmatprep.mubr.f32.mxu0 0.0
      %795 = vmatmul.mubr.f32.gmra.mxu0 %v726
      %v796 = vpop.f32.mrf.mxu0
      %v797 = vadd.f32 0.0, %v796
      %v798 = vpop.f32.mrf.mxu0
      %799 = vdwg.mxu0
      %v801 = vunpack.c.l.s4 1983009808
      %v802 = vunpack.c.0.s8 %v801
      %v803 = vlaneseq
      %v804 = vshrl.u32 %v803, 7
      %v805 = vsub.s32 %v802, %v804
      %v806 = vrot.slane %v710, %v805
      %807 = vrot.lane.b32.xlu0 %v806, 96
      %v808 = vpop.permute.xlu0 %807
      %v809 = vsel %vm725, %v710, 0
      %v811 = vsel %vm725, %v808, 0
      %813 = vmatprep.subr.mxu0 0.0
      %814 = vmatpush1.xpose.msra.mxu0 0.0
      %815 = vmatprep.subr.mxu0 0.0
      %816 = vmatpush1.xpose.msra.mxu0 0.0
      %817 = vmatprep.subr.mxu0 0.0
      %818 = vmatpush1.xpose.msra.mxu0 0.0
      %819 = vmatprep.subr.mxu0 0.0
      %820 = vmatpush1.xpose.msra.mxu0 0.0
      %821 = vmatprep.subr.mxu0 0.0
      %822 = vmatpush1.xpose.msra.mxu0 0.0
      %823 = vmatprep.subr.mxu0 0.0
      %824 = vmatpush1.xpose.msra.mxu0 0.0
      %825 = vmatprep.subr.mxu0 0.0
      %826 = vmatpush1.xpose.msra.mxu0 0.0
      %827 = vmatprep.subr.mxu0 0.0
      %828 = vmatpush1.xpose.msra.mxu0 0.0
      %829 = vmatprep.subr.mxu0 0.0
      %830 = vmatpush1.xpose.msra.mxu0 0.0
      %831 = vmatprep.subr.mxu0 0.0
      %832 = vmatpush1.xpose.msra.mxu0 0.0
      %833 = vmatprep.subr.mxu0 0.0
      %834 = vmatpush1.xpose.msra.mxu0 0.0
      %835 = vmatprep.subr.mxu0 0.0
      %836 = vmatpush1.xpose.msra.mxu0 0.0
      %837 = vmatprep.subr.mxu0 0.0
      %838 = vmatpush1.xpose.msra.mxu0 0.0
      %839 = vmatprep.subr.mxu0 0.0
      %840 = vmatpush1.xpose.msra.mxu0 0.0
      %841 = vmatprep.subr.mxu0 0.0
      %842 = vmatpush1.xpose.msra.mxu0 0.0
      %843 = vmatprep.subr.mxu0 0.0
      %844 = vmatpush1.xpose.msra.mxu0 %v811
      %845 = vmatprep.subr.mxu0 0.0
      %846 = vmatpush2.xpose.msra.mxu0 0.0
      %847 = vmatprep.subr.mxu0 0.0
      %848 = vmatpush2.xpose.msra.mxu0 0.0
      %849 = vmatprep.subr.mxu0 0.0
      %850 = vmatpush2.xpose.msra.mxu0 0.0
      %851 = vmatprep.subr.mxu0 0.0
      %852 = vmatpush2.xpose.msra.mxu0 0.0
      %853 = vmatprep.subr.mxu0 0.0
      %854 = vmatpush2.xpose.msra.mxu0 0.0
      %855 = vmatprep.subr.mxu0 0.0
      %856 = vmatpush2.xpose.msra.mxu0 0.0
      %857 = vmatprep.subr.mxu0 0.0
      %858 = vmatpush2.xpose.msra.mxu0 0.0
      %859 = vmatprep.subr.mxu0 0.0
      %860 = vmatpush2.xpose.msra.mxu0 0.0
      %861 = vmatprep.subr.mxu0 0.0
      %862 = vmatpush2.xpose.msra.mxu0 0.0
      %863 = vmatprep.subr.mxu0 0.0
      %864 = vmatpush2.xpose.msra.mxu0 0.0
      %865 = vmatprep.subr.mxu0 0.0
      %866 = vmatpush2.xpose.msra.mxu0 0.0
      %867 = vmatprep.subr.mxu0 0.0
      %868 = vmatpush2.xpose.msra.mxu0 0.0
      %869 = vmatprep.subr.mxu0 0.0
      %870 = vmatpush2.xpose.msra.mxu0 0.0
      %871 = vmatprep.subr.mxu0 0.0
      %872 = vmatpush2.xpose.msra.mxu0 0.0
      %873 = vmatprep.subr.mxu0 0.0
      %874 = vmatpush2.xpose.msra.mxu0 0.0
      %875 = vmatprep.subr.mxu0 0.0
      %876 = vmatpush2.xpose.msra.mxu0 0.0
      %877 = vmatprep.mubr.f32.mxu0 0.0
      %878 = vmatmul.mubr.f32.gmra.mxu0 %v809
      %v879 = vpop.f32.mrf.mxu0
      %v880 = vadd.f32 0.0, %v879
      %v881 = vpop.f32.mrf.mxu0
      %882 = vdwg.mxu0
      %v884 = vunpack.c.l.s4 1983009808
      %v885 = vunpack.c.0.s8 %v884
      %v886 = vlaneseq
      %v887 = vshrl.u32 %v886, 7
      %v888 = vsub.s32 %v885, %v887
      %v889 = vrot.slane %v709, %v888
      %890 = vrot.lane.b32.xlu0 %v889, 96
      %v891 = vpop.permute.xlu0 %890
      %v892 = vsel %vm725, %v709, 0
      %v894 = vsel %vm725, %v891, 0
      %896 = vmatprep.subr.mxu0 0.0
      %897 = vmatpush1.xpose.msra.mxu0 0.0
      %898 = vmatprep.subr.mxu0 0.0
      %899 = vmatpush1.xpose.msra.mxu0 0.0
      %900 = vmatprep.subr.mxu0 0.0
      %901 = vmatpush1.xpose.msra.mxu0 0.0
      %902 = vmatprep.subr.mxu0 0.0
      %903 = vmatpush1.xpose.msra.mxu0 0.0
      %904 = vmatprep.subr.mxu0 0.0
      %905 = vmatpush1.xpose.msra.mxu0 0.0
      %906 = vmatprep.subr.mxu0 0.0
      %907 = vmatpush1.xpose.msra.mxu0 0.0
      %908 = vmatprep.subr.mxu0 0.0
      %909 = vmatpush1.xpose.msra.mxu0 0.0
      %910 = vmatprep.subr.mxu0 0.0
      %911 = vmatpush1.xpose.msra.mxu0 0.0
      %912 = vmatprep.subr.mxu0 0.0
      %913 = vmatpush1.xpose.msra.mxu0 0.0
      %914 = vmatprep.subr.mxu0 0.0
      %915 = vmatpush1.xpose.msra.mxu0 0.0
      %916 = vmatprep.subr.mxu0 0.0
      %917 = vmatpush1.xpose.msra.mxu0 0.0
      %918 = vmatprep.subr.mxu0 0.0
      %919 = vmatpush1.xpose.msra.mxu0 0.0
      %920 = vmatprep.subr.mxu0 0.0
      %921 = vmatpush1.xpose.msra.mxu0 0.0
      %922 = vmatprep.subr.mxu0 0.0
      %923 = vmatpush1.xpose.msra.mxu0 0.0
      %924 = vmatprep.subr.mxu0 0.0
      %925 = vmatpush1.xpose.msra.mxu0 0.0
      %926 = vmatprep.subr.mxu0 0.0
      %927 = vmatpush1.xpose.msra.mxu0 %v894
      %928 = vmatprep.subr.mxu0 0.0
      %929 = vmatpush2.xpose.msra.mxu0 0.0
      %930 = vmatprep.subr.mxu0 0.0
      %931 = vmatpush2.xpose.msra.mxu0 0.0
      %932 = vmatprep.subr.mxu0 0.0
      %933 = vmatpush2.xpose.msra.mxu0 0.0
      %934 = vmatprep.subr.mxu0 0.0
      %935 = vmatpush2.xpose.msra.mxu0 0.0
      %936 = vmatprep.subr.mxu0 0.0
      %937 = vmatpush2.xpose.msra.mxu0 0.0
      %938 = vmatprep.subr.mxu0 0.0
      %939 = vmatpush2.xpose.msra.mxu0 0.0
      %940 = vmatprep.subr.mxu0 0.0
      %941 = vmatpush2.xpose.msra.mxu0 0.0
      %942 = vmatprep.subr.mxu0 0.0
      %943 = vmatpush2.xpose.msra.mxu0 0.0
      %944 = vmatprep.subr.mxu0 0.0
      %945 = vmatpush2.xpose.msra.mxu0 0.0
      %946 = vmatprep.subr.mxu0 0.0
      %947 = vmatpush2.xpose.msra.mxu0 0.0
      %948 = vmatprep.subr.mxu0 0.0
      %949 = vmatpush2.xpose.msra.mxu0 0.0
      %950 = vmatprep.subr.mxu0 0.0
      %951 = vmatpush2.xpose.msra.mxu0 0.0
      %952 = vmatprep.subr.mxu0 0.0
      %953 = vmatpush2.xpose.msra.mxu0 0.0
      %954 = vmatprep.subr.mxu0 0.0
      %955 = vmatpush2.xpose.msra.mxu0 0.0
      %956 = vmatprep.subr.mxu0 0.0
      %957 = vmatpush2.xpose.msra.mxu0 0.0
      %958 = vmatprep.subr.mxu0 0.0
      %959 = vmatpush2.xpose.msra.mxu0 0.0
      %960 = vmatprep.mubr.f32.mxu0 0.0
      %961 = vmatmul.mubr.f32.gmra.mxu0 %v892
      %v962 = vpop.f32.mrf.mxu0
      %v963 = vadd.f32 0.0, %v962
      %v964 = vpop.f32.mrf.mxu0
      %965 = vdwg.mxu0
      %v967 = vunpack.c.l.s4 1983009808
      %v968 = vunpack.c.0.s8 %v967
      %v969 = vlaneseq
      %v970 = vshrl.u32 %v969, 7
      %v971 = vsub.s32 %v968, %v970
      %v972 = vrot.slane %v711, %v971
      %973 = vrot.lane.b32.xlu0 %v972, 96
      %v974 = vpop.permute.xlu0 %973
      %v975 = vsel %vm725, %v711, 0
      %v977 = vsel %vm725, %v974, 0
      %979 = vmatprep.subr.mxu0 0.0
      %980 = vmatpush1.xpose.msra.mxu0 0.0
      %981 = vmatprep.subr.mxu0 0.0
      %982 = vmatpush1.xpose.msra.mxu0 0.0
      %983 = vmatprep.subr.mxu0 0.0
      %984 = vmatpush1.xpose.msra.mxu0 0.0
      %985 = vmatprep.subr.mxu0 0.0
      %986 = vmatpush1.xpose.msra.mxu0 0.0
      %987 = vmatprep.subr.mxu0 0.0
      %988 = vmatpush1.xpose.msra.mxu0 0.0
      %989 = vmatprep.subr.mxu0 0.0
      %990 = vmatpush1.xpose.msra.mxu0 0.0
      %991 = vmatprep.subr.mxu0 0.0
      %992 = vmatpush1.xpose.msra.mxu0 0.0
      %993 = vmatprep.subr.mxu0 0.0
      %994 = vmatpush1.xpose.msra.mxu0 0.0
      %995 = vmatprep.subr.mxu0 0.0
      %996 = vmatpush1.xpose.msra.mxu0 0.0
      %997 = vmatprep.subr.mxu0 0.0
      %998 = vmatpush1.xpose.msra.mxu0 0.0
      %999 = vmatprep.subr.mxu0 0.0
      %1000 = vmatpush1.xpose.msra.mxu0 0.0
      %1001 = vmatprep.subr.mxu0 0.0
      %1002 = vmatpush1.xpose.msra.mxu0 0.0
      %1003 = vmatprep.subr.mxu0 0.0
      %1004 = vmatpush1.xpose.msra.mxu0 0.0
      %1005 = vmatprep.subr.mxu0 0.0
      %1006 = vmatpush1.xpose.msra.mxu0 0.0
      %1007 = vmatprep.subr.mxu0 0.0
      %1008 = vmatpush1.xpose.msra.mxu0 0.0
      %1009 = vmatprep.subr.mxu0 0.0
      %1010 = vmatpush1.xpose.msra.mxu0 %v977
      %1011 = vmatprep.subr.mxu0 0.0
      %1012 = vmatpush2.xpose.msra.mxu0 0.0
      %1013 = vmatprep.subr.mxu0 0.0
      %1014 = vmatpush2.xpose.msra.mxu0 0.0
      %1015 = vmatprep.subr.mxu0 0.0
      %1016 = vmatpush2.xpose.msra.mxu0 0.0
      %1017 = vmatprep.subr.mxu0 0.0
      %1018 = vmatpush2.xpose.msra.mxu0 0.0
      %1019 = vmatprep.subr.mxu0 0.0
      %1020 = vmatpush2.xpose.msra.mxu0 0.0
      %1021 = vmatprep.subr.mxu0 0.0
      %1022 = vmatpush2.xpose.msra.mxu0 0.0
      %1023 = vmatprep.subr.mxu0 0.0
      %1024 = vmatpush2.xpose.msra.mxu0 0.0
      %1025 = vmatprep.subr.mxu0 0.0
      %1026 = vmatpush2.xpose.msra.mxu0 0.0
      %1027 = vmatprep.subr.mxu0 0.0
      %1028 = vmatpush2.xpose.msra.mxu0 0.0
      %1029 = vmatprep.subr.mxu0 0.0
      %1030 = vmatpush2.xpose.msra.mxu0 0.0
      %1031 = vmatprep.subr.mxu0 0.0
      %1032 = vmatpush2.xpose.msra.mxu0 0.0
      %1033 = vmatprep.subr.mxu0 0.0
      %1034 = vmatpush2.xpose.msra.mxu0 0.0
      %1035 = vmatprep.subr.mxu0 0.0
      %1036 = vmatpush2.xpose.msra.mxu0 0.0
      %1037 = vmatprep.subr.mxu0 0.0
      %1038 = vmatpush2.xpose.msra.mxu0 0.0
      %1039 = vmatprep.subr.mxu0 0.0
      %1040 = vmatpush2.xpose.msra.mxu0 0.0
      %1041 = vmatprep.subr.mxu0 0.0
      %1042 = vmatpush2.xpose.msra.mxu0 0.0
      %1043 = vmatprep.mubr.f32.mxu0 0.0
      %1044 = vmatmul.mubr.f32.gmra.mxu0 %v975
      %v1045 = vpop.f32.mrf.mxu0
      %v1046 = vadd.f32 0.0, %v1045
      %v1047 = vpop.f32.mrf.mxu0
      %1048 = vdwg.mxu0
      %v1049 = vmul.f32 %v797, 0.35355338
      %v1050 = vmul.f32 %v880, 0.35355338
      %v1051 = vmul.f32 %v963, 0.35355338
      %v1052 = vmul.f32 %v1046, 0.35355338
      %vm1053 = vcmask 9216
      %v1054 = vsel %vm1053, %v1049, -inf
      %1055 = vmax.xlane.f32.xlu0 %v1054
      %v1056 = vpop.xlane.xlu0 %1055
      %v1057 = vsel %vm1053, %v1050, -inf
      %1058 = vmax.xlane.f32.xlu0 %v1057
      %v1059 = vpop.xlane.xlu0 %1058
      %v1060 = vsel %vm1053, %v1051, -inf
      %1061 = vmax.xlane.f32.xlu0 %v1060
      %v1062 = vpop.xlane.xlu0 %1061
      %v1063 = vsel %vm1053, %v1052, -inf
      %1064 = vmax.xlane.f32.xlu0 %v1063
      %v1065 = vpop.xlane.xlu0 %1064
      %v1066 = vsub.f32 %v1049, %v1056
      %v1067 = vsub.f32 %v1050, %v1059
      %v1068 = vsub.f32 %v1051, %v1062
      %v1069 = vsub.f32 %v1052, %v1065
      %v1070 = vmul.f32 %v1066, 1.442695
      %v1071 = vpow.pop %v1070
      %v1072 = vmul.f32 %v1067, 1.442695
      %v1073 = vpow.pop %v1072
      %v1074 = vmul.f32 %v1068, 1.442695
      %v1075 = vpow.pop %v1074
      %v1076 = vmul.f32 %v1069, 1.442695
      %v1077 = vpow.pop %v1076
      %v1078 = vsel %vm1053, %v1071, 0.0
      %1079 = vadd.xlane.f32.xlu0 %v1078
      %v1080 = vpop.xlane.xlu0 %1079
      %v1081 = vsel %vm1053, %v1073, 0.0
      %1082 = vadd.xlane.f32.xlu0 %v1081
      %v1083 = vpop.xlane.xlu0 %1082
      %v1084 = vsel %vm1053, %v1075, 0.0
      %1085 = vadd.xlane.f32.xlu0 %v1084
      %v1086 = vpop.xlane.xlu0 %1085
      %v1087 = vsel %vm1053, %v1077, 0.0
      %1088 = vadd.xlane.f32.xlu0 %v1087
      %v1089 = vpop.xlane.xlu0 %1088
      %v1090 = vrcp.pop %v1080
      %v1091 = vmul.f32 %v1071, %v1090
      %v1092 = vrcp.pop %v1083
      %v1093 = vmul.f32 %v1073, %v1092
      %v1094 = vrcp.pop %v1086
      %v1095 = vmul.f32 %v1075, %v1094
      %v1096 = vrcp.pop %v1089
      %v1097 = vmul.f32 %v1077, %v1096
      %1098 = vrot.lane.b32.xlu0 %v722, 64
      %v1099 = vpop.permute.xlu0 %1098
      %vm1100 = vcmask 15360
      %v1102 = vsel %vm1100, %v1091, 0
      %vm1104 = vcmask 1041408
      %v1105 = vsel %vm1104, %v1099, 0
      %1107 = vmatprep.subr.mxu0 0.0
      %1108 = vmatpush1.msra.mxu0 0.0
      %1109 = vmatprep.subr.mxu0 0.0
      %1110 = vmatpush1.msra.mxu0 0.0
      %1111 = vmatprep.subr.mxu0 0.0
      %1112 = vmatpush1.msra.mxu0 0.0
      %1113 = vmatprep.subr.mxu0 0.0
      %1114 = vmatpush1.msra.mxu0 0.0
      %1115 = vmatprep.subr.mxu0 0.0
      %1116 = vmatpush1.msra.mxu0 0.0
      %1117 = vmatprep.subr.mxu0 0.0
      %1118 = vmatpush1.msra.mxu0 0.0
      %1119 = vmatprep.subr.mxu0 0.0
      %1120 = vmatpush1.msra.mxu0 0.0
      %1121 = vmatprep.subr.mxu0 0.0
      %1122 = vmatpush1.msra.mxu0 0.0
      %1123 = vmatprep.subr.mxu0 0.0
      %1124 = vmatpush1.msra.mxu0 0.0
      %1125 = vmatprep.subr.mxu0 0.0
      %1126 = vmatpush1.msra.mxu0 0.0
      %1127 = vmatprep.subr.mxu0 0.0
      %1128 = vmatpush1.msra.mxu0 0.0
      %1129 = vmatprep.subr.mxu0 0.0
      %1130 = vmatpush1.msra.mxu0 0.0
      %1131 = vmatprep.subr.mxu0 0.0
      %1132 = vmatpush1.msra.mxu0 0.0
      %1133 = vmatprep.subr.mxu0 0.0
      %1134 = vmatpush1.msra.mxu0 0.0
      %1135 = vmatprep.subr.mxu0 0.0
      %1136 = vmatpush1.msra.mxu0 0.0
      %1137 = vmatprep.subr.mxu0 0.0
      %1138 = vmatpush1.msra.mxu0 %v1105
      %1139 = vmatprep.subr.mxu0 0.0
      %1140 = vmatpush2.msra.mxu0 0.0
      %1141 = vmatprep.subr.mxu0 0.0
      %1142 = vmatpush2.msra.mxu0 0.0
      %1143 = vmatprep.subr.mxu0 0.0
      %1144 = vmatpush2.msra.mxu0 0.0
      %1145 = vmatprep.subr.mxu0 0.0
      %1146 = vmatpush2.msra.mxu0 0.0
      %1147 = vmatprep.subr.mxu0 0.0
      %1148 = vmatpush2.msra.mxu0 0.0
      %1149 = vmatprep.subr.mxu0 0.0
      %1150 = vmatpush2.msra.mxu0 0.0
      %1151 = vmatprep.subr.mxu0 0.0
      %1152 = vmatpush2.msra.mxu0 0.0
      %1153 = vmatprep.subr.mxu0 0.0
      %1154 = vmatpush2.msra.mxu0 0.0
      %1155 = vmatprep.subr.mxu0 0.0
      %1156 = vmatpush2.msra.mxu0 0.0
      %1157 = vmatprep.subr.mxu0 0.0
      %1158 = vmatpush2.msra.mxu0 0.0
      %1159 = vmatprep.subr.mxu0 0.0
      %1160 = vmatpush2.msra.mxu0 0.0
      %1161 = vmatprep.subr.mxu0 0.0
      %1162 = vmatpush2.msra.mxu0 0.0
      %1163 = vmatprep.subr.mxu0 0.0
      %1164 = vmatpush2.msra.mxu0 0.0
      %1165 = vmatprep.subr.mxu0 0.0
      %1166 = vmatpush2.msra.mxu0 0.0
      %1167 = vmatprep.subr.mxu0 0.0
      %1168 = vmatpush2.msra.mxu0 0.0
      %1169 = vmatprep.subr.mxu0 0.0
      %1170 = vmatpush2.msra.mxu0 0.0
      %1171 = vmatprep.mubr.f32.mxu0 0.0
      %1172 = vmatmul.mubr.f32.gmra.mxu0 %v1102
      %v1173 = vpop.f32.mrf.mxu0
      %v1174 = vadd.f32 0.0, %v1173
      %v1175 = vpop.f32.mrf.mxu0
      %1176 = vdwg.mxu0
      %1177 = vrot.lane.b32.xlu0 %v806, 64
      %v1178 = vpop.permute.xlu0 %1177
      %v1180 = vsel %vm1100, %v1093, 0
      %v1182 = vsel %vm1104, %v1178, 0
      %1184 = vmatprep.subr.mxu0 0.0
      %1185 = vmatpush1.msra.mxu0 0.0
      %1186 = vmatprep.subr.mxu0 0.0
      %1187 = vmatpush1.msra.mxu0 0.0
      %1188 = vmatprep.subr.mxu0 0.0
      %1189 = vmatpush1.msra.mxu0 0.0
      %1190 = vmatprep.subr.mxu0 0.0
      %1191 = vmatpush1.msra.mxu0 0.0
      %1192 = vmatprep.subr.mxu0 0.0
      %1193 = vmatpush1.msra.mxu0 0.0
      %1194 = vmatprep.subr.mxu0 0.0
      %1195 = vmatpush1.msra.mxu0 0.0
      %1196 = vmatprep.subr.mxu0 0.0
      %1197 = vmatpush1.msra.mxu0 0.0
      %1198 = vmatprep.subr.mxu0 0.0
      %1199 = vmatpush1.msra.mxu0 0.0
      %1200 = vmatprep.subr.mxu0 0.0
      %1201 = vmatpush1.msra.mxu0 0.0
      %1202 = vmatprep.subr.mxu0 0.0
      %1203 = vmatpush1.msra.mxu0 0.0
      %1204 = vmatprep.subr.mxu0 0.0
      %1205 = vmatpush1.msra.mxu0 0.0
      %1206 = vmatprep.subr.mxu0 0.0
      %1207 = vmatpush1.msra.mxu0 0.0
      %1208 = vmatprep.subr.mxu0 0.0
      %1209 = vmatpush1.msra.mxu0 0.0
      %1210 = vmatprep.subr.mxu0 0.0
      %1211 = vmatpush1.msra.mxu0 0.0
      %1212 = vmatprep.subr.mxu0 0.0
      %1213 = vmatpush1.msra.mxu0 0.0
      %1214 = vmatprep.subr.mxu0 0.0
      %1215 = vmatpush1.msra.mxu0 %v1182
      %1216 = vmatprep.subr.mxu0 0.0
      %1217 = vmatpush2.msra.mxu0 0.0
      %1218 = vmatprep.subr.mxu0 0.0
      %1219 = vmatpush2.msra.mxu0 0.0
      %1220 = vmatprep.subr.mxu0 0.0
      %1221 = vmatpush2.msra.mxu0 0.0
      %1222 = vmatprep.subr.mxu0 0.0
      %1223 = vmatpush2.msra.mxu0 0.0
      %1224 = vmatprep.subr.mxu0 0.0
      %1225 = vmatpush2.msra.mxu0 0.0
      %1226 = vmatprep.subr.mxu0 0.0
      %1227 = vmatpush2.msra.mxu0 0.0
      %1228 = vmatprep.subr.mxu0 0.0
      %1229 = vmatpush2.msra.mxu0 0.0
      %1230 = vmatprep.subr.mxu0 0.0
      %1231 = vmatpush2.msra.mxu0 0.0
      %1232 = vmatprep.subr.mxu0 0.0
      %1233 = vmatpush2.msra.mxu0 0.0
      %1234 = vmatprep.subr.mxu0 0.0
      %1235 = vmatpush2.msra.mxu0 0.0
      %1236 = vmatprep.subr.mxu0 0.0
      %1237 = vmatpush2.msra.mxu0 0.0
      %1238 = vmatprep.subr.mxu0 0.0
      %1239 = vmatpush2.msra.mxu0 0.0
      %1240 = vmatprep.subr.mxu0 0.0
      %1241 = vmatpush2.msra.mxu0 0.0
      %1242 = vmatprep.subr.mxu0 0.0
      %1243 = vmatpush2.msra.mxu0 0.0
      %1244 = vmatprep.subr.mxu0 0.0
      %1245 = vmatpush2.msra.mxu0 0.0
      %1246 = vmatprep.subr.mxu0 0.0
      %1247 = vmatpush2.msra.mxu0 0.0
      %1248 = vmatprep.mubr.f32.mxu0 0.0
      %1249 = vmatmul.mubr.f32.gmra.mxu0 %v1180
      %v1250 = vpop.f32.mrf.mxu0
      %v1251 = vadd.f32 0.0, %v1250
      %v1252 = vpop.f32.mrf.mxu0
      %1253 = vdwg.mxu0
      %1254 = vrot.lane.b32.xlu0 %v889, 64
      %v1255 = vpop.permute.xlu0 %1254
      %v1257 = vsel %vm1100, %v1095, 0
      %v1259 = vsel %vm1104, %v1255, 0
      %1261 = vmatprep.subr.mxu0 0.0
      %1262 = vmatpush1.msra.mxu0 0.0
      %1263 = vmatprep.subr.mxu0 0.0
      %1264 = vmatpush1.msra.mxu0 0.0
      %1265 = vmatprep.subr.mxu0 0.0
      %1266 = vmatpush1.msra.mxu0 0.0
      %1267 = vmatprep.subr.mxu0 0.0
      %1268 = vmatpush1.msra.mxu0 0.0
      %1269 = vmatprep.subr.mxu0 0.0
      %1270 = vmatpush1.msra.mxu0 0.0
      %1271 = vmatprep.subr.mxu0 0.0
      %1272 = vmatpush1.msra.mxu0 0.0
      %1273 = vmatprep.subr.mxu0 0.0
      %1274 = vmatpush1.msra.mxu0 0.0
      %1275 = vmatprep.subr.mxu0 0.0
      %1276 = vmatpush1.msra.mxu0 0.0
      %1277 = vmatprep.subr.mxu0 0.0
      %1278 = vmatpush1.msra.mxu0 0.0
      %1279 = vmatprep.subr.mxu0 0.0
      %1280 = vmatpush1.msra.mxu0 0.0
      %1281 = vmatprep.subr.mxu0 0.0
      %1282 = vmatpush1.msra.mxu0 0.0
      %1283 = vmatprep.subr.mxu0 0.0
      %1284 = vmatpush1.msra.mxu0 0.0
      %1285 = vmatprep.subr.mxu0 0.0
      %1286 = vmatpush1.msra.mxu0 0.0
      %1287 = vmatprep.subr.mxu0 0.0
      %1288 = vmatpush1.msra.mxu0 0.0
      %1289 = vmatprep.subr.mxu0 0.0
      %1290 = vmatpush1.msra.mxu0 0.0
      %1291 = vmatprep.subr.mxu0 0.0
      %1292 = vmatpush1.msra.mxu0 %v1259
      %1293 = vmatprep.subr.mxu0 0.0
      %1294 = vmatpush2.msra.mxu0 0.0
      %1295 = vmatprep.subr.mxu0 0.0
      %1296 = vmatpush2.msra.mxu0 0.0
      %1297 = vmatprep.subr.mxu0 0.0
      %1298 = vmatpush2.msra.mxu0 0.0
      %1299 = vmatprep.subr.mxu0 0.0
      %1300 = vmatpush2.msra.mxu0 0.0
      %1301 = vmatprep.subr.mxu0 0.0
      %1302 = vmatpush2.msra.mxu0 0.0
      %1303 = vmatprep.subr.mxu0 0.0
      %1304 = vmatpush2.msra.mxu0 0.0
      %1305 = vmatprep.subr.mxu0 0.0
      %1306 = vmatpush2.msra.mxu0 0.0
      %1307 = vmatprep.subr.mxu0 0.0
      %1308 = vmatpush2.msra.mxu0 0.0
      %1309 = vmatprep.subr.mxu0 0.0
      %1310 = vmatpush2.msra.mxu0 0.0
      %1311 = vmatprep.subr.mxu0 0.0
      %1312 = vmatpush2.msra.mxu0 0.0
      %1313 = vmatprep.subr.mxu0 0.0
      %1314 = vmatpush2.msra.mxu0 0.0
      %1315 = vmatprep.subr.mxu0 0.0
      %1316 = vmatpush2.msra.mxu0 0.0
      %1317 = vmatprep.subr.mxu0 0.0
      %1318 = vmatpush2.msra.mxu0 0.0
      %1319 = vmatprep.subr.mxu0 0.0
      %1320 = vmatpush2.msra.mxu0 0.0
      %1321 = vmatprep.subr.mxu0 0.0
      %1322 = vmatpush2.msra.mxu0 0.0
      %1323 = vmatprep.subr.mxu0 0.0
      %1324 = vmatpush2.msra.mxu0 0.0
      %1325 = vmatprep.mubr.f32.mxu0 0.0
      %1326 = vmatmul.mubr.f32.gmra.mxu0 %v1257
      %v1327 = vpop.f32.mrf.mxu0
      %v1328 = vadd.f32 0.0, %v1327
      %v1329 = vpop.f32.mrf.mxu0
      %1330 = vdwg.mxu0
      %1331 = vrot.lane.b32.xlu0 %v972, 64
      %v1332 = vpop.permute.xlu0 %1331
      %v1334 = vsel %vm1100, %v1097, 0
      %v1336 = vsel %vm1104, %v1332, 0
      %1338 = vmatprep.subr.mxu0 0.0
      %1339 = vmatpush1.msra.mxu0 0.0
      %1340 = vmatprep.subr.mxu0 0.0
      %1341 = vmatpush1.msra.mxu0 0.0
      %1342 = vmatprep.subr.mxu0 0.0
      %1343 = vmatpush1.msra.mxu0 0.0
      %1344 = vmatprep.subr.mxu0 0.0
      %1345 = vmatpush1.msra.mxu0 0.0
      %1346 = vmatprep.subr.mxu0 0.0
      %1347 = vmatpush1.msra.mxu0 0.0
      %1348 = vmatprep.subr.mxu0 0.0
      %1349 = vmatpush1.msra.mxu0 0.0
      %1350 = vmatprep.subr.mxu0 0.0
      %1351 = vmatpush1.msra.mxu0 0.0
      %1352 = vmatprep.subr.mxu0 0.0
      %1353 = vmatpush1.msra.mxu0 0.0
      %1354 = vmatprep.subr.mxu0 0.0
      %1355 = vmatpush1.msra.mxu0 0.0
      %1356 = vmatprep.subr.mxu0 0.0
      %1357 = vmatpush1.msra.mxu0 0.0
      %1358 = vmatprep.subr.mxu0 0.0
      %1359 = vmatpush1.msra.mxu0 0.0
      %1360 = vmatprep.subr.mxu0 0.0
      %1361 = vmatpush1.msra.mxu0 0.0
      %1362 = vmatprep.subr.mxu0 0.0
      %1363 = vmatpush1.msra.mxu0 0.0
      %1364 = vmatprep.subr.mxu0 0.0
      %1365 = vmatpush1.msra.mxu0 0.0
      %1366 = vmatprep.subr.mxu0 0.0
      %1367 = vmatpush1.msra.mxu0 0.0
      %1368 = vmatprep.subr.mxu0 0.0
      %1369 = vmatpush1.msra.mxu0 %v1336
      %1370 = vmatprep.subr.mxu0 0.0
      %1371 = vmatpush2.msra.mxu0 0.0
      %1372 = vmatprep.subr.mxu0 0.0
      %1373 = vmatpush2.msra.mxu0 0.0
      %1374 = vmatprep.subr.mxu0 0.0
      %1375 = vmatpush2.msra.mxu0 0.0
      %1376 = vmatprep.subr.mxu0 0.0
      %1377 = vmatpush2.msra.mxu0 0.0
      %1378 = vmatprep.subr.mxu0 0.0
      %1379 = vmatpush2.msra.mxu0 0.0
      %1380 = vmatprep.subr.mxu0 0.0
      %1381 = vmatpush2.msra.mxu0 0.0
      %1382 = vmatprep.subr.mxu0 0.0
      %1383 = vmatpush2.msra.mxu0 0.0
      %1384 = vmatprep.subr.mxu0 0.0
      %1385 = vmatpush2.msra.mxu0 0.0
      %1386 = vmatprep.subr.mxu0 0.0
      %1387 = vmatpush2.msra.mxu0 0.0
      %1388 = vmatprep.subr.mxu0 0.0
      %1389 = vmatpush2.msra.mxu0 0.0
      %1390 = vmatprep.subr.mxu0 0.0
      %1391 = vmatpush2.msra.mxu0 0.0
      %1392 = vmatprep.subr.mxu0 0.0
      %1393 = vmatpush2.msra.mxu0 0.0
      %1394 = vmatprep.subr.mxu0 0.0
      %1395 = vmatpush2.msra.mxu0 0.0
      %1396 = vmatprep.subr.mxu0 0.0
      %1397 = vmatpush2.msra.mxu0 0.0
      %1398 = vmatprep.subr.mxu0 0.0
      %1399 = vmatpush2.msra.mxu0 0.0
      %1400 = vmatprep.subr.mxu0 0.0
      %1401 = vmatpush2.msra.mxu0 0.0
      %1402 = vmatprep.mubr.f32.mxu0 0.0
      %1403 = vmatmul.mubr.f32.gmra.mxu0 %v1334
      %v1404 = vpop.f32.mrf.mxu0
      %v1405 = vadd.f32 0.0, %v1404
      %v1406 = vpop.f32.mrf.mxu0
      %1407 = vdwg.mxu0
      %1408 = vrot.lane.b32.xlu0 %v722, 120
      %v1409 = vpop.permute.xlu0 %1408
      %1410 = vrot.lane.b32.xlu0 %v722, 88
      %v1411 = vpop.permute.xlu0 %1410
      %v1412 = vsel %vm725, %v1409, 0
      %v1414 = vsel %vm725, %v1411, 0
      %1416 = vmatprep.subr.mxu0 0.0
      %1417 = vmatpush1.xpose.msra.mxu0 0.0
      %1418 = vmatprep.subr.mxu0 0.0
      %1419 = vmatpush1.xpose.msra.mxu0 0.0
      %1420 = vmatprep.subr.mxu0 0.0
      %1421 = vmatpush1.xpose.msra.mxu0 0.0
      %1422 = vmatprep.subr.mxu0 0.0
      %1423 = vmatpush1.xpose.msra.mxu0 0.0
      %1424 = vmatprep.subr.mxu0 0.0
      %1425 = vmatpush1.xpose.msra.mxu0 0.0
      %1426 = vmatprep.subr.mxu0 0.0
      %1427 = vmatpush1.xpose.msra.mxu0 0.0
      %1428 = vmatprep.subr.mxu0 0.0
      %1429 = vmatpush1.xpose.msra.mxu0 0.0
      %1430 = vmatprep.subr.mxu0 0.0
      %1431 = vmatpush1.xpose.msra.mxu0 0.0
      %1432 = vmatprep.subr.mxu0 0.0
      %1433 = vmatpush1.xpose.msra.mxu0 0.0
      %1434 = vmatprep.subr.mxu0 0.0
      %1435 = vmatpush1.xpose.msra.mxu0 0.0
      %1436 = vmatprep.subr.mxu0 0.0
      %1437 = vmatpush1.xpose.msra.mxu0 0.0
      %1438 = vmatprep.subr.mxu0 0.0
      %1439 = vmatpush1.xpose.msra.mxu0 0.0
      %1440 = vmatprep.subr.mxu0 0.0
      %1441 = vmatpush1.xpose.msra.mxu0 0.0
      %1442 = vmatprep.subr.mxu0 0.0
      %1443 = vmatpush1.xpose.msra.mxu0 0.0
      %1444 = vmatprep.subr.mxu0 0.0
      %1445 = vmatpush1.xpose.msra.mxu0 0.0
      %1446 = vmatprep.subr.mxu0 0.0
      %1447 = vmatpush1.xpose.msra.mxu0 %v1414
      %1448 = vmatprep.subr.mxu0 0.0
      %1449 = vmatpush2.xpose.msra.mxu0 0.0
      %1450 = vmatprep.subr.mxu0 0.0
      %1451 = vmatpush2.xpose.msra.mxu0 0.0
      %1452 = vmatprep.subr.mxu0 0.0
      %1453 = vmatpush2.xpose.msra.mxu0 0.0
      %1454 = vmatprep.subr.mxu0 0.0
      %1455 = vmatpush2.xpose.msra.mxu0 0.0
      %1456 = vmatprep.subr.mxu0 0.0
      %1457 = vmatpush2.xpose.msra.mxu0 0.0
      %1458 = vmatprep.subr.mxu0 0.0
      %1459 = vmatpush2.xpose.msra.mxu0 0.0
      %1460 = vmatprep.subr.mxu0 0.0
      %1461 = vmatpush2.xpose.msra.mxu0 0.0
      %1462 = vmatprep.subr.mxu0 0.0
      %1463 = vmatpush2.xpose.msra.mxu0 0.0
      %1464 = vmatprep.subr.mxu0 0.0
      %1465 = vmatpush2.xpose.msra.mxu0 0.0
      %1466 = vmatprep.subr.mxu0 0.0
      %1467 = vmatpush2.xpose.msra.mxu0 0.0
      %1468 = vmatprep.subr.mxu0 0.0
      %1469 = vmatpush2.xpose.msra.mxu0 0.0
      %1470 = vmatprep.subr.mxu0 0.0
      %1471 = vmatpush2.xpose.msra.mxu0 0.0
      %1472 = vmatprep.subr.mxu0 0.0
      %1473 = vmatpush2.xpose.msra.mxu0 0.0
      %1474 = vmatprep.subr.mxu0 0.0
      %1475 = vmatpush2.xpose.msra.mxu0 0.0
      %1476 = vmatprep.subr.mxu0 0.0
      %1477 = vmatpush2.xpose.msra.mxu0 0.0
      %1478 = vmatprep.subr.mxu0 0.0
      %1479 = vmatpush2.xpose.msra.mxu0 0.0
      %1480 = vmatprep.mubr.f32.mxu0 0.0
      %1481 = vmatmul.mubr.f32.gmra.mxu0 %v1412
      %v1482 = vpop.f32.mrf.mxu0
      %v1483 = vadd.f32 0.0, %v1482
      %v1484 = vpop.f32.mrf.mxu0
      %1485 = vdwg.mxu0
      %1486 = vrot.lane.b32.xlu0 %v806, 120
      %v1487 = vpop.permute.xlu0 %1486
      %1488 = vrot.lane.b32.xlu0 %v806, 88
      %v1489 = vpop.permute.xlu0 %1488
      %v1490 = vsel %vm725, %v1487, 0
      %v1492 = vsel %vm725, %v1489, 0
      %1494 = vmatprep.subr.mxu0 0.0
      %1495 = vmatpush1.xpose.msra.mxu0 0.0
      %1496 = vmatprep.subr.mxu0 0.0
      %1497 = vmatpush1.xpose.msra.mxu0 0.0
      %1498 = vmatprep.subr.mxu0 0.0
      %1499 = vmatpush1.xpose.msra.mxu0 0.0
      %1500 = vmatprep.subr.mxu0 0.0
      %1501 = vmatpush1.xpose.msra.mxu0 0.0
      %1502 = vmatprep.subr.mxu0 0.0
      %1503 = vmatpush1.xpose.msra.mxu0 0.0
      %1504 = vmatprep.subr.mxu0 0.0
      %1505 = vmatpush1.xpose.msra.mxu0 0.0
      %1506 = vmatprep.subr.mxu0 0.0
      %1507 = vmatpush1.xpose.msra.mxu0 0.0
      %1508 = vmatprep.subr.mxu0 0.0
      %1509 = vmatpush1.xpose.msra.mxu0 0.0
      %1510 = vmatprep.subr.mxu0 0.0
      %1511 = vmatpush1.xpose.msra.mxu0 0.0
      %1512 = vmatprep.subr.mxu0 0.0
      %1513 = vmatpush1.xpose.msra.mxu0 0.0
      %1514 = vmatprep.subr.mxu0 0.0
      %1515 = vmatpush1.xpose.msra.mxu0 0.0
      %1516 = vmatprep.subr.mxu0 0.0
      %1517 = vmatpush1.xpose.msra.mxu0 0.0
      %1518 = vmatprep.subr.mxu0 0.0
      %1519 = vmatpush1.xpose.msra.mxu0 0.0
      %1520 = vmatprep.subr.mxu0 0.0
      %1521 = vmatpush1.xpose.msra.mxu0 0.0
      %1522 = vmatprep.subr.mxu0 0.0
      %1523 = vmatpush1.xpose.msra.mxu0 0.0
      %1524 = vmatprep.subr.mxu0 0.0
      %1525 = vmatpush1.xpose.msra.mxu0 %v1492
      %1526 = vmatprep.subr.mxu0 0.0
      %1527 = vmatpush2.xpose.msra.mxu0 0.0
      %1528 = vmatprep.subr.mxu0 0.0
      %1529 = vmatpush2.xpose.msra.mxu0 0.0
      %1530 = vmatprep.subr.mxu0 0.0
      %1531 = vmatpush2.xpose.msra.mxu0 0.0
      %1532 = vmatprep.subr.mxu0 0.0
      %1533 = vmatpush2.xpose.msra.mxu0 0.0
      %1534 = vmatprep.subr.mxu0 0.0
      %1535 = vmatpush2.xpose.msra.mxu0 0.0
      %1536 = vmatprep.subr.mxu0 0.0
      %1537 = vmatpush2.xpose.msra.mxu0 0.0
      %1538 = vmatprep.subr.mxu0 0.0
      %1539 = vmatpush2.xpose.msra.mxu0 0.0
      %1540 = vmatprep.subr.mxu0 0.0
      %1541 = vmatpush2.xpose.msra.mxu0 0.0
      %1542 = vmatprep.subr.mxu0 0.0
      %1543 = vmatpush2.xpose.msra.mxu0 0.0
      %1544 = vmatprep.subr.mxu0 0.0
      %1545 = vmatpush2.xpose.msra.mxu0 0.0
      %1546 = vmatprep.subr.mxu0 0.0
      %1547 = vmatpush2.xpose.msra.mxu0 0.0
      %1548 = vmatprep.subr.mxu0 0.0
      %1549 = vmatpush2.xpose.msra.mxu0 0.0
      %1550 = vmatprep.subr.mxu0 0.0
      %1551 = vmatpush2.xpose.msra.mxu0 0.0
      %1552 = vmatprep.subr.mxu0 0.0
      %1553 = vmatpush2.xpose.msra.mxu0 0.0
      %1554 = vmatprep.subr.mxu0 0.0
      %1555 = vmatpush2.xpose.msra.mxu0 0.0
      %1556 = vmatprep.subr.mxu0 0.0
      %1557 = vmatpush2.xpose.msra.mxu0 0.0
      %1558 = vmatprep.mubr.f32.mxu0 0.0
      %1559 = vmatmul.mubr.f32.gmra.mxu0 %v1490
      %v1560 = vpop.f32.mrf.mxu0
      %v1561 = vadd.f32 0.0, %v1560
      %v1562 = vpop.f32.mrf.mxu0
      %1563 = vdwg.mxu0
      %1564 = vrot.lane.b32.xlu0 %v889, 120
      %v1565 = vpop.permute.xlu0 %1564
      %1566 = vrot.lane.b32.xlu0 %v889, 88
      %v1567 = vpop.permute.xlu0 %1566
      %v1568 = vsel %vm725, %v1565, 0
      %v1570 = vsel %vm725, %v1567, 0
      %1572 = vmatprep.subr.mxu0 0.0
      %1573 = vmatpush1.xpose.msra.mxu0 0.0
      %1574 = vmatprep.subr.mxu0 0.0
      %1575 = vmatpush1.xpose.msra.mxu0 0.0
      %1576 = vmatprep.subr.mxu0 0.0
      %1577 = vmatpush1.xpose.msra.mxu0 0.0
      %1578 = vmatprep.subr.mxu0 0.0
      %1579 = vmatpush1.xpose.msra.mxu0 0.0
      %1580 = vmatprep.subr.mxu0 0.0
      %1581 = vmatpush1.xpose.msra.mxu0 0.0
      %1582 = vmatprep.subr.mxu0 0.0
      %1583 = vmatpush1.xpose.msra.mxu0 0.0
      %1584 = vmatprep.subr.mxu0 0.0
      %1585 = vmatpush1.xpose.msra.mxu0 0.0
      %1586 = vmatprep.subr.mxu0 0.0
      %1587 = vmatpush1.xpose.msra.mxu0 0.0
      %1588 = vmatprep.subr.mxu0 0.0
      %1589 = vmatpush1.xpose.msra.mxu0 0.0
      %1590 = vmatprep.subr.mxu0 0.0
      %1591 = vmatpush1.xpose.msra.mxu0 0.0
      %1592 = vmatprep.subr.mxu0 0.0
      %1593 = vmatpush1.xpose.msra.mxu0 0.0
      %1594 = vmatprep.subr.mxu0 0.0
      %1595 = vmatpush1.xpose.msra.mxu0 0.0
      %1596 = vmatprep.subr.mxu0 0.0
      %1597 = vmatpush1.xpose.msra.mxu0 0.0
      %1598 = vmatprep.subr.mxu0 0.0
      %1599 = vmatpush1.xpose.msra.mxu0 0.0
      %1600 = vmatprep.subr.mxu0 0.0
      %1601 = vmatpush1.xpose.msra.mxu0 0.0
      %1602 = vmatprep.subr.mxu0 0.0
      %1603 = vmatpush1.xpose.msra.mxu0 %v1570
      %1604 = vmatprep.subr.mxu0 0.0
      %1605 = vmatpush2.xpose.msra.mxu0 0.0
      %1606 = vmatprep.subr.mxu0 0.0
      %1607 = vmatpush2.xpose.msra.mxu0 0.0
      %1608 = vmatprep.subr.mxu0 0.0
      %1609 = vmatpush2.xpose.msra.mxu0 0.0
      %1610 = vmatprep.subr.mxu0 0.0
      %1611 = vmatpush2.xpose.msra.mxu0 0.0
      %1612 = vmatprep.subr.mxu0 0.0
      %1613 = vmatpush2.xpose.msra.mxu0 0.0
      %1614 = vmatprep.subr.mxu0 0.0
      %1615 = vmatpush2.xpose.msra.mxu0 0.0
      %1616 = vmatprep.subr.mxu0 0.0
      %1617 = vmatpush2.xpose.msra.mxu0 0.0
      %1618 = vmatprep.subr.mxu0 0.0
      %1619 = vmatpush2.xpose.msra.mxu0 0.0
      %1620 = vmatprep.subr.mxu0 0.0
      %1621 = vmatpush2.xpose.msra.mxu0 0.0
      %1622 = vmatprep.subr.mxu0 0.0
      %1623 = vmatpush2.xpose.msra.mxu0 0.0
      %1624 = vmatprep.subr.mxu0 0.0
      %1625 = vmatpush2.xpose.msra.mxu0 0.0
      %1626 = vmatprep.subr.mxu0 0.0
      %1627 = vmatpush2.xpose.msra.mxu0 0.0
      %1628 = vmatprep.subr.mxu0 0.0
      %1629 = vmatpush2.xpose.msra.mxu0 0.0
      %1630 = vmatprep.subr.mxu0 0.0
      %1631 = vmatpush2.xpose.msra.mxu0 0.0
      %1632 = vmatprep.subr.mxu0 0.0
      %1633 = vmatpush2.xpose.msra.mxu0 0.0
      %1634 = vmatprep.subr.mxu0 0.0
      %1635 = vmatpush2.xpose.msra.mxu0 0.0
      %1636 = vmatprep.mubr.f32.mxu0 0.0
      %1637 = vmatmul.mubr.f32.gmra.mxu0 %v1568
      %v1638 = vpop.f32.mrf.mxu0
      %v1639 = vadd.f32 0.0, %v1638
      %v1640 = vpop.f32.mrf.mxu0
      %1641 = vdwg.mxu0
      %1642 = vrot.lane.b32.xlu0 %v972, 120
      %v1643 = vpop.permute.xlu0 %1642
      %1644 = vrot.lane.b32.xlu0 %v972, 88
      %v1645 = vpop.permute.xlu0 %1644
      %v1646 = vsel %vm725, %v1643, 0
      %v1648 = vsel %vm725, %v1645, 0
      %1650 = vmatprep.subr.mxu0 0.0
      %1651 = vmatpush1.xpose.msra.mxu0 0.0
      %1652 = vmatprep.subr.mxu0 0.0
      %1653 = vmatpush1.xpose.msra.mxu0 0.0
      %1654 = vmatprep.subr.mxu0 0.0
      %1655 = vmatpush1.xpose.msra.mxu0 0.0
      %1656 = vmatprep.subr.mxu0 0.0
      %1657 = vmatpush1.xpose.msra.mxu0 0.0
      %1658 = vmatprep.subr.mxu0 0.0
      %1659 = vmatpush1.xpose.msra.mxu0 0.0
      %1660 = vmatprep.subr.mxu0 0.0
      %1661 = vmatpush1.xpose.msra.mxu0 0.0
      %1662 = vmatprep.subr.mxu0 0.0
      %1663 = vmatpush1.xpose.msra.mxu0 0.0
      %1664 = vmatprep.subr.mxu0 0.0
      %1665 = vmatpush1.xpose.msra.mxu0 0.0
      %1666 = vmatprep.subr.mxu0 0.0
      %1667 = vmatpush1.xpose.msra.mxu0 0.0
      %1668 = vmatprep.subr.mxu0 0.0
      %1669 = vmatpush1.xpose.msra.mxu0 0.0
      %1670 = vmatprep.subr.mxu0 0.0
      %1671 = vmatpush1.xpose.msra.mxu0 0.0
      %1672 = vmatprep.subr.mxu0 0.0
      %1673 = vmatpush1.xpose.msra.mxu0 0.0
      %1674 = vmatprep.subr.mxu0 0.0
      %1675 = vmatpush1.xpose.msra.mxu0 0.0
      %1676 = vmatprep.subr.mxu0 0.0
      %1677 = vmatpush1.xpose.msra.mxu0 0.0
      %1678 = vmatprep.subr.mxu0 0.0
      %1679 = vmatpush1.xpose.msra.mxu0 0.0
      %1680 = vmatprep.subr.mxu0 0.0
      %1681 = vmatpush1.xpose.msra.mxu0 %v1648
      %1682 = vmatprep.subr.mxu0 0.0
      %1683 = vmatpush2.xpose.msra.mxu0 0.0
      %1684 = vmatprep.subr.mxu0 0.0
      %1685 = vmatpush2.xpose.msra.mxu0 0.0
      %1686 = vmatprep.subr.mxu0 0.0
      %1687 = vmatpush2.xpose.msra.mxu0 0.0
      %1688 = vmatprep.subr.mxu0 0.0
      %1689 = vmatpush2.xpose.msra.mxu0 0.0
      %1690 = vmatprep.subr.mxu0 0.0
      %1691 = vmatpush2.xpose.msra.mxu0 0.0
      %1692 = vmatprep.subr.mxu0 0.0
      %1693 = vmatpush2.xpose.msra.mxu0 0.0
      %1694 = vmatprep.subr.mxu0 0.0
      %1695 = vmatpush2.xpose.msra.mxu0 0.0
      %1696 = vmatprep.subr.mxu0 0.0
      %1697 = vmatpush2.xpose.msra.mxu0 0.0
      %1698 = vmatprep.subr.mxu0 0.0
      %1699 = vmatpush2.xpose.msra.mxu0 0.0
      %1700 = vmatprep.subr.mxu0 0.0
      %1701 = vmatpush2.xpose.msra.mxu0 0.0
      %1702 = vmatprep.subr.mxu0 0.0
      %1703 = vmatpush2.xpose.msra.mxu0 0.0
      %1704 = vmatprep.subr.mxu0 0.0
      %1705 = vmatpush2.xpose.msra.mxu0 0.0
      %1706 = vmatprep.subr.mxu0 0.0
      %1707 = vmatpush2.xpose.msra.mxu0 0.0
      %1708 = vmatprep.subr.mxu0 0.0
      %1709 = vmatpush2.xpose.msra.mxu0 0.0
      %1710 = vmatprep.subr.mxu0 0.0
      %1711 = vmatpush2.xpose.msra.mxu0 0.0
      %1712 = vmatprep.subr.mxu0 0.0
      %1713 = vmatpush2.xpose.msra.mxu0 0.0
      %1714 = vmatprep.mubr.f32.mxu0 0.0
      %1715 = vmatmul.mubr.f32.gmra.mxu0 %v1646
      %v1716 = vpop.f32.mrf.mxu0
      %v1717 = vadd.f32 0.0, %v1716
      %v1718 = vpop.f32.mrf.mxu0
      %1719 = vdwg.mxu0
      %v1720 = vmul.f32 %v1483, 0.35355338
      %v1721 = vmul.f32 %v1561, 0.35355338
      %v1722 = vmul.f32 %v1639, 0.35355338
      %v1723 = vmul.f32 %v1717, 0.35355338
      %v1724 = vsel %vm1053, %v1720, -inf
      %1725 = vmax.xlane.f32.xlu0 %v1724
      %v1726 = vpop.xlane.xlu0 %1725
      %v1727 = vsel %vm1053, %v1721, -inf
      %1728 = vmax.xlane.f32.xlu0 %v1727
      %v1729 = vpop.xlane.xlu0 %1728
      %v1730 = vsel %vm1053, %v1722, -inf
      %1731 = vmax.xlane.f32.xlu0 %v1730
      %v1732 = vpop.xlane.xlu0 %1731
      %v1733 = vsel %vm1053, %v1723, -inf
      %1734 = vmax.xlane.f32.xlu0 %v1733
      %v1735 = vpop.xlane.xlu0 %1734
      %v1736 = vsub.f32 %v1720, %v1726
      %v1737 = vsub.f32 %v1721, %v1729
      %v1738 = vsub.f32 %v1722, %v1732
      %v1739 = vsub.f32 %v1723, %v1735
      %v1740 = vmul.f32 %v1736, 1.442695
      %v1741 = vpow.pop %v1740
      %v1742 = vmul.f32 %v1737, 1.442695
      %v1743 = vpow.pop %v1742
      %v1744 = vmul.f32 %v1738, 1.442695
      %v1745 = vpow.pop %v1744
      %v1746 = vmul.f32 %v1739, 1.442695
      %v1747 = vpow.pop %v1746
      %v1748 = vsel %vm1053, %v1741, 0.0
      %1749 = vadd.xlane.f32.xlu0 %v1748
      %v1750 = vpop.xlane.xlu0 %1749
      %v1751 = vsel %vm1053, %v1743, 0.0
      %1752 = vadd.xlane.f32.xlu0 %v1751
      %v1753 = vpop.xlane.xlu0 %1752
      %v1754 = vsel %vm1053, %v1745, 0.0
      %1755 = vadd.xlane.f32.xlu0 %v1754
      %v1756 = vpop.xlane.xlu0 %1755
      %v1757 = vsel %vm1053, %v1747, 0.0
      %1758 = vadd.xlane.f32.xlu0 %v1757
      %v1759 = vpop.xlane.xlu0 %1758
      %v1760 = vrcp.pop %v1750
      %v1761 = vmul.f32 %v1741, %v1760
      %v1762 = vrcp.pop %v1753
      %v1763 = vmul.f32 %v1743, %v1762
      %v1764 = vrcp.pop %v1756
      %v1765 = vmul.f32 %v1745, %v1764
      %v1766 = vrcp.pop %v1759
      %v1767 = vmul.f32 %v1747, %v1766
      %1768 = vrot.lane.b32.xlu0 %v722, 56
      %v1769 = vpop.permute.xlu0 %1768
      %v1771 = vsel %vm1100, %v1761, 0
      %v1773 = vsel %vm1104, %v1769, 0
      %1775 = vmatprep.subr.mxu0 0.0
      %1776 = vmatpush1.msra.mxu0 0.0
      %1777 = vmatprep.subr.mxu0 0.0
      %1778 = vmatpush1.msra.mxu0 0.0
      %1779 = vmatprep.subr.mxu0 0.0
      %1780 = vmatpush1.msra.mxu0 0.0
      %1781 = vmatprep.subr.mxu0 0.0
      %1782 = vmatpush1.msra.mxu0 0.0
      %1783 = vmatprep.subr.mxu0 0.0
      %1784 = vmatpush1.msra.mxu0 0.0
      %1785 = vmatprep.subr.mxu0 0.0
      %1786 = vmatpush1.msra.mxu0 0.0
      %1787 = vmatprep.subr.mxu0 0.0
      %1788 = vmatpush1.msra.mxu0 0.0
      %1789 = vmatprep.subr.mxu0 0.0
      %1790 = vmatpush1.msra.mxu0 0.0
      %1791 = vmatprep.subr.mxu0 0.0
      %1792 = vmatpush1.msra.mxu0 0.0
      %1793 = vmatprep.subr.mxu0 0.0
      %1794 = vmatpush1.msra.mxu0 0.0
      %1795 = vmatprep.subr.mxu0 0.0
      %1796 = vmatpush1.msra.mxu0 0.0
      %1797 = vmatprep.subr.mxu0 0.0
      %1798 = vmatpush1.msra.mxu0 0.0
      %1799 = vmatprep.subr.mxu0 0.0
      %1800 = vmatpush1.msra.mxu0 0.0
      %1801 = vmatprep.subr.mxu0 0.0
      %1802 = vmatpush1.msra.mxu0 0.0
      %1803 = vmatprep.subr.mxu0 0.0
      %1804 = vmatpush1.msra.mxu0 0.0
      %1805 = vmatprep.subr.mxu0 0.0
      %1806 = vmatpush1.msra.mxu0 %v1773
      %1807 = vmatprep.subr.mxu0 0.0
      %1808 = vmatpush2.msra.mxu0 0.0
      %1809 = vmatprep.subr.mxu0 0.0
      %1810 = vmatpush2.msra.mxu0 0.0
      %1811 = vmatprep.subr.mxu0 0.0
      %1812 = vmatpush2.msra.mxu0 0.0
      %1813 = vmatprep.subr.mxu0 0.0
      %1814 = vmatpush2.msra.mxu0 0.0
      %1815 = vmatprep.subr.mxu0 0.0
      %1816 = vmatpush2.msra.mxu0 0.0
      %1817 = vmatprep.subr.mxu0 0.0
      %1818 = vmatpush2.msra.mxu0 0.0
      %1819 = vmatprep.subr.mxu0 0.0
      %1820 = vmatpush2.msra.mxu0 0.0
      %1821 = vmatprep.subr.mxu0 0.0
      %1822 = vmatpush2.msra.mxu0 0.0
      %1823 = vmatprep.subr.mxu0 0.0
      %1824 = vmatpush2.msra.mxu0 0.0
      %1825 = vmatprep.subr.mxu0 0.0
      %1826 = vmatpush2.msra.mxu0 0.0
      %1827 = vmatprep.subr.mxu0 0.0
      %1828 = vmatpush2.msra.mxu0 0.0
      %1829 = vmatprep.subr.mxu0 0.0
      %1830 = vmatpush2.msra.mxu0 0.0
      %1831 = vmatprep.subr.mxu0 0.0
      %1832 = vmatpush2.msra.mxu0 0.0
      %1833 = vmatprep.subr.mxu0 0.0
      %1834 = vmatpush2.msra.mxu0 0.0
      %1835 = vmatprep.subr.mxu0 0.0
      %1836 = vmatpush2.msra.mxu0 0.0
      %1837 = vmatprep.subr.mxu0 0.0
      %1838 = vmatpush2.msra.mxu0 0.0
      %1839 = vmatprep.mubr.f32.mxu0 0.0
      %1840 = vmatmul.mubr.f32.gmra.mxu0 %v1771
      %v1841 = vpop.f32.mrf.mxu0
      %v1842 = vadd.f32 0.0, %v1841
      %v1843 = vpop.f32.mrf.mxu0
      %1844 = vdwg.mxu0
      %1845 = vrot.lane.b32.xlu0 %v806, 56
      %v1846 = vpop.permute.xlu0 %1845
      %v1848 = vsel %vm1100, %v1763, 0
      %v1850 = vsel %vm1104, %v1846, 0
      %1852 = vmatprep.subr.mxu0 0.0
      %1853 = vmatpush1.msra.mxu0 0.0
      %1854 = vmatprep.subr.mxu0 0.0
      %1855 = vmatpush1.msra.mxu0 0.0
      %1856 = vmatprep.subr.mxu0 0.0
      %1857 = vmatpush1.msra.mxu0 0.0
      %1858 = vmatprep.subr.mxu0 0.0
      %1859 = vmatpush1.msra.mxu0 0.0
      %1860 = vmatprep.subr.mxu0 0.0
      %1861 = vmatpush1.msra.mxu0 0.0
      %1862 = vmatprep.subr.mxu0 0.0
      %1863 = vmatpush1.msra.mxu0 0.0
      %1864 = vmatprep.subr.mxu0 0.0
      %1865 = vmatpush1.msra.mxu0 0.0
      %1866 = vmatprep.subr.mxu0 0.0
      %1867 = vmatpush1.msra.mxu0 0.0
      %1868 = vmatprep.subr.mxu0 0.0
      %1869 = vmatpush1.msra.mxu0 0.0
      %1870 = vmatprep.subr.mxu0 0.0
      %1871 = vmatpush1.msra.mxu0 0.0
      %1872 = vmatprep.subr.mxu0 0.0
      %1873 = vmatpush1.msra.mxu0 0.0
      %1874 = vmatprep.subr.mxu0 0.0
      %1875 = vmatpush1.msra.mxu0 0.0
      %1876 = vmatprep.subr.mxu0 0.0
      %1877 = vmatpush1.msra.mxu0 0.0
      %1878 = vmatprep.subr.mxu0 0.0
      %1879 = vmatpush1.msra.mxu0 0.0
      %1880 = vmatprep.subr.mxu0 0.0
      %1881 = vmatpush1.msra.mxu0 0.0
      %1882 = vmatprep.subr.mxu0 0.0
      %1883 = vmatpush1.msra.mxu0 %v1850
      %1884 = vmatprep.subr.mxu0 0.0
      %1885 = vmatpush2.msra.mxu0 0.0
      %1886 = vmatprep.subr.mxu0 0.0
      %1887 = vmatpush2.msra.mxu0 0.0
      %1888 = vmatprep.subr.mxu0 0.0
      %1889 = vmatpush2.msra.mxu0 0.0
      %1890 = vmatprep.subr.mxu0 0.0
      %1891 = vmatpush2.msra.mxu0 0.0
      %1892 = vmatprep.subr.mxu0 0.0
      %1893 = vmatpush2.msra.mxu0 0.0
      %1894 = vmatprep.subr.mxu0 0.0
      %1895 = vmatpush2.msra.mxu0 0.0
      %1896 = vmatprep.subr.mxu0 0.0
      %1897 = vmatpush2.msra.mxu0 0.0
      %1898 = vmatprep.subr.mxu0 0.0
      %1899 = vmatpush2.msra.mxu0 0.0
      %1900 = vmatprep.subr.mxu0 0.0
      %1901 = vmatpush2.msra.mxu0 0.0
      %1902 = vmatprep.subr.mxu0 0.0
      %1903 = vmatpush2.msra.mxu0 0.0
      %1904 = vmatprep.subr.mxu0 0.0
      %1905 = vmatpush2.msra.mxu0 0.0
      %1906 = vmatprep.subr.mxu0 0.0
      %1907 = vmatpush2.msra.mxu0 0.0
      %1908 = vmatprep.subr.mxu0 0.0
      %1909 = vmatpush2.msra.mxu0 0.0
      %1910 = vmatprep.subr.mxu0 0.0
      %1911 = vmatpush2.msra.mxu0 0.0
      %1912 = vmatprep.subr.mxu0 0.0
      %1913 = vmatpush2.msra.mxu0 0.0
      %1914 = vmatprep.subr.mxu0 0.0
      %1915 = vmatpush2.msra.mxu0 0.0
      %1916 = vmatprep.mubr.f32.mxu0 0.0
      %1917 = vmatmul.mubr.f32.gmra.mxu0 %v1848
      %v1918 = vpop.f32.mrf.mxu0
      %v1919 = vadd.f32 0.0, %v1918
      %v1920 = vpop.f32.mrf.mxu0
      %1921 = vdwg.mxu0
      %1922 = vrot.lane.b32.xlu0 %v889, 56
      %v1923 = vpop.permute.xlu0 %1922
      %v1925 = vsel %vm1100, %v1765, 0
      %v1927 = vsel %vm1104, %v1923, 0
      %1929 = vmatprep.subr.mxu0 0.0
      %1930 = vmatpush1.msra.mxu0 0.0
      %1931 = vmatprep.subr.mxu0 0.0
      %1932 = vmatpush1.msra.mxu0 0.0
      %1933 = vmatprep.subr.mxu0 0.0
      %1934 = vmatpush1.msra.mxu0 0.0
      %1935 = vmatprep.subr.mxu0 0.0
      %1936 = vmatpush1.msra.mxu0 0.0
      %1937 = vmatprep.subr.mxu0 0.0
      %1938 = vmatpush1.msra.mxu0 0.0
      %1939 = vmatprep.subr.mxu0 0.0
      %1940 = vmatpush1.msra.mxu0 0.0
      %1941 = vmatprep.subr.mxu0 0.0
      %1942 = vmatpush1.msra.mxu0 0.0
      %1943 = vmatprep.subr.mxu0 0.0
      %1944 = vmatpush1.msra.mxu0 0.0
      %1945 = vmatprep.subr.mxu0 0.0
      %1946 = vmatpush1.msra.mxu0 0.0
      %1947 = vmatprep.subr.mxu0 0.0
      %1948 = vmatpush1.msra.mxu0 0.0
      %1949 = vmatprep.subr.mxu0 0.0
      %1950 = vmatpush1.msra.mxu0 0.0
      %1951 = vmatprep.subr.mxu0 0.0
      %1952 = vmatpush1.msra.mxu0 0.0
      %1953 = vmatprep.subr.mxu0 0.0
      %1954 = vmatpush1.msra.mxu0 0.0
      %1955 = vmatprep.subr.mxu0 0.0
      %1956 = vmatpush1.msra.mxu0 0.0
      %1957 = vmatprep.subr.mxu0 0.0
      %1958 = vmatpush1.msra.mxu0 0.0
      %1959 = vmatprep.subr.mxu0 0.0
      %1960 = vmatpush1.msra.mxu0 %v1927
      %1961 = vmatprep.subr.mxu0 0.0
      %1962 = vmatpush2.msra.mxu0 0.0
      %1963 = vmatprep.subr.mxu0 0.0
      %1964 = vmatpush2.msra.mxu0 0.0
      %1965 = vmatprep.subr.mxu0 0.0
      %1966 = vmatpush2.msra.mxu0 0.0
      %1967 = vmatprep.subr.mxu0 0.0
      %1968 = vmatpush2.msra.mxu0 0.0
      %1969 = vmatprep.subr.mxu0 0.0
      %1970 = vmatpush2.msra.mxu0 0.0
      %1971 = vmatprep.subr.mxu0 0.0
      %1972 = vmatpush2.msra.mxu0 0.0
      %1973 = vmatprep.subr.mxu0 0.0
      %1974 = vmatpush2.msra.mxu0 0.0
      %1975 = vmatprep.subr.mxu0 0.0
      %1976 = vmatpush2.msra.mxu0 0.0
      %1977 = vmatprep.subr.mxu0 0.0
      %1978 = vmatpush2.msra.mxu0 0.0
      %1979 = vmatprep.subr.mxu0 0.0
      %1980 = vmatpush2.msra.mxu0 0.0
      %1981 = vmatprep.subr.mxu0 0.0
      %1982 = vmatpush2.msra.mxu0 0.0
      %1983 = vmatprep.subr.mxu0 0.0
      %1984 = vmatpush2.msra.mxu0 0.0
      %1985 = vmatprep.subr.mxu0 0.0
      %1986 = vmatpush2.msra.mxu0 0.0
      %1987 = vmatprep.subr.mxu0 0.0
      %1988 = vmatpush2.msra.mxu0 0.0
      %1989 = vmatprep.subr.mxu0 0.0
      %1990 = vmatpush2.msra.mxu0 0.0
      %1991 = vmatprep.subr.mxu0 0.0
      %1992 = vmatpush2.msra.mxu0 0.0
      %1993 = vmatprep.mubr.f32.mxu0 0.0
      %1994 = vmatmul.mubr.f32.gmra.mxu0 %v1925
      %v1995 = vpop.f32.mrf.mxu0
      %v1996 = vadd.f32 0.0, %v1995
      %v1997 = vpop.f32.mrf.mxu0
      %1998 = vdwg.mxu0
      %1999 = vrot.lane.b32.xlu0 %v972, 56
      %v2000 = vpop.permute.xlu0 %1999
      %v2002 = vsel %vm1100, %v1767, 0
      %v2004 = vsel %vm1104, %v2000, 0
      %2006 = vmatprep.subr.mxu0 0.0
      %2007 = vmatpush1.msra.mxu0 0.0
      %2008 = vmatprep.subr.mxu0 0.0
      %2009 = vmatpush1.msra.mxu0 0.0
      %2010 = vmatprep.subr.mxu0 0.0
      %2011 = vmatpush1.msra.mxu0 0.0
      %2012 = vmatprep.subr.mxu0 0.0
      %2013 = vmatpush1.msra.mxu0 0.0
      %2014 = vmatprep.subr.mxu0 0.0
      %2015 = vmatpush1.msra.mxu0 0.0
      %2016 = vmatprep.subr.mxu0 0.0
      %2017 = vmatpush1.msra.mxu0 0.0
      %2018 = vmatprep.subr.mxu0 0.0
      %2019 = vmatpush1.msra.mxu0 0.0
      %2020 = vmatprep.subr.mxu0 0.0
      %2021 = vmatpush1.msra.mxu0 0.0
      %2022 = vmatprep.subr.mxu0 0.0
      %2023 = vmatpush1.msra.mxu0 0.0
      %2024 = vmatprep.subr.mxu0 0.0
      %2025 = vmatpush1.msra.mxu0 0.0
      %2026 = vmatprep.subr.mxu0 0.0
      %2027 = vmatpush1.msra.mxu0 0.0
      %2028 = vmatprep.subr.mxu0 0.0
      %2029 = vmatpush1.msra.mxu0 0.0
      %2030 = vmatprep.subr.mxu0 0.0
      %2031 = vmatpush1.msra.mxu0 0.0
      %2032 = vmatprep.subr.mxu0 0.0
      %2033 = vmatpush1.msra.mxu0 0.0
      %2034 = vmatprep.subr.mxu0 0.0
      %2035 = vmatpush1.msra.mxu0 0.0
      %2036 = vmatprep.subr.mxu0 0.0
      %2037 = vmatpush1.msra.mxu0 %v2004
      %2038 = vmatprep.subr.mxu0 0.0
      %2039 = vmatpush2.msra.mxu0 0.0
      %2040 = vmatprep.subr.mxu0 0.0
      %2041 = vmatpush2.msra.mxu0 0.0
      %2042 = vmatprep.subr.mxu0 0.0
      %2043 = vmatpush2.msra.mxu0 0.0
      %2044 = vmatprep.subr.mxu0 0.0
      %2045 = vmatpush2.msra.mxu0 0.0
      %2046 = vmatprep.subr.mxu0 0.0
      %2047 = vmatpush2.msra.mxu0 0.0
      %2048 = vmatprep.subr.mxu0 0.0
      %2049 = vmatpush2.msra.mxu0 0.0
      %2050 = vmatprep.subr.mxu0 0.0
      %2051 = vmatpush2.msra.mxu0 0.0
      %2052 = vmatprep.subr.mxu0 0.0
      %2053 = vmatpush2.msra.mxu0 0.0
      %2054 = vmatprep.subr.mxu0 0.0
      %2055 = vmatpush2.msra.mxu0 0.0
      %2056 = vmatprep.subr.mxu0 0.0
      %2057 = vmatpush2.msra.mxu0 0.0
      %2058 = vmatprep.subr.mxu0 0.0
      %2059 = vmatpush2.msra.mxu0 0.0
      %2060 = vmatprep.subr.mxu0 0.0
      %2061 = vmatpush2.msra.mxu0 0.0
      %2062 = vmatprep.subr.mxu0 0.0
      %2063 = vmatpush2.msra.mxu0 0.0
      %2064 = vmatprep.subr.mxu0 0.0
      %2065 = vmatpush2.msra.mxu0 0.0
      %2066 = vmatprep.subr.mxu0 0.0
      %2067 = vmatpush2.msra.mxu0 0.0
      %2068 = vmatprep.subr.mxu0 0.0
      %2069 = vmatpush2.msra.mxu0 0.0
      %2070 = vmatprep.mubr.f32.mxu0 0.0
      %2071 = vmatmul.mubr.f32.gmra.mxu0 %v2002
      %v2072 = vpop.f32.mrf.mxu0
      %v2073 = vadd.f32 0.0, %v2072
      %v2074 = vpop.f32.mrf.mxu0
      %2075 = vdwg.mxu0
      %v2080 = vcombine.low %v1842, %v1919
      %v2081 = vcombine.low %v1996, %v2073
      %v2083 = vunpack.c.l.s4 1983009808
      %v2084 = vunpack.c.0.s8 %v2083
      %v2085 = vlaneseq
      %v2086 = vshrl.u32 %v2085, 7
      %v2087 = vsub.s32 %v2084, %v2086
      %v2088 = vrot.slane %v2080, %v2087
      %v2090 = vunpack.c.l.s4 1983009808
      %v2091 = vunpack.c.0.s8 %v2090
      %v2092 = vlaneseq
      %v2093 = vshrl.u32 %v2092, 7
      %v2094 = vsub.s32 %v2091, %v2093
      %v2095 = vrot.slane %v2081, %v2094
      %v2096 = vcombine.low %v2088, %v2095
      %v2097 = vsel %vm725, %v2096, 0
      %2099 = vmatprep.subr.mxu0 0.0
      %2100 = vmatpush1.msra.mxu0 0.0
      %2101 = vmatprep.subr.mxu0 0.0
      %2102 = vmatpush1.msra.mxu0 0.0
      %2103 = vmatprep.subr.mxu0 0.0
      %2104 = vmatpush1.msra.mxu0 0.0
      %2105 = vmatprep.subr.mxu0 0.0
      %2106 = vmatpush1.msra.mxu0 0.0
      %2107 = vmatprep.subr.mxu0 0.0
      %2108 = vmatpush1.msra.mxu0 0.0
      %2109 = vmatprep.subr.mxu0 0.0
      %2110 = vmatpush1.msra.mxu0 0.0
      %2111 = vmatprep.subr.mxu0 0.0
      %2112 = vmatpush1.msra.mxu0 0.0
      %2113 = vmatprep.subr.mxu0 0.0
      %2114 = vmatpush1.msra.mxu0 0.0
      %2115 = vmatprep.subr.mxu0 0.0
      %2116 = vmatpush1.msra.mxu0 0.0
      %2117 = vmatprep.subr.mxu0 0.0
      %2118 = vmatpush1.msra.mxu0 0.0
      %2119 = vmatprep.subr.mxu0 0.0
      %2120 = vmatpush1.msra.mxu0 0.0
      %2121 = vmatprep.subr.mxu0 0.0
      %2122 = vmatpush1.msra.mxu0 0.0
      %2123 = vmatprep.subr.mxu0 0.0
      %2124 = vmatpush1.msra.mxu0 0.0
      %2125 = vmatprep.subr.mxu0 0.0
      %2126 = vmatpush1.msra.mxu0 0.0
      %2127 = vmatprep.subr.mxu0 0.0
      %2128 = vmatpush1.msra.mxu0 0.0
      %2129 = vmatprep.subr.mxu0 0.0
      %2130 = vmatpush1.msra.mxu0 %v713
      %2131 = vmatprep.subr.mxu0 0.0
      %2132 = vmatpush2.msra.mxu0 0.0
      %2133 = vmatprep.subr.mxu0 0.0
      %2134 = vmatpush2.msra.mxu0 0.0
      %2135 = vmatprep.subr.mxu0 0.0
      %2136 = vmatpush2.msra.mxu0 0.0
      %2137 = vmatprep.subr.mxu0 0.0
      %2138 = vmatpush2.msra.mxu0 0.0
      %2139 = vmatprep.subr.mxu0 0.0
      %2140 = vmatpush2.msra.mxu0 0.0
      %2141 = vmatprep.subr.mxu0 0.0
      %2142 = vmatpush2.msra.mxu0 0.0
      %2143 = vmatprep.subr.mxu0 0.0
      %2144 = vmatpush2.msra.mxu0 0.0
      %2145 = vmatprep.subr.mxu0 0.0
      %2146 = vmatpush2.msra.mxu0 0.0
      %2147 = vmatprep.subr.mxu0 0.0
      %2148 = vmatpush2.msra.mxu0 0.0
      %2149 = vmatprep.subr.mxu0 0.0
      %2150 = vmatpush2.msra.mxu0 0.0
      %2151 = vmatprep.subr.mxu0 0.0
      %2152 = vmatpush2.msra.mxu0 0.0
      %2153 = vmatprep.subr.mxu0 0.0
      %2154 = vmatpush2.msra.mxu0 0.0
      %2155 = vmatprep.subr.mxu0 0.0
      %2156 = vmatpush2.msra.mxu0 0.0
      %2157 = vmatprep.subr.mxu0 0.0
      %2158 = vmatpush2.msra.mxu0 0.0
      %2159 = vmatprep.subr.mxu0 0.0
      %2160 = vmatpush2.msra.mxu0 0.0
      %2161 = vmatprep.subr.mxu0 0.0
      %2162 = vmatpush2.msra.mxu0 0.0
      %2163 = vmatprep.mubr.f32.mxu0 0.0
      %2164 = vmatmul.mubr.f32.gmra.mxu0 %v2097
      %v2165 = vpop.f32.mrf.mxu0
      %v2166 = vadd.f32 0.0, %v2165
      %v2167 = vpop.f32.mrf.mxu0
      %2168 = vdwg.mxu0
      %v2173 = vcombine.low %v1174, %v1251
      %v2174 = vcombine.low %v1328, %v1405
      %v2176 = vunpack.c.l.s4 1983009808
      %v2177 = vunpack.c.0.s8 %v2176
      %v2178 = vlaneseq
      %v2179 = vshrl.u32 %v2178, 7
      %v2180 = vsub.s32 %v2177, %v2179
      %v2181 = vrot.slane %v2173, %v2180
      %v2183 = vunpack.c.l.s4 1983009808
      %v2184 = vunpack.c.0.s8 %v2183
      %v2185 = vlaneseq
      %v2186 = vshrl.u32 %v2185, 7
      %v2187 = vsub.s32 %v2184, %v2186
      %v2188 = vrot.slane %v2174, %v2187
      %v2189 = vcombine.low %v2181, %v2188
      %v2190 = vsel %vm725, %v2189, 0
      %2192 = vmatprep.subr.mxu0 0.0
      %2193 = vmatpush1.msra.mxu0 0.0
      %2194 = vmatprep.subr.mxu0 0.0
      %2195 = vmatpush1.msra.mxu0 0.0
      %2196 = vmatprep.subr.mxu0 0.0
      %2197 = vmatpush1.msra.mxu0 0.0
      %2198 = vmatprep.subr.mxu0 0.0
      %2199 = vmatpush1.msra.mxu0 0.0
      %2200 = vmatprep.subr.mxu0 0.0
      %2201 = vmatpush1.msra.mxu0 0.0
      %2202 = vmatprep.subr.mxu0 0.0
      %2203 = vmatpush1.msra.mxu0 0.0
      %2204 = vmatprep.subr.mxu0 0.0
      %2205 = vmatpush1.msra.mxu0 0.0
      %2206 = vmatprep.subr.mxu0 0.0
      %2207 = vmatpush1.msra.mxu0 0.0
      %2208 = vmatprep.subr.mxu0 0.0
      %2209 = vmatpush1.msra.mxu0 0.0
      %2210 = vmatprep.subr.mxu0 0.0
      %2211 = vmatpush1.msra.mxu0 0.0
      %2212 = vmatprep.subr.mxu0 0.0
      %2213 = vmatpush1.msra.mxu0 0.0
      %2214 = vmatprep.subr.mxu0 0.0
      %2215 = vmatpush1.msra.mxu0 0.0
      %2216 = vmatprep.subr.mxu0 0.0
      %2217 = vmatpush1.msra.mxu0 0.0
      %2218 = vmatprep.subr.mxu0 0.0
      %2219 = vmatpush1.msra.mxu0 0.0
      %2220 = vmatprep.subr.mxu0 0.0
      %2221 = vmatpush1.msra.mxu0 0.0
      %2222 = vmatprep.subr.mxu0 0.0
      %2223 = vmatpush1.msra.mxu0 %v712
      %2224 = vmatprep.subr.mxu0 0.0
      %2225 = vmatpush2.msra.mxu0 0.0
      %2226 = vmatprep.subr.mxu0 0.0
      %2227 = vmatpush2.msra.mxu0 0.0
      %2228 = vmatprep.subr.mxu0 0.0
      %2229 = vmatpush2.msra.mxu0 0.0
      %2230 = vmatprep.subr.mxu0 0.0
      %2231 = vmatpush2.msra.mxu0 0.0
      %2232 = vmatprep.subr.mxu0 0.0
      %2233 = vmatpush2.msra.mxu0 0.0
      %2234 = vmatprep.subr.mxu0 0.0
      %2235 = vmatpush2.msra.mxu0 0.0
      %2236 = vmatprep.subr.mxu0 0.0
      %2237 = vmatpush2.msra.mxu0 0.0
      %2238 = vmatprep.subr.mxu0 0.0
      %2239 = vmatpush2.msra.mxu0 0.0
      %2240 = vmatprep.subr.mxu0 0.0
      %2241 = vmatpush2.msra.mxu0 0.0
      %2242 = vmatprep.subr.mxu0 0.0
      %2243 = vmatpush2.msra.mxu0 0.0
      %2244 = vmatprep.subr.mxu0 0.0
      %2245 = vmatpush2.msra.mxu0 0.0
      %2246 = vmatprep.subr.mxu0 0.0
      %2247 = vmatpush2.msra.mxu0 0.0
      %2248 = vmatprep.subr.mxu0 0.0
      %2249 = vmatpush2.msra.mxu0 0.0
      %2250 = vmatprep.subr.mxu0 0.0
      %2251 = vmatpush2.msra.mxu0 0.0
      %2252 = vmatprep.subr.mxu0 0.0
      %2253 = vmatpush2.msra.mxu0 0.0
      %2254 = vmatprep.subr.mxu0 0.0
      %2255 = vmatpush2.msra.mxu0 0.0
      %2256 = vmatprep.mubr.f32.mxu0 0.0
      %2257 = vmatmul.mubr.f32.gmra.mxu0 %v2190
      %v2258 = vpop.f32.mrf.mxu0
      %v2259 = vadd.f32 %v2166, %v2258
      %v2260 = vpop.f32.mrf.mxu0
      %2261 = vdwg.mxu0
      %2262 = vrot.lane.b32.xlu0 %v722, 112
      %v2263 = vpop.permute.xlu0 %2262
      %2264 = vrot.lane.b32.xlu0 %v722, 80
      %v2265 = vpop.permute.xlu0 %2264
      %v2266 = vsel %vm725, %v2263, 0
      %v2268 = vsel %vm725, %v2265, 0
      %2270 = vmatprep.subr.mxu0 0.0
      %2271 = vmatpush1.xpose.msra.mxu0 0.0
      %2272 = vmatprep.subr.mxu0 0.0
      %2273 = vmatpush1.xpose.msra.mxu0 0.0
      %2274 = vmatprep.subr.mxu0 0.0
      %2275 = vmatpush1.xpose.msra.mxu0 0.0
      %2276 = vmatprep.subr.mxu0 0.0
      %2277 = vmatpush1.xpose.msra.mxu0 0.0
      %2278 = vmatprep.subr.mxu0 0.0
      %2279 = vmatpush1.xpose.msra.mxu0 0.0
      %2280 = vmatprep.subr.mxu0 0.0
      %2281 = vmatpush1.xpose.msra.mxu0 0.0
      %2282 = vmatprep.subr.mxu0 0.0
      %2283 = vmatpush1.xpose.msra.mxu0 0.0
      %2284 = vmatprep.subr.mxu0 0.0
      %2285 = vmatpush1.xpose.msra.mxu0 0.0
      %2286 = vmatprep.subr.mxu0 0.0
      %2287 = vmatpush1.xpose.msra.mxu0 0.0
      %2288 = vmatprep.subr.mxu0 0.0
      %2289 = vmatpush1.xpose.msra.mxu0 0.0
      %2290 = vmatprep.subr.mxu0 0.0
      %2291 = vmatpush1.xpose.msra.mxu0 0.0
      %2292 = vmatprep.subr.mxu0 0.0
      %2293 = vmatpush1.xpose.msra.mxu0 0.0
      %2294 = vmatprep.subr.mxu0 0.0
      %2295 = vmatpush1.xpose.msra.mxu0 0.0
      %2296 = vmatprep.subr.mxu0 0.0
      %2297 = vmatpush1.xpose.msra.mxu0 0.0
      %2298 = vmatprep.subr.mxu0 0.0
      %2299 = vmatpush1.xpose.msra.mxu0 0.0
      %2300 = vmatprep.subr.mxu0 0.0
      %2301 = vmatpush1.xpose.msra.mxu0 %v2268
      %2302 = vmatprep.subr.mxu0 0.0
      %2303 = vmatpush2.xpose.msra.mxu0 0.0
      %2304 = vmatprep.subr.mxu0 0.0
      %2305 = vmatpush2.xpose.msra.mxu0 0.0
      %2306 = vmatprep.subr.mxu0 0.0
      %2307 = vmatpush2.xpose.msra.mxu0 0.0
      %2308 = vmatprep.subr.mxu0 0.0
      %2309 = vmatpush2.xpose.msra.mxu0 0.0
      %2310 = vmatprep.subr.mxu0 0.0
      %2311 = vmatpush2.xpose.msra.mxu0 0.0
      %2312 = vmatprep.subr.mxu0 0.0
      %2313 = vmatpush2.xpose.msra.mxu0 0.0
      %2314 = vmatprep.subr.mxu0 0.0
      %2315 = vmatpush2.xpose.msra.mxu0 0.0
      %2316 = vmatprep.subr.mxu0 0.0
      %2317 = vmatpush2.xpose.msra.mxu0 0.0
      %2318 = vmatprep.subr.mxu0 0.0
      %2319 = vmatpush2.xpose.msra.mxu0 0.0
      %2320 = vmatprep.subr.mxu0 0.0
      %2321 = vmatpush2.xpose.msra.mxu0 0.0
      %2322 = vmatprep.subr.mxu0 0.0
      %2323 = vmatpush2.xpose.msra.mxu0 0.0
      %2324 = vmatprep.subr.mxu0 0.0
      %2325 = vmatpush2.xpose.msra.mxu0 0.0
      %2326 = vmatprep.subr.mxu0 0.0
      %2327 = vmatpush2.xpose.msra.mxu0 0.0
      %2328 = vmatprep.subr.mxu0 0.0
      %2329 = vmatpush2.xpose.msra.mxu0 0.0
      %2330 = vmatprep.subr.mxu0 0.0
      %2331 = vmatpush2.xpose.msra.mxu0 0.0
      %2332 = vmatprep.subr.mxu0 0.0
      %2333 = vmatpush2.xpose.msra.mxu0 0.0
      %2334 = vmatprep.mubr.f32.mxu0 0.0
      %2335 = vmatmul.mubr.f32.gmra.mxu0 %v2266
      %v2336 = vpop.f32.mrf.mxu0
      %v2337 = vadd.f32 0.0, %v2336
      %v2338 = vpop.f32.mrf.mxu0
      %2339 = vdwg.mxu0
      %2340 = vrot.lane.b32.xlu0 %v806, 112
      %v2341 = vpop.permute.xlu0 %2340
      %2342 = vrot.lane.b32.xlu0 %v806, 80
      %v2343 = vpop.permute.xlu0 %2342
      %v2344 = vsel %vm725, %v2341, 0
      %v2346 = vsel %vm725, %v2343, 0
      %2348 = vmatprep.subr.mxu0 0.0
      %2349 = vmatpush1.xpose.msra.mxu0 0.0
      %2350 = vmatprep.subr.mxu0 0.0
      %2351 = vmatpush1.xpose.msra.mxu0 0.0
      %2352 = vmatprep.subr.mxu0 0.0
      %2353 = vmatpush1.xpose.msra.mxu0 0.0
      %2354 = vmatprep.subr.mxu0 0.0
      %2355 = vmatpush1.xpose.msra.mxu0 0.0
      %2356 = vmatprep.subr.mxu0 0.0
      %2357 = vmatpush1.xpose.msra.mxu0 0.0
      %2358 = vmatprep.subr.mxu0 0.0
      %2359 = vmatpush1.xpose.msra.mxu0 0.0
      %2360 = vmatprep.subr.mxu0 0.0
      %2361 = vmatpush1.xpose.msra.mxu0 0.0
      %2362 = vmatprep.subr.mxu0 0.0
      %2363 = vmatpush1.xpose.msra.mxu0 0.0
      %2364 = vmatprep.subr.mxu0 0.0
      %2365 = vmatpush1.xpose.msra.mxu0 0.0
      %2366 = vmatprep.subr.mxu0 0.0
      %2367 = vmatpush1.xpose.msra.mxu0 0.0
      %2368 = vmatprep.subr.mxu0 0.0
      %2369 = vmatpush1.xpose.msra.mxu0 0.0
      %2370 = vmatprep.subr.mxu0 0.0
      %2371 = vmatpush1.xpose.msra.mxu0 0.0
      %2372 = vmatprep.subr.mxu0 0.0
      %2373 = vmatpush1.xpose.msra.mxu0 0.0
      %2374 = vmatprep.subr.mxu0 0.0
      %2375 = vmatpush1.xpose.msra.mxu0 0.0
      %2376 = vmatprep.subr.mxu0 0.0
      %2377 = vmatpush1.xpose.msra.mxu0 0.0
      %2378 = vmatprep.subr.mxu0 0.0
      %2379 = vmatpush1.xpose.msra.mxu0 %v2346
      %2380 = vmatprep.subr.mxu0 0.0
      %2381 = vmatpush2.xpose.msra.mxu0 0.0
      %2382 = vmatprep.subr.mxu0 0.0
      %2383 = vmatpush2.xpose.msra.mxu0 0.0
      %2384 = vmatprep.subr.mxu0 0.0
      %2385 = vmatpush2.xpose.msra.mxu0 0.0
      %2386 = vmatprep.subr.mxu0 0.0
      %2387 = vmatpush2.xpose.msra.mxu0 0.0
      %2388 = vmatprep.subr.mxu0 0.0
      %2389 = vmatpush2.xpose.msra.mxu0 0.0
      %2390 = vmatprep.subr.mxu0 0.0
      %2391 = vmatpush2.xpose.msra.mxu0 0.0
      %2392 = vmatprep.subr.mxu0 0.0
      %2393 = vmatpush2.xpose.msra.mxu0 0.0
      %2394 = vmatprep.subr.mxu0 0.0
      %2395 = vmatpush2.xpose.msra.mxu0 0.0
      %2396 = vmatprep.subr.mxu0 0.0
      %2397 = vmatpush2.xpose.msra.mxu0 0.0
      %2398 = vmatprep.subr.mxu0 0.0
      %2399 = vmatpush2.xpose.msra.mxu0 0.0
      %2400 = vmatprep.subr.mxu0 0.0
      %2401 = vmatpush2.xpose.msra.mxu0 0.0
      %2402 = vmatprep.subr.mxu0 0.0
      %2403 = vmatpush2.xpose.msra.mxu0 0.0
      %2404 = vmatprep.subr.mxu0 0.0
      %2405 = vmatpush2.xpose.msra.mxu0 0.0
      %2406 = vmatprep.subr.mxu0 0.0
      %2407 = vmatpush2.xpose.msra.mxu0 0.0
      %2408 = vmatprep.subr.mxu0 0.0
      %2409 = vmatpush2.xpose.msra.mxu0 0.0
      %2410 = vmatprep.subr.mxu0 0.0
      %2411 = vmatpush2.xpose.msra.mxu0 0.0
      %2412 = vmatprep.mubr.f32.mxu0 0.0
      %2413 = vmatmul.mubr.f32.gmra.mxu0 %v2344
      %v2414 = vpop.f32.mrf.mxu0
      %v2415 = vadd.f32 0.0, %v2414
      %v2416 = vpop.f32.mrf.mxu0
      %2417 = vdwg.mxu0
      %2418 = vrot.lane.b32.xlu0 %v889, 112
      %v2419 = vpop.permute.xlu0 %2418
      %2420 = vrot.lane.b32.xlu0 %v889, 80
      %v2421 = vpop.permute.xlu0 %2420
      %v2422 = vsel %vm725, %v2419, 0
      %v2424 = vsel %vm725, %v2421, 0
      %2426 = vmatprep.subr.mxu0 0.0
      %2427 = vmatpush1.xpose.msra.mxu0 0.0
      %2428 = vmatprep.subr.mxu0 0.0
      %2429 = vmatpush1.xpose.msra.mxu0 0.0
      %2430 = vmatprep.subr.mxu0 0.0
      %2431 = vmatpush1.xpose.msra.mxu0 0.0
      %2432 = vmatprep.subr.mxu0 0.0
      %2433 = vmatpush1.xpose.msra.mxu0 0.0
      %2434 = vmatprep.subr.mxu0 0.0
      %2435 = vmatpush1.xpose.msra.mxu0 0.0
      %2436 = vmatprep.subr.mxu0 0.0
      %2437 = vmatpush1.xpose.msra.mxu0 0.0
      %2438 = vmatprep.subr.mxu0 0.0
      %2439 = vmatpush1.xpose.msra.mxu0 0.0
      %2440 = vmatprep.subr.mxu0 0.0
      %2441 = vmatpush1.xpose.msra.mxu0 0.0
      %2442 = vmatprep.subr.mxu0 0.0
      %2443 = vmatpush1.xpose.msra.mxu0 0.0
      %2444 = vmatprep.subr.mxu0 0.0
      %2445 = vmatpush1.xpose.msra.mxu0 0.0
      %2446 = vmatprep.subr.mxu0 0.0
      %2447 = vmatpush1.xpose.msra.mxu0 0.0
      %2448 = vmatprep.subr.mxu0 0.0
      %2449 = vmatpush1.xpose.msra.mxu0 0.0
      %2450 = vmatprep.subr.mxu0 0.0
      %2451 = vmatpush1.xpose.msra.mxu0 0.0
      %2452 = vmatprep.subr.mxu0 0.0
      %2453 = vmatpush1.xpose.msra.mxu0 0.0
      %2454 = vmatprep.subr.mxu0 0.0
      %2455 = vmatpush1.xpose.msra.mxu0 0.0
      %2456 = vmatprep.subr.mxu0 0.0
      %2457 = vmatpush1.xpose.msra.mxu0 %v2424
      %2458 = vmatprep.subr.mxu0 0.0
      %2459 = vmatpush2.xpose.msra.mxu0 0.0
      %2460 = vmatprep.subr.mxu0 0.0
      %2461 = vmatpush2.xpose.msra.mxu0 0.0
      %2462 = vmatprep.subr.mxu0 0.0
      %2463 = vmatpush2.xpose.msra.mxu0 0.0
      %2464 = vmatprep.subr.mxu0 0.0
      %2465 = vmatpush2.xpose.msra.mxu0 0.0
      %2466 = vmatprep.subr.mxu0 0.0
      %2467 = vmatpush2.xpose.msra.mxu0 0.0
      %2468 = vmatprep.subr.mxu0 0.0
      %2469 = vmatpush2.xpose.msra.mxu0 0.0
      %2470 = vmatprep.subr.mxu0 0.0
      %2471 = vmatpush2.xpose.msra.mxu0 0.0
      %2472 = vmatprep.subr.mxu0 0.0
      %2473 = vmatpush2.xpose.msra.mxu0 0.0
      %2474 = vmatprep.subr.mxu0 0.0
      %2475 = vmatpush2.xpose.msra.mxu0 0.0
      %2476 = vmatprep.subr.mxu0 0.0
      %2477 = vmatpush2.xpose.msra.mxu0 0.0
      %2478 = vmatprep.subr.mxu0 0.0
      %2479 = vmatpush2.xpose.msra.mxu0 0.0
      %2480 = vmatprep.subr.mxu0 0.0
      %2481 = vmatpush2.xpose.msra.mxu0 0.0
      %2482 = vmatprep.subr.mxu0 0.0
      %2483 = vmatpush2.xpose.msra.mxu0 0.0
      %2484 = vmatprep.subr.mxu0 0.0
      %2485 = vmatpush2.xpose.msra.mxu0 0.0
      %2486 = vmatprep.subr.mxu0 0.0
      %2487 = vmatpush2.xpose.msra.mxu0 0.0
      %2488 = vmatprep.subr.mxu0 0.0
      %2489 = vmatpush2.xpose.msra.mxu0 0.0
      %2490 = vmatprep.mubr.f32.mxu0 0.0
      %2491 = vmatmul.mubr.f32.gmra.mxu0 %v2422
      %v2492 = vpop.f32.mrf.mxu0
      %v2493 = vadd.f32 0.0, %v2492
      %v2494 = vpop.f32.mrf.mxu0
      %2495 = vdwg.mxu0
      %2496 = vrot.lane.b32.xlu0 %v972, 112
      %v2497 = vpop.permute.xlu0 %2496
      %2498 = vrot.lane.b32.xlu0 %v972, 80
      %v2499 = vpop.permute.xlu0 %2498
      %v2500 = vsel %vm725, %v2497, 0
      %v2502 = vsel %vm725, %v2499, 0
      %2504 = vmatprep.subr.mxu0 0.0
      %2505 = vmatpush1.xpose.msra.mxu0 0.0
      %2506 = vmatprep.subr.mxu0 0.0
      %2507 = vmatpush1.xpose.msra.mxu0 0.0
      %2508 = vmatprep.subr.mxu0 0.0
      %2509 = vmatpush1.xpose.msra.mxu0 0.0
      %2510 = vmatprep.subr.mxu0 0.0
      %2511 = vmatpush1.xpose.msra.mxu0 0.0
      %2512 = vmatprep.subr.mxu0 0.0
      %2513 = vmatpush1.xpose.msra.mxu0 0.0
      %2514 = vmatprep.subr.mxu0 0.0
      %2515 = vmatpush1.xpose.msra.mxu0 0.0
      %2516 = vmatprep.subr.mxu0 0.0
      %2517 = vmatpush1.xpose.msra.mxu0 0.0
      %2518 = vmatprep.subr.mxu0 0.0
      %2519 = vmatpush1.xpose.msra.mxu0 0.0
      %2520 = vmatprep.subr.mxu0 0.0
      %2521 = vmatpush1.xpose.msra.mxu0 0.0
      %2522 = vmatprep.subr.mxu0 0.0
      %2523 = vmatpush1.xpose.msra.mxu0 0.0
      %2524 = vmatprep.subr.mxu0 0.0
      %2525 = vmatpush1.xpose.msra.mxu0 0.0
      %2526 = vmatprep.subr.mxu0 0.0
      %2527 = vmatpush1.xpose.msra.mxu0 0.0
      %2528 = vmatprep.subr.mxu0 0.0
      %2529 = vmatpush1.xpose.msra.mxu0 0.0
      %2530 = vmatprep.subr.mxu0 0.0
      %2531 = vmatpush1.xpose.msra.mxu0 0.0
      %2532 = vmatprep.subr.mxu0 0.0
      %2533 = vmatpush1.xpose.msra.mxu0 0.0
      %2534 = vmatprep.subr.mxu0 0.0
      %2535 = vmatpush1.xpose.msra.mxu0 %v2502
      %2536 = vmatprep.subr.mxu0 0.0
      %2537 = vmatpush2.xpose.msra.mxu0 0.0
      %2538 = vmatprep.subr.mxu0 0.0
      %2539 = vmatpush2.xpose.msra.mxu0 0.0
      %2540 = vmatprep.subr.mxu0 0.0
      %2541 = vmatpush2.xpose.msra.mxu0 0.0
      %2542 = vmatprep.subr.mxu0 0.0
      %2543 = vmatpush2.xpose.msra.mxu0 0.0
      %2544 = vmatprep.subr.mxu0 0.0
      %2545 = vmatpush2.xpose.msra.mxu0 0.0
      %2546 = vmatprep.subr.mxu0 0.0
      %2547 = vmatpush2.xpose.msra.mxu0 0.0
      %2548 = vmatprep.subr.mxu0 0.0
      %2549 = vmatpush2.xpose.msra.mxu0 0.0
      %2550 = vmatprep.subr.mxu0 0.0
      %2551 = vmatpush2.xpose.msra.mxu0 0.0
      %2552 = vmatprep.subr.mxu0 0.0
      %2553 = vmatpush2.xpose.msra.mxu0 0.0
      %2554 = vmatprep.subr.mxu0 0.0
      %2555 = vmatpush2.xpose.msra.mxu0 0.0
      %2556 = vmatprep.subr.mxu0 0.0
      %2557 = vmatpush2.xpose.msra.mxu0 0.0
      %2558 = vmatprep.subr.mxu0 0.0
      %2559 = vmatpush2.xpose.msra.mxu0 0.0
      %2560 = vmatprep.subr.mxu0 0.0
      %2561 = vmatpush2.xpose.msra.mxu0 0.0
      %2562 = vmatprep.subr.mxu0 0.0
      %2563 = vmatpush2.xpose.msra.mxu0 0.0
      %2564 = vmatprep.subr.mxu0 0.0
      %2565 = vmatpush2.xpose.msra.mxu0 0.0
      %2566 = vmatprep.subr.mxu0 0.0
      %2567 = vmatpush2.xpose.msra.mxu0 0.0
      %2568 = vmatprep.mubr.f32.mxu0 0.0
      %2569 = vmatmul.mubr.f32.gmra.mxu0 %v2500
      %v2570 = vpop.f32.mrf.mxu0
      %v2571 = vadd.f32 0.0, %v2570
      %v2572 = vpop.f32.mrf.mxu0
      %2573 = vdwg.mxu0
      %v2574 = vmul.f32 %v2337, 0.35355338
      %v2575 = vmul.f32 %v2415, 0.35355338
      %v2576 = vmul.f32 %v2493, 0.35355338
      %v2577 = vmul.f32 %v2571, 0.35355338
      %v2578 = vsel %vm1053, %v2574, -inf
      %2579 = vmax.xlane.f32.xlu0 %v2578
      %v2580 = vpop.xlane.xlu0 %2579
      %v2581 = vsel %vm1053, %v2575, -inf
      %2582 = vmax.xlane.f32.xlu0 %v2581
      %v2583 = vpop.xlane.xlu0 %2582
      %v2584 = vsel %vm1053, %v2576, -inf
      %2585 = vmax.xlane.f32.xlu0 %v2584
      %v2586 = vpop.xlane.xlu0 %2585
      %v2587 = vsel %vm1053, %v2577, -inf
      %2588 = vmax.xlane.f32.xlu0 %v2587
      %v2589 = vpop.xlane.xlu0 %2588
      %v2590 = vsub.f32 %v2574, %v2580
      %v2591 = vsub.f32 %v2575, %v2583
      %v2592 = vsub.f32 %v2576, %v2586
      %v2593 = vsub.f32 %v2577, %v2589
      %v2594 = vmul.f32 %v2590, 1.442695
      %v2595 = vpow.pop %v2594
      %v2596 = vmul.f32 %v2591, 1.442695
      %v2597 = vpow.pop %v2596
      %v2598 = vmul.f32 %v2592, 1.442695
      %v2599 = vpow.pop %v2598
      %v2600 = vmul.f32 %v2593, 1.442695
      %v2601 = vpow.pop %v2600
      %v2602 = vsel %vm1053, %v2595, 0.0
      %2603 = vadd.xlane.f32.xlu0 %v2602
      %v2604 = vpop.xlane.xlu0 %2603
      %v2605 = vsel %vm1053, %v2597, 0.0
      %2606 = vadd.xlane.f32.xlu0 %v2605
      %v2607 = vpop.xlane.xlu0 %2606
      %v2608 = vsel %vm1053, %v2599, 0.0
      %2609 = vadd.xlane.f32.xlu0 %v2608
      %v2610 = vpop.xlane.xlu0 %2609
      %v2611 = vsel %vm1053, %v2601, 0.0
      %2612 = vadd.xlane.f32.xlu0 %v2611
      %v2613 = vpop.xlane.xlu0 %2612
      %v2614 = vrcp.pop %v2604
      %v2615 = vmul.f32 %v2595, %v2614
      %v2616 = vrcp.pop %v2607
      %v2617 = vmul.f32 %v2597, %v2616
      %v2618 = vrcp.pop %v2610
      %v2619 = vmul.f32 %v2599, %v2618
      %v2620 = vrcp.pop %v2613
      %v2621 = vmul.f32 %v2601, %v2620
      %2622 = vrot.lane.b32.xlu0 %v722, 48
      %v2623 = vpop.permute.xlu0 %2622
      %v2625 = vsel %vm1100, %v2615, 0
      %v2627 = vsel %vm1104, %v2623, 0
      %2629 = vmatprep.subr.mxu0 0.0
      %2630 = vmatpush1.msra.mxu0 0.0
      %2631 = vmatprep.subr.mxu0 0.0
      %2632 = vmatpush1.msra.mxu0 0.0
      %2633 = vmatprep.subr.mxu0 0.0
      %2634 = vmatpush1.msra.mxu0 0.0
      %2635 = vmatprep.subr.mxu0 0.0
      %2636 = vmatpush1.msra.mxu0 0.0
      %2637 = vmatprep.subr.mxu0 0.0
      %2638 = vmatpush1.msra.mxu0 0.0
      %2639 = vmatprep.subr.mxu0 0.0
      %2640 = vmatpush1.msra.mxu0 0.0
      %2641 = vmatprep.subr.mxu0 0.0
      %2642 = vmatpush1.msra.mxu0 0.0
      %2643 = vmatprep.subr.mxu0 0.0
      %2644 = vmatpush1.msra.mxu0 0.0
      %2645 = vmatprep.subr.mxu0 0.0
      %2646 = vmatpush1.msra.mxu0 0.0
      %2647 = vmatprep.subr.mxu0 0.0
      %2648 = vmatpush1.msra.mxu0 0.0
      %2649 = vmatprep.subr.mxu0 0.0
      %2650 = vmatpush1.msra.mxu0 0.0
      %2651 = vmatprep.subr.mxu0 0.0
      %2652 = vmatpush1.msra.mxu0 0.0
      %2653 = vmatprep.subr.mxu0 0.0
      %2654 = vmatpush1.msra.mxu0 0.0
      %2655 = vmatprep.subr.mxu0 0.0
      %2656 = vmatpush1.msra.mxu0 0.0
      %2657 = vmatprep.subr.mxu0 0.0
      %2658 = vmatpush1.msra.mxu0 0.0
      %2659 = vmatprep.subr.mxu0 0.0
      %2660 = vmatpush1.msra.mxu0 %v2627
      %2661 = vmatprep.subr.mxu0 0.0
      %2662 = vmatpush2.msra.mxu0 0.0
      %2663 = vmatprep.subr.mxu0 0.0
      %2664 = vmatpush2.msra.mxu0 0.0
      %2665 = vmatprep.subr.mxu0 0.0
      %2666 = vmatpush2.msra.mxu0 0.0
      %2667 = vmatprep.subr.mxu0 0.0
      %2668 = vmatpush2.msra.mxu0 0.0
      %2669 = vmatprep.subr.mxu0 0.0
      %2670 = vmatpush2.msra.mxu0 0.0
      %2671 = vmatprep.subr.mxu0 0.0
      %2672 = vmatpush2.msra.mxu0 0.0
      %2673 = vmatprep.subr.mxu0 0.0
      %2674 = vmatpush2.msra.mxu0 0.0
      %2675 = vmatprep.subr.mxu0 0.0
      %2676 = vmatpush2.msra.mxu0 0.0
      %2677 = vmatprep.subr.mxu0 0.0
      %2678 = vmatpush2.msra.mxu0 0.0
      %2679 = vmatprep.subr.mxu0 0.0
      %2680 = vmatpush2.msra.mxu0 0.0
      %2681 = vmatprep.subr.mxu0 0.0
      %2682 = vmatpush2.msra.mxu0 0.0
      %2683 = vmatprep.subr.mxu0 0.0
      %2684 = vmatpush2.msra.mxu0 0.0
      %2685 = vmatprep.subr.mxu0 0.0
      %2686 = vmatpush2.msra.mxu0 0.0
      %2687 = vmatprep.subr.mxu0 0.0
      %2688 = vmatpush2.msra.mxu0 0.0
      %2689 = vmatprep.subr.mxu0 0.0
      %2690 = vmatpush2.msra.mxu0 0.0
      %2691 = vmatprep.subr.mxu0 0.0
      %2692 = vmatpush2.msra.mxu0 0.0
      %2693 = vmatprep.mubr.f32.mxu0 0.0
      %2694 = vmatmul.mubr.f32.gmra.mxu0 %v2625
      %v2695 = vpop.f32.mrf.mxu0
      %v2696 = vadd.f32 0.0, %v2695
      %v2697 = vpop.f32.mrf.mxu0
      %2698 = vdwg.mxu0
      %2699 = vrot.lane.b32.xlu0 %v806, 48
      %v2700 = vpop.permute.xlu0 %2699
      %v2702 = vsel %vm1100, %v2617, 0
      %v2704 = vsel %vm1104, %v2700, 0
      %2706 = vmatprep.subr.mxu0 0.0
      %2707 = vmatpush1.msra.mxu0 0.0
      %2708 = vmatprep.subr.mxu0 0.0
      %2709 = vmatpush1.msra.mxu0 0.0
      %2710 = vmatprep.subr.mxu0 0.0
      %2711 = vmatpush1.msra.mxu0 0.0
      %2712 = vmatprep.subr.mxu0 0.0
      %2713 = vmatpush1.msra.mxu0 0.0
      %2714 = vmatprep.subr.mxu0 0.0
      %2715 = vmatpush1.msra.mxu0 0.0
      %2716 = vmatprep.subr.mxu0 0.0
      %2717 = vmatpush1.msra.mxu0 0.0
      %2718 = vmatprep.subr.mxu0 0.0
      %2719 = vmatpush1.msra.mxu0 0.0
      %2720 = vmatprep.subr.mxu0 0.0
      %2721 = vmatpush1.msra.mxu0 0.0
      %2722 = vmatprep.subr.mxu0 0.0
      %2723 = vmatpush1.msra.mxu0 0.0
      %2724 = vmatprep.subr.mxu0 0.0
      %2725 = vmatpush1.msra.mxu0 0.0
      %2726 = vmatprep.subr.mxu0 0.0
      %2727 = vmatpush1.msra.mxu0 0.0
      %2728 = vmatprep.subr.mxu0 0.0
      %2729 = vmatpush1.msra.mxu0 0.0
      %2730 = vmatprep.subr.mxu0 0.0
      %2731 = vmatpush1.msra.mxu0 0.0
      %2732 = vmatprep.subr.mxu0 0.0
      %2733 = vmatpush1.msra.mxu0 0.0
      %2734 = vmatprep.subr.mxu0 0.0
      %2735 = vmatpush1.msra.mxu0 0.0
      %2736 = vmatprep.subr.mxu0 0.0
      %2737 = vmatpush1.msra.mxu0 %v2704
      %2738 = vmatprep.subr.mxu0 0.0
      %2739 = vmatpush2.msra.mxu0 0.0
      %2740 = vmatprep.subr.mxu0 0.0
      %2741 = vmatpush2.msra.mxu0 0.0
      %2742 = vmatprep.subr.mxu0 0.0
      %2743 = vmatpush2.msra.mxu0 0.0
      %2744 = vmatprep.subr.mxu0 0.0
      %2745 = vmatpush2.msra.mxu0 0.0
      %2746 = vmatprep.subr.mxu0 0.0
      %2747 = vmatpush2.msra.mxu0 0.0
      %2748 = vmatprep.subr.mxu0 0.0
      %2749 = vmatpush2.msra.mxu0 0.0
      %2750 = vmatprep.subr.mxu0 0.0
      %2751 = vmatpush2.msra.mxu0 0.0
      %2752 = vmatprep.subr.mxu0 0.0
      %2753 = vmatpush2.msra.mxu0 0.0
      %2754 = vmatprep.subr.mxu0 0.0
      %2755 = vmatpush2.msra.mxu0 0.0
      %2756 = vmatprep.subr.mxu0 0.0
      %2757 = vmatpush2.msra.mxu0 0.0
      %2758 = vmatprep.subr.mxu0 0.0
      %2759 = vmatpush2.msra.mxu0 0.0
      %2760 = vmatprep.subr.mxu0 0.0
      %2761 = vmatpush2.msra.mxu0 0.0
      %2762 = vmatprep.subr.mxu0 0.0
      %2763 = vmatpush2.msra.mxu0 0.0
      %2764 = vmatprep.subr.mxu0 0.0
      %2765 = vmatpush2.msra.mxu0 0.0
      %2766 = vmatprep.subr.mxu0 0.0
      %2767 = vmatpush2.msra.mxu0 0.0
      %2768 = vmatprep.subr.mxu0 0.0
      %2769 = vmatpush2.msra.mxu0 0.0
      %2770 = vmatprep.mubr.f32.mxu0 0.0
      %2771 = vmatmul.mubr.f32.gmra.mxu0 %v2702
      %v2772 = vpop.f32.mrf.mxu0
      %v2773 = vadd.f32 0.0, %v2772
      %v2774 = vpop.f32.mrf.mxu0
      %2775 = vdwg.mxu0
      %2776 = vrot.lane.b32.xlu0 %v889, 48
      %v2777 = vpop.permute.xlu0 %2776
      %v2779 = vsel %vm1100, %v2619, 0
      %v2781 = vsel %vm1104, %v2777, 0
      %2783 = vmatprep.subr.mxu0 0.0
      %2784 = vmatpush1.msra.mxu0 0.0
      %2785 = vmatprep.subr.mxu0 0.0
      %2786 = vmatpush1.msra.mxu0 0.0
      %2787 = vmatprep.subr.mxu0 0.0
      %2788 = vmatpush1.msra.mxu0 0.0
      %2789 = vmatprep.subr.mxu0 0.0
      %2790 = vmatpush1.msra.mxu0 0.0
      %2791 = vmatprep.subr.mxu0 0.0
      %2792 = vmatpush1.msra.mxu0 0.0
      %2793 = vmatprep.subr.mxu0 0.0
      %2794 = vmatpush1.msra.mxu0 0.0
      %2795 = vmatprep.subr.mxu0 0.0
      %2796 = vmatpush1.msra.mxu0 0.0
      %2797 = vmatprep.subr.mxu0 0.0
      %2798 = vmatpush1.msra.mxu0 0.0
      %2799 = vmatprep.subr.mxu0 0.0
      %2800 = vmatpush1.msra.mxu0 0.0
      %2801 = vmatprep.subr.mxu0 0.0
      %2802 = vmatpush1.msra.mxu0 0.0
      %2803 = vmatprep.subr.mxu0 0.0
      %2804 = vmatpush1.msra.mxu0 0.0
      %2805 = vmatprep.subr.mxu0 0.0
      %2806 = vmatpush1.msra.mxu0 0.0
      %2807 = vmatprep.subr.mxu0 0.0
      %2808 = vmatpush1.msra.mxu0 0.0
      %2809 = vmatprep.subr.mxu0 0.0
      %2810 = vmatpush1.msra.mxu0 0.0
      %2811 = vmatprep.subr.mxu0 0.0
      %2812 = vmatpush1.msra.mxu0 0.0
      %2813 = vmatprep.subr.mxu0 0.0
      %2814 = vmatpush1.msra.mxu0 %v2781
      %2815 = vmatprep.subr.mxu0 0.0
      %2816 = vmatpush2.msra.mxu0 0.0
      %2817 = vmatprep.subr.mxu0 0.0
      %2818 = vmatpush2.msra.mxu0 0.0
      %2819 = vmatprep.subr.mxu0 0.0
      %2820 = vmatpush2.msra.mxu0 0.0
      %2821 = vmatprep.subr.mxu0 0.0
      %2822 = vmatpush2.msra.mxu0 0.0
      %2823 = vmatprep.subr.mxu0 0.0
      %2824 = vmatpush2.msra.mxu0 0.0
      %2825 = vmatprep.subr.mxu0 0.0
      %2826 = vmatpush2.msra.mxu0 0.0
      %2827 = vmatprep.subr.mxu0 0.0
      %2828 = vmatpush2.msra.mxu0 0.0
      %2829 = vmatprep.subr.mxu0 0.0
      %2830 = vmatpush2.msra.mxu0 0.0
      %2831 = vmatprep.subr.mxu0 0.0
      %2832 = vmatpush2.msra.mxu0 0.0
      %2833 = vmatprep.subr.mxu0 0.0
      %2834 = vmatpush2.msra.mxu0 0.0
      %2835 = vmatprep.subr.mxu0 0.0
      %2836 = vmatpush2.msra.mxu0 0.0
      %2837 = vmatprep.subr.mxu0 0.0
      %2838 = vmatpush2.msra.mxu0 0.0
      %2839 = vmatprep.subr.mxu0 0.0
      %2840 = vmatpush2.msra.mxu0 0.0
      %2841 = vmatprep.subr.mxu0 0.0
      %2842 = vmatpush2.msra.mxu0 0.0
      %2843 = vmatprep.subr.mxu0 0.0
      %2844 = vmatpush2.msra.mxu0 0.0
      %2845 = vmatprep.subr.mxu0 0.0
      %2846 = vmatpush2.msra.mxu0 0.0
      %2847 = vmatprep.mubr.f32.mxu0 0.0
      %2848 = vmatmul.mubr.f32.gmra.mxu0 %v2779
      %v2849 = vpop.f32.mrf.mxu0
      %v2850 = vadd.f32 0.0, %v2849
      %v2851 = vpop.f32.mrf.mxu0
      %2852 = vdwg.mxu0
      %2853 = vrot.lane.b32.xlu0 %v972, 48
      %v2854 = vpop.permute.xlu0 %2853
      %v2856 = vsel %vm1100, %v2621, 0
      %v2858 = vsel %vm1104, %v2854, 0
      %2860 = vmatprep.subr.mxu0 0.0
      %2861 = vmatpush1.msra.mxu0 0.0
      %2862 = vmatprep.subr.mxu0 0.0
      %2863 = vmatpush1.msra.mxu0 0.0
      %2864 = vmatprep.subr.mxu0 0.0
      %2865 = vmatpush1.msra.mxu0 0.0
      %2866 = vmatprep.subr.mxu0 0.0
      %2867 = vmatpush1.msra.mxu0 0.0
      %2868 = vmatprep.subr.mxu0 0.0
      %2869 = vmatpush1.msra.mxu0 0.0
      %2870 = vmatprep.subr.mxu0 0.0
      %2871 = vmatpush1.msra.mxu0 0.0
      %2872 = vmatprep.subr.mxu0 0.0
      %2873 = vmatpush1.msra.mxu0 0.0
      %2874 = vmatprep.subr.mxu0 0.0
      %2875 = vmatpush1.msra.mxu0 0.0
      %2876 = vmatprep.subr.mxu0 0.0
      %2877 = vmatpush1.msra.mxu0 0.0
      %2878 = vmatprep.subr.mxu0 0.0
      %2879 = vmatpush1.msra.mxu0 0.0
      %2880 = vmatprep.subr.mxu0 0.0
      %2881 = vmatpush1.msra.mxu0 0.0
      %2882 = vmatprep.subr.mxu0 0.0
      %2883 = vmatpush1.msra.mxu0 0.0
      %2884 = vmatprep.subr.mxu0 0.0
      %2885 = vmatpush1.msra.mxu0 0.0
      %2886 = vmatprep.subr.mxu0 0.0
      %2887 = vmatpush1.msra.mxu0 0.0
      %2888 = vmatprep.subr.mxu0 0.0
      %2889 = vmatpush1.msra.mxu0 0.0
      %2890 = vmatprep.subr.mxu0 0.0
      %2891 = vmatpush1.msra.mxu0 %v2858
      %2892 = vmatprep.subr.mxu0 0.0
      %2893 = vmatpush2.msra.mxu0 0.0
      %2894 = vmatprep.subr.mxu0 0.0
      %2895 = vmatpush2.msra.mxu0 0.0
      %2896 = vmatprep.subr.mxu0 0.0
      %2897 = vmatpush2.msra.mxu0 0.0
      %2898 = vmatprep.subr.mxu0 0.0
      %2899 = vmatpush2.msra.mxu0 0.0
      %2900 = vmatprep.subr.mxu0 0.0
      %2901 = vmatpush2.msra.mxu0 0.0
      %2902 = vmatprep.subr.mxu0 0.0
      %2903 = vmatpush2.msra.mxu0 0.0
      %2904 = vmatprep.subr.mxu0 0.0
      %2905 = vmatpush2.msra.mxu0 0.0
      %2906 = vmatprep.subr.mxu0 0.0
      %2907 = vmatpush2.msra.mxu0 0.0
      %2908 = vmatprep.subr.mxu0 0.0
      %2909 = vmatpush2.msra.mxu0 0.0
      %2910 = vmatprep.subr.mxu0 0.0
      %2911 = vmatpush2.msra.mxu0 0.0
      %2912 = vmatprep.subr.mxu0 0.0
      %2913 = vmatpush2.msra.mxu0 0.0
      %2914 = vmatprep.subr.mxu0 0.0
      %2915 = vmatpush2.msra.mxu0 0.0
      %2916 = vmatprep.subr.mxu0 0.0
      %2917 = vmatpush2.msra.mxu0 0.0
      %2918 = vmatprep.subr.mxu0 0.0
      %2919 = vmatpush2.msra.mxu0 0.0
      %2920 = vmatprep.subr.mxu0 0.0
      %2921 = vmatpush2.msra.mxu0 0.0
      %2922 = vmatprep.subr.mxu0 0.0
      %2923 = vmatpush2.msra.mxu0 0.0
      %2924 = vmatprep.mubr.f32.mxu0 0.0
      %2925 = vmatmul.mubr.f32.gmra.mxu0 %v2856
      %v2926 = vpop.f32.mrf.mxu0
      %v2927 = vadd.f32 0.0, %v2926
      %v2928 = vpop.f32.mrf.mxu0
      %2929 = vdwg.mxu0
      %v2934 = vcombine.low %v2696, %v2773
      %v2935 = vcombine.low %v2850, %v2927
      %v2937 = vunpack.c.l.s4 1983009808
      %v2938 = vunpack.c.0.s8 %v2937
      %v2939 = vlaneseq
      %v2940 = vshrl.u32 %v2939, 7
      %v2941 = vsub.s32 %v2938, %v2940
      %v2942 = vrot.slane %v2934, %v2941
      %v2944 = vunpack.c.l.s4 1983009808
      %v2945 = vunpack.c.0.s8 %v2944
      %v2946 = vlaneseq
      %v2947 = vshrl.u32 %v2946, 7
      %v2948 = vsub.s32 %v2945, %v2947
      %v2949 = vrot.slane %v2935, %v2948
      %v2950 = vcombine.low %v2942, %v2949
      %v2951 = vsel %vm725, %v2950, 0
      %2953 = vmatprep.subr.mxu0 0.0
      %2954 = vmatpush1.msra.mxu0 0.0
      %2955 = vmatprep.subr.mxu0 0.0
      %2956 = vmatpush1.msra.mxu0 0.0
      %2957 = vmatprep.subr.mxu0 0.0
      %2958 = vmatpush1.msra.mxu0 0.0
      %2959 = vmatprep.subr.mxu0 0.0
      %2960 = vmatpush1.msra.mxu0 0.0
      %2961 = vmatprep.subr.mxu0 0.0
      %2962 = vmatpush1.msra.mxu0 0.0
      %2963 = vmatprep.subr.mxu0 0.0
      %2964 = vmatpush1.msra.mxu0 0.0
      %2965 = vmatprep.subr.mxu0 0.0
      %2966 = vmatpush1.msra.mxu0 0.0
      %2967 = vmatprep.subr.mxu0 0.0
      %2968 = vmatpush1.msra.mxu0 0.0
      %2969 = vmatprep.subr.mxu0 0.0
      %2970 = vmatpush1.msra.mxu0 0.0
      %2971 = vmatprep.subr.mxu0 0.0
      %2972 = vmatpush1.msra.mxu0 0.0
      %2973 = vmatprep.subr.mxu0 0.0
      %2974 = vmatpush1.msra.mxu0 0.0
      %2975 = vmatprep.subr.mxu0 0.0
      %2976 = vmatpush1.msra.mxu0 0.0
      %2977 = vmatprep.subr.mxu0 0.0
      %2978 = vmatpush1.msra.mxu0 0.0
      %2979 = vmatprep.subr.mxu0 0.0
      %2980 = vmatpush1.msra.mxu0 0.0
      %2981 = vmatprep.subr.mxu0 0.0
      %2982 = vmatpush1.msra.mxu0 0.0
      %2983 = vmatprep.subr.mxu0 0.0
      %2984 = vmatpush1.msra.mxu0 %v714
      %2985 = vmatprep.subr.mxu0 0.0
      %2986 = vmatpush2.msra.mxu0 0.0
      %2987 = vmatprep.subr.mxu0 0.0
      %2988 = vmatpush2.msra.mxu0 0.0
      %2989 = vmatprep.subr.mxu0 0.0
      %2990 = vmatpush2.msra.mxu0 0.0
      %2991 = vmatprep.subr.mxu0 0.0
      %2992 = vmatpush2.msra.mxu0 0.0
      %2993 = vmatprep.subr.mxu0 0.0
      %2994 = vmatpush2.msra.mxu0 0.0
      %2995 = vmatprep.subr.mxu0 0.0
      %2996 = vmatpush2.msra.mxu0 0.0
      %2997 = vmatprep.subr.mxu0 0.0
      %2998 = vmatpush2.msra.mxu0 0.0
      %2999 = vmatprep.subr.mxu0 0.0
      %3000 = vmatpush2.msra.mxu0 0.0
      %3001 = vmatprep.subr.mxu0 0.0
      %3002 = vmatpush2.msra.mxu0 0.0
      %3003 = vmatprep.subr.mxu0 0.0
      %3004 = vmatpush2.msra.mxu0 0.0
      %3005 = vmatprep.subr.mxu0 0.0
      %3006 = vmatpush2.msra.mxu0 0.0
      %3007 = vmatprep.subr.mxu0 0.0
      %3008 = vmatpush2.msra.mxu0 0.0
      %3009 = vmatprep.subr.mxu0 0.0
      %3010 = vmatpush2.msra.mxu0 0.0
      %3011 = vmatprep.subr.mxu0 0.0
      %3012 = vmatpush2.msra.mxu0 0.0
      %3013 = vmatprep.subr.mxu0 0.0
      %3014 = vmatpush2.msra.mxu0 0.0
      %3015 = vmatprep.subr.mxu0 0.0
      %3016 = vmatpush2.msra.mxu0 0.0
      %3017 = vmatprep.mubr.f32.mxu0 0.0
      %3018 = vmatmul.mubr.f32.gmra.mxu0 %v2951
      %v3019 = vpop.f32.mrf.mxu0
      %v3020 = vadd.f32 0.0, %v3019
      %v3021 = vpop.f32.mrf.mxu0
      %3022 = vdwg.mxu0
      %v3023 = vadd.f32 %v2259, %v3020
      %3024 = vrot.lane.b32.xlu0 %v722, 104
      %v3025 = vpop.permute.xlu0 %3024
      %3026 = vrot.lane.b32.xlu0 %v722, 72
      %v3027 = vpop.permute.xlu0 %3026
      %v3028 = vsel %vm725, %v3025, 0
      %v3030 = vsel %vm725, %v3027, 0
      %3032 = vmatprep.subr.mxu0 0.0
      %3033 = vmatpush1.xpose.msra.mxu0 0.0
      %3034 = vmatprep.subr.mxu0 0.0
      %3035 = vmatpush1.xpose.msra.mxu0 0.0
      %3036 = vmatprep.subr.mxu0 0.0
      %3037 = vmatpush1.xpose.msra.mxu0 0.0
      %3038 = vmatprep.subr.mxu0 0.0
      %3039 = vmatpush1.xpose.msra.mxu0 0.0
      %3040 = vmatprep.subr.mxu0 0.0
      %3041 = vmatpush1.xpose.msra.mxu0 0.0
      %3042 = vmatprep.subr.mxu0 0.0
      %3043 = vmatpush1.xpose.msra.mxu0 0.0
      %3044 = vmatprep.subr.mxu0 0.0
      %3045 = vmatpush1.xpose.msra.mxu0 0.0
      %3046 = vmatprep.subr.mxu0 0.0
      %3047 = vmatpush1.xpose.msra.mxu0 0.0
      %3048 = vmatprep.subr.mxu0 0.0
      %3049 = vmatpush1.xpose.msra.mxu0 0.0
      %3050 = vmatprep.subr.mxu0 0.0
      %3051 = vmatpush1.xpose.msra.mxu0 0.0
      %3052 = vmatprep.subr.mxu0 0.0
      %3053 = vmatpush1.xpose.msra.mxu0 0.0
      %3054 = vmatprep.subr.mxu0 0.0
      %3055 = vmatpush1.xpose.msra.mxu0 0.0
      %3056 = vmatprep.subr.mxu0 0.0
      %3057 = vmatpush1.xpose.msra.mxu0 0.0
      %3058 = vmatprep.subr.mxu0 0.0
      %3059 = vmatpush1.xpose.msra.mxu0 0.0
      %3060 = vmatprep.subr.mxu0 0.0
      %3061 = vmatpush1.xpose.msra.mxu0 0.0
      %3062 = vmatprep.subr.mxu0 0.0
      %3063 = vmatpush1.xpose.msra.mxu0 %v3030
      %3064 = vmatprep.subr.mxu0 0.0
      %3065 = vmatpush2.xpose.msra.mxu0 0.0
      %3066 = vmatprep.subr.mxu0 0.0
      %3067 = vmatpush2.xpose.msra.mxu0 0.0
      %3068 = vmatprep.subr.mxu0 0.0
      %3069 = vmatpush2.xpose.msra.mxu0 0.0
      %3070 = vmatprep.subr.mxu0 0.0
      %3071 = vmatpush2.xpose.msra.mxu0 0.0
      %3072 = vmatprep.subr.mxu0 0.0
      %3073 = vmatpush2.xpose.msra.mxu0 0.0
      %3074 = vmatprep.subr.mxu0 0.0
      %3075 = vmatpush2.xpose.msra.mxu0 0.0
      %3076 = vmatprep.subr.mxu0 0.0
      %3077 = vmatpush2.xpose.msra.mxu0 0.0
      %3078 = vmatprep.subr.mxu0 0.0
      %3079 = vmatpush2.xpose.msra.mxu0 0.0
      %3080 = vmatprep.subr.mxu0 0.0
      %3081 = vmatpush2.xpose.msra.mxu0 0.0
      %3082 = vmatprep.subr.mxu0 0.0
      %3083 = vmatpush2.xpose.msra.mxu0 0.0
      %3084 = vmatprep.subr.mxu0 0.0
      %3085 = vmatpush2.xpose.msra.mxu0 0.0
      %3086 = vmatprep.subr.mxu0 0.0
      %3087 = vmatpush2.xpose.msra.mxu0 0.0
      %3088 = vmatprep.subr.mxu0 0.0
      %3089 = vmatpush2.xpose.msra.mxu0 0.0
      %3090 = vmatprep.subr.mxu0 0.0
      %3091 = vmatpush2.xpose.msra.mxu0 0.0
      %3092 = vmatprep.subr.mxu0 0.0
      %3093 = vmatpush2.xpose.msra.mxu0 0.0
      %3094 = vmatprep.subr.mxu0 0.0
      %3095 = vmatpush2.xpose.msra.mxu0 0.0
      %3096 = vmatprep.mubr.f32.mxu0 0.0
      %3097 = vmatmul.mubr.f32.gmra.mxu0 %v3028
      %v3098 = vpop.f32.mrf.mxu0
      %v3099 = vadd.f32 0.0, %v3098
      %v3100 = vpop.f32.mrf.mxu0
      %3101 = vdwg.mxu0
      %3102 = vrot.lane.b32.xlu0 %v806, 104
      %v3103 = vpop.permute.xlu0 %3102
      %3104 = vrot.lane.b32.xlu0 %v806, 72
      %v3105 = vpop.permute.xlu0 %3104
      %v3106 = vsel %vm725, %v3103, 0
      %v3108 = vsel %vm725, %v3105, 0
      %3110 = vmatprep.subr.mxu0 0.0
      %3111 = vmatpush1.xpose.msra.mxu0 0.0
      %3112 = vmatprep.subr.mxu0 0.0
      %3113 = vmatpush1.xpose.msra.mxu0 0.0
      %3114 = vmatprep.subr.mxu0 0.0
      %3115 = vmatpush1.xpose.msra.mxu0 0.0
      %3116 = vmatprep.subr.mxu0 0.0
      %3117 = vmatpush1.xpose.msra.mxu0 0.0
      %3118 = vmatprep.subr.mxu0 0.0
      %3119 = vmatpush1.xpose.msra.mxu0 0.0
      %3120 = vmatprep.subr.mxu0 0.0
      %3121 = vmatpush1.xpose.msra.mxu0 0.0
      %3122 = vmatprep.subr.mxu0 0.0
      %3123 = vmatpush1.xpose.msra.mxu0 0.0
      %3124 = vmatprep.subr.mxu0 0.0
      %3125 = vmatpush1.xpose.msra.mxu0 0.0
      %3126 = vmatprep.subr.mxu0 0.0
      %3127 = vmatpush1.xpose.msra.mxu0 0.0
      %3128 = vmatprep.subr.mxu0 0.0
      %3129 = vmatpush1.xpose.msra.mxu0 0.0
      %3130 = vmatprep.subr.mxu0 0.0
      %3131 = vmatpush1.xpose.msra.mxu0 0.0
      %3132 = vmatprep.subr.mxu0 0.0
      %3133 = vmatpush1.xpose.msra.mxu0 0.0
      %3134 = vmatprep.subr.mxu0 0.0
      %3135 = vmatpush1.xpose.msra.mxu0 0.0
      %3136 = vmatprep.subr.mxu0 0.0
      %3137 = vmatpush1.xpose.msra.mxu0 0.0
      %3138 = vmatprep.subr.mxu0 0.0
      %3139 = vmatpush1.xpose.msra.mxu0 0.0
      %3140 = vmatprep.subr.mxu0 0.0
      %3141 = vmatpush1.xpose.msra.mxu0 %v3108
      %3142 = vmatprep.subr.mxu0 0.0
      %3143 = vmatpush2.xpose.msra.mxu0 0.0
      %3144 = vmatprep.subr.mxu0 0.0
      %3145 = vmatpush2.xpose.msra.mxu0 0.0
      %3146 = vmatprep.subr.mxu0 0.0
      %3147 = vmatpush2.xpose.msra.mxu0 0.0
      %3148 = vmatprep.subr.mxu0 0.0
      %3149 = vmatpush2.xpose.msra.mxu0 0.0
      %3150 = vmatprep.subr.mxu0 0.0
      %3151 = vmatpush2.xpose.msra.mxu0 0.0
      %3152 = vmatprep.subr.mxu0 0.0
      %3153 = vmatpush2.xpose.msra.mxu0 0.0
      %3154 = vmatprep.subr.mxu0 0.0
      %3155 = vmatpush2.xpose.msra.mxu0 0.0
      %3156 = vmatprep.subr.mxu0 0.0
      %3157 = vmatpush2.xpose.msra.mxu0 0.0
      %3158 = vmatprep.subr.mxu0 0.0
      %3159 = vmatpush2.xpose.msra.mxu0 0.0
      %3160 = vmatprep.subr.mxu0 0.0
      %3161 = vmatpush2.xpose.msra.mxu0 0.0
      %3162 = vmatprep.subr.mxu0 0.0
      %3163 = vmatpush2.xpose.msra.mxu0 0.0
      %3164 = vmatprep.subr.mxu0 0.0
      %3165 = vmatpush2.xpose.msra.mxu0 0.0
      %3166 = vmatprep.subr.mxu0 0.0
      %3167 = vmatpush2.xpose.msra.mxu0 0.0
      %3168 = vmatprep.subr.mxu0 0.0
      %3169 = vmatpush2.xpose.msra.mxu0 0.0
      %3170 = vmatprep.subr.mxu0 0.0
      %3171 = vmatpush2.xpose.msra.mxu0 0.0
      %3172 = vmatprep.subr.mxu0 0.0
      %3173 = vmatpush2.xpose.msra.mxu0 0.0
      %3174 = vmatprep.mubr.f32.mxu0 0.0
      %3175 = vmatmul.mubr.f32.gmra.mxu0 %v3106
      %v3176 = vpop.f32.mrf.mxu0
      %v3177 = vadd.f32 0.0, %v3176
      %v3178 = vpop.f32.mrf.mxu0
      %3179 = vdwg.mxu0
      %3180 = vrot.lane.b32.xlu0 %v889, 104
      %v3181 = vpop.permute.xlu0 %3180
      %3182 = vrot.lane.b32.xlu0 %v889, 72
      %v3183 = vpop.permute.xlu0 %3182
      %v3184 = vsel %vm725, %v3181, 0
      %v3186 = vsel %vm725, %v3183, 0
      %3188 = vmatprep.subr.mxu0 0.0
      %3189 = vmatpush1.xpose.msra.mxu0 0.0
      %3190 = vmatprep.subr.mxu0 0.0
      %3191 = vmatpush1.xpose.msra.mxu0 0.0
      %3192 = vmatprep.subr.mxu0 0.0
      %3193 = vmatpush1.xpose.msra.mxu0 0.0
      %3194 = vmatprep.subr.mxu0 0.0
      %3195 = vmatpush1.xpose.msra.mxu0 0.0
      %3196 = vmatprep.subr.mxu0 0.0
      %3197 = vmatpush1.xpose.msra.mxu0 0.0
      %3198 = vmatprep.subr.mxu0 0.0
      %3199 = vmatpush1.xpose.msra.mxu0 0.0
      %3200 = vmatprep.subr.mxu0 0.0
      %3201 = vmatpush1.xpose.msra.mxu0 0.0
      %3202 = vmatprep.subr.mxu0 0.0
      %3203 = vmatpush1.xpose.msra.mxu0 0.0
      %3204 = vmatprep.subr.mxu0 0.0
      %3205 = vmatpush1.xpose.msra.mxu0 0.0
      %3206 = vmatprep.subr.mxu0 0.0
      %3207 = vmatpush1.xpose.msra.mxu0 0.0
      %3208 = vmatprep.subr.mxu0 0.0
      %3209 = vmatpush1.xpose.msra.mxu0 0.0
      %3210 = vmatprep.subr.mxu0 0.0
      %3211 = vmatpush1.xpose.msra.mxu0 0.0
      %3212 = vmatprep.subr.mxu0 0.0
      %3213 = vmatpush1.xpose.msra.mxu0 0.0
      %3214 = vmatprep.subr.mxu0 0.0
      %3215 = vmatpush1.xpose.msra.mxu0 0.0
      %3216 = vmatprep.subr.mxu0 0.0
      %3217 = vmatpush1.xpose.msra.mxu0 0.0
      %3218 = vmatprep.subr.mxu0 0.0
      %3219 = vmatpush1.xpose.msra.mxu0 %v3186
      %3220 = vmatprep.subr.mxu0 0.0
      %3221 = vmatpush2.xpose.msra.mxu0 0.0
      %3222 = vmatprep.subr.mxu0 0.0
      %3223 = vmatpush2.xpose.msra.mxu0 0.0
      %3224 = vmatprep.subr.mxu0 0.0
      %3225 = vmatpush2.xpose.msra.mxu0 0.0
      %3226 = vmatprep.subr.mxu0 0.0
      %3227 = vmatpush2.xpose.msra.mxu0 0.0
      %3228 = vmatprep.subr.mxu0 0.0
      %3229 = vmatpush2.xpose.msra.mxu0 0.0
      %3230 = vmatprep.subr.mxu0 0.0
      %3231 = vmatpush2.xpose.msra.mxu0 0.0
      %3232 = vmatprep.subr.mxu0 0.0
      %3233 = vmatpush2.xpose.msra.mxu0 0.0
      %3234 = vmatprep.subr.mxu0 0.0
      %3235 = vmatpush2.xpose.msra.mxu0 0.0
      %3236 = vmatprep.subr.mxu0 0.0
      %3237 = vmatpush2.xpose.msra.mxu0 0.0
      %3238 = vmatprep.subr.mxu0 0.0
      %3239 = vmatpush2.xpose.msra.mxu0 0.0
      %3240 = vmatprep.subr.mxu0 0.0
      %3241 = vmatpush2.xpose.msra.mxu0 0.0
      %3242 = vmatprep.subr.mxu0 0.0
      %3243 = vmatpush2.xpose.msra.mxu0 0.0
      %3244 = vmatprep.subr.mxu0 0.0
      %3245 = vmatpush2.xpose.msra.mxu0 0.0
      %3246 = vmatprep.subr.mxu0 0.0
      %3247 = vmatpush2.xpose.msra.mxu0 0.0
      %3248 = vmatprep.subr.mxu0 0.0
      %3249 = vmatpush2.xpose.msra.mxu0 0.0
      %3250 = vmatprep.subr.mxu0 0.0
      %3251 = vmatpush2.xpose.msra.mxu0 0.0
      %3252 = vmatprep.mubr.f32.mxu0 0.0
      %3253 = vmatmul.mubr.f32.gmra.mxu0 %v3184
      %v3254 = vpop.f32.mrf.mxu0
      %v3255 = vadd.f32 0.0, %v3254
      %v3256 = vpop.f32.mrf.mxu0
      %3257 = vdwg.mxu0
      %3258 = vrot.lane.b32.xlu0 %v972, 104
      %v3259 = vpop.permute.xlu0 %3258
      %3260 = vrot.lane.b32.xlu0 %v972, 72
      %v3261 = vpop.permute.xlu0 %3260
      %v3262 = vsel %vm725, %v3259, 0
      %v3264 = vsel %vm725, %v3261, 0
      %3266 = vmatprep.subr.mxu0 0.0
      %3267 = vmatpush1.xpose.msra.mxu0 0.0
      %3268 = vmatprep.subr.mxu0 0.0
      %3269 = vmatpush1.xpose.msra.mxu0 0.0
      %3270 = vmatprep.subr.mxu0 0.0
      %3271 = vmatpush1.xpose.msra.mxu0 0.0
      %3272 = vmatprep.subr.mxu0 0.0
      %3273 = vmatpush1.xpose.msra.mxu0 0.0
      %3274 = vmatprep.subr.mxu0 0.0
      %3275 = vmatpush1.xpose.msra.mxu0 0.0
      %3276 = vmatprep.subr.mxu0 0.0
      %3277 = vmatpush1.xpose.msra.mxu0 0.0
      %3278 = vmatprep.subr.mxu0 0.0
      %3279 = vmatpush1.xpose.msra.mxu0 0.0
      %3280 = vmatprep.subr.mxu0 0.0
      %3281 = vmatpush1.xpose.msra.mxu0 0.0
      %3282 = vmatprep.subr.mxu0 0.0
      %3283 = vmatpush1.xpose.msra.mxu0 0.0
      %3284 = vmatprep.subr.mxu0 0.0
      %3285 = vmatpush1.xpose.msra.mxu0 0.0
      %3286 = vmatprep.subr.mxu0 0.0
      %3287 = vmatpush1.xpose.msra.mxu0 0.0
      %3288 = vmatprep.subr.mxu0 0.0
      %3289 = vmatpush1.xpose.msra.mxu0 0.0
      %3290 = vmatprep.subr.mxu0 0.0
      %3291 = vmatpush1.xpose.msra.mxu0 0.0
      %3292 = vmatprep.subr.mxu0 0.0
      %3293 = vmatpush1.xpose.msra.mxu0 0.0
      %3294 = vmatprep.subr.mxu0 0.0
      %3295 = vmatpush1.xpose.msra.mxu0 0.0
      %3296 = vmatprep.subr.mxu0 0.0
      %3297 = vmatpush1.xpose.msra.mxu0 %v3264
      %3298 = vmatprep.subr.mxu0 0.0
      %3299 = vmatpush2.xpose.msra.mxu0 0.0
      %3300 = vmatprep.subr.mxu0 0.0
      %3301 = vmatpush2.xpose.msra.mxu0 0.0
      %3302 = vmatprep.subr.mxu0 0.0
      %3303 = vmatpush2.xpose.msra.mxu0 0.0
      %3304 = vmatprep.subr.mxu0 0.0
      %3305 = vmatpush2.xpose.msra.mxu0 0.0
      %3306 = vmatprep.subr.mxu0 0.0
      %3307 = vmatpush2.xpose.msra.mxu0 0.0
      %3308 = vmatprep.subr.mxu0 0.0
      %3309 = vmatpush2.xpose.msra.mxu0 0.0
      %3310 = vmatprep.subr.mxu0 0.0
      %3311 = vmatpush2.xpose.msra.mxu0 0.0
      %3312 = vmatprep.subr.mxu0 0.0
      %3313 = vmatpush2.xpose.msra.mxu0 0.0
      %3314 = vmatprep.subr.mxu0 0.0
      %3315 = vmatpush2.xpose.msra.mxu0 0.0
      %3316 = vmatprep.subr.mxu0 0.0
      %3317 = vmatpush2.xpose.msra.mxu0 0.0
      %3318 = vmatprep.subr.mxu0 0.0
      %3319 = vmatpush2.xpose.msra.mxu0 0.0
      %3320 = vmatprep.subr.mxu0 0.0
      %3321 = vmatpush2.xpose.msra.mxu0 0.0
      %3322 = vmatprep.subr.mxu0 0.0
      %3323 = vmatpush2.xpose.msra.mxu0 0.0
      %3324 = vmatprep.subr.mxu0 0.0
      %3325 = vmatpush2.xpose.msra.mxu0 0.0
      %3326 = vmatprep.subr.mxu0 0.0
      %3327 = vmatpush2.xpose.msra.mxu0 0.0
      %3328 = vmatprep.subr.mxu0 0.0
      %3329 = vmatpush2.xpose.msra.mxu0 0.0
      %3330 = vmatprep.mubr.f32.mxu0 0.0
      %3331 = vmatmul.mubr.f32.gmra.mxu0 %v3262
      %v3332 = vpop.f32.mrf.mxu0
      %v3333 = vadd.f32 0.0, %v3332
      %v3334 = vpop.f32.mrf.mxu0
      %3335 = vdwg.mxu0
      %v3336 = vmul.f32 %v3099, 0.35355338
      %v3337 = vmul.f32 %v3177, 0.35355338
      %v3338 = vmul.f32 %v3255, 0.35355338
      %v3339 = vmul.f32 %v3333, 0.35355338
      %v3340 = vsel %vm1053, %v3336, -inf
      %3341 = vmax.xlane.f32.xlu0 %v3340
      %v3342 = vpop.xlane.xlu0 %3341
      %v3343 = vsel %vm1053, %v3337, -inf
      %3344 = vmax.xlane.f32.xlu0 %v3343
      %v3345 = vpop.xlane.xlu0 %3344
      %v3346 = vsel %vm1053, %v3338, -inf
      %3347 = vmax.xlane.f32.xlu0 %v3346
      %v3348 = vpop.xlane.xlu0 %3347
      %v3349 = vsel %vm1053, %v3339, -inf
      %3350 = vmax.xlane.f32.xlu0 %v3349
      %v3351 = vpop.xlane.xlu0 %3350
      %v3352 = vsub.f32 %v3336, %v3342
      %v3353 = vsub.f32 %v3337, %v3345
      %v3354 = vsub.f32 %v3338, %v3348
      %v3355 = vsub.f32 %v3339, %v3351
      %v3356 = vmul.f32 %v3352, 1.442695
      %v3357 = vpow.pop %v3356
      %v3358 = vmul.f32 %v3353, 1.442695
      %v3359 = vpow.pop %v3358
      %v3360 = vmul.f32 %v3354, 1.442695
      %v3361 = vpow.pop %v3360
      %v3362 = vmul.f32 %v3355, 1.442695
      %v3363 = vpow.pop %v3362
      %v3364 = vsel %vm1053, %v3357, 0.0
      %3365 = vadd.xlane.f32.xlu0 %v3364
      %v3366 = vpop.xlane.xlu0 %3365
      %v3367 = vsel %vm1053, %v3359, 0.0
      %3368 = vadd.xlane.f32.xlu0 %v3367
      %v3369 = vpop.xlane.xlu0 %3368
      %v3370 = vsel %vm1053, %v3361, 0.0
      %3371 = vadd.xlane.f32.xlu0 %v3370
      %v3372 = vpop.xlane.xlu0 %3371
      %v3373 = vsel %vm1053, %v3363, 0.0
      %3374 = vadd.xlane.f32.xlu0 %v3373
      %v3375 = vpop.xlane.xlu0 %3374
      %v3376 = vrcp.pop %v3366
      %v3377 = vmul.f32 %v3357, %v3376
      %v3378 = vrcp.pop %v3369
      %v3379 = vmul.f32 %v3359, %v3378
      %v3380 = vrcp.pop %v3372
      %v3381 = vmul.f32 %v3361, %v3380
      %v3382 = vrcp.pop %v3375
      %v3383 = vmul.f32 %v3363, %v3382
      %3384 = vrot.lane.b32.xlu0 %v722, 40
      %v3385 = vpop.permute.xlu0 %3384
      %v3387 = vsel %vm1100, %v3377, 0
      %v3389 = vsel %vm1104, %v3385, 0
      %3391 = vmatprep.subr.mxu0 0.0
      %3392 = vmatpush1.msra.mxu0 0.0
      %3393 = vmatprep.subr.mxu0 0.0
      %3394 = vmatpush1.msra.mxu0 0.0
      %3395 = vmatprep.subr.mxu0 0.0
      %3396 = vmatpush1.msra.mxu0 0.0
      %3397 = vmatprep.subr.mxu0 0.0
      %3398 = vmatpush1.msra.mxu0 0.0
      %3399 = vmatprep.subr.mxu0 0.0
      %3400 = vmatpush1.msra.mxu0 0.0
      %3401 = vmatprep.subr.mxu0 0.0
      %3402 = vmatpush1.msra.mxu0 0.0
      %3403 = vmatprep.subr.mxu0 0.0
      %3404 = vmatpush1.msra.mxu0 0.0
      %3405 = vmatprep.subr.mxu0 0.0
      %3406 = vmatpush1.msra.mxu0 0.0
      %3407 = vmatprep.subr.mxu0 0.0
      %3408 = vmatpush1.msra.mxu0 0.0
      %3409 = vmatprep.subr.mxu0 0.0
      %3410 = vmatpush1.msra.mxu0 0.0
      %3411 = vmatprep.subr.mxu0 0.0
      %3412 = vmatpush1.msra.mxu0 0.0
      %3413 = vmatprep.subr.mxu0 0.0
      %3414 = vmatpush1.msra.mxu0 0.0
      %3415 = vmatprep.subr.mxu0 0.0
      %3416 = vmatpush1.msra.mxu0 0.0
      %3417 = vmatprep.subr.mxu0 0.0
      %3418 = vmatpush1.msra.mxu0 0.0
      %3419 = vmatprep.subr.mxu0 0.0
      %3420 = vmatpush1.msra.mxu0 0.0
      %3421 = vmatprep.subr.mxu0 0.0
      %3422 = vmatpush1.msra.mxu0 %v3389
      %3423 = vmatprep.subr.mxu0 0.0
      %3424 = vmatpush2.msra.mxu0 0.0
      %3425 = vmatprep.subr.mxu0 0.0
      %3426 = vmatpush2.msra.mxu0 0.0
      %3427 = vmatprep.subr.mxu0 0.0
      %3428 = vmatpush2.msra.mxu0 0.0
      %3429 = vmatprep.subr.mxu0 0.0
      %3430 = vmatpush2.msra.mxu0 0.0
      %3431 = vmatprep.subr.mxu0 0.0
      %3432 = vmatpush2.msra.mxu0 0.0
      %3433 = vmatprep.subr.mxu0 0.0
      %3434 = vmatpush2.msra.mxu0 0.0
      %3435 = vmatprep.subr.mxu0 0.0
      %3436 = vmatpush2.msra.mxu0 0.0
      %3437 = vmatprep.subr.mxu0 0.0
      %3438 = vmatpush2.msra.mxu0 0.0
      %3439 = vmatprep.subr.mxu0 0.0
      %3440 = vmatpush2.msra.mxu0 0.0
      %3441 = vmatprep.subr.mxu0 0.0
      %3442 = vmatpush2.msra.mxu0 0.0
      %3443 = vmatprep.subr.mxu0 0.0
      %3444 = vmatpush2.msra.mxu0 0.0
      %3445 = vmatprep.subr.mxu0 0.0
      %3446 = vmatpush2.msra.mxu0 0.0
      %3447 = vmatprep.subr.mxu0 0.0
      %3448 = vmatpush2.msra.mxu0 0.0
      %3449 = vmatprep.subr.mxu0 0.0
      %3450 = vmatpush2.msra.mxu0 0.0
      %3451 = vmatprep.subr.mxu0 0.0
      %3452 = vmatpush2.msra.mxu0 0.0
      %3453 = vmatprep.subr.mxu0 0.0
      %3454 = vmatpush2.msra.mxu0 0.0
      %3455 = vmatprep.mubr.f32.mxu0 0.0
      %3456 = vmatmul.mubr.f32.gmra.mxu0 %v3387
      %v3457 = vpop.f32.mrf.mxu0
      %v3458 = vadd.f32 0.0, %v3457
      %v3459 = vpop.f32.mrf.mxu0
      %3460 = vdwg.mxu0
      %3461 = vrot.lane.b32.xlu0 %v806, 40
      %v3462 = vpop.permute.xlu0 %3461
      %v3464 = vsel %vm1100, %v3379, 0
      %v3466 = vsel %vm1104, %v3462, 0
      %3468 = vmatprep.subr.mxu0 0.0
      %3469 = vmatpush1.msra.mxu0 0.0
      %3470 = vmatprep.subr.mxu0 0.0
      %3471 = vmatpush1.msra.mxu0 0.0
      %3472 = vmatprep.subr.mxu0 0.0
      %3473 = vmatpush1.msra.mxu0 0.0
      %3474 = vmatprep.subr.mxu0 0.0
      %3475 = vmatpush1.msra.mxu0 0.0
      %3476 = vmatprep.subr.mxu0 0.0
      %3477 = vmatpush1.msra.mxu0 0.0
      %3478 = vmatprep.subr.mxu0 0.0
      %3479 = vmatpush1.msra.mxu0 0.0
      %3480 = vmatprep.subr.mxu0 0.0
      %3481 = vmatpush1.msra.mxu0 0.0
      %3482 = vmatprep.subr.mxu0 0.0
      %3483 = vmatpush1.msra.mxu0 0.0
      %3484 = vmatprep.subr.mxu0 0.0
      %3485 = vmatpush1.msra.mxu0 0.0
      %3486 = vmatprep.subr.mxu0 0.0
      %3487 = vmatpush1.msra.mxu0 0.0
      %3488 = vmatprep.subr.mxu0 0.0
      %3489 = vmatpush1.msra.mxu0 0.0
      %3490 = vmatprep.subr.mxu0 0.0
      %3491 = vmatpush1.msra.mxu0 0.0
      %3492 = vmatprep.subr.mxu0 0.0
      %3493 = vmatpush1.msra.mxu0 0.0
      %3494 = vmatprep.subr.mxu0 0.0
      %3495 = vmatpush1.msra.mxu0 0.0
      %3496 = vmatprep.subr.mxu0 0.0
      %3497 = vmatpush1.msra.mxu0 0.0
      %3498 = vmatprep.subr.mxu0 0.0
      %3499 = vmatpush1.msra.mxu0 %v3466
      %3500 = vmatprep.subr.mxu0 0.0
      %3501 = vmatpush2.msra.mxu0 0.0
      %3502 = vmatprep.subr.mxu0 0.0
      %3503 = vmatpush2.msra.mxu0 0.0
      %3504 = vmatprep.subr.mxu0 0.0
      %3505 = vmatpush2.msra.mxu0 0.0
      %3506 = vmatprep.subr.mxu0 0.0
      %3507 = vmatpush2.msra.mxu0 0.0
      %3508 = vmatprep.subr.mxu0 0.0
      %3509 = vmatpush2.msra.mxu0 0.0
      %3510 = vmatprep.subr.mxu0 0.0
      %3511 = vmatpush2.msra.mxu0 0.0
      %3512 = vmatprep.subr.mxu0 0.0
      %3513 = vmatpush2.msra.mxu0 0.0
      %3514 = vmatprep.subr.mxu0 0.0
      %3515 = vmatpush2.msra.mxu0 0.0
      %3516 = vmatprep.subr.mxu0 0.0
      %3517 = vmatpush2.msra.mxu0 0.0
      %3518 = vmatprep.subr.mxu0 0.0
      %3519 = vmatpush2.msra.mxu0 0.0
      %3520 = vmatprep.subr.mxu0 0.0
      %3521 = vmatpush2.msra.mxu0 0.0
      %3522 = vmatprep.subr.mxu0 0.0
      %3523 = vmatpush2.msra.mxu0 0.0
      %3524 = vmatprep.subr.mxu0 0.0
      %3525 = vmatpush2.msra.mxu0 0.0
      %3526 = vmatprep.subr.mxu0 0.0
      %3527 = vmatpush2.msra.mxu0 0.0
      %3528 = vmatprep.subr.mxu0 0.0
      %3529 = vmatpush2.msra.mxu0 0.0
      %3530 = vmatprep.subr.mxu0 0.0
      %3531 = vmatpush2.msra.mxu0 0.0
      %3532 = vmatprep.mubr.f32.mxu0 0.0
      %3533 = vmatmul.mubr.f32.gmra.mxu0 %v3464
      %v3534 = vpop.f32.mrf.mxu0
      %v3535 = vadd.f32 0.0, %v3534
      %v3536 = vpop.f32.mrf.mxu0
      %3537 = vdwg.mxu0
      %3538 = vrot.lane.b32.xlu0 %v889, 40
      %v3539 = vpop.permute.xlu0 %3538
      %v3541 = vsel %vm1100, %v3381, 0
      %v3543 = vsel %vm1104, %v3539, 0
      %3545 = vmatprep.subr.mxu0 0.0
      %3546 = vmatpush1.msra.mxu0 0.0
      %3547 = vmatprep.subr.mxu0 0.0
      %3548 = vmatpush1.msra.mxu0 0.0
      %3549 = vmatprep.subr.mxu0 0.0
      %3550 = vmatpush1.msra.mxu0 0.0
      %3551 = vmatprep.subr.mxu0 0.0
      %3552 = vmatpush1.msra.mxu0 0.0
      %3553 = vmatprep.subr.mxu0 0.0
      %3554 = vmatpush1.msra.mxu0 0.0
      %3555 = vmatprep.subr.mxu0 0.0
      %3556 = vmatpush1.msra.mxu0 0.0
      %3557 = vmatprep.subr.mxu0 0.0
      %3558 = vmatpush1.msra.mxu0 0.0
      %3559 = vmatprep.subr.mxu0 0.0
      %3560 = vmatpush1.msra.mxu0 0.0
      %3561 = vmatprep.subr.mxu0 0.0
      %3562 = vmatpush1.msra.mxu0 0.0
      %3563 = vmatprep.subr.mxu0 0.0
      %3564 = vmatpush1.msra.mxu0 0.0
      %3565 = vmatprep.subr.mxu0 0.0
      %3566 = vmatpush1.msra.mxu0 0.0
      %3567 = vmatprep.subr.mxu0 0.0
      %3568 = vmatpush1.msra.mxu0 0.0
      %3569 = vmatprep.subr.mxu0 0.0
      %3570 = vmatpush1.msra.mxu0 0.0
      %3571 = vmatprep.subr.mxu0 0.0
      %3572 = vmatpush1.msra.mxu0 0.0
      %3573 = vmatprep.subr.mxu0 0.0
      %3574 = vmatpush1.msra.mxu0 0.0
      %3575 = vmatprep.subr.mxu0 0.0
      %3576 = vmatpush1.msra.mxu0 %v3543
      %3577 = vmatprep.subr.mxu0 0.0
      %3578 = vmatpush2.msra.mxu0 0.0
      %3579 = vmatprep.subr.mxu0 0.0
      %3580 = vmatpush2.msra.mxu0 0.0
      %3581 = vmatprep.subr.mxu0 0.0
      %3582 = vmatpush2.msra.mxu0 0.0
      %3583 = vmatprep.subr.mxu0 0.0
      %3584 = vmatpush2.msra.mxu0 0.0
      %3585 = vmatprep.subr.mxu0 0.0
      %3586 = vmatpush2.msra.mxu0 0.0
      %3587 = vmatprep.subr.mxu0 0.0
      %3588 = vmatpush2.msra.mxu0 0.0
      %3589 = vmatprep.subr.mxu0 0.0
      %3590 = vmatpush2.msra.mxu0 0.0
      %3591 = vmatprep.subr.mxu0 0.0
      %3592 = vmatpush2.msra.mxu0 0.0
      %3593 = vmatprep.subr.mxu0 0.0
      %3594 = vmatpush2.msra.mxu0 0.0
      %3595 = vmatprep.subr.mxu0 0.0
      %3596 = vmatpush2.msra.mxu0 0.0
      %3597 = vmatprep.subr.mxu0 0.0
      %3598 = vmatpush2.msra.mxu0 0.0
      %3599 = vmatprep.subr.mxu0 0.0
      %3600 = vmatpush2.msra.mxu0 0.0
      %3601 = vmatprep.subr.mxu0 0.0
      %3602 = vmatpush2.msra.mxu0 0.0
      %3603 = vmatprep.subr.mxu0 0.0
      %3604 = vmatpush2.msra.mxu0 0.0
      %3605 = vmatprep.subr.mxu0 0.0
      %3606 = vmatpush2.msra.mxu0 0.0
      %3607 = vmatprep.subr.mxu0 0.0
      %3608 = vmatpush2.msra.mxu0 0.0
      %3609 = vmatprep.mubr.f32.mxu0 0.0
      %3610 = vmatmul.mubr.f32.gmra.mxu0 %v3541
      %v3611 = vpop.f32.mrf.mxu0
      %v3612 = vadd.f32 0.0, %v3611
      %v3613 = vpop.f32.mrf.mxu0
      %3614 = vdwg.mxu0
      %3615 = vrot.lane.b32.xlu0 %v972, 40
      %v3616 = vpop.permute.xlu0 %3615
      %v3618 = vsel %vm1100, %v3383, 0
      %v3620 = vsel %vm1104, %v3616, 0
      %3622 = vmatprep.subr.mxu0 0.0
      %3623 = vmatpush1.msra.mxu0 0.0
      %3624 = vmatprep.subr.mxu0 0.0
      %3625 = vmatpush1.msra.mxu0 0.0
      %3626 = vmatprep.subr.mxu0 0.0
      %3627 = vmatpush1.msra.mxu0 0.0
      %3628 = vmatprep.subr.mxu0 0.0
      %3629 = vmatpush1.msra.mxu0 0.0
      %3630 = vmatprep.subr.mxu0 0.0
      %3631 = vmatpush1.msra.mxu0 0.0
      %3632 = vmatprep.subr.mxu0 0.0
      %3633 = vmatpush1.msra.mxu0 0.0
      %3634 = vmatprep.subr.mxu0 0.0
      %3635 = vmatpush1.msra.mxu0 0.0
      %3636 = vmatprep.subr.mxu0 0.0
      %3637 = vmatpush1.msra.mxu0 0.0
      %3638 = vmatprep.subr.mxu0 0.0
      %3639 = vmatpush1.msra.mxu0 0.0
      %3640 = vmatprep.subr.mxu0 0.0
      %3641 = vmatpush1.msra.mxu0 0.0
      %3642 = vmatprep.subr.mxu0 0.0
      %3643 = vmatpush1.msra.mxu0 0.0
      %3644 = vmatprep.subr.mxu0 0.0
      %3645 = vmatpush1.msra.mxu0 0.0
      %3646 = vmatprep.subr.mxu0 0.0
      %3647 = vmatpush1.msra.mxu0 0.0
      %3648 = vmatprep.subr.mxu0 0.0
      %3649 = vmatpush1.msra.mxu0 0.0
      %3650 = vmatprep.subr.mxu0 0.0
      %3651 = vmatpush1.msra.mxu0 0.0
      %3652 = vmatprep.subr.mxu0 0.0
      %3653 = vmatpush1.msra.mxu0 %v3620
      %3654 = vmatprep.subr.mxu0 0.0
      %3655 = vmatpush2.msra.mxu0 0.0
      %3656 = vmatprep.subr.mxu0 0.0
      %3657 = vmatpush2.msra.mxu0 0.0
      %3658 = vmatprep.subr.mxu0 0.0
      %3659 = vmatpush2.msra.mxu0 0.0
      %3660 = vmatprep.subr.mxu0 0.0
      %3661 = vmatpush2.msra.mxu0 0.0
      %3662 = vmatprep.subr.mxu0 0.0
      %3663 = vmatpush2.msra.mxu0 0.0
      %3664 = vmatprep.subr.mxu0 0.0
      %3665 = vmatpush2.msra.mxu0 0.0
      %3666 = vmatprep.subr.mxu0 0.0
      %3667 = vmatpush2.msra.mxu0 0.0
      %3668 = vmatprep.subr.mxu0 0.0
      %3669 = vmatpush2.msra.mxu0 0.0
      %3670 = vmatprep.subr.mxu0 0.0
      %3671 = vmatpush2.msra.mxu0 0.0
      %3672 = vmatprep.subr.mxu0 0.0
      %3673 = vmatpush2.msra.mxu0 0.0
      %3674 = vmatprep.subr.mxu0 0.0
      %3675 = vmatpush2.msra.mxu0 0.0
      %3676 = vmatprep.subr.mxu0 0.0
      %3677 = vmatpush2.msra.mxu0 0.0
      %3678 = vmatprep.subr.mxu0 0.0
      %3679 = vmatpush2.msra.mxu0 0.0
      %3680 = vmatprep.subr.mxu0 0.0
      %3681 = vmatpush2.msra.mxu0 0.0
      %3682 = vmatprep.subr.mxu0 0.0
      %3683 = vmatpush2.msra.mxu0 0.0
      %3684 = vmatprep.subr.mxu0 0.0
      %3685 = vmatpush2.msra.mxu0 0.0
      %3686 = vmatprep.mubr.f32.mxu0 0.0
      %3687 = vmatmul.mubr.f32.gmra.mxu0 %v3618
      %v3688 = vpop.f32.mrf.mxu0
      %v3689 = vadd.f32 0.0, %v3688
      %v3690 = vpop.f32.mrf.mxu0
      %3691 = vdwg.mxu0
      %v3696 = vcombine.low %v3458, %v3535
      %v3697 = vcombine.low %v3612, %v3689
      %v3699 = vunpack.c.l.s4 1983009808
      %v3700 = vunpack.c.0.s8 %v3699
      %v3701 = vlaneseq
      %v3702 = vshrl.u32 %v3701, 7
      %v3703 = vsub.s32 %v3700, %v3702
      %v3704 = vrot.slane %v3696, %v3703
      %v3706 = vunpack.c.l.s4 1983009808
      %v3707 = vunpack.c.0.s8 %v3706
      %v3708 = vlaneseq
      %v3709 = vshrl.u32 %v3708, 7
      %v3710 = vsub.s32 %v3707, %v3709
      %v3711 = vrot.slane %v3697, %v3710
      %v3712 = vcombine.low %v3704, %v3711
      %v3713 = vsel %vm725, %v3712, 0
      %3715 = vmatprep.subr.mxu0 0.0
      %3716 = vmatpush1.msra.mxu0 0.0
      %3717 = vmatprep.subr.mxu0 0.0
      %3718 = vmatpush1.msra.mxu0 0.0
      %3719 = vmatprep.subr.mxu0 0.0
      %3720 = vmatpush1.msra.mxu0 0.0
      %3721 = vmatprep.subr.mxu0 0.0
      %3722 = vmatpush1.msra.mxu0 0.0
      %3723 = vmatprep.subr.mxu0 0.0
      %3724 = vmatpush1.msra.mxu0 0.0
      %3725 = vmatprep.subr.mxu0 0.0
      %3726 = vmatpush1.msra.mxu0 0.0
      %3727 = vmatprep.subr.mxu0 0.0
      %3728 = vmatpush1.msra.mxu0 0.0
      %3729 = vmatprep.subr.mxu0 0.0
      %3730 = vmatpush1.msra.mxu0 0.0
      %3731 = vmatprep.subr.mxu0 0.0
      %3732 = vmatpush1.msra.mxu0 0.0
      %3733 = vmatprep.subr.mxu0 0.0
      %3734 = vmatpush1.msra.mxu0 0.0
      %3735 = vmatprep.subr.mxu0 0.0
      %3736 = vmatpush1.msra.mxu0 0.0
      %3737 = vmatprep.subr.mxu0 0.0
      %3738 = vmatpush1.msra.mxu0 0.0
      %3739 = vmatprep.subr.mxu0 0.0
      %3740 = vmatpush1.msra.mxu0 0.0
      %3741 = vmatprep.subr.mxu0 0.0
      %3742 = vmatpush1.msra.mxu0 0.0
      %3743 = vmatprep.subr.mxu0 0.0
      %3744 = vmatpush1.msra.mxu0 0.0
      %3745 = vmatprep.subr.mxu0 0.0
      %3746 = vmatpush1.msra.mxu0 %v715
      %3747 = vmatprep.subr.mxu0 0.0
      %3748 = vmatpush2.msra.mxu0 0.0
      %3749 = vmatprep.subr.mxu0 0.0
      %3750 = vmatpush2.msra.mxu0 0.0
      %3751 = vmatprep.subr.mxu0 0.0
      %3752 = vmatpush2.msra.mxu0 0.0
      %3753 = vmatprep.subr.mxu0 0.0
      %3754 = vmatpush2.msra.mxu0 0.0
      %3755 = vmatprep.subr.mxu0 0.0
      %3756 = vmatpush2.msra.mxu0 0.0
      %3757 = vmatprep.subr.mxu0 0.0
      %3758 = vmatpush2.msra.mxu0 0.0
      %3759 = vmatprep.subr.mxu0 0.0
      %3760 = vmatpush2.msra.mxu0 0.0
      %3761 = vmatprep.subr.mxu0 0.0
      %3762 = vmatpush2.msra.mxu0 0.0
      %3763 = vmatprep.subr.mxu0 0.0
      %3764 = vmatpush2.msra.mxu0 0.0
      %3765 = vmatprep.subr.mxu0 0.0
      %3766 = vmatpush2.msra.mxu0 0.0
      %3767 = vmatprep.subr.mxu0 0.0
      %3768 = vmatpush2.msra.mxu0 0.0
      %3769 = vmatprep.subr.mxu0 0.0
      %3770 = vmatpush2.msra.mxu0 0.0
      %3771 = vmatprep.subr.mxu0 0.0
      %3772 = vmatpush2.msra.mxu0 0.0
      %3773 = vmatprep.subr.mxu0 0.0
      %3774 = vmatpush2.msra.mxu0 0.0
      %3775 = vmatprep.subr.mxu0 0.0
      %3776 = vmatpush2.msra.mxu0 0.0
      %3777 = vmatprep.subr.mxu0 0.0
      %3778 = vmatpush2.msra.mxu0 0.0
      %3779 = vmatprep.mubr.f32.mxu0 0.0
      %3780 = vmatmul.mubr.f32.gmra.mxu0 %v3713
      %v3781 = vpop.f32.mrf.mxu0
      %v3782 = vadd.f32 0.0, %v3781
      %v3783 = vpop.f32.mrf.mxu0
      %3784 = vdwg.mxu0
      %v3785 = vadd.f32 %v3023, %v3782
      %v3786 = vld [vmem:[%s6] sm:$0x1]
      %v3788 = vlaneseq
      %v3789 = vshrl.u32 %v3788, 7
      %v3790 = vsub.s32 0, %v3789
      %v3791 = vrot.slane %v3786, %v3790
      %v3793 = vadd.f32 %v3785, %v3791
      %v3794 = vadd.f32 %v608, %v3793
      %v3795 = vld [vmem:[%s7] sm:$0x1]
      %v3796 = vld [vmem:[%s8] sm:$0x1]
      %v3797 = vsel %vm620, %v3794, 0.0
      %3798 = vadd.xlane.f32.xlu0 %v3797
      %v3799 = vpop.xlane.xlu0 %3798
      %v3800 = vrcp.pop 32.0
      %v3801 = vmul.f32 %v3799, %v3800
      %v3802 = vsub.f32 %v3794, %v3801
      %v3803 = vmul.f32 %v3802, %v3802
      %v3804 = vsel %vm620, %v3803, 0.0
      %3805 = vadd.xlane.f32.xlu0 %v3804
      %v3806 = vpop.xlane.xlu0 %3805
      %v3807 = vmul.f32 %v3806, %v3800
      %v3808 = vadd.f32 %v3807, 1e-05
      %v3809 = vrsqrt.pop %v3808
      %v3810 = vmul.f32 %v3802, %v3809
      %v3812 = vlaneseq
      %v3813 = vshrl.u32 %v3812, 7
      %v3814 = vsub.s32 0, %v3813
      %v3815 = vrot.slane %v3795, %v3814
      %v3817 = vmul.f32 %v3810, %v3815
      %v3819 = vlaneseq
      %v3820 = vshrl.u32 %v3819, 7
      %v3821 = vsub.s32 0, %v3820
      %v3822 = vrot.slane %v3796, %v3821
      %v3824 = vadd.f32 %v3817, %v3822
      %v3825 = vld [vmem:[%s9] sm:$0xff]
      %v3826 = vld [vmem:[%s9 + $0x8] sm:$0xff]
      %v3827 = vld [vmem:[%s9 + $0x10] sm:$0xff]
      %v3828 = vld [vmem:[%s9 + $0x18] sm:$0xff]
      %v3829 = vld [vmem:[%s9 + $0x20] sm:$0xff]
      %v3830 = vld [vmem:[%s9 + $0x28] sm:$0xff]
      %v3831 = vld [vmem:[%s9 + $0x30] sm:$0xff]
      %v3832 = vld [vmem:[%s9 + $0x38] sm:$0xff]
      %v3833 = vld [vmem:[%s9 + $0x40] sm:$0xff]
      %v3834 = vld [vmem:[%s9 + $0x48] sm:$0xff]
      %v3835 = vld [vmem:[%s9 + $0x50] sm:$0xff]
      %v3836 = vld [vmem:[%s9 + $0x58] sm:$0xff]
      %v3837 = vld [vmem:[%s9 + $0x60] sm:$0xff]
      %v3838 = vld [vmem:[%s9 + $0x68] sm:$0xff]
      %v3839 = vld [vmem:[%s9 + $0x70] sm:$0xff]
      %v3840 = vld [vmem:[%s9 + $0x78] sm:$0xff]
      %v3841 = vld [vmem:[%s9 + $0x80] sm:$0xff]
      %v3842 = vld [vmem:[%s9 + $0x88] sm:$0xff]
      %v3843 = vld [vmem:[%s9 + $0x90] sm:$0xff]
      %v3844 = vld [vmem:[%s9 + $0x98] sm:$0xff]
      %v3845 = vld [vmem:[%s9 + $0xa0] sm:$0xff]
      %v3846 = vld [vmem:[%s9 + $0xa8] sm:$0xff]
      %v3847 = vld [vmem:[%s9 + $0xb0] sm:$0xff]
      %v3848 = vld [vmem:[%s9 + $0xb8] sm:$0xff]
      %v3849 = vld [vmem:[%s9 + $0xc0] sm:$0xff]
      %v3850 = vld [vmem:[%s9 + $0xc8] sm:$0xff]
      %v3851 = vld [vmem:[%s9 + $0xd0] sm:$0xff]
      %v3852 = vld [vmem:[%s9 + $0xd8] sm:$0xff]
      %v3853 = vld [vmem:[%s9 + $0xe0] sm:$0xff]
      %v3854 = vld [vmem:[%s9 + $0xe8] sm:$0xff]
      %v3855 = vld [vmem:[%s9 + $0xf0] sm:$0xff]
      %v3856 = vld [vmem:[%s9 + $0xf8] sm:$0xff]
      %v3857 = vld [vmem:[%s9 + $0x100] sm:$0xff]
      %v3858 = vld [vmem:[%s9 + $0x108] sm:$0xff]
      %v3859 = vld [vmem:[%s9 + $0x110] sm:$0xff]
      %v3860 = vld [vmem:[%s9 + $0x118] sm:$0xff]
      %v3861 = vld [vmem:[%s9 + $0x120] sm:$0xff]
      %v3862 = vld [vmem:[%s9 + $0x128] sm:$0xff]
      %v3863 = vld [vmem:[%s9 + $0x130] sm:$0xff]
      %v3864 = vld [vmem:[%s9 + $0x138] sm:$0xff]
      %v3865 = vld [vmem:[%s9 + $0x140] sm:$0xff]
      %v3866 = vld [vmem:[%s9 + $0x148] sm:$0xff]
      %v3867 = vld [vmem:[%s9 + $0x150] sm:$0xff]
      %v3868 = vld [vmem:[%s9 + $0x158] sm:$0xff]
      %v3869 = vld [vmem:[%s9 + $0x160] sm:$0xff]
      %v3870 = vld [vmem:[%s9 + $0x168] sm:$0xff]
      %v3871 = vld [vmem:[%s9 + $0x170] sm:$0xff]
      %v3872 = vld [vmem:[%s9 + $0x178] sm:$0xff]
      %v3873 = vld [vmem:[%s9 + $0x180] sm:$0xff]
      %v3874 = vld [vmem:[%s9 + $0x188] sm:$0xff]
      %v3875 = vld [vmem:[%s9 + $0x190] sm:$0xff]
      %v3876 = vld [vmem:[%s9 + $0x198] sm:$0xff]
      %v3877 = vld [vmem:[%s9 + $0x1a0] sm:$0xff]
      %v3878 = vld [vmem:[%s9 + $0x1a8] sm:$0xff]
      %v3879 = vld [vmem:[%s9 + $0x1b0] sm:$0xff]
      %v3880 = vld [vmem:[%s9 + $0x1b8] sm:$0xff]
      %v3881 = vld [vmem:[%s9 + $0x1c0] sm:$0xff]
      %v3882 = vld [vmem:[%s9 + $0x1c8] sm:$0xff]
      %v3883 = vld [vmem:[%s9 + $0x1d0] sm:$0xff]
      %v3884 = vld [vmem:[%s9 + $0x1d8] sm:$0xff]
      %v3885 = vld [vmem:[%s9 + $0x1e0] sm:$0xff]
      %v3886 = vld [vmem:[%s9 + $0x1e8] sm:$0xff]
      %v3887 = vld [vmem:[%s9 + $0x1f0] sm:$0xff]
      %v3888 = vld [vmem:[%s9 + $0x1f8] sm:$0xff]
      %v3889 = vld [vmem:[%s10] sm:$0xff]
      %v3890 = vld [vmem:[%s10 + $0x8] sm:$0xff]
      %v3893 = vlaneseq
      %v3894 = vshrl.u32 %v3893, 7
      %v3895 = vsub.s32 0, %v3894
      %v3896 = vrot.slane %v3889, %v3895
      %v3897 = vlaneseq
      %v3898 = vshrl.u32 %v3897, 7
      %v3899 = vsub.s32 1, %v3898
      %v3900 = vrot.slane %v3889, %v3899
      %v3901 = vlaneseq
      %v3902 = vshrl.u32 %v3901, 7
      %v3903 = vsub.s32 2, %v3902
      %v3904 = vrot.slane %v3889, %v3903
      %v3905 = vlaneseq
      %v3906 = vshrl.u32 %v3905, 7
      %v3907 = vsub.s32 3, %v3906
      %v3908 = vrot.slane %v3889, %v3907
      %v3909 = vlaneseq
      %v3910 = vshrl.u32 %v3909, 7
      %v3911 = vsub.s32 4, %v3910
      %v3912 = vrot.slane %v3889, %v3911
      %v3913 = vlaneseq
      %v3914 = vshrl.u32 %v3913, 7
      %v3915 = vsub.s32 5, %v3914
      %v3916 = vrot.slane %v3889, %v3915
      %v3917 = vlaneseq
      %v3918 = vshrl.u32 %v3917, 7
      %v3919 = vsub.s32 6, %v3918
      %v3920 = vrot.slane %v3889, %v3919
      %v3921 = vlaneseq
      %v3922 = vshrl.u32 %v3921, 7
      %v3923 = vsub.s32 7, %v3922
      %v3924 = vrot.slane %v3889, %v3923
      %v3925 = vlaneseq
      %v3926 = vshrl.u32 %v3925, 7
      %v3927 = vsub.s32 0, %v3926
      %v3928 = vrot.slane %v3890, %v3927
      %v3929 = vlaneseq
      %v3930 = vshrl.u32 %v3929, 7
      %v3931 = vsub.s32 1, %v3930
      %v3932 = vrot.slane %v3890, %v3931
      %v3933 = vlaneseq
      %v3934 = vshrl.u32 %v3933, 7
      %v3935 = vsub.s32 2, %v3934
      %v3936 = vrot.slane %v3890, %v3935
      %v3937 = vlaneseq
      %v3938 = vshrl.u32 %v3937, 7
      %v3939 = vsub.s32 3, %v3938
      %v3940 = vrot.slane %v3890, %v3939
      %v3941 = vlaneseq
      %v3942 = vshrl.u32 %v3941, 7
      %v3943 = vsub.s32 4, %v3942
      %v3944 = vrot.slane %v3890, %v3943
      %v3945 = vlaneseq
      %v3946 = vshrl.u32 %v3945, 7
      %v3947 = vsub.s32 5, %v3946
      %v3948 = vrot.slane %v3890, %v3947
      %v3949 = vlaneseq
      %v3950 = vshrl.u32 %v3949, 7
      %v3951 = vsub.s32 6, %v3950
      %v3952 = vrot.slane %v3890, %v3951
      %v3953 = vlaneseq
      %v3954 = vshrl.u32 %v3953, 7
      %v3955 = vsub.s32 7, %v3954
      %v3956 = vrot.slane %v3890, %v3955
      %v3974 = vsel %vm620, %v3824, 0
      %3976 = vmatprep.subr.mxu0 0.0
      %3977 = vmatpush1.msra.mxu0 0.0
      %3978 = vmatprep.subr.mxu0 0.0
      %3979 = vmatpush1.msra.mxu0 0.0
      %3980 = vmatprep.subr.mxu0 0.0
      %3981 = vmatpush1.msra.mxu0 0.0
      %3982 = vmatprep.subr.mxu0 0.0
      %3983 = vmatpush1.msra.mxu0 0.0
      %3984 = vmatprep.subr.mxu0 0.0
      %3985 = vmatpush1.msra.mxu0 0.0
      %3986 = vmatprep.subr.mxu0 0.0
      %3987 = vmatpush1.msra.mxu0 0.0
      %3988 = vmatprep.subr.mxu0 0.0
      %3989 = vmatpush1.msra.mxu0 0.0
      %3990 = vmatprep.subr.mxu0 0.0
      %3991 = vmatpush1.msra.mxu0 0.0
      %3992 = vmatprep.subr.mxu0 0.0
      %3993 = vmatpush1.msra.mxu0 0.0
      %3994 = vmatprep.subr.mxu0 0.0
      %3995 = vmatpush1.msra.mxu0 0.0
      %3996 = vmatprep.subr.mxu0 0.0
      %3997 = vmatpush1.msra.mxu0 0.0
      %3998 = vmatprep.subr.mxu0 0.0
      %3999 = vmatpush1.msra.mxu0 0.0
      %4000 = vmatprep.subr.mxu0 %v3874
      %4001 = vmatpush1.msra.mxu0 %v3873
      %4002 = vmatprep.subr.mxu0 %v3858
      %4003 = vmatpush1.msra.mxu0 %v3857
      %4004 = vmatprep.subr.mxu0 %v3842
      %4005 = vmatpush1.msra.mxu0 %v3841
      %4006 = vmatprep.subr.mxu0 %v3826
      %4007 = vmatpush1.msra.mxu0 %v3825
      %4008 = vmatprep.subr.mxu0 0.0
      %4009 = vmatpush2.msra.mxu0 0.0
      %4010 = vmatprep.subr.mxu0 0.0
      %4011 = vmatpush2.msra.mxu0 0.0
      %4012 = vmatprep.subr.mxu0 0.0
      %4013 = vmatpush2.msra.mxu0 0.0
      %4014 = vmatprep.subr.mxu0 0.0
      %4015 = vmatpush2.msra.mxu0 0.0
      %4016 = vmatprep.subr.mxu0 0.0
      %4017 = vmatpush2.msra.mxu0 0.0
      %4018 = vmatprep.subr.mxu0 0.0
      %4019 = vmatpush2.msra.mxu0 0.0
      %4020 = vmatprep.subr.mxu0 0.0
      %4021 = vmatpush2.msra.mxu0 0.0
      %4022 = vmatprep.subr.mxu0 0.0
      %4023 = vmatpush2.msra.mxu0 0.0
      %4024 = vmatprep.subr.mxu0 0.0
      %4025 = vmatpush2.msra.mxu0 0.0
      %4026 = vmatprep.subr.mxu0 0.0
      %4027 = vmatpush2.msra.mxu0 0.0
      %4028 = vmatprep.subr.mxu0 0.0
      %4029 = vmatpush2.msra.mxu0 0.0
      %4030 = vmatprep.subr.mxu0 0.0
      %4031 = vmatpush2.msra.mxu0 0.0
      %4032 = vmatprep.subr.mxu0 0.0
      %4033 = vmatpush2.msra.mxu0 0.0
      %4034 = vmatprep.subr.mxu0 0.0
      %4035 = vmatpush2.msra.mxu0 0.0
      %4036 = vmatprep.subr.mxu0 0.0
      %4037 = vmatpush2.msra.mxu0 0.0
      %4038 = vmatprep.subr.mxu0 0.0
      %4039 = vmatpush2.msra.mxu0 0.0
      %4040 = vmatprep.mubr.f32.mxu0 0.0
      %4041 = vmatmul.mubr.f32.gmra.mxu0 %v3974
      %v4042 = vpop.f32.mrf.mxu0
      %v4043 = vadd.f32 %v3896, %v4042
      %v4044 = vpop.f32.mrf.mxu0
      %v4045 = vadd.f32 %v3900, %v4044
      %4046 = vdwg.mxu0
      %4047 = vmatprep.subr.mxu0 0.0
      %4048 = vmatpush1.msra.mxu0 0.0
      %4049 = vmatprep.subr.mxu0 0.0
      %4050 = vmatpush1.msra.mxu0 0.0
      %4051 = vmatprep.subr.mxu0 0.0
      %4052 = vmatpush1.msra.mxu0 0.0
      %4053 = vmatprep.subr.mxu0 0.0
      %4054 = vmatpush1.msra.mxu0 0.0
      %4055 = vmatprep.subr.mxu0 0.0
      %4056 = vmatpush1.msra.mxu0 0.0
      %4057 = vmatprep.subr.mxu0 0.0
      %4058 = vmatpush1.msra.mxu0 0.0
      %4059 = vmatprep.subr.mxu0 0.0
      %4060 = vmatpush1.msra.mxu0 0.0
      %4061 = vmatprep.subr.mxu0 0.0
      %4062 = vmatpush1.msra.mxu0 0.0
      %4063 = vmatprep.subr.mxu0 0.0
      %4064 = vmatpush1.msra.mxu0 0.0
      %4065 = vmatprep.subr.mxu0 0.0
      %4066 = vmatpush1.msra.mxu0 0.0
      %4067 = vmatprep.subr.mxu0 0.0
      %4068 = vmatpush1.msra.mxu0 0.0
      %4069 = vmatprep.subr.mxu0 0.0
      %4070 = vmatpush1.msra.mxu0 0.0
      %4071 = vmatprep.subr.mxu0 %v3876
      %4072 = vmatpush1.msra.mxu0 %v3875
      %4073 = vmatprep.subr.mxu0 %v3860
      %4074 = vmatpush1.msra.mxu0 %v3859
      %4075 = vmatprep.subr.mxu0 %v3844
      %4076 = vmatpush1.msra.mxu0 %v3843
      %4077 = vmatprep.subr.mxu0 %v3828
      %4078 = vmatpush1.msra.mxu0 %v3827
      %4079 = vmatprep.subr.mxu0 0.0
      %4080 = vmatpush2.msra.mxu0 0.0
      %4081 = vmatprep.subr.mxu0 0.0
      %4082 = vmatpush2.msra.mxu0 0.0
      %4083 = vmatprep.subr.mxu0 0.0
      %4084 = vmatpush2.msra.mxu0 0.0
      %4085 = vmatprep.subr.mxu0 0.0
      %4086 = vmatpush2.msra.mxu0 0.0
      %4087 = vmatprep.subr.mxu0 0.0
      %4088 = vmatpush2.msra.mxu0 0.0
      %4089 = vmatprep.subr.mxu0 0.0
      %4090 = vmatpush2.msra.mxu0 0.0
      %4091 = vmatprep.subr.mxu0 0.0
      %4092 = vmatpush2.msra.mxu0 0.0
      %4093 = vmatprep.subr.mxu0 0.0
      %4094 = vmatpush2.msra.mxu0 0.0
      %4095 = vmatprep.subr.mxu0 0.0
      %4096 = vmatpush2.msra.mxu0 0.0
      %4097 = vmatprep.subr.mxu0 0.0
      %4098 = vmatpush2.msra.mxu0 0.0
      %4099 = vmatprep.subr.mxu0 0.0
      %4100 = vmatpush2.msra.mxu0 0.0
      %4101 = vmatprep.subr.mxu0 0.0
      %4102 = vmatpush2.msra.mxu0 0.0
      %4103 = vmatprep.subr.mxu0 0.0
      %4104 = vmatpush2.msra.mxu0 0.0
      %4105 = vmatprep.subr.mxu0 0.0
      %4106 = vmatpush2.msra.mxu0 0.0
      %4107 = vmatprep.subr.mxu0 0.0
      %4108 = vmatpush2.msra.mxu0 0.0
      %4109 = vmatprep.subr.mxu0 0.0
      %4110 = vmatpush2.msra.mxu0 0.0
      %4111 = vmatprep.mubr.f32.mxu0 0.0
      %4112 = vmatmul.mubr.f32.gmra.mxu0 %v3974
      %v4113 = vpop.f32.mrf.mxu0
      %v4114 = vadd.f32 %v3904, %v4113
      %v4115 = vpop.f32.mrf.mxu0
      %v4116 = vadd.f32 %v3908, %v4115
      %4117 = vdwg.mxu0
      %4118 = vmatprep.subr.mxu0 0.0
      %4119 = vmatpush1.msra.mxu0 0.0
      %4120 = vmatprep.subr.mxu0 0.0
      %4121 = vmatpush1.msra.mxu0 0.0
      %4122 = vmatprep.subr.mxu0 0.0
      %4123 = vmatpush1.msra.mxu0 0.0
      %4124 = vmatprep.subr.mxu0 0.0
      %4125 = vmatpush1.msra.mxu0 0.0
      %4126 = vmatprep.subr.mxu0 0.0
      %4127 = vmatpush1.msra.mxu0 0.0
      %4128 = vmatprep.subr.mxu0 0.0
      %4129 = vmatpush1.msra.mxu0 0.0
      %4130 = vmatprep.subr.mxu0 0.0
      %4131 = vmatpush1.msra.mxu0 0.0
      %4132 = vmatprep.subr.mxu0 0.0
      %4133 = vmatpush1.msra.mxu0 0.0
      %4134 = vmatprep.subr.mxu0 0.0
      %4135 = vmatpush1.msra.mxu0 0.0
      %4136 = vmatprep.subr.mxu0 0.0
      %4137 = vmatpush1.msra.mxu0 0.0
      %4138 = vmatprep.subr.mxu0 0.0
      %4139 = vmatpush1.msra.mxu0 0.0
      %4140 = vmatprep.subr.mxu0 0.0
      %4141 = vmatpush1.msra.mxu0 0.0
      %4142 = vmatprep.subr.mxu0 %v3878
      %4143 = vmatpush1.msra.mxu0 %v3877
      %4144 = vmatprep.subr.mxu0 %v3862
      %4145 = vmatpush1.msra.mxu0 %v3861
      %4146 = vmatprep.subr.mxu0 %v3846
      %4147 = vmatpush1.msra.mxu0 %v3845
      %4148 = vmatprep.subr.mxu0 %v3830
      %4149 = vmatpush1.msra.mxu0 %v3829
      %4150 = vmatprep.subr.mxu0 0.0
      %4151 = vmatpush2.msra.mxu0 0.0
      %4152 = vmatprep.subr.mxu0 0.0
      %4153 = vmatpush2.msra.mxu0 0.0
      %4154 = vmatprep.subr.mxu0 0.0
      %4155 = vmatpush2.msra.mxu0 0.0
      %4156 = vmatprep.subr.mxu0 0.0
      %4157 = vmatpush2.msra.mxu0 0.0
      %4158 = vmatprep.subr.mxu0 0.0
      %4159 = vmatpush2.msra.mxu0 0.0
      %4160 = vmatprep.subr.mxu0 0.0
      %4161 = vmatpush2.msra.mxu0 0.0
      %4162 = vmatprep.subr.mxu0 0.0
      %4163 = vmatpush2.msra.mxu0 0.0
      %4164 = vmatprep.subr.mxu0 0.0
      %4165 = vmatpush2.msra.mxu0 0.0
      %4166 = vmatprep.subr.mxu0 0.0
      %4167 = vmatpush2.msra.mxu0 0.0
      %4168 = vmatprep.subr.mxu0 0.0
      %4169 = vmatpush2.msra.mxu0 0.0
      %4170 = vmatprep.subr.mxu0 0.0
      %4171 = vmatpush2.msra.mxu0 0.0
      %4172 = vmatprep.subr.mxu0 0.0
      %4173 = vmatpush2.msra.mxu0 0.0
      %4174 = vmatprep.subr.mxu0 0.0
      %4175 = vmatpush2.msra.mxu0 0.0
      %4176 = vmatprep.subr.mxu0 0.0
      %4177 = vmatpush2.msra.mxu0 0.0
      %4178 = vmatprep.subr.mxu0 0.0
      %4179 = vmatpush2.msra.mxu0 0.0
      %4180 = vmatprep.subr.mxu0 0.0
      %4181 = vmatpush2.msra.mxu0 0.0
      %4182 = vmatprep.mubr.f32.mxu0 0.0
      %4183 = vmatmul.mubr.f32.gmra.mxu0 %v3974
      %v4184 = vpop.f32.mrf.mxu0
      %v4185 = vadd.f32 %v3912, %v4184
      %v4186 = vpop.f32.mrf.mxu0
      %v4187 = vadd.f32 %v3916, %v4186
      %4188 = vdwg.mxu0
      %4189 = vmatprep.subr.mxu0 0.0
      %4190 = vmatpush1.msra.mxu0 0.0
      %4191 = vmatprep.subr.mxu0 0.0
      %4192 = vmatpush1.msra.mxu0 0.0
      %4193 = vmatprep.subr.mxu0 0.0
      %4194 = vmatpush1.msra.mxu0 0.0
      %4195 = vmatprep.subr.mxu0 0.0
      %4196 = vmatpush1.msra.mxu0 0.0
      %4197 = vmatprep.subr.mxu0 0.0
      %4198 = vmatpush1.msra.mxu0 0.0
      %4199 = vmatprep.subr.mxu0 0.0
      %4200 = vmatpush1.msra.mxu0 0.0
      %4201 = vmatprep.subr.mxu0 0.0
      %4202 = vmatpush1.msra.mxu0 0.0
      %4203 = vmatprep.subr.mxu0 0.0
      %4204 = vmatpush1.msra.mxu0 0.0
      %4205 = vmatprep.subr.mxu0 0.0
      %4206 = vmatpush1.msra.mxu0 0.0
      %4207 = vmatprep.subr.mxu0 0.0
      %4208 = vmatpush1.msra.mxu0 0.0
      %4209 = vmatprep.subr.mxu0 0.0
      %4210 = vmatpush1.msra.mxu0 0.0
      %4211 = vmatprep.subr.mxu0 0.0
      %4212 = vmatpush1.msra.mxu0 0.0
      %4213 = vmatprep.subr.mxu0 %v3880
      %4214 = vmatpush1.msra.mxu0 %v3879
      %4215 = vmatprep.subr.mxu0 %v3864
      %4216 = vmatpush1.msra.mxu0 %v3863
      %4217 = vmatprep.subr.mxu0 %v3848
      %4218 = vmatpush1.msra.mxu0 %v3847
      %4219 = vmatprep.subr.mxu0 %v3832
      %4220 = vmatpush1.msra.mxu0 %v3831
      %4221 = vmatprep.subr.mxu0 0.0
      %4222 = vmatpush2.msra.mxu0 0.0
      %4223 = vmatprep.subr.mxu0 0.0
      %4224 = vmatpush2.msra.mxu0 0.0
      %4225 = vmatprep.subr.mxu0 0.0
      %4226 = vmatpush2.msra.mxu0 0.0
      %4227 = vmatprep.subr.mxu0 0.0
      %4228 = vmatpush2.msra.mxu0 0.0
      %4229 = vmatprep.subr.mxu0 0.0
      %4230 = vmatpush2.msra.mxu0 0.0
      %4231 = vmatprep.subr.mxu0 0.0
      %4232 = vmatpush2.msra.mxu0 0.0
      %4233 = vmatprep.subr.mxu0 0.0
      %4234 = vmatpush2.msra.mxu0 0.0
      %4235 = vmatprep.subr.mxu0 0.0
      %4236 = vmatpush2.msra.mxu0 0.0
      %4237 = vmatprep.subr.mxu0 0.0
      %4238 = vmatpush2.msra.mxu0 0.0
      %4239 = vmatprep.subr.mxu0 0.0
      %4240 = vmatpush2.msra.mxu0 0.0
      %4241 = vmatprep.subr.mxu0 0.0
      %4242 = vmatpush2.msra.mxu0 0.0
      %4243 = vmatprep.subr.mxu0 0.0
      %4244 = vmatpush2.msra.mxu0 0.0
      %4245 = vmatprep.subr.mxu0 0.0
      %4246 = vmatpush2.msra.mxu0 0.0
      %4247 = vmatprep.subr.mxu0 0.0
      %4248 = vmatpush2.msra.mxu0 0.0
      %4249 = vmatprep.subr.mxu0 0.0
      %4250 = vmatpush2.msra.mxu0 0.0
      %4251 = vmatprep.subr.mxu0 0.0
      %4252 = vmatpush2.msra.mxu0 0.0
      %4253 = vmatprep.mubr.f32.mxu0 0.0
      %4254 = vmatmul.mubr.f32.gmra.mxu0 %v3974
      %v4255 = vpop.f32.mrf.mxu0
      %v4256 = vadd.f32 %v3920, %v4255
      %v4257 = vpop.f32.mrf.mxu0
      %v4258 = vadd.f32 %v3924, %v4257
      %4259 = vdwg.mxu0
      %4260 = vmatprep.subr.mxu0 0.0
      %4261 = vmatpush1.msra.mxu0 0.0
      %4262 = vmatprep.subr.mxu0 0.0
      %4263 = vmatpush1.msra.mxu0 0.0
      %4264 = vmatprep.subr.mxu0 0.0
      %4265 = vmatpush1.msra.mxu0 0.0
      %4266 = vmatprep.subr.mxu0 0.0
      %4267 = vmatpush1.msra.mxu0 0.0
      %4268 = vmatprep.subr.mxu0 0.0
      %4269 = vmatpush1.msra.mxu0 0.0
      %4270 = vmatprep.subr.mxu0 0.0
      %4271 = vmatpush1.msra.mxu0 0.0
      %4272 = vmatprep.subr.mxu0 0.0
      %4273 = vmatpush1.msra.mxu0 0.0
      %4274 = vmatprep.subr.mxu0 0.0
      %4275 = vmatpush1.msra.mxu0 0.0
      %4276 = vmatprep.subr.mxu0 0.0
      %4277 = vmatpush1.msra.mxu0 0.0
      %4278 = vmatprep.subr.mxu0 0.0
      %4279 = vmatpush1.msra.mxu0 0.0
      %4280 = vmatprep.subr.mxu0 0.0
      %4281 = vmatpush1.msra.mxu0 0.0
      %4282 = vmatprep.subr.mxu0 0.0
      %4283 = vmatpush1.msra.mxu0 0.0
      %4284 = vmatprep.subr.mxu0 %v3882
      %4285 = vmatpush1.msra.mxu0 %v3881
      %4286 = vmatprep.subr.mxu0 %v3866
      %4287 = vmatpush1.msra.mxu0 %v3865
      %4288 = vmatprep.subr.mxu0 %v3850
      %4289 = vmatpush1.msra.mxu0 %v3849
      %4290 = vmatprep.subr.mxu0 %v3834
      %4291 = vmatpush1.msra.mxu0 %v3833
      %4292 = vmatprep.subr.mxu0 0.0
      %4293 = vmatpush2.msra.mxu0 0.0
      %4294 = vmatprep.subr.mxu0 0.0
      %4295 = vmatpush2.msra.mxu0 0.0
      %4296 = vmatprep.subr.mxu0 0.0
      %4297 = vmatpush2.msra.mxu0 0.0
      %4298 = vmatprep.subr.mxu0 0.0
      %4299 = vmatpush2.msra.mxu0 0.0
      %4300 = vmatprep.subr.mxu0 0.0
      %4301 = vmatpush2.msra.mxu0 0.0
      %4302 = vmatprep.subr.mxu0 0.0
      %4303 = vmatpush2.msra.mxu0 0.0
      %4304 = vmatprep.subr.mxu0 0.0
      %4305 = vmatpush2.msra.mxu0 0.0
      %4306 = vmatprep.subr.mxu0 0.0
      %4307 = vmatpush2.msra.mxu0 0.0
      %4308 = vmatprep.subr.mxu0 0.0
      %4309 = vmatpush2.msra.mxu0 0.0
      %4310 = vmatprep.subr.mxu0 0.0
      %4311 = vmatpush2.msra.mxu0 0.0
      %4312 = vmatprep.subr.mxu0 0.0
      %4313 = vmatpush2.msra.mxu0 0.0
      %4314 = vmatprep.subr.mxu0 0.0
      %4315 = vmatpush2.msra.mxu0 0.0
      %4316 = vmatprep.subr.mxu0 0.0
      %4317 = vmatpush2.msra.mxu0 0.0
      %4318 = vmatprep.subr.mxu0 0.0
      %4319 = vmatpush2.msra.mxu0 0.0
      %4320 = vmatprep.subr.mxu0 0.0
      %4321 = vmatpush2.msra.mxu0 0.0
      %4322 = vmatprep.subr.mxu0 0.0
      %4323 = vmatpush2.msra.mxu0 0.0
      %4324 = vmatprep.mubr.f32.mxu0 0.0
      %4325 = vmatmul.mubr.f32.gmra.mxu0 %v3974
      %v4326 = vpop.f32.mrf.mxu0
      %v4327 = vadd.f32 %v3928, %v4326
      %v4328 = vpop.f32.mrf.mxu0
      %v4329 = vadd.f32 %v3932, %v4328
      %4330 = vdwg.mxu0
      %4331 = vmatprep.subr.mxu0 0.0
      %4332 = vmatpush1.msra.mxu0 0.0
      %4333 = vmatprep.subr.mxu0 0.0
      %4334 = vmatpush1.msra.mxu0 0.0
      %4335 = vmatprep.subr.mxu0 0.0
      %4336 = vmatpush1.msra.mxu0 0.0
      %4337 = vmatprep.subr.mxu0 0.0
      %4338 = vmatpush1.msra.mxu0 0.0
      %4339 = vmatprep.subr.mxu0 0.0
      %4340 = vmatpush1.msra.mxu0 0.0
      %4341 = vmatprep.subr.mxu0 0.0
      %4342 = vmatpush1.msra.mxu0 0.0
      %4343 = vmatprep.subr.mxu0 0.0
      %4344 = vmatpush1.msra.mxu0 0.0
      %4345 = vmatprep.subr.mxu0 0.0
      %4346 = vmatpush1.msra.mxu0 0.0
      %4347 = vmatprep.subr.mxu0 0.0
      %4348 = vmatpush1.msra.mxu0 0.0
      %4349 = vmatprep.subr.mxu0 0.0
      %4350 = vmatpush1.msra.mxu0 0.0
      %4351 = vmatprep.subr.mxu0 0.0
      %4352 = vmatpush1.msra.mxu0 0.0
      %4353 = vmatprep.subr.mxu0 0.0
      %4354 = vmatpush1.msra.mxu0 0.0
      %4355 = vmatprep.subr.mxu0 %v3884
      %4356 = vmatpush1.msra.mxu0 %v3883
      %4357 = vmatprep.subr.mxu0 %v3868
      %4358 = vmatpush1.msra.mxu0 %v3867
      %4359 = vmatprep.subr.mxu0 %v3852
      %4360 = vmatpush1.msra.mxu0 %v3851
      %4361 = vmatprep.subr.mxu0 %v3836
      %4362 = vmatpush1.msra.mxu0 %v3835
      %4363 = vmatprep.subr.mxu0 0.0
      %4364 = vmatpush2.msra.mxu0 0.0
      %4365 = vmatprep.subr.mxu0 0.0
      %4366 = vmatpush2.msra.mxu0 0.0
      %4367 = vmatprep.subr.mxu0 0.0
      %4368 = vmatpush2.msra.mxu0 0.0
      %4369 = vmatprep.subr.mxu0 0.0
      %4370 = vmatpush2.msra.mxu0 0.0
      %4371 = vmatprep.subr.mxu0 0.0
      %4372 = vmatpush2.msra.mxu0 0.0
      %4373 = vmatprep.subr.mxu0 0.0
      %4374 = vmatpush2.msra.mxu0 0.0
      %4375 = vmatprep.subr.mxu0 0.0
      %4376 = vmatpush2.msra.mxu0 0.0
      %4377 = vmatprep.subr.mxu0 0.0
      %4378 = vmatpush2.msra.mxu0 0.0
      %4379 = vmatprep.subr.mxu0 0.0
      %4380 = vmatpush2.msra.mxu0 0.0
      %4381 = vmatprep.subr.mxu0 0.0
      %4382 = vmatpush2.msra.mxu0 0.0
      %4383 = vmatprep.subr.mxu0 0.0
      %4384 = vmatpush2.msra.mxu0 0.0
      %4385 = vmatprep.subr.mxu0 0.0
      %4386 = vmatpush2.msra.mxu0 0.0
      %4387 = vmatprep.subr.mxu0 0.0
      %4388 = vmatpush2.msra.mxu0 0.0
      %4389 = vmatprep.subr.mxu0 0.0
      %4390 = vmatpush2.msra.mxu0 0.0
      %4391 = vmatprep.subr.mxu0 0.0
      %4392 = vmatpush2.msra.mxu0 0.0
      %4393 = vmatprep.subr.mxu0 0.0
      %4394 = vmatpush2.msra.mxu0 0.0
      %4395 = vmatprep.mubr.f32.mxu0 0.0
      %4396 = vmatmul.mubr.f32.gmra.mxu0 %v3974
      %v4397 = vpop.f32.mrf.mxu0
      %v4398 = vadd.f32 %v3936, %v4397
      %v4399 = vpop.f32.mrf.mxu0
      %v4400 = vadd.f32 %v3940, %v4399
      %4401 = vdwg.mxu0
      %4402 = vmatprep.subr.mxu0 0.0
      %4403 = vmatpush1.msra.mxu0 0.0
      %4404 = vmatprep.subr.mxu0 0.0
      %4405 = vmatpush1.msra.mxu0 0.0
      %4406 = vmatprep.subr.mxu0 0.0
      %4407 = vmatpush1.msra.mxu0 0.0
      %4408 = vmatprep.subr.mxu0 0.0
      %4409 = vmatpush1.msra.mxu0 0.0
      %4410 = vmatprep.subr.mxu0 0.0
      %4411 = vmatpush1.msra.mxu0 0.0
      %4412 = vmatprep.subr.mxu0 0.0
      %4413 = vmatpush1.msra.mxu0 0.0
      %4414 = vmatprep.subr.mxu0 0.0
      %4415 = vmatpush1.msra.mxu0 0.0
      %4416 = vmatprep.subr.mxu0 0.0
      %4417 = vmatpush1.msra.mxu0 0.0
      %4418 = vmatprep.subr.mxu0 0.0
      %4419 = vmatpush1.msra.mxu0 0.0
      %4420 = vmatprep.subr.mxu0 0.0
      %4421 = vmatpush1.msra.mxu0 0.0
      %4422 = vmatprep.subr.mxu0 0.0
      %4423 = vmatpush1.msra.mxu0 0.0
      %4424 = vmatprep.subr.mxu0 0.0
      %4425 = vmatpush1.msra.mxu0 0.0
      %4426 = vmatprep.subr.mxu0 %v3886
      %4427 = vmatpush1.msra.mxu0 %v3885
      %4428 = vmatprep.subr.mxu0 %v3870
      %4429 = vmatpush1.msra.mxu0 %v3869
      %4430 = vmatprep.subr.mxu0 %v3854
      %4431 = vmatpush1.msra.mxu0 %v3853
      %4432 = vmatprep.subr.mxu0 %v3838
      %4433 = vmatpush1.msra.mxu0 %v3837
      %4434 = vmatprep.subr.mxu0 0.0
      %4435 = vmatpush2.msra.mxu0 0.0
      %4436 = vmatprep.subr.mxu0 0.0
      %4437 = vmatpush2.msra.mxu0 0.0
      %4438 = vmatprep.subr.mxu0 0.0
      %4439 = vmatpush2.msra.mxu0 0.0
      %4440 = vmatprep.subr.mxu0 0.0
      %4441 = vmatpush2.msra.mxu0 0.0
      %4442 = vmatprep.subr.mxu0 0.0
      %4443 = vmatpush2.msra.mxu0 0.0
      %4444 = vmatprep.subr.mxu0 0.0
      %4445 = vmatpush2.msra.mxu0 0.0
      %4446 = vmatprep.subr.mxu0 0.0
      %4447 = vmatpush2.msra.mxu0 0.0
      %4448 = vmatprep.subr.mxu0 0.0
      %4449 = vmatpush2.msra.mxu0 0.0
      %4450 = vmatprep.subr.mxu0 0.0
      %4451 = vmatpush2.msra.mxu0 0.0
      %4452 = vmatprep.subr.mxu0 0.0
      %4453 = vmatpush2.msra.mxu0 0.0
      %4454 = vmatprep.subr.mxu0 0.0
      %4455 = vmatpush2.msra.mxu0 0.0
      %4456 = vmatprep.subr.mxu0 0.0
      %4457 = vmatpush2.msra.mxu0 0.0
      %4458 = vmatprep.subr.mxu0 0.0
      %4459 = vmatpush2.msra.mxu0 0.0
      %4460 = vmatprep.subr.mxu0 0.0
      %4461 = vmatpush2.msra.mxu0 0.0
      %4462 = vmatprep.subr.mxu0 0.0
      %4463 = vmatpush2.msra.mxu0 0.0
      %4464 = vmatprep.subr.mxu0 0.0
      %4465 = vmatpush2.msra.mxu0 0.0
      %4466 = vmatprep.mubr.f32.mxu0 0.0
      %4467 = vmatmul.mubr.f32.gmra.mxu0 %v3974
      %v4468 = vpop.f32.mrf.mxu0
      %v4469 = vadd.f32 %v3944, %v4468
      %v4470 = vpop.f32.mrf.mxu0
      %v4471 = vadd.f32 %v3948, %v4470
      %4472 = vdwg.mxu0
      %4473 = vmatprep.subr.mxu0 0.0
      %4474 = vmatpush1.msra.mxu0 0.0
      %4475 = vmatprep.subr.mxu0 0.0
      %4476 = vmatpush1.msra.mxu0 0.0
      %4477 = vmatprep.subr.mxu0 0.0
      %4478 = vmatpush1.msra.mxu0 0.0
      %4479 = vmatprep.subr.mxu0 0.0
      %4480 = vmatpush1.msra.mxu0 0.0
      %4481 = vmatprep.subr.mxu0 0.0
      %4482 = vmatpush1.msra.mxu0 0.0
      %4483 = vmatprep.subr.mxu0 0.0
      %4484 = vmatpush1.msra.mxu0 0.0
      %4485 = vmatprep.subr.mxu0 0.0
      %4486 = vmatpush1.msra.mxu0 0.0
      %4487 = vmatprep.subr.mxu0 0.0
      %4488 = vmatpush1.msra.mxu0 0.0
      %4489 = vmatprep.subr.mxu0 0.0
      %4490 = vmatpush1.msra.mxu0 0.0
      %4491 = vmatprep.subr.mxu0 0.0
      %4492 = vmatpush1.msra.mxu0 0.0
      %4493 = vmatprep.subr.mxu0 0.0
      %4494 = vmatpush1.msra.mxu0 0.0
      %4495 = vmatprep.subr.mxu0 0.0
      %4496 = vmatpush1.msra.mxu0 0.0
      %4497 = vmatprep.subr.mxu0 %v3888
      %4498 = vmatpush1.msra.mxu0 %v3887
      %4499 = vmatprep.subr.mxu0 %v3872
      %4500 = vmatpush1.msra.mxu0 %v3871
      %4501 = vmatprep.subr.mxu0 %v3856
      %4502 = vmatpush1.msra.mxu0 %v3855
      %4503 = vmatprep.subr.mxu0 %v3840
      %4504 = vmatpush1.msra.mxu0 %v3839
      %4505 = vmatprep.subr.mxu0 0.0
      %4506 = vmatpush2.msra.mxu0 0.0
      %4507 = vmatprep.subr.mxu0 0.0
      %4508 = vmatpush2.msra.mxu0 0.0
      %4509 = vmatprep.subr.mxu0 0.0
      %4510 = vmatpush2.msra.mxu0 0.0
      %4511 = vmatprep.subr.mxu0 0.0
      %4512 = vmatpush2.msra.mxu0 0.0
      %4513 = vmatprep.subr.mxu0 0.0
      %4514 = vmatpush2.msra.mxu0 0.0
      %4515 = vmatprep.subr.mxu0 0.0
      %4516 = vmatpush2.msra.mxu0 0.0
      %4517 = vmatprep.subr.mxu0 0.0
      %4518 = vmatpush2.msra.mxu0 0.0
      %4519 = vmatprep.subr.mxu0 0.0
      %4520 = vmatpush2.msra.mxu0 0.0
      %4521 = vmatprep.subr.mxu0 0.0
      %4522 = vmatpush2.msra.mxu0 0.0
      %4523 = vmatprep.subr.mxu0 0.0
      %4524 = vmatpush2.msra.mxu0 0.0
      %4525 = vmatprep.subr.mxu0 0.0
      %4526 = vmatpush2.msra.mxu0 0.0
      %4527 = vmatprep.subr.mxu0 0.0
      %4528 = vmatpush2.msra.mxu0 0.0
      %4529 = vmatprep.subr.mxu0 0.0
      %4530 = vmatpush2.msra.mxu0 0.0
      %4531 = vmatprep.subr.mxu0 0.0
      %4532 = vmatpush2.msra.mxu0 0.0
      %4533 = vmatprep.subr.mxu0 0.0
      %4534 = vmatpush2.msra.mxu0 0.0
      %4535 = vmatprep.subr.mxu0 0.0
      %4536 = vmatpush2.msra.mxu0 0.0
      %4537 = vmatprep.mubr.f32.mxu0 0.0
      %4538 = vmatmul.mubr.f32.gmra.mxu0 %v3974
      %v4539 = vpop.f32.mrf.mxu0
      %v4540 = vadd.f32 %v3952, %v4539
      %v4541 = vpop.f32.mrf.mxu0
      %v4542 = vadd.f32 %v3956, %v4541
      %4543 = vdwg.mxu0
      %v4544 = vmax.f32 %v4043, 0.0
      %v4545 = vmax.f32 %v4045, 0.0
      %v4546 = vmax.f32 %v4114, 0.0
      %v4547 = vmax.f32 %v4116, 0.0
      %v4548 = vmax.f32 %v4185, 0.0
      %v4549 = vmax.f32 %v4187, 0.0
      %v4550 = vmax.f32 %v4256, 0.0
      %v4551 = vmax.f32 %v4258, 0.0
      %v4552 = vmax.f32 %v4327, 0.0
      %v4553 = vmax.f32 %v4329, 0.0
      %v4554 = vmax.f32 %v4398, 0.0
      %v4555 = vmax.f32 %v4400, 0.0
      %v4556 = vmax.f32 %v4469, 0.0
      %v4557 = vmax.f32 %v4471, 0.0
      %v4558 = vmax.f32 %v4540, 0.0
      %v4559 = vmax.f32 %v4542, 0.0
      %v4560 = vld [vmem:[%s11] sm:$0xff]
      %v4561 = vld [vmem:[%s11 + $0x8] sm:$0xff]
      %v4562 = vld [vmem:[%s11 + $0x10] sm:$0xff]
      %v4563 = vld [vmem:[%s11 + $0x18] sm:$0xff]
      %v4564 = vld [vmem:[%s11 + $0x20] sm:$0xff]
      %v4565 = vld [vmem:[%s11 + $0x28] sm:$0xff]
      %v4566 = vld [vmem:[%s11 + $0x30] sm:$0xff]
      %v4567 = vld [vmem:[%s11 + $0x38] sm:$0xff]
      %v4568 = vld [vmem:[%s11 + $0x40] sm:$0xff]
      %v4569 = vld [vmem:[%s11 + $0x48] sm:$0xff]
      %v4570 = vld [vmem:[%s11 + $0x50] sm:$0xff]
      %v4571 = vld [vmem:[%s11 + $0x58] sm:$0xff]
      %v4572 = vld [vmem:[%s11 + $0x60] sm:$0xff]
      %v4573 = vld [vmem:[%s11 + $0x68] sm:$0xff]
      %v4574 = vld [vmem:[%s11 + $0x70] sm:$0xff]
      %v4575 = vld [vmem:[%s11 + $0x78] sm:$0xff]
      %v4576 = vld [vmem:[%s11 + $0x80] sm:$0xff]
      %v4577 = vld [vmem:[%s11 + $0x88] sm:$0xff]
      %v4578 = vld [vmem:[%s11 + $0x90] sm:$0xff]
      %v4579 = vld [vmem:[%s11 + $0x98] sm:$0xff]
      %v4580 = vld [vmem:[%s11 + $0xa0] sm:$0xff]
      %v4581 = vld [vmem:[%s11 + $0xa8] sm:$0xff]
      %v4582 = vld [vmem:[%s11 + $0xb0] sm:$0xff]
      %v4583 = vld [vmem:[%s11 + $0xb8] sm:$0xff]
      %v4584 = vld [vmem:[%s11 + $0xc0] sm:$0xff]
      %v4585 = vld [vmem:[%s11 + $0xc8] sm:$0xff]
      %v4586 = vld [vmem:[%s11 + $0xd0] sm:$0xff]
      %v4587 = vld [vmem:[%s11 + $0xd8] sm:$0xff]
      %v4588 = vld [vmem:[%s11 + $0xe0] sm:$0xff]
      %v4589 = vld [vmem:[%s11 + $0xe8] sm:$0xff]
      %v4590 = vld [vmem:[%s11 + $0xf0] sm:$0xff]
      %v4591 = vld [vmem:[%s11 + $0xf8] sm:$0xff]
      %v4592 = vld [vmem:[%s11 + $0x100] sm:$0xff]
      %v4593 = vld [vmem:[%s11 + $0x108] sm:$0xff]
      %v4594 = vld [vmem:[%s11 + $0x110] sm:$0xff]
      %v4595 = vld [vmem:[%s11 + $0x118] sm:$0xff]
      %v4596 = vld [vmem:[%s11 + $0x120] sm:$0xff]
      %v4597 = vld [vmem:[%s11 + $0x128] sm:$0xff]
      %v4598 = vld [vmem:[%s11 + $0x130] sm:$0xff]
      %v4599 = vld [vmem:[%s11 + $0x138] sm:$0xff]
      %v4600 = vld [vmem:[%s11 + $0x140] sm:$0xff]
      %v4601 = vld [vmem:[%s11 + $0x148] sm:$0xff]
      %v4602 = vld [vmem:[%s11 + $0x150] sm:$0xff]
      %v4603 = vld [vmem:[%s11 + $0x158] sm:$0xff]
      %v4604 = vld [vmem:[%s11 + $0x160] sm:$0xff]
      %v4605 = vld [vmem:[%s11 + $0x168] sm:$0xff]
      %v4606 = vld [vmem:[%s11 + $0x170] sm:$0xff]
      %v4607 = vld [vmem:[%s11 + $0x178] sm:$0xff]
      %v4608 = vld [vmem:[%s11 + $0x180] sm:$0xff]
      %v4609 = vld [vmem:[%s11 + $0x188] sm:$0xff]
      %v4610 = vld [vmem:[%s11 + $0x190] sm:$0xff]
      %v4611 = vld [vmem:[%s11 + $0x198] sm:$0xff]
      %v4612 = vld [vmem:[%s11 + $0x1a0] sm:$0xff]
      %v4613 = vld [vmem:[%s11 + $0x1a8] sm:$0xff]
      %v4614 = vld [vmem:[%s11 + $0x1b0] sm:$0xff]
      %v4615 = vld [vmem:[%s11 + $0x1b8] sm:$0xff]
      %v4616 = vld [vmem:[%s11 + $0x1c0] sm:$0xff]
      %v4617 = vld [vmem:[%s11 + $0x1c8] sm:$0xff]
      %v4618 = vld [vmem:[%s11 + $0x1d0] sm:$0xff]
      %v4619 = vld [vmem:[%s11 + $0x1d8] sm:$0xff]
      %v4620 = vld [vmem:[%s11 + $0x1e0] sm:$0xff]
      %v4621 = vld [vmem:[%s11 + $0x1e8] sm:$0xff]
      %v4622 = vld [vmem:[%s11 + $0x1f0] sm:$0xff]
      %v4623 = vld [vmem:[%s11 + $0x1f8] sm:$0xff]
      %v4624 = vld [vmem:[%s11 + $0x200] sm:$0xff]
      %v4625 = vld [vmem:[%s11 + $0x208] sm:$0xff]
      %v4626 = vld [vmem:[%s11 + $0x210] sm:$0xff]
      %v4627 = vld [vmem:[%s11 + $0x218] sm:$0xff]
      %v4628 = vld [vmem:[%s11 + $0x220] sm:$0xff]
      %v4629 = vld [vmem:[%s11 + $0x228] sm:$0xff]
      %v4630 = vld [vmem:[%s11 + $0x230] sm:$0xff]
      %v4631 = vld [vmem:[%s11 + $0x238] sm:$0xff]
      %v4632 = vld [vmem:[%s11 + $0x240] sm:$0xff]
      %v4633 = vld [vmem:[%s11 + $0x248] sm:$0xff]
      %v4634 = vld [vmem:[%s11 + $0x250] sm:$0xff]
      %v4635 = vld [vmem:[%s11 + $0x258] sm:$0xff]
      %v4636 = vld [vmem:[%s11 + $0x260] sm:$0xff]
      %v4637 = vld [vmem:[%s11 + $0x268] sm:$0xff]
      %v4638 = vld [vmem:[%s11 + $0x270] sm:$0xff]
      %v4639 = vld [vmem:[%s11 + $0x278] sm:$0xff]
      %v4640 = vld [vmem:[%s11 + $0x280] sm:$0xff]
      %v4641 = vld [vmem:[%s11 + $0x288] sm:$0xff]
      %v4642 = vld [vmem:[%s11 + $0x290] sm:$0xff]
      %v4643 = vld [vmem:[%s11 + $0x298] sm:$0xff]
      %v4644 = vld [vmem:[%s11 + $0x2a0] sm:$0xff]
      %v4645 = vld [vmem:[%s11 + $0x2a8] sm:$0xff]
      %v4646 = vld [vmem:[%s11 + $0x2b0] sm:$0xff]
      %v4647 = vld [vmem:[%s11 + $0x2b8] sm:$0xff]
      %v4648 = vld [vmem:[%s11 + $0x2c0] sm:$0xff]
      %v4649 = vld [vmem:[%s11 + $0x2c8] sm:$0xff]
      %v4650 = vld [vmem:[%s11 + $0x2d0] sm:$0xff]
      %v4651 = vld [vmem:[%s11 + $0x2d8] sm:$0xff]
      %v4652 = vld [vmem:[%s11 + $0x2e0] sm:$0xff]
      %v4653 = vld [vmem:[%s11 + $0x2e8] sm:$0xff]
      %v4654 = vld [vmem:[%s11 + $0x2f0] sm:$0xff]
      %v4655 = vld [vmem:[%s11 + $0x2f8] sm:$0xff]
      %v4656 = vld [vmem:[%s11 + $0x300] sm:$0xff]
      %v4657 = vld [vmem:[%s11 + $0x308] sm:$0xff]
      %v4658 = vld [vmem:[%s11 + $0x310] sm:$0xff]
      %v4659 = vld [vmem:[%s11 + $0x318] sm:$0xff]
      %v4660 = vld [vmem:[%s11 + $0x320] sm:$0xff]
      %v4661 = vld [vmem:[%s11 + $0x328] sm:$0xff]
      %v4662 = vld [vmem:[%s11 + $0x330] sm:$0xff]
      %v4663 = vld [vmem:[%s11 + $0x338] sm:$0xff]
      %v4664 = vld [vmem:[%s11 + $0x340] sm:$0xff]
      %v4665 = vld [vmem:[%s11 + $0x348] sm:$0xff]
      %v4666 = vld [vmem:[%s11 + $0x350] sm:$0xff]
      %v4667 = vld [vmem:[%s11 + $0x358] sm:$0xff]
      %v4668 = vld [vmem:[%s11 + $0x360] sm:$0xff]
      %v4669 = vld [vmem:[%s11 + $0x368] sm:$0xff]
      %v4670 = vld [vmem:[%s11 + $0x370] sm:$0xff]
      %v4671 = vld [vmem:[%s11 + $0x378] sm:$0xff]
      %v4672 = vld [vmem:[%s11 + $0x380] sm:$0xff]
      %v4673 = vld [vmem:[%s11 + $0x388] sm:$0xff]
      %v4674 = vld [vmem:[%s11 + $0x390] sm:$0xff]
      %v4675 = vld [vmem:[%s11 + $0x398] sm:$0xff]
      %v4676 = vld [vmem:[%s11 + $0x3a0] sm:$0xff]
      %v4677 = vld [vmem:[%s11 + $0x3a8] sm:$0xff]
      %v4678 = vld [vmem:[%s11 + $0x3b0] sm:$0xff]
      %v4679 = vld [vmem:[%s11 + $0x3b8] sm:$0xff]
      %v4680 = vld [vmem:[%s11 + $0x3c0] sm:$0xff]
      %v4681 = vld [vmem:[%s11 + $0x3c8] sm:$0xff]
      %v4682 = vld [vmem:[%s11 + $0x3d0] sm:$0xff]
      %v4683 = vld [vmem:[%s11 + $0x3d8] sm:$0xff]
      %v4684 = vld [vmem:[%s11 + $0x3e0] sm:$0xff]
      %v4685 = vld [vmem:[%s11 + $0x3e8] sm:$0xff]
      %v4686 = vld [vmem:[%s11 + $0x3f0] sm:$0xff]
      %v4687 = vld [vmem:[%s11 + $0x3f8] sm:$0xff]
      %v4688 = vld [vmem:[%s11 + $0x400] sm:$0xff]
      %v4689 = vld [vmem:[%s11 + $0x408] sm:$0xff]
      %v4690 = vld [vmem:[%s11 + $0x410] sm:$0xff]
      %v4691 = vld [vmem:[%s11 + $0x418] sm:$0xff]
      %v4692 = vld [vmem:[%s11 + $0x420] sm:$0xff]
      %v4693 = vld [vmem:[%s11 + $0x428] sm:$0xff]
      %v4694 = vld [vmem:[%s11 + $0x430] sm:$0xff]
      %v4695 = vld [vmem:[%s11 + $0x438] sm:$0xff]
      %v4696 = vld [vmem:[%s11 + $0x440] sm:$0xff]
      %v4697 = vld [vmem:[%s11 + $0x448] sm:$0xff]
      %v4698 = vld [vmem:[%s11 + $0x450] sm:$0xff]
      %v4699 = vld [vmem:[%s11 + $0x458] sm:$0xff]
      %v4700 = vld [vmem:[%s11 + $0x460] sm:$0xff]
      %v4701 = vld [vmem:[%s11 + $0x468] sm:$0xff]
      %v4702 = vld [vmem:[%s11 + $0x470] sm:$0xff]
      %v4703 = vld [vmem:[%s11 + $0x478] sm:$0xff]
      %v4704 = vld [vmem:[%s11 + $0x480] sm:$0xff]
      %v4705 = vld [vmem:[%s11 + $0x488] sm:$0xff]
      %v4706 = vld [vmem:[%s11 + $0x490] sm:$0xff]
      %v4707 = vld [vmem:[%s11 + $0x498] sm:$0xff]
      %v4708 = vld [vmem:[%s11 + $0x4a0] sm:$0xff]
      %v4709 = vld [vmem:[%s11 + $0x4a8] sm:$0xff]
      %v4710 = vld [vmem:[%s11 + $0x4b0] sm:$0xff]
      %v4711 = vld [vmem:[%s11 + $0x4b8] sm:$0xff]
      %v4712 = vld [vmem:[%s11 + $0x4c0] sm:$0xff]
      %v4713 = vld [vmem:[%s11 + $0x4c8] sm:$0xff]
      %v4714 = vld [vmem:[%s11 + $0x4d0] sm:$0xff]
      %v4715 = vld [vmem:[%s11 + $0x4d8] sm:$0xff]
      %v4716 = vld [vmem:[%s11 + $0x4e0] sm:$0xff]
      %v4717 = vld [vmem:[%s11 + $0x4e8] sm:$0xff]
      %v4718 = vld [vmem:[%s11 + $0x4f0] sm:$0xff]
      %v4719 = vld [vmem:[%s11 + $0x4f8] sm:$0xff]
      %v4720 = vld [vmem:[%s11 + $0x500] sm:$0xff]
      %v4721 = vld [vmem:[%s11 + $0x508] sm:$0xff]
      %v4722 = vld [vmem:[%s11 + $0x510] sm:$0xff]
      %v4723 = vld [vmem:[%s11 + $0x518] sm:$0xff]
      %v4724 = vld [vmem:[%s11 + $0x520] sm:$0xff]
      %v4725 = vld [vmem:[%s11 + $0x528] sm:$0xff]
      %v4726 = vld [vmem:[%s11 + $0x530] sm:$0xff]
      %v4727 = vld [vmem:[%s11 + $0x538] sm:$0xff]
      %v4728 = vld [vmem:[%s11 + $0x540] sm:$0xff]
      %v4729 = vld [vmem:[%s11 + $0x548] sm:$0xff]
      %v4730 = vld [vmem:[%s11 + $0x550] sm:$0xff]
      %v4731 = vld [vmem:[%s11 + $0x558] sm:$0xff]
      %v4732 = vld [vmem:[%s11 + $0x560] sm:$0xff]
      %v4733 = vld [vmem:[%s11 + $0x568] sm:$0xff]
      %v4734 = vld [vmem:[%s11 + $0x570] sm:$0xff]
      %v4735 = vld [vmem:[%s11 + $0x578] sm:$0xff]
      %v4736 = vld [vmem:[%s11 + $0x580] sm:$0xff]
      %v4737 = vld [vmem:[%s11 + $0x588] sm:$0xff]
      %v4738 = vld [vmem:[%s11 + $0x590] sm:$0xff]
      %v4739 = vld [vmem:[%s11 + $0x598] sm:$0xff]
      %v4740 = vld [vmem:[%s11 + $0x5a0] sm:$0xff]
      %v4741 = vld [vmem:[%s11 + $0x5a8] sm:$0xff]
      %v4742 = vld [vmem:[%s11 + $0x5b0] sm:$0xff]
      %v4743 = vld [vmem:[%s11 + $0x5b8] sm:$0xff]
      %v4744 = vld [vmem:[%s11 + $0x5c0] sm:$0xff]
      %v4745 = vld [vmem:[%s11 + $0x5c8] sm:$0xff]
      %v4746 = vld [vmem:[%s11 + $0x5d0] sm:$0xff]
      %v4747 = vld [vmem:[%s11 + $0x5d8] sm:$0xff]
      %v4748 = vld [vmem:[%s11 + $0x5e0] sm:$0xff]
      %v4749 = vld [vmem:[%s11 + $0x5e8] sm:$0xff]
      %v4750 = vld [vmem:[%s11 + $0x5f0] sm:$0xff]
      %v4751 = vld [vmem:[%s11 + $0x5f8] sm:$0xff]
      %v4752 = vld [vmem:[%s11 + $0x600] sm:$0xff]
      %v4753 = vld [vmem:[%s11 + $0x608] sm:$0xff]
      %v4754 = vld [vmem:[%s11 + $0x610] sm:$0xff]
      %v4755 = vld [vmem:[%s11 + $0x618] sm:$0xff]
      %v4756 = vld [vmem:[%s11 + $0x620] sm:$0xff]
      %v4757 = vld [vmem:[%s11 + $0x628] sm:$0xff]
      %v4758 = vld [vmem:[%s11 + $0x630] sm:$0xff]
      %v4759 = vld [vmem:[%s11 + $0x638] sm:$0xff]
      %v4760 = vld [vmem:[%s11 + $0x640] sm:$0xff]
      %v4761 = vld [vmem:[%s11 + $0x648] sm:$0xff]
      %v4762 = vld [vmem:[%s11 + $0x650] sm:$0xff]
      %v4763 = vld [vmem:[%s11 + $0x658] sm:$0xff]
      %v4764 = vld [vmem:[%s11 + $0x660] sm:$0xff]
      %v4765 = vld [vmem:[%s11 + $0x668] sm:$0xff]
      %v4766 = vld [vmem:[%s11 + $0x670] sm:$0xff]
      %v4767 = vld [vmem:[%s11 + $0x678] sm:$0xff]
      %v4768 = vld [vmem:[%s11 + $0x680] sm:$0xff]
      %v4769 = vld [vmem:[%s11 + $0x688] sm:$0xff]
      %v4770 = vld [vmem:[%s11 + $0x690] sm:$0xff]
      %v4771 = vld [vmem:[%s11 + $0x698] sm:$0xff]
      %v4772 = vld [vmem:[%s11 + $0x6a0] sm:$0xff]
      %v4773 = vld [vmem:[%s11 + $0x6a8] sm:$0xff]
      %v4774 = vld [vmem:[%s11 + $0x6b0] sm:$0xff]
      %v4775 = vld [vmem:[%s11 + $0x6b8] sm:$0xff]
      %v4776 = vld [vmem:[%s11 + $0x6c0] sm:$0xff]
      %v4777 = vld [vmem:[%s11 + $0x6c8] sm:$0xff]
      %v4778 = vld [vmem:[%s11 + $0x6d0] sm:$0xff]
      %v4779 = vld [vmem:[%s11 + $0x6d8] sm:$0xff]
      %v4780 = vld [vmem:[%s11 + $0x6e0] sm:$0xff]
      %v4781 = vld [vmem:[%s11 + $0x6e8] sm:$0xff]
      %v4782 = vld [vmem:[%s11 + $0x6f0] sm:$0xff]
      %v4783 = vld [vmem:[%s11 + $0x6f8] sm:$0xff]
      %v4784 = vld [vmem:[%s11 + $0x700] sm:$0xff]
      %v4785 = vld [vmem:[%s11 + $0x708] sm:$0xff]
      %v4786 = vld [vmem:[%s11 + $0x710] sm:$0xff]
      %v4787 = vld [vmem:[%s11 + $0x718] sm:$0xff]
      %v4788 = vld [vmem:[%s11 + $0x720] sm:$0xff]
      %v4789 = vld [vmem:[%s11 + $0x728] sm:$0xff]
      %v4790 = vld [vmem:[%s11 + $0x730] sm:$0xff]
      %v4791 = vld [vmem:[%s11 + $0x738] sm:$0xff]
      %v4792 = vld [vmem:[%s11 + $0x740] sm:$0xff]
      %v4793 = vld [vmem:[%s11 + $0x748] sm:$0xff]
      %v4794 = vld [vmem:[%s11 + $0x750] sm:$0xff]
      %v4795 = vld [vmem:[%s11 + $0x758] sm:$0xff]
      %v4796 = vld [vmem:[%s11 + $0x760] sm:$0xff]
      %v4797 = vld [vmem:[%s11 + $0x768] sm:$0xff]
      %v4798 = vld [vmem:[%s11 + $0x770] sm:$0xff]
      %v4799 = vld [vmem:[%s11 + $0x778] sm:$0xff]
      %v4800 = vld [vmem:[%s11 + $0x780] sm:$0xff]
      %v4801 = vld [vmem:[%s11 + $0x788] sm:$0xff]
      %v4802 = vld [vmem:[%s11 + $0x790] sm:$0xff]
      %v4803 = vld [vmem:[%s11 + $0x798] sm:$0xff]
      %v4804 = vld [vmem:[%s11 + $0x7a0] sm:$0xff]
      %v4805 = vld [vmem:[%s11 + $0x7a8] sm:$0xff]
      %v4806 = vld [vmem:[%s11 + $0x7b0] sm:$0xff]
      %v4807 = vld [vmem:[%s11 + $0x7b8] sm:$0xff]
      %v4808 = vld [vmem:[%s11 + $0x7c0] sm:$0xff]
      %v4809 = vld [vmem:[%s11 + $0x7c8] sm:$0xff]
      %v4810 = vld [vmem:[%s11 + $0x7d0] sm:$0xff]
      %v4811 = vld [vmem:[%s11 + $0x7d8] sm:$0xff]
      %v4812 = vld [vmem:[%s11 + $0x7e0] sm:$0xff]
      %v4813 = vld [vmem:[%s11 + $0x7e8] sm:$0xff]
      %v4814 = vld [vmem:[%s11 + $0x7f0] sm:$0xff]
      %v4815 = vld [vmem:[%s11 + $0x7f8] sm:$0xff]
      %v4816 = vld [vmem:[%s12] sm:$0x1]
      %v4818 = vlaneseq
      %v4819 = vshrl.u32 %v4818, 7
      %v4820 = vsub.s32 0, %v4819
      %v4821 = vrot.slane %v4816, %v4820
      %4823 = vmatprep.subr.mxu0 0.0
      %4824 = vmatpush1.msra.mxu0 %v4575
      %4825 = vmatprep.subr.mxu0 0.0
      %4826 = vmatpush1.msra.mxu0 %v4574
      %4827 = vmatprep.subr.mxu0 0.0
      %4828 = vmatpush1.msra.mxu0 %v4573
      %4829 = vmatprep.subr.mxu0 0.0
      %4830 = vmatpush1.msra.mxu0 %v4572
      %4831 = vmatprep.subr.mxu0 0.0
      %4832 = vmatpush1.msra.mxu0 %v4571
      %4833 = vmatprep.subr.mxu0 0.0
      %4834 = vmatpush1.msra.mxu0 %v4570
      %4835 = vmatprep.subr.mxu0 0.0
      %4836 = vmatpush1.msra.mxu0 %v4569
      %4837 = vmatprep.subr.mxu0 0.0
      %4838 = vmatpush1.msra.mxu0 %v4568
      %4839 = vmatprep.subr.mxu0 0.0
      %4840 = vmatpush1.msra.mxu0 %v4567
      %4841 = vmatprep.subr.mxu0 0.0
      %4842 = vmatpush1.msra.mxu0 %v4566
      %4843 = vmatprep.subr.mxu0 0.0
      %4844 = vmatpush1.msra.mxu0 %v4565
      %4845 = vmatprep.subr.mxu0 0.0
      %4846 = vmatpush1.msra.mxu0 %v4564
      %4847 = vmatprep.subr.mxu0 0.0
      %4848 = vmatpush1.msra.mxu0 %v4563
      %4849 = vmatprep.subr.mxu0 0.0
      %4850 = vmatpush1.msra.mxu0 %v4562
      %4851 = vmatprep.subr.mxu0 0.0
      %4852 = vmatpush1.msra.mxu0 %v4561
      %4853 = vmatprep.subr.mxu0 0.0
      %4854 = vmatpush1.msra.mxu0 %v4560
      %4855 = vmatprep.subr.mxu0 0.0
      %4856 = vmatpush2.msra.mxu0 %v4591
      %4857 = vmatprep.subr.mxu0 0.0
      %4858 = vmatpush2.msra.mxu0 %v4590
      %4859 = vmatprep.subr.mxu0 0.0
      %4860 = vmatpush2.msra.mxu0 %v4589
      %4861 = vmatprep.subr.mxu0 0.0
      %4862 = vmatpush2.msra.mxu0 %v4588
      %4863 = vmatprep.subr.mxu0 0.0
      %4864 = vmatpush2.msra.mxu0 %v4587
      %4865 = vmatprep.subr.mxu0 0.0
      %4866 = vmatpush2.msra.mxu0 %v4586
      %4867 = vmatprep.subr.mxu0 0.0
      %4868 = vmatpush2.msra.mxu0 %v4585
      %4869 = vmatprep.subr.mxu0 0.0
      %4870 = vmatpush2.msra.mxu0 %v4584
      %4871 = vmatprep.subr.mxu0 0.0
      %4872 = vmatpush2.msra.mxu0 %v4583
      %4873 = vmatprep.subr.mxu0 0.0
      %4874 = vmatpush2.msra.mxu0 %v4582
      %4875 = vmatprep.subr.mxu0 0.0
      %4876 = vmatpush2.msra.mxu0 %v4581
      %4877 = vmatprep.subr.mxu0 0.0
      %4878 = vmatpush2.msra.mxu0 %v4580
      %4879 = vmatprep.subr.mxu0 0.0
      %4880 = vmatpush2.msra.mxu0 %v4579
      %4881 = vmatprep.subr.mxu0 0.0
      %4882 = vmatpush2.msra.mxu0 %v4578
      %4883 = vmatprep.subr.mxu0 0.0
      %4884 = vmatpush2.msra.mxu0 %v4577
      %4885 = vmatprep.subr.mxu0 0.0
      %4886 = vmatpush2.msra.mxu0 %v4576
      %4887 = vmatprep.mubr.f32.mxu0 %v4545
      %4888 = vmatmul.mubr.f32.gmra.mxu0 %v4544
      %v4889 = vpop.f32.mrf.mxu0
      %v4890 = vadd.f32 %v4821, %v4889
      %v4891 = vpop.f32.mrf.mxu0
      %4892 = vdwg.mxu0
      %4893 = vmatprep.subr.mxu0 0.0
      %4894 = vmatpush1.msra.mxu0 %v4607
      %4895 = vmatprep.subr.mxu0 0.0
      %4896 = vmatpush1.msra.mxu0 %v4606
      %4897 = vmatprep.subr.mxu0 0.0
      %4898 = vmatpush1.msra.mxu0 %v4605
      %4899 = vmatprep.subr.mxu0 0.0
      %4900 = vmatpush1.msra.mxu0 %v4604
      %4901 = vmatprep.subr.mxu0 0.0
      %4902 = vmatpush1.msra.mxu0 %v4603
      %4903 = vmatprep.subr.mxu0 0.0
      %4904 = vmatpush1.msra.mxu0 %v4602
      %4905 = vmatprep.subr.mxu0 0.0
      %4906 = vmatpush1.msra.mxu0 %v4601
      %4907 = vmatprep.subr.mxu0 0.0
      %4908 = vmatpush1.msra.mxu0 %v4600
      %4909 = vmatprep.subr.mxu0 0.0
      %4910 = vmatpush1.msra.mxu0 %v4599
      %4911 = vmatprep.subr.mxu0 0.0
      %4912 = vmatpush1.msra.mxu0 %v4598
      %4913 = vmatprep.subr.mxu0 0.0
      %4914 = vmatpush1.msra.mxu0 %v4597
      %4915 = vmatprep.subr.mxu0 0.0
      %4916 = vmatpush1.msra.mxu0 %v4596
      %4917 = vmatprep.subr.mxu0 0.0
      %4918 = vmatpush1.msra.mxu0 %v4595
      %4919 = vmatprep.subr.mxu0 0.0
      %4920 = vmatpush1.msra.mxu0 %v4594
      %4921 = vmatprep.subr.mxu0 0.0
      %4922 = vmatpush1.msra.mxu0 %v4593
      %4923 = vmatprep.subr.mxu0 0.0
      %4924 = vmatpush1.msra.mxu0 %v4592
      %4925 = vmatprep.subr.mxu0 0.0
      %4926 = vmatpush2.msra.mxu0 %v4623
      %4927 = vmatprep.subr.mxu0 0.0
      %4928 = vmatpush2.msra.mxu0 %v4622
      %4929 = vmatprep.subr.mxu0 0.0
      %4930 = vmatpush2.msra.mxu0 %v4621
      %4931 = vmatprep.subr.mxu0 0.0
      %4932 = vmatpush2.msra.mxu0 %v4620
      %4933 = vmatprep.subr.mxu0 0.0
      %4934 = vmatpush2.msra.mxu0 %v4619
      %4935 = vmatprep.subr.mxu0 0.0
      %4936 = vmatpush2.msra.mxu0 %v4618
      %4937 = vmatprep.subr.mxu0 0.0
      %4938 = vmatpush2.msra.mxu0 %v4617
      %4939 = vmatprep.subr.mxu0 0.0
      %4940 = vmatpush2.msra.mxu0 %v4616
      %4941 = vmatprep.subr.mxu0 0.0
      %4942 = vmatpush2.msra.mxu0 %v4615
      %4943 = vmatprep.subr.mxu0 0.0
      %4944 = vmatpush2.msra.mxu0 %v4614
      %4945 = vmatprep.subr.mxu0 0.0
      %4946 = vmatpush2.msra.mxu0 %v4613
      %4947 = vmatprep.subr.mxu0 0.0
      %4948 = vmatpush2.msra.mxu0 %v4612
      %4949 = vmatprep.subr.mxu0 0.0
      %4950 = vmatpush2.msra.mxu0 %v4611
      %4951 = vmatprep.subr.mxu0 0.0
      %4952 = vmatpush2.msra.mxu0 %v4610
      %4953 = vmatprep.subr.mxu0 0.0
      %4954 = vmatpush2.msra.mxu0 %v4609
      %4955 = vmatprep.subr.mxu0 0.0
      %4956 = vmatpush2.msra.mxu0 %v4608
      %4957 = vmatprep.mubr.f32.mxu0 %v4547
      %4958 = vmatmul.mubr.f32.gmra.mxu0 %v4546
      %v4959 = vpop.f32.mrf.mxu0
      %v4960 = vadd.f32 %v4890, %v4959
      %v4961 = vpop.f32.mrf.mxu0
      %4962 = vdwg.mxu0
      %4963 = vmatprep.subr.mxu0 0.0
      %4964 = vmatpush1.msra.mxu0 %v4639
      %4965 = vmatprep.subr.mxu0 0.0
      %4966 = vmatpush1.msra.mxu0 %v4638
      %4967 = vmatprep.subr.mxu0 0.0
      %4968 = vmatpush1.msra.mxu0 %v4637
      %4969 = vmatprep.subr.mxu0 0.0
      %4970 = vmatpush1.msra.mxu0 %v4636
      %4971 = vmatprep.subr.mxu0 0.0
      %4972 = vmatpush1.msra.mxu0 %v4635
      %4973 = vmatprep.subr.mxu0 0.0
      %4974 = vmatpush1.msra.mxu0 %v4634
      %4975 = vmatprep.subr.mxu0 0.0
      %4976 = vmatpush1.msra.mxu0 %v4633
      %4977 = vmatprep.subr.mxu0 0.0
      %4978 = vmatpush1.msra.mxu0 %v4632
      %4979 = vmatprep.subr.mxu0 0.0
      %4980 = vmatpush1.msra.mxu0 %v4631
      %4981 = vmatprep.subr.mxu0 0.0
      %4982 = vmatpush1.msra.mxu0 %v4630
      %4983 = vmatprep.subr.mxu0 0.0
      %4984 = vmatpush1.msra.mxu0 %v4629
      %4985 = vmatprep.subr.mxu0 0.0
      %4986 = vmatpush1.msra.mxu0 %v4628
      %4987 = vmatprep.subr.mxu0 0.0
      %4988 = vmatpush1.msra.mxu0 %v4627
      %4989 = vmatprep.subr.mxu0 0.0
      %4990 = vmatpush1.msra.mxu0 %v4626
      %4991 = vmatprep.subr.mxu0 0.0
      %4992 = vmatpush1.msra.mxu0 %v4625
      %4993 = vmatprep.subr.mxu0 0.0
      %4994 = vmatpush1.msra.mxu0 %v4624
      %4995 = vmatprep.subr.mxu0 0.0
      %4996 = vmatpush2.msra.mxu0 %v4655
      %4997 = vmatprep.subr.mxu0 0.0
      %4998 = vmatpush2.msra.mxu0 %v4654
      %4999 = vmatprep.subr.mxu0 0.0
      %5000 = vmatpush2.msra.mxu0 %v4653
      %5001 = vmatprep.subr.mxu0 0.0
      %5002 = vmatpush2.msra.mxu0 %v4652
      %5003 = vmatprep.subr.mxu0 0.0
      %5004 = vmatpush2.msra.mxu0 %v4651
      %5005 = vmatprep.subr.mxu0 0.0
      %5006 = vmatpush2.msra.mxu0 %v4650
      %5007 = vmatprep.subr.mxu0 0.0
      %5008 = vmatpush2.msra.mxu0 %v4649
      %5009 = vmatprep.subr.mxu0 0.0
      %5010 = vmatpush2.msra.mxu0 %v4648
      %5011 = vmatprep.subr.mxu0 0.0
      %5012 = vmatpush2.msra.mxu0 %v4647
      %5013 = vmatprep.subr.mxu0 0.0
      %5014 = vmatpush2.msra.mxu0 %v4646
      %5015 = vmatprep.subr.mxu0 0.0
      %5016 = vmatpush2.msra.mxu0 %v4645
      %5017 = vmatprep.subr.mxu0 0.0
      %5018 = vmatpush2.msra.mxu0 %v4644
      %5019 = vmatprep.subr.mxu0 0.0
      %5020 = vmatpush2.msra.mxu0 %v4643
      %5021 = vmatprep.subr.mxu0 0.0
      %5022 = vmatpush2.msra.mxu0 %v4642
      %5023 = vmatprep.subr.mxu0 0.0
      %5024 = vmatpush2.msra.mxu0 %v4641
      %5025 = vmatprep.subr.mxu0 0.0
      %5026 = vmatpush2.msra.mxu0 %v4640
      %5027 = vmatprep.mubr.f32.mxu0 %v4549
      %5028 = vmatmul.mubr.f32.gmra.mxu0 %v4548
      %v5029 = vpop.f32.mrf.mxu0
      %v5030 = vadd.f32 %v4960, %v5029
      %v5031 = vpop.f32.mrf.mxu0
      %5032 = vdwg.mxu0
      %5033 = vmatprep.subr.mxu0 0.0
      %5034 = vmatpush1.msra.mxu0 %v4671
      %5035 = vmatprep.subr.mxu0 0.0
      %5036 = vmatpush1.msra.mxu0 %v4670
      %5037 = vmatprep.subr.mxu0 0.0
      %5038 = vmatpush1.msra.mxu0 %v4669
      %5039 = vmatprep.subr.mxu0 0.0
      %5040 = vmatpush1.msra.mxu0 %v4668
      %5041 = vmatprep.subr.mxu0 0.0
      %5042 = vmatpush1.msra.mxu0 %v4667
      %5043 = vmatprep.subr.mxu0 0.0
      %5044 = vmatpush1.msra.mxu0 %v4666
      %5045 = vmatprep.subr.mxu0 0.0
      %5046 = vmatpush1.msra.mxu0 %v4665
      %5047 = vmatprep.subr.mxu0 0.0
      %5048 = vmatpush1.msra.mxu0 %v4664
      %5049 = vmatprep.subr.mxu0 0.0
      %5050 = vmatpush1.msra.mxu0 %v4663
      %5051 = vmatprep.subr.mxu0 0.0
      %5052 = vmatpush1.msra.mxu0 %v4662
      %5053 = vmatprep.subr.mxu0 0.0
      %5054 = vmatpush1.msra.mxu0 %v4661
      %5055 = vmatprep.subr.mxu0 0.0
      %5056 = vmatpush1.msra.mxu0 %v4660
      %5057 = vmatprep.subr.mxu0 0.0
      %5058 = vmatpush1.msra.mxu0 %v4659
      %5059 = vmatprep.subr.mxu0 0.0
      %5060 = vmatpush1.msra.mxu0 %v4658
      %5061 = vmatprep.subr.mxu0 0.0
      %5062 = vmatpush1.msra.mxu0 %v4657
      %5063 = vmatprep.subr.mxu0 0.0
      %5064 = vmatpush1.msra.mxu0 %v4656
      %5065 = vmatprep.subr.mxu0 0.0
      %5066 = vmatpush2.msra.mxu0 %v4687
      %5067 = vmatprep.subr.mxu0 0.0
      %5068 = vmatpush2.msra.mxu0 %v4686
      %5069 = vmatprep.subr.mxu0 0.0
      %5070 = vmatpush2.msra.mxu0 %v4685
      %5071 = vmatprep.subr.mxu0 0.0
      %5072 = vmatpush2.msra.mxu0 %v4684
      %5073 = vmatprep.subr.mxu0 0.0
      %5074 = vmatpush2.msra.mxu0 %v4683
      %5075 = vmatprep.subr.mxu0 0.0
      %5076 = vmatpush2.msra.mxu0 %v4682
      %5077 = vmatprep.subr.mxu0 0.0
      %5078 = vmatpush2.msra.mxu0 %v4681
      %5079 = vmatprep.subr.mxu0 0.0
      %5080 = vmatpush2.msra.mxu0 %v4680
      %5081 = vmatprep.subr.mxu0 0.0
      %5082 = vmatpush2.msra.mxu0 %v4679
      %5083 = vmatprep.subr.mxu0 0.0
      %5084 = vmatpush2.msra.mxu0 %v4678
      %5085 = vmatprep.subr.mxu0 0.0
      %5086 = vmatpush2.msra.mxu0 %v4677
      %5087 = vmatprep.subr.mxu0 0.0
      %5088 = vmatpush2.msra.mxu0 %v4676
      %5089 = vmatprep.subr.mxu0 0.0
      %5090 = vmatpush2.msra.mxu0 %v4675
      %5091 = vmatprep.subr.mxu0 0.0
      %5092 = vmatpush2.msra.mxu0 %v4674
      %5093 = vmatprep.subr.mxu0 0.0
      %5094 = vmatpush2.msra.mxu0 %v4673
      %5095 = vmatprep.subr.mxu0 0.0
      %5096 = vmatpush2.msra.mxu0 %v4672
      %5097 = vmatprep.mubr.f32.mxu0 %v4551
      %5098 = vmatmul.mubr.f32.gmra.mxu0 %v4550
      %v5099 = vpop.f32.mrf.mxu0
      %v5100 = vadd.f32 %v5030, %v5099
      %v5101 = vpop.f32.mrf.mxu0
      %5102 = vdwg.mxu0
      %5103 = vmatprep.subr.mxu0 0.0
      %5104 = vmatpush1.msra.mxu0 %v4703
      %5105 = vmatprep.subr.mxu0 0.0
      %5106 = vmatpush1.msra.mxu0 %v4702
      %5107 = vmatprep.subr.mxu0 0.0
      %5108 = vmatpush1.msra.mxu0 %v4701
      %5109 = vmatprep.subr.mxu0 0.0
      %5110 = vmatpush1.msra.mxu0 %v4700
      %5111 = vmatprep.subr.mxu0 0.0
      %5112 = vmatpush1.msra.mxu0 %v4699
      %5113 = vmatprep.subr.mxu0 0.0
      %5114 = vmatpush1.msra.mxu0 %v4698
      %5115 = vmatprep.subr.mxu0 0.0
      %5116 = vmatpush1.msra.mxu0 %v4697
      %5117 = vmatprep.subr.mxu0 0.0
      %5118 = vmatpush1.msra.mxu0 %v4696
      %5119 = vmatprep.subr.mxu0 0.0
      %5120 = vmatpush1.msra.mxu0 %v4695
      %5121 = vmatprep.subr.mxu0 0.0
      %5122 = vmatpush1.msra.mxu0 %v4694
      %5123 = vmatprep.subr.mxu0 0.0
      %5124 = vmatpush1.msra.mxu0 %v4693
      %5125 = vmatprep.subr.mxu0 0.0
      %5126 = vmatpush1.msra.mxu0 %v4692
      %5127 = vmatprep.subr.mxu0 0.0
      %5128 = vmatpush1.msra.mxu0 %v4691
      %5129 = vmatprep.subr.mxu0 0.0
      %5130 = vmatpush1.msra.mxu0 %v4690
      %5131 = vmatprep.subr.mxu0 0.0
      %5132 = vmatpush1.msra.mxu0 %v4689
      %5133 = vmatprep.subr.mxu0 0.0
      %5134 = vmatpush1.msra.mxu0 %v4688
      %5135 = vmatprep.subr.mxu0 0.0
      %5136 = vmatpush2.msra.mxu0 %v4719
      %5137 = vmatprep.subr.mxu0 0.0
      %5138 = vmatpush2.msra.mxu0 %v4718
      %5139 = vmatprep.subr.mxu0 0.0
      %5140 = vmatpush2.msra.mxu0 %v4717
      %5141 = vmatprep.subr.mxu0 0.0
      %5142 = vmatpush2.msra.mxu0 %v4716
      %5143 = vmatprep.subr.mxu0 0.0
      %5144 = vmatpush2.msra.mxu0 %v4715
      %5145 = vmatprep.subr.mxu0 0.0
      %5146 = vmatpush2.msra.mxu0 %v4714
      %5147 = vmatprep.subr.mxu0 0.0
      %5148 = vmatpush2.msra.mxu0 %v4713
      %5149 = vmatprep.subr.mxu0 0.0
      %5150 = vmatpush2.msra.mxu0 %v4712
      %5151 = vmatprep.subr.mxu0 0.0
      %5152 = vmatpush2.msra.mxu0 %v4711
      %5153 = vmatprep.subr.mxu0 0.0
      %5154 = vmatpush2.msra.mxu0 %v4710
      %5155 = vmatprep.subr.mxu0 0.0
      %5156 = vmatpush2.msra.mxu0 %v4709
      %5157 = vmatprep.subr.mxu0 0.0
      %5158 = vmatpush2.msra.mxu0 %v4708
      %5159 = vmatprep.subr.mxu0 0.0
      %5160 = vmatpush2.msra.mxu0 %v4707
      %5161 = vmatprep.subr.mxu0 0.0
      %5162 = vmatpush2.msra.mxu0 %v4706
      %5163 = vmatprep.subr.mxu0 0.0
      %5164 = vmatpush2.msra.mxu0 %v4705
      %5165 = vmatprep.subr.mxu0 0.0
      %5166 = vmatpush2.msra.mxu0 %v4704
      %5167 = vmatprep.mubr.f32.mxu0 %v4553
      %5168 = vmatmul.mubr.f32.gmra.mxu0 %v4552
      %v5169 = vpop.f32.mrf.mxu0
      %v5170 = vadd.f32 %v5100, %v5169
      %v5171 = vpop.f32.mrf.mxu0
      %5172 = vdwg.mxu0
      %5173 = vmatprep.subr.mxu0 0.0
      %5174 = vmatpush1.msra.mxu0 %v4735
      %5175 = vmatprep.subr.mxu0 0.0
      %5176 = vmatpush1.msra.mxu0 %v4734
      %5177 = vmatprep.subr.mxu0 0.0
      %5178 = vmatpush1.msra.mxu0 %v4733
      %5179 = vmatprep.subr.mxu0 0.0
      %5180 = vmatpush1.msra.mxu0 %v4732
      %5181 = vmatprep.subr.mxu0 0.0
      %5182 = vmatpush1.msra.mxu0 %v4731
      %5183 = vmatprep.subr.mxu0 0.0
      %5184 = vmatpush1.msra.mxu0 %v4730
      %5185 = vmatprep.subr.mxu0 0.0
      %5186 = vmatpush1.msra.mxu0 %v4729
      %5187 = vmatprep.subr.mxu0 0.0
      %5188 = vmatpush1.msra.mxu0 %v4728
      %5189 = vmatprep.subr.mxu0 0.0
      %5190 = vmatpush1.msra.mxu0 %v4727
      %5191 = vmatprep.subr.mxu0 0.0
      %5192 = vmatpush1.msra.mxu0 %v4726
      %5193 = vmatprep.subr.mxu0 0.0
      %5194 = vmatpush1.msra.mxu0 %v4725
      %5195 = vmatprep.subr.mxu0 0.0
      %5196 = vmatpush1.msra.mxu0 %v4724
      %5197 = vmatprep.subr.mxu0 0.0
      %5198 = vmatpush1.msra.mxu0 %v4723
      %5199 = vmatprep.subr.mxu0 0.0
      %5200 = vmatpush1.msra.mxu0 %v4722
      %5201 = vmatprep.subr.mxu0 0.0
      %5202 = vmatpush1.msra.mxu0 %v4721
      %5203 = vmatprep.subr.mxu0 0.0
      %5204 = vmatpush1.msra.mxu0 %v4720
      %5205 = vmatprep.subr.mxu0 0.0
      %5206 = vmatpush2.msra.mxu0 %v4751
      %5207 = vmatprep.subr.mxu0 0.0
      %5208 = vmatpush2.msra.mxu0 %v4750
      %5209 = vmatprep.subr.mxu0 0.0
      %5210 = vmatpush2.msra.mxu0 %v4749
      %5211 = vmatprep.subr.mxu0 0.0
      %5212 = vmatpush2.msra.mxu0 %v4748
      %5213 = vmatprep.subr.mxu0 0.0
      %5214 = vmatpush2.msra.mxu0 %v4747
      %5215 = vmatprep.subr.mxu0 0.0
      %5216 = vmatpush2.msra.mxu0 %v4746
      %5217 = vmatprep.subr.mxu0 0.0
      %5218 = vmatpush2.msra.mxu0 %v4745
      %5219 = vmatprep.subr.mxu0 0.0
      %5220 = vmatpush2.msra.mxu0 %v4744
      %5221 = vmatprep.subr.mxu0 0.0
      %5222 = vmatpush2.msra.mxu0 %v4743
      %5223 = vmatprep.subr.mxu0 0.0
      %5224 = vmatpush2.msra.mxu0 %v4742
      %5225 = vmatprep.subr.mxu0 0.0
      %5226 = vmatpush2.msra.mxu0 %v4741
      %5227 = vmatprep.subr.mxu0 0.0
      %5228 = vmatpush2.msra.mxu0 %v4740
      %5229 = vmatprep.subr.mxu0 0.0
      %5230 = vmatpush2.msra.mxu0 %v4739
      %5231 = vmatprep.subr.mxu0 0.0
      %5232 = vmatpush2.msra.mxu0 %v4738
      %5233 = vmatprep.subr.mxu0 0.0
      %5234 = vmatpush2.msra.mxu0 %v4737
      %5235 = vmatprep.subr.mxu0 0.0
      %5236 = vmatpush2.msra.mxu0 %v4736
      %5237 = vmatprep.mubr.f32.mxu0 %v4555
      %5238 = vmatmul.mubr.f32.gmra.mxu0 %v4554
      %v5239 = vpop.f32.mrf.mxu0
      %v5240 = vadd.f32 %v5170, %v5239
      %v5241 = vpop.f32.mrf.mxu0
      %5242 = vdwg.mxu0
      %5243 = vmatprep.subr.mxu0 0.0
      %5244 = vmatpush1.msra.mxu0 %v4767
      %5245 = vmatprep.subr.mxu0 0.0
      %5246 = vmatpush1.msra.mxu0 %v4766
      %5247 = vmatprep.subr.mxu0 0.0
      %5248 = vmatpush1.msra.mxu0 %v4765
      %5249 = vmatprep.subr.mxu0 0.0
      %5250 = vmatpush1.msra.mxu0 %v4764
      %5251 = vmatprep.subr.mxu0 0.0
      %5252 = vmatpush1.msra.mxu0 %v4763
      %5253 = vmatprep.subr.mxu0 0.0
      %5254 = vmatpush1.msra.mxu0 %v4762
      %5255 = vmatprep.subr.mxu0 0.0
      %5256 = vmatpush1.msra.mxu0 %v4761
      %5257 = vmatprep.subr.mxu0 0.0
      %5258 = vmatpush1.msra.mxu0 %v4760
      %5259 = vmatprep.subr.mxu0 0.0
      %5260 = vmatpush1.msra.mxu0 %v4759
      %5261 = vmatprep.subr.mxu0 0.0
      %5262 = vmatpush1.msra.mxu0 %v4758
      %5263 = vmatprep.subr.mxu0 0.0
      %5264 = vmatpush1.msra.mxu0 %v4757
      %5265 = vmatprep.subr.mxu0 0.0
      %5266 = vmatpush1.msra.mxu0 %v4756
      %5267 = vmatprep.subr.mxu0 0.0
      %5268 = vmatpush1.msra.mxu0 %v4755
      %5269 = vmatprep.subr.mxu0 0.0
      %5270 = vmatpush1.msra.mxu0 %v4754
      %5271 = vmatprep.subr.mxu0 0.0
      %5272 = vmatpush1.msra.mxu0 %v4753
      %5273 = vmatprep.subr.mxu0 0.0
      %5274 = vmatpush1.msra.mxu0 %v4752
      %5275 = vmatprep.subr.mxu0 0.0
      %5276 = vmatpush2.msra.mxu0 %v4783
      %5277 = vmatprep.subr.mxu0 0.0
      %5278 = vmatpush2.msra.mxu0 %v4782
      %5279 = vmatprep.subr.mxu0 0.0
      %5280 = vmatpush2.msra.mxu0 %v4781
      %5281 = vmatprep.subr.mxu0 0.0
      %5282 = vmatpush2.msra.mxu0 %v4780
      %5283 = vmatprep.subr.mxu0 0.0
      %5284 = vmatpush2.msra.mxu0 %v4779
      %5285 = vmatprep.subr.mxu0 0.0
      %5286 = vmatpush2.msra.mxu0 %v4778
      %5287 = vmatprep.subr.mxu0 0.0
      %5288 = vmatpush2.msra.mxu0 %v4777
      %5289 = vmatprep.subr.mxu0 0.0
      %5290 = vmatpush2.msra.mxu0 %v4776
      %5291 = vmatprep.subr.mxu0 0.0
      %5292 = vmatpush2.msra.mxu0 %v4775
      %5293 = vmatprep.subr.mxu0 0.0
      %5294 = vmatpush2.msra.mxu0 %v4774
      %5295 = vmatprep.subr.mxu0 0.0
      %5296 = vmatpush2.msra.mxu0 %v4773
      %5297 = vmatprep.subr.mxu0 0.0
      %5298 = vmatpush2.msra.mxu0 %v4772
      %5299 = vmatprep.subr.mxu0 0.0
      %5300 = vmatpush2.msra.mxu0 %v4771
      %5301 = vmatprep.subr.mxu0 0.0
      %5302 = vmatpush2.msra.mxu0 %v4770
      %5303 = vmatprep.subr.mxu0 0.0
      %5304 = vmatpush2.msra.mxu0 %v4769
      %5305 = vmatprep.subr.mxu0 0.0
      %5306 = vmatpush2.msra.mxu0 %v4768
      %5307 = vmatprep.mubr.f32.mxu0 %v4557
      %5308 = vmatmul.mubr.f32.gmra.mxu0 %v4556
      %v5309 = vpop.f32.mrf.mxu0
      %v5310 = vadd.f32 %v5240, %v5309
      %v5311 = vpop.f32.mrf.mxu0
      %5312 = vdwg.mxu0
      %5313 = vmatprep.subr.mxu0 0.0
      %5314 = vmatpush1.msra.mxu0 %v4799
      %5315 = vmatprep.subr.mxu0 0.0
      %5316 = vmatpush1.msra.mxu0 %v4798
      %5317 = vmatprep.subr.mxu0 0.0
      %5318 = vmatpush1.msra.mxu0 %v4797
      %5319 = vmatprep.subr.mxu0 0.0
      %5320 = vmatpush1.msra.mxu0 %v4796
      %5321 = vmatprep.subr.mxu0 0.0
      %5322 = vmatpush1.msra.mxu0 %v4795
      %5323 = vmatprep.subr.mxu0 0.0
      %5324 = vmatpush1.msra.mxu0 %v4794
      %5325 = vmatprep.subr.mxu0 0.0
      %5326 = vmatpush1.msra.mxu0 %v4793
      %5327 = vmatprep.subr.mxu0 0.0
      %5328 = vmatpush1.msra.mxu0 %v4792
      %5329 = vmatprep.subr.mxu0 0.0
      %5330 = vmatpush1.msra.mxu0 %v4791
      %5331 = vmatprep.subr.mxu0 0.0
      %5332 = vmatpush1.msra.mxu0 %v4790
      %5333 = vmatprep.subr.mxu0 0.0
      %5334 = vmatpush1.msra.mxu0 %v4789
      %5335 = vmatprep.subr.mxu0 0.0
      %5336 = vmatpush1.msra.mxu0 %v4788
      %5337 = vmatprep.subr.mxu0 0.0
      %5338 = vmatpush1.msra.mxu0 %v4787
      %5339 = vmatprep.subr.mxu0 0.0
      %5340 = vmatpush1.msra.mxu0 %v4786
      %5341 = vmatprep.subr.mxu0 0.0
      %5342 = vmatpush1.msra.mxu0 %v4785
      %5343 = vmatprep.subr.mxu0 0.0
      %5344 = vmatpush1.msra.mxu0 %v4784
      %5345 = vmatprep.subr.mxu0 0.0
      %5346 = vmatpush2.msra.mxu0 %v4815
      %5347 = vmatprep.subr.mxu0 0.0
      %5348 = vmatpush2.msra.mxu0 %v4814
      %5349 = vmatprep.subr.mxu0 0.0
      %5350 = vmatpush2.msra.mxu0 %v4813
      %5351 = vmatprep.subr.mxu0 0.0
      %5352 = vmatpush2.msra.mxu0 %v4812
      %5353 = vmatprep.subr.mxu0 0.0
      %5354 = vmatpush2.msra.mxu0 %v4811
      %5355 = vmatprep.subr.mxu0 0.0
      %5356 = vmatpush2.msra.mxu0 %v4810
      %5357 = vmatprep.subr.mxu0 0.0
      %5358 = vmatpush2.msra.mxu0 %v4809
      %5359 = vmatprep.subr.mxu0 0.0
      %5360 = vmatpush2.msra.mxu0 %v4808
      %5361 = vmatprep.subr.mxu0 0.0
      %5362 = vmatpush2.msra.mxu0 %v4807
      %5363 = vmatprep.subr.mxu0 0.0
      %5364 = vmatpush2.msra.mxu0 %v4806
      %5365 = vmatprep.subr.mxu0 0.0
      %5366 = vmatpush2.msra.mxu0 %v4805
      %5367 = vmatprep.subr.mxu0 0.0
      %5368 = vmatpush2.msra.mxu0 %v4804
      %5369 = vmatprep.subr.mxu0 0.0
      %5370 = vmatpush2.msra.mxu0 %v4803
      %5371 = vmatprep.subr.mxu0 0.0
      %5372 = vmatpush2.msra.mxu0 %v4802
      %5373 = vmatprep.subr.mxu0 0.0
      %5374 = vmatpush2.msra.mxu0 %v4801
      %5375 = vmatprep.subr.mxu0 0.0
      %5376 = vmatpush2.msra.mxu0 %v4800
      %5377 = vmatprep.mubr.f32.mxu0 %v4559
      %5378 = vmatmul.mubr.f32.gmra.mxu0 %v4558
      %v5379 = vpop.f32.mrf.mxu0
      %v5380 = vadd.f32 %v5310, %v5379
      %v5381 = vpop.f32.mrf.mxu0
      %5382 = vdwg.mxu0
      %v5383 = vadd.f32 %v3824, %v5380
      %v5384 = vld [vmem:[%s13] sm:$0x1]
      %v5385 = vld [vmem:[%s14] sm:$0x1]
      %v5386 = vsel %vm620, %v5383, 0.0
      %5387 = vadd.xlane.f32.xlu0 %v5386
      %v5388 = vpop.xlane.xlu0 %5387
      %v5389 = vmul.f32 %v5388, %v3800
      %v5390 = vsub.f32 %v5383, %v5389
      %v5391 = vmul.f32 %v5390, %v5390
      %v5392 = vsel %vm620, %v5391, 0.0
      %5393 = vadd.xlane.f32.xlu0 %v5392
      %v5394 = vpop.xlane.xlu0 %5393
      %v5395 = vmul.f32 %v5394, %v3800
      %v5396 = vadd.f32 %v5395, 1e-05
      %v5397 = vrsqrt.pop %v5396
      %v5398 = vmul.f32 %v5390, %v5397
      %v5400 = vlaneseq
      %v5401 = vshrl.u32 %v5400, 7
      %v5402 = vsub.s32 0, %v5401
      %v5403 = vrot.slane %v5384, %v5402
      %v5405 = vmul.f32 %v5398, %v5403
      %v5407 = vlaneseq
      %v5408 = vshrl.u32 %v5407, 7
      %v5409 = vsub.s32 0, %v5408
      %v5410 = vrot.slane %v5385, %v5409
      %v5412 = vadd.f32 %v5405, %v5410
      %s5413 = scalar_lea.vmem %s3, 32
      %v5414 = vld [vmem:[%s5413] sm:$0xff]
      %v5415 = vld [vmem:[%s5413 + $0x8] sm:$0xff]
      %v5416 = vld [vmem:[%s5413 + $0x10] sm:$0xff]
      %v5417 = vld [vmem:[%s5413 + $0x18] sm:$0xff]
      %s5418 = scalar_lea.vmem %s4, 1
      %v5419 = vld [vmem:[%s5418] sm:$0x1]
      %v5421 = vlaneseq
      %v5422 = vshrl.u32 %v5421, 7
      %v5423 = vsub.s32 0, %v5422
      %v5424 = vrot.slane %v5419, %v5423
      %v5427 = vsel %vm620, %v5412, 0
      %5429 = vmatprep.subr.mxu0 0.0
      %5430 = vmatpush1.msra.mxu0 0.0
      %5431 = vmatprep.subr.mxu0 0.0
      %5432 = vmatpush1.msra.mxu0 0.0
      %5433 = vmatprep.subr.mxu0 0.0
      %5434 = vmatpush1.msra.mxu0 0.0
      %5435 = vmatprep.subr.mxu0 0.0
      %5436 = vmatpush1.msra.mxu0 0.0
      %5437 = vmatprep.subr.mxu0 0.0
      %5438 = vmatpush1.msra.mxu0 0.0
      %5439 = vmatprep.subr.mxu0 0.0
      %5440 = vmatpush1.msra.mxu0 0.0
      %5441 = vmatprep.subr.mxu0 0.0
      %5442 = vmatpush1.msra.mxu0 0.0
      %5443 = vmatprep.subr.mxu0 0.0
      %5444 = vmatpush1.msra.mxu0 0.0
      %5445 = vmatprep.subr.mxu0 0.0
      %5446 = vmatpush1.msra.mxu0 0.0
      %5447 = vmatprep.subr.mxu0 0.0
      %5448 = vmatpush1.msra.mxu0 0.0
      %5449 = vmatprep.subr.mxu0 0.0
      %5450 = vmatpush1.msra.mxu0 0.0
      %5451 = vmatprep.subr.mxu0 0.0
      %5452 = vmatpush1.msra.mxu0 0.0
      %5453 = vmatprep.subr.mxu0 0.0
      %5454 = vmatpush1.msra.mxu0 %v5417
      %5455 = vmatprep.subr.mxu0 0.0
      %5456 = vmatpush1.msra.mxu0 %v5416
      %5457 = vmatprep.subr.mxu0 0.0
      %5458 = vmatpush1.msra.mxu0 %v5415
      %5459 = vmatprep.subr.mxu0 0.0
      %5460 = vmatpush1.msra.mxu0 %v5414
      %5461 = vmatprep.subr.mxu0 0.0
      %5462 = vmatpush2.msra.mxu0 0.0
      %5463 = vmatprep.subr.mxu0 0.0
      %5464 = vmatpush2.msra.mxu0 0.0
      %5465 = vmatprep.subr.mxu0 0.0
      %5466 = vmatpush2.msra.mxu0 0.0
      %5467 = vmatprep.subr.mxu0 0.0
      %5468 = vmatpush2.msra.mxu0 0.0
      %5469 = vmatprep.subr.mxu0 0.0
      %5470 = vmatpush2.msra.mxu0 0.0
      %5471 = vmatprep.subr.mxu0 0.0
      %5472 = vmatpush2.msra.mxu0 0.0
      %5473 = vmatprep.subr.mxu0 0.0
      %5474 = vmatpush2.msra.mxu0 0.0
      %5475 = vmatprep.subr.mxu0 0.0
      %5476 = vmatpush2.msra.mxu0 0.0
      %5477 = vmatprep.subr.mxu0 0.0
      %5478 = vmatpush2.msra.mxu0 0.0
      %5479 = vmatprep.subr.mxu0 0.0
      %5480 = vmatpush2.msra.mxu0 0.0
      %5481 = vmatprep.subr.mxu0 0.0
      %5482 = vmatpush2.msra.mxu0 0.0
      %5483 = vmatprep.subr.mxu0 0.0
      %5484 = vmatpush2.msra.mxu0 0.0
      %5485 = vmatprep.subr.mxu0 0.0
      %5486 = vmatpush2.msra.mxu0 0.0
      %5487 = vmatprep.subr.mxu0 0.0
      %5488 = vmatpush2.msra.mxu0 0.0
      %5489 = vmatprep.subr.mxu0 0.0
      %5490 = vmatpush2.msra.mxu0 0.0
      %5491 = vmatprep.subr.mxu0 0.0
      %5492 = vmatpush2.msra.mxu0 0.0
      %5493 = vmatprep.mubr.f32.mxu0 0.0
      %5494 = vmatmul.mubr.f32.gmra.mxu0 %v5427
      %v5495 = vpop.f32.mrf.mxu0
      %v5496 = vadd.f32 %v5424, %v5495
      %v5497 = vpop.f32.mrf.mxu0
      %5498 = vdwg.mxu0
      %v5500 = vcombine.high %v5496, %v5496
      %v5502 = vunpack.c.l.s4 1983009808
      %v5503 = vunpack.c.0.s8 %v5502
      %v5504 = vlaneseq
      %v5505 = vshrl.u32 %v5504, 7
      %v5506 = vsub.s32 %v5503, %v5505
      %v5507 = vrot.slane %v5496, %v5506
      %v5509 = vunpack.c.l.s4 1983009808
      %v5510 = vunpack.c.0.s8 %v5509
      %v5511 = vlaneseq
      %v5512 = vshrl.u32 %v5511, 7
      %v5513 = vsub.s32 %v5510, %v5512
      %v5514 = vrot.slane %v5500, %v5513
      %v5515 = vcombine.high %v5507, %v5507
      %v5516 = vcombine.high %v5514, %v5514
      %s5517 = scalar_lea.vmem %s5, 32
      %v5518 = vld [vmem:[%s5517] sm:$0xff]
      %v5519 = vld [vmem:[%s5517 + $0x8] sm:$0xff]
      %v5520 = vld [vmem:[%s5517 + $0x10] sm:$0xff]
      %v5521 = vld [vmem:[%s5517 + $0x18] sm:$0xff]
      %v5523 = vunpack.c.l.s4 1983009808
      %v5524 = vunpack.c.0.s8 %v5523
      %v5525 = vlaneseq
      %v5526 = vshrl.u32 %v5525, 7
      %v5527 = vsub.s32 %v5524, %v5526
      %v5528 = vrot.slane %v5507, %v5527
      %5529 = vrot.lane.b32.xlu0 %v5528, 96
      %v5530 = vpop.permute.xlu0 %5529
      %v5531 = vsel %vm725, %v5507, 0
      %v5533 = vsel %vm725, %v5530, 0
      %5535 = vmatprep.subr.mxu0 0.0
      %5536 = vmatpush1.xpose.msra.mxu0 0.0
      %5537 = vmatprep.subr.mxu0 0.0
      %5538 = vmatpush1.xpose.msra.mxu0 0.0
      %5539 = vmatprep.subr.mxu0 0.0
      %5540 = vmatpush1.xpose.msra.mxu0 0.0
      %5541 = vmatprep.subr.mxu0 0.0
      %5542 = vmatpush1.xpose.msra.mxu0 0.0
      %5543 = vmatprep.subr.mxu0 0.0
      %5544 = vmatpush1.xpose.msra.mxu0 0.0
      %5545 = vmatprep.subr.mxu0 0.0
      %5546 = vmatpush1.xpose.msra.mxu0 0.0
      %5547 = vmatprep.subr.mxu0 0.0
      %5548 = vmatpush1.xpose.msra.mxu0 0.0
      %5549 = vmatprep.subr.mxu0 0.0
      %5550 = vmatpush1.xpose.msra.mxu0 0.0
      %5551 = vmatprep.subr.mxu0 0.0
      %5552 = vmatpush1.xpose.msra.mxu0 0.0
      %5553 = vmatprep.subr.mxu0 0.0
      %5554 = vmatpush1.xpose.msra.mxu0 0.0
      %5555 = vmatprep.subr.mxu0 0.0
      %5556 = vmatpush1.xpose.msra.mxu0 0.0
      %5557 = vmatprep.subr.mxu0 0.0
      %5558 = vmatpush1.xpose.msra.mxu0 0.0
      %5559 = vmatprep.subr.mxu0 0.0
      %5560 = vmatpush1.xpose.msra.mxu0 0.0
      %5561 = vmatprep.subr.mxu0 0.0
      %5562 = vmatpush1.xpose.msra.mxu0 0.0
      %5563 = vmatprep.subr.mxu0 0.0
      %5564 = vmatpush1.xpose.msra.mxu0 0.0
      %5565 = vmatprep.subr.mxu0 0.0
      %5566 = vmatpush1.xpose.msra.mxu0 %v5533
      %5567 = vmatprep.subr.mxu0 0.0
      %5568 = vmatpush2.xpose.msra.mxu0 0.0
      %5569 = vmatprep.subr.mxu0 0.0
      %5570 = vmatpush2.xpose.msra.mxu0 0.0
      %5571 = vmatprep.subr.mxu0 0.0
      %5572 = vmatpush2.xpose.msra.mxu0 0.0
      %5573 = vmatprep.subr.mxu0 0.0
      %5574 = vmatpush2.xpose.msra.mxu0 0.0
      %5575 = vmatprep.subr.mxu0 0.0
      %5576 = vmatpush2.xpose.msra.mxu0 0.0
      %5577 = vmatprep.subr.mxu0 0.0
      %5578 = vmatpush2.xpose.msra.mxu0 0.0
      %5579 = vmatprep.subr.mxu0 0.0
      %5580 = vmatpush2.xpose.msra.mxu0 0.0
      %5581 = vmatprep.subr.mxu0 0.0
      %5582 = vmatpush2.xpose.msra.mxu0 0.0
      %5583 = vmatprep.subr.mxu0 0.0
      %5584 = vmatpush2.xpose.msra.mxu0 0.0
      %5585 = vmatprep.subr.mxu0 0.0
      %5586 = vmatpush2.xpose.msra.mxu0 0.0
      %5587 = vmatprep.subr.mxu0 0.0
      %5588 = vmatpush2.xpose.msra.mxu0 0.0
      %5589 = vmatprep.subr.mxu0 0.0
      %5590 = vmatpush2.xpose.msra.mxu0 0.0
      %5591 = vmatprep.subr.mxu0 0.0
      %5592 = vmatpush2.xpose.msra.mxu0 0.0
      %5593 = vmatprep.subr.mxu0 0.0
      %5594 = vmatpush2.xpose.msra.mxu0 0.0
      %5595 = vmatprep.subr.mxu0 0.0
      %5596 = vmatpush2.xpose.msra.mxu0 0.0
      %5597 = vmatprep.subr.mxu0 0.0
      %5598 = vmatpush2.xpose.msra.mxu0 0.0
      %5599 = vmatprep.mubr.f32.mxu0 0.0
      %5600 = vmatmul.mubr.f32.gmra.mxu0 %v5531
      %v5601 = vpop.f32.mrf.mxu0
      %v5602 = vadd.f32 0.0, %v5601
      %v5603 = vpop.f32.mrf.mxu0
      %5604 = vdwg.mxu0
      %v5606 = vunpack.c.l.s4 1983009808
      %v5607 = vunpack.c.0.s8 %v5606
      %v5608 = vlaneseq
      %v5609 = vshrl.u32 %v5608, 7
      %v5610 = vsub.s32 %v5607, %v5609
      %v5611 = vrot.slane %v5515, %v5610
      %5612 = vrot.lane.b32.xlu0 %v5611, 96
      %v5613 = vpop.permute.xlu0 %5612
      %v5614 = vsel %vm725, %v5515, 0
      %v5616 = vsel %vm725, %v5613, 0
      %5618 = vmatprep.subr.mxu0 0.0
      %5619 = vmatpush1.xpose.msra.mxu0 0.0
      %5620 = vmatprep.subr.mxu0 0.0
      %5621 = vmatpush1.xpose.msra.mxu0 0.0
      %5622 = vmatprep.subr.mxu0 0.0
      %5623 = vmatpush1.xpose.msra.mxu0 0.0
      %5624 = vmatprep.subr.mxu0 0.0
      %5625 = vmatpush1.xpose.msra.mxu0 0.0
      %5626 = vmatprep.subr.mxu0 0.0
      %5627 = vmatpush1.xpose.msra.mxu0 0.0
      %5628 = vmatprep.subr.mxu0 0.0
      %5629 = vmatpush1.xpose.msra.mxu0 0.0
      %5630 = vmatprep.subr.mxu0 0.0
      %5631 = vmatpush1.xpose.msra.mxu0 0.0
      %5632 = vmatprep.subr.mxu0 0.0
      %5633 = vmatpush1.xpose.msra.mxu0 0.0
      %5634 = vmatprep.subr.mxu0 0.0
      %5635 = vmatpush1.xpose.msra.mxu0 0.0
      %5636 = vmatprep.subr.mxu0 0.0
      %5637 = vmatpush1.xpose.msra.mxu0 0.0
      %5638 = vmatprep.subr.mxu0 0.0
      %5639 = vmatpush1.xpose.msra.mxu0 0.0
      %5640 = vmatprep.subr.mxu0 0.0
      %5641 = vmatpush1.xpose.msra.mxu0 0.0
      %5642 = vmatprep.subr.mxu0 0.0
      %5643 = vmatpush1.xpose.msra.mxu0 0.0
      %5644 = vmatprep.subr.mxu0 0.0
      %5645 = vmatpush1.xpose.msra.mxu0 0.0
      %5646 = vmatprep.subr.mxu0 0.0
      %5647 = vmatpush1.xpose.msra.mxu0 0.0
      %5648 = vmatprep.subr.mxu0 0.0
      %5649 = vmatpush1.xpose.msra.mxu0 %v5616
      %5650 = vmatprep.subr.mxu0 0.0
      %5651 = vmatpush2.xpose.msra.mxu0 0.0
      %5652 = vmatprep.subr.mxu0 0.0
      %5653 = vmatpush2.xpose.msra.mxu0 0.0
      %5654 = vmatprep.subr.mxu0 0.0
      %5655 = vmatpush2.xpose.msra.mxu0 0.0
      %5656 = vmatprep.subr.mxu0 0.0
      %5657 = vmatpush2.xpose.msra.mxu0 0.0
      %5658 = vmatprep.subr.mxu0 0.0
      %5659 = vmatpush2.xpose.msra.mxu0 0.0
      %5660 = vmatprep.subr.mxu0 0.0
      %5661 = vmatpush2.xpose.msra.mxu0 0.0
      %5662 = vmatprep.subr.mxu0 0.0
      %5663 = vmatpush2.xpose.msra.mxu0 0.0
      %5664 = vmatprep.subr.mxu0 0.0
      %5665 = vmatpush2.xpose.msra.mxu0 0.0
      %5666 = vmatprep.subr.mxu0 0.0
      %5667 = vmatpush2.xpose.msra.mxu0 0.0
      %5668 = vmatprep.subr.mxu0 0.0
      %5669 = vmatpush2.xpose.msra.mxu0 0.0
      %5670 = vmatprep.subr.mxu0 0.0
      %5671 = vmatpush2.xpose.msra.mxu0 0.0
      %5672 = vmatprep.subr.mxu0 0.0
      %5673 = vmatpush2.xpose.msra.mxu0 0.0
      %5674 = vmatprep.subr.mxu0 0.0
      %5675 = vmatpush2.xpose.msra.mxu0 0.0
      %5676 = vmatprep.subr.mxu0 0.0
      %5677 = vmatpush2.xpose.msra.mxu0 0.0
      %5678 = vmatprep.subr.mxu0 0.0
      %5679 = vmatpush2.xpose.msra.mxu0 0.0
      %5680 = vmatprep.subr.mxu0 0.0
      %5681 = vmatpush2.xpose.msra.mxu0 0.0
      %5682 = vmatprep.mubr.f32.mxu0 0.0
      %5683 = vmatmul.mubr.f32.gmra.mxu0 %v5614
      %v5684 = vpop.f32.mrf.mxu0
      %v5685 = vadd.f32 0.0, %v5684
      %v5686 = vpop.f32.mrf.mxu0
      %5687 = vdwg.mxu0
      %v5689 = vunpack.c.l.s4 1983009808
      %v5690 = vunpack.c.0.s8 %v5689
      %v5691 = vlaneseq
      %v5692 = vshrl.u32 %v5691, 7
      %v5693 = vsub.s32 %v5690, %v5692
      %v5694 = vrot.slane %v5514, %v5693
      %5695 = vrot.lane.b32.xlu0 %v5694, 96
      %v5696 = vpop.permute.xlu0 %5695
      %v5697 = vsel %vm725, %v5514, 0
      %v5699 = vsel %vm725, %v5696, 0
      %5701 = vmatprep.subr.mxu0 0.0
      %5702 = vmatpush1.xpose.msra.mxu0 0.0
      %5703 = vmatprep.subr.mxu0 0.0
      %5704 = vmatpush1.xpose.msra.mxu0 0.0
      %5705 = vmatprep.subr.mxu0 0.0
      %5706 = vmatpush1.xpose.msra.mxu0 0.0
      %5707 = vmatprep.subr.mxu0 0.0
      %5708 = vmatpush1.xpose.msra.mxu0 0.0
      %5709 = vmatprep.subr.mxu0 0.0
      %5710 = vmatpush1.xpose.msra.mxu0 0.0
      %5711 = vmatprep.subr.mxu0 0.0
      %5712 = vmatpush1.xpose.msra.mxu0 0.0
      %5713 = vmatprep.subr.mxu0 0.0
      %5714 = vmatpush1.xpose.msra.mxu0 0.0
      %5715 = vmatprep.subr.mxu0 0.0
      %5716 = vmatpush1.xpose.msra.mxu0 0.0
      %5717 = vmatprep.subr.mxu0 0.0
      %5718 = vmatpush1.xpose.msra.mxu0 0.0
      %5719 = vmatprep.subr.mxu0 0.0
      %5720 = vmatpush1.xpose.msra.mxu0 0.0
      %5721 = vmatprep.subr.mxu0 0.0
      %5722 = vmatpush1.xpose.msra.mxu0 0.0
      %5723 = vmatprep.subr.mxu0 0.0
      %5724 = vmatpush1.xpose.msra.mxu0 0.0
      %5725 = vmatprep.subr.mxu0 0.0
      %5726 = vmatpush1.xpose.msra.mxu0 0.0
      %5727 = vmatprep.subr.mxu0 0.0
      %5728 = vmatpush1.xpose.msra.mxu0 0.0
      %5729 = vmatprep.subr.mxu0 0.0
      %5730 = vmatpush1.xpose.msra.mxu0 0.0
      %5731 = vmatprep.subr.mxu0 0.0
      %5732 = vmatpush1.xpose.msra.mxu0 %v5699
      %5733 = vmatprep.subr.mxu0 0.0
      %5734 = vmatpush2.xpose.msra.mxu0 0.0
      %5735 = vmatprep.subr.mxu0 0.0
      %5736 = vmatpush2.xpose.msra.mxu0 0.0
      %5737 = vmatprep.subr.mxu0 0.0
      %5738 = vmatpush2.xpose.msra.mxu0 0.0
      %5739 = vmatprep.subr.mxu0 0.0
      %5740 = vmatpush2.xpose.msra.mxu0 0.0
      %5741 = vmatprep.subr.mxu0 0.0
      %5742 = vmatpush2.xpose.msra.mxu0 0.0
      %5743 = vmatprep.subr.mxu0 0.0
      %5744 = vmatpush2.xpose.msra.mxu0 0.0
      %5745 = vmatprep.subr.mxu0 0.0
      %5746 = vmatpush2.xpose.msra.mxu0 0.0
      %5747 = vmatprep.subr.mxu0 0.0
      %5748 = vmatpush2.xpose.msra.mxu0 0.0
      %5749 = vmatprep.subr.mxu0 0.0
      %5750 = vmatpush2.xpose.msra.mxu0 0.0
      %5751 = vmatprep.subr.mxu0 0.0
      %5752 = vmatpush2.xpose.msra.mxu0 0.0
      %5753 = vmatprep.subr.mxu0 0.0
      %5754 = vmatpush2.xpose.msra.mxu0 0.0
      %5755 = vmatprep.subr.mxu0 0.0
      %5756 = vmatpush2.xpose.msra.mxu0 0.0
      %5757 = vmatprep.subr.mxu0 0.0
      %5758 = vmatpush2.xpose.msra.mxu0 0.0
      %5759 = vmatprep.subr.mxu0 0.0
      %5760 = vmatpush2.xpose.msra.mxu0 0.0
      %5761 = vmatprep.subr.mxu0 0.0
      %5762 = vmatpush2.xpose.msra.mxu0 0.0
      %5763 = vmatprep.subr.mxu0 0.0
      %5764 = vmatpush2.xpose.msra.mxu0 0.0
      %5765 = vmatprep.mubr.f32.mxu0 0.0
      %5766 = vmatmul.mubr.f32.gmra.mxu0 %v5697
      %v5767 = vpop.f32.mrf.mxu0
      %v5768 = vadd.f32 0.0, %v5767
      %v5769 = vpop.f32.mrf.mxu0
      %5770 = vdwg.mxu0
      %v5772 = vunpack.c.l.s4 1983009808
      %v5773 = vunpack.c.0.s8 %v5772
      %v5774 = vlaneseq
      %v5775 = vshrl.u32 %v5774, 7
      %v5776 = vsub.s32 %v5773, %v5775
      %v5777 = vrot.slane %v5516, %v5776
      %5778 = vrot.lane.b32.xlu0 %v5777, 96
      %v5779 = vpop.permute.xlu0 %5778
      %v5780 = vsel %vm725, %v5516, 0
      %v5782 = vsel %vm725, %v5779, 0
      %5784 = vmatprep.subr.mxu0 0.0
      %5785 = vmatpush1.xpose.msra.mxu0 0.0
      %5786 = vmatprep.subr.mxu0 0.0
      %5787 = vmatpush1.xpose.msra.mxu0 0.0
      %5788 = vmatprep.subr.mxu0 0.0
      %5789 = vmatpush1.xpose.msra.mxu0 0.0
      %5790 = vmatprep.subr.mxu0 0.0
      %5791 = vmatpush1.xpose.msra.mxu0 0.0
      %5792 = vmatprep.subr.mxu0 0.0
      %5793 = vmatpush1.xpose.msra.mxu0 0.0
      %5794 = vmatprep.subr.mxu0 0.0
      %5795 = vmatpush1.xpose.msra.mxu0 0.0
      %5796 = vmatprep.subr.mxu0 0.0
      %5797 = vmatpush1.xpose.msra.mxu0 0.0
      %5798 = vmatprep.subr.mxu0 0.0
      %5799 = vmatpush1.xpose.msra.mxu0 0.0
      %5800 = vmatprep.subr.mxu0 0.0
      %5801 = vmatpush1.xpose.msra.mxu0 0.0
      %5802 = vmatprep.subr.mxu0 0.0
      %5803 = vmatpush1.xpose.msra.mxu0 0.0
      %5804 = vmatprep.subr.mxu0 0.0
      %5805 = vmatpush1.xpose.msra.mxu0 0.0
      %5806 = vmatprep.subr.mxu0 0.0
      %5807 = vmatpush1.xpose.msra.mxu0 0.0
      %5808 = vmatprep.subr.mxu0 0.0
      %5809 = vmatpush1.xpose.msra.mxu0 0.0
      %5810 = vmatprep.subr.mxu0 0.0
      %5811 = vmatpush1.xpose.msra.mxu0 0.0
      %5812 = vmatprep.subr.mxu0 0.0
      %5813 = vmatpush1.xpose.msra.mxu0 0.0
      %5814 = vmatprep.subr.mxu0 0.0
      %5815 = vmatpush1.xpose.msra.mxu0 %v5782
      %5816 = vmatprep.subr.mxu0 0.0
      %5817 = vmatpush2.xpose.msra.mxu0 0.0
      %5818 = vmatprep.subr.mxu0 0.0
      %5819 = vmatpush2.xpose.msra.mxu0 0.0
      %5820 = vmatprep.subr.mxu0 0.0
      %5821 = vmatpush2.xpose.msra.mxu0 0.0
      %5822 = vmatprep.subr.mxu0 0.0
      %5823 = vmatpush2.xpose.msra.mxu0 0.0
      %5824 = vmatprep.subr.mxu0 0.0
      %5825 = vmatpush2.xpose.msra.mxu0 0.0
      %5826 = vmatprep.subr.mxu0 0.0
      %5827 = vmatpush2.xpose.msra.mxu0 0.0
      %5828 = vmatprep.subr.mxu0 0.0
      %5829 = vmatpush2.xpose.msra.mxu0 0.0
      %5830 = vmatprep.subr.mxu0 0.0
      %5831 = vmatpush2.xpose.msra.mxu0 0.0
      %5832 = vmatprep.subr.mxu0 0.0
      %5833 = vmatpush2.xpose.msra.mxu0 0.0
      %5834 = vmatprep.subr.mxu0 0.0
      %5835 = vmatpush2.xpose.msra.mxu0 0.0
      %5836 = vmatprep.subr.mxu0 0.0
      %5837 = vmatpush2.xpose.msra.mxu0 0.0
      %5838 = vmatprep.subr.mxu0 0.0
      %5839 = vmatpush2.xpose.msra.mxu0 0.0
      %5840 = vmatprep.subr.mxu0 0.0
      %5841 = vmatpush2.xpose.msra.mxu0 0.0
      %5842 = vmatprep.subr.mxu0 0.0
      %5843 = vmatpush2.xpose.msra.mxu0 0.0
      %5844 = vmatprep.subr.mxu0 0.0
      %5845 = vmatpush2.xpose.msra.mxu0 0.0
      %5846 = vmatprep.subr.mxu0 0.0
      %5847 = vmatpush2.xpose.msra.mxu0 0.0
      %5848 = vmatprep.mubr.f32.mxu0 0.0
      %5849 = vmatmul.mubr.f32.gmra.mxu0 %v5780
      %v5850 = vpop.f32.mrf.mxu0
      %v5851 = vadd.f32 0.0, %v5850
      %v5852 = vpop.f32.mrf.mxu0
      %5853 = vdwg.mxu0
      %v5854 = vmul.f32 %v5602, 0.35355338
      %v5855 = vmul.f32 %v5685, 0.35355338
      %v5856 = vmul.f32 %v5768, 0.35355338
      %v5857 = vmul.f32 %v5851, 0.35355338
      %v5858 = vsel %vm1053, %v5854, -inf
      %5859 = vmax.xlane.f32.xlu0 %v5858
      %v5860 = vpop.xlane.xlu0 %5859
      %v5861 = vsel %vm1053, %v5855, -inf
      %5862 = vmax.xlane.f32.xlu0 %v5861
      %v5863 = vpop.xlane.xlu0 %5862
      %v5864 = vsel %vm1053, %v5856, -inf
      %5865 = vmax.xlane.f32.xlu0 %v5864
      %v5866 = vpop.xlane.xlu0 %5865
      %v5867 = vsel %vm1053, %v5857, -inf
      %5868 = vmax.xlane.f32.xlu0 %v5867
      %v5869 = vpop.xlane.xlu0 %5868
      %v5870 = vsub.f32 %v5854, %v5860
      %v5871 = vsub.f32 %v5855, %v5863
      %v5872 = vsub.f32 %v5856, %v5866
      %v5873 = vsub.f32 %v5857, %v5869
      %v5874 = vmul.f32 %v5870, 1.442695
      %v5875 = vpow.pop %v5874
      %v5876 = vmul.f32 %v5871, 1.442695
      %v5877 = vpow.pop %v5876
      %v5878 = vmul.f32 %v5872, 1.442695
      %v5879 = vpow.pop %v5878
      %v5880 = vmul.f32 %v5873, 1.442695
      %v5881 = vpow.pop %v5880
      %v5882 = vsel %vm1053, %v5875, 0.0
      %5883 = vadd.xlane.f32.xlu0 %v5882
      %v5884 = vpop.xlane.xlu0 %5883
      %v5885 = vsel %vm1053, %v5877, 0.0
      %5886 = vadd.xlane.f32.xlu0 %v5885
      %v5887 = vpop.xlane.xlu0 %5886
      %v5888 = vsel %vm1053, %v5879, 0.0
      %5889 = vadd.xlane.f32.xlu0 %v5888
      %v5890 = vpop.xlane.xlu0 %5889
      %v5891 = vsel %vm1053, %v5881, 0.0
      %5892 = vadd.xlane.f32.xlu0 %v5891
      %v5893 = vpop.xlane.xlu0 %5892
      %v5894 = vrcp.pop %v5884
      %v5895 = vmul.f32 %v5875, %v5894
      %v5896 = vrcp.pop %v5887
      %v5897 = vmul.f32 %v5877, %v5896
      %v5898 = vrcp.pop %v5890
      %v5899 = vmul.f32 %v5879, %v5898
      %v5900 = vrcp.pop %v5893
      %v5901 = vmul.f32 %v5881, %v5900
      %5902 = vrot.lane.b32.xlu0 %v5528, 64
      %v5903 = vpop.permute.xlu0 %5902
      %v5905 = vsel %vm1100, %v5895, 0
      %v5907 = vsel %vm1104, %v5903, 0
      %5909 = vmatprep.subr.mxu0 0.0
      %5910 = vmatpush1.msra.mxu0 0.0
      %5911 = vmatprep.subr.mxu0 0.0
      %5912 = vmatpush1.msra.mxu0 0.0
      %5913 = vmatprep.subr.mxu0 0.0
      %5914 = vmatpush1.msra.mxu0 0.0
      %5915 = vmatprep.subr.mxu0 0.0
      %5916 = vmatpush1.msra.mxu0 0.0
      %5917 = vmatprep.subr.mxu0 0.0
      %5918 = vmatpush1.msra.mxu0 0.0
      %5919 = vmatprep.subr.mxu0 0.0
      %5920 = vmatpush1.msra.mxu0 0.0
      %5921 = vmatprep.subr.mxu0 0.0
      %5922 = vmatpush1.msra.mxu0 0.0
      %5923 = vmatprep.subr.mxu0 0.0
      %5924 = vmatpush1.msra.mxu0 0.0
      %5925 = vmatprep.subr.mxu0 0.0
      %5926 = vmatpush1.msra.mxu0 0.0
      %5927 = vmatprep.subr.mxu0 0.0
      %5928 = vmatpush1.msra.mxu0 0.0
      %5929 = vmatprep.subr.mxu0 0.0
      %5930 = vmatpush1.msra.mxu0 0.0
      %5931 = vmatprep.subr.mxu0 0.0
      %5932 = vmatpush1.msra.mxu0 0.0
      %5933 = vmatprep.subr.mxu0 0.0
      %5934 = vmatpush1.msra.mxu0 0.0
      %5935 = vmatprep.subr.mxu0 0.0
      %5936 = vmatpush1.msra.mxu0 0.0
      %5937 = vmatprep.subr.mxu0 0.0
      %5938 = vmatpush1.msra.mxu0 0.0
      %5939 = vmatprep.subr.mxu0 0.0
      %5940 = vmatpush1.msra.mxu0 %v5907
      %5941 = vmatprep.subr.mxu0 0.0
      %5942 = vmatpush2.msra.mxu0 0.0
      %5943 = vmatprep.subr.mxu0 0.0
      %5944 = vmatpush2.msra.mxu0 0.0
      %5945 = vmatprep.subr.mxu0 0.0
      %5946 = vmatpush2.msra.mxu0 0.0
      %5947 = vmatprep.subr.mxu0 0.0
      %5948 = vmatpush2.msra.mxu0 0.0
      %5949 = vmatprep.subr.mxu0 0.0
      %5950 = vmatpush2.msra.mxu0 0.0
      %5951 = vmatprep.subr.mxu0 0.0
      %5952 = vmatpush2.msra.mxu0 0.0
      %5953 = vmatprep.subr.mxu0 0.0
      %5954 = vmatpush2.msra.mxu0 0.0
      %5955 = vmatprep.subr.mxu0 0.0
      %5956 = vmatpush2.msra.mxu0 0.0
      %5957 = vmatprep.subr.mxu0 0.0
      %5958 = vmatpush2.msra.mxu0 0.0
      %5959 = vmatprep.subr.mxu0 0.0
      %5960 = vmatpush2.msra.mxu0 0.0
      %5961 = vmatprep.subr.mxu0 0.0
      %5962 = vmatpush2.msra.mxu0 0.0
      %5963 = vmatprep.subr.mxu0 0.0
      %5964 = vmatpush2.msra.mxu0 0.0
      %5965 = vmatprep.subr.mxu0 0.0
      %5966 = vmatpush2.msra.mxu0 0.0
      %5967 = vmatprep.subr.mxu0 0.0
      %5968 = vmatpush2.msra.mxu0 0.0
      %5969 = vmatprep.subr.mxu0 0.0
      %5970 = vmatpush2.msra.mxu0 0.0
      %5971 = vmatprep.subr.mxu0 0.0
      %5972 = vmatpush2.msra.mxu0 0.0
      %5973 = vmatprep.mubr.f32.mxu0 0.0
      %5974 = vmatmul.mubr.f32.gmra.mxu0 %v5905
      %v5975 = vpop.f32.mrf.mxu0
      %v5976 = vadd.f32 0.0, %v5975
      %v5977 = vpop.f32.mrf.mxu0
      %5978 = vdwg.mxu0
      %5979 = vrot.lane.b32.xlu0 %v5611, 64
      %v5980 = vpop.permute.xlu0 %5979
      %v5982 = vsel %vm1100, %v5897, 0
      %v5984 = vsel %vm1104, %v5980, 0
      %5986 = vmatprep.subr.mxu0 0.0
      %5987 = vmatpush1.msra.mxu0 0.0
      %5988 = vmatprep.subr.mxu0 0.0
      %5989 = vmatpush1.msra.mxu0 0.0
      %5990 = vmatprep.subr.mxu0 0.0
      %5991 = vmatpush1.msra.mxu0 0.0
      %5992 = vmatprep.subr.mxu0 0.0
      %5993 = vmatpush1.msra.mxu0 0.0
      %5994 = vmatprep.subr.mxu0 0.0
      %5995 = vmatpush1.msra.mxu0 0.0
      %5996 = vmatprep.subr.mxu0 0.0
      %5997 = vmatpush1.msra.mxu0 0.0
      %5998 = vmatprep.subr.mxu0 0.0
      %5999 = vmatpush1.msra.mxu0 0.0
      %6000 = vmatprep.subr.mxu0 0.0
      %6001 = vmatpush1.msra.mxu0 0.0
      %6002 = vmatprep.subr.mxu0 0.0
      %6003 = vmatpush1.msra.mxu0 0.0
      %6004 = vmatprep.subr.mxu0 0.0
      %6005 = vmatpush1.msra.mxu0 0.0
      %6006 = vmatprep.subr.mxu0 0.0
      %6007 = vmatpush1.msra.mxu0 0.0
      %6008 = vmatprep.subr.mxu0 0.0
      %6009 = vmatpush1.msra.mxu0 0.0
      %6010 = vmatprep.subr.mxu0 0.0
      %6011 = vmatpush1.msra.mxu0 0.0
      %6012 = vmatprep.subr.mxu0 0.0
      %6013 = vmatpush1.msra.mxu0 0.0
      %6014 = vmatprep.subr.mxu0 0.0
      %6015 = vmatpush1.msra.mxu0 0.0
      %6016 = vmatprep.subr.mxu0 0.0
      %6017 = vmatpush1.msra.mxu0 %v5984
      %6018 = vmatprep.subr.mxu0 0.0
      %6019 = vmatpush2.msra.mxu0 0.0
      %6020 = vmatprep.subr.mxu0 0.0
      %6021 = vmatpush2.msra.mxu0 0.0
      %6022 = vmatprep.subr.mxu0 0.0
      %6023 = vmatpush2.msra.mxu0 0.0
      %6024 = vmatprep.subr.mxu0 0.0
      %6025 = vmatpush2.msra.mxu0 0.0
      %6026 = vmatprep.subr.mxu0 0.0
      %6027 = vmatpush2.msra.mxu0 0.0
      %6028 = vmatprep.subr.mxu0 0.0
      %6029 = vmatpush2.msra.mxu0 0.0
      %6030 = vmatprep.subr.mxu0 0.0
      %6031 = vmatpush2.msra.mxu0 0.0
      %6032 = vmatprep.subr.mxu0 0.0
      %6033 = vmatpush2.msra.mxu0 0.0
      %6034 = vmatprep.subr.mxu0 0.0
      %6035 = vmatpush2.msra.mxu0 0.0
      %6036 = vmatprep.subr.mxu0 0.0
      %6037 = vmatpush2.msra.mxu0 0.0
      %6038 = vmatprep.subr.mxu0 0.0
      %6039 = vmatpush2.msra.mxu0 0.0
      %6040 = vmatprep.subr.mxu0 0.0
      %6041 = vmatpush2.msra.mxu0 0.0
      %6042 = vmatprep.subr.mxu0 0.0
      %6043 = vmatpush2.msra.mxu0 0.0
      %6044 = vmatprep.subr.mxu0 0.0
      %6045 = vmatpush2.msra.mxu0 0.0
      %6046 = vmatprep.subr.mxu0 0.0
      %6047 = vmatpush2.msra.mxu0 0.0
      %6048 = vmatprep.subr.mxu0 0.0
      %6049 = vmatpush2.msra.mxu0 0.0
      %6050 = vmatprep.mubr.f32.mxu0 0.0
      %6051 = vmatmul.mubr.f32.gmra.mxu0 %v5982
      %v6052 = vpop.f32.mrf.mxu0
      %v6053 = vadd.f32 0.0, %v6052
      %v6054 = vpop.f32.mrf.mxu0
      %6055 = vdwg.mxu0
      %6056 = vrot.lane.b32.xlu0 %v5694, 64
      %v6057 = vpop.permute.xlu0 %6056
      %v6059 = vsel %vm1100, %v5899, 0
      %v6061 = vsel %vm1104, %v6057, 0
      %6063 = vmatprep.subr.mxu0 0.0
      %6064 = vmatpush1.msra.mxu0 0.0
      %6065 = vmatprep.subr.mxu0 0.0
      %6066 = vmatpush1.msra.mxu0 0.0
      %6067 = vmatprep.subr.mxu0 0.0
      %6068 = vmatpush1.msra.mxu0 0.0
      %6069 = vmatprep.subr.mxu0 0.0
      %6070 = vmatpush1.msra.mxu0 0.0
      %6071 = vmatprep.subr.mxu0 0.0
      %6072 = vmatpush1.msra.mxu0 0.0
      %6073 = vmatprep.subr.mxu0 0.0
      %6074 = vmatpush1.msra.mxu0 0.0
      %6075 = vmatprep.subr.mxu0 0.0
      %6076 = vmatpush1.msra.mxu0 0.0
      %6077 = vmatprep.subr.mxu0 0.0
      %6078 = vmatpush1.msra.mxu0 0.0
      %6079 = vmatprep.subr.mxu0 0.0
      %6080 = vmatpush1.msra.mxu0 0.0
      %6081 = vmatprep.subr.mxu0 0.0
      %6082 = vmatpush1.msra.mxu0 0.0
      %6083 = vmatprep.subr.mxu0 0.0
      %6084 = vmatpush1.msra.mxu0 0.0
      %6085 = vmatprep.subr.mxu0 0.0
      %6086 = vmatpush1.msra.mxu0 0.0
      %6087 = vmatprep.subr.mxu0 0.0
      %6088 = vmatpush1.msra.mxu0 0.0
      %6089 = vmatprep.subr.mxu0 0.0
      %6090 = vmatpush1.msra.mxu0 0.0
      %6091 = vmatprep.subr.mxu0 0.0
      %6092 = vmatpush1.msra.mxu0 0.0
      %6093 = vmatprep.subr.mxu0 0.0
      %6094 = vmatpush1.msra.mxu0 %v6061
      %6095 = vmatprep.subr.mxu0 0.0
      %6096 = vmatpush2.msra.mxu0 0.0
      %6097 = vmatprep.subr.mxu0 0.0
      %6098 = vmatpush2.msra.mxu0 0.0
      %6099 = vmatprep.subr.mxu0 0.0
      %6100 = vmatpush2.msra.mxu0 0.0
      %6101 = vmatprep.subr.mxu0 0.0
      %6102 = vmatpush2.msra.mxu0 0.0
      %6103 = vmatprep.subr.mxu0 0.0
      %6104 = vmatpush2.msra.mxu0 0.0
      %6105 = vmatprep.subr.mxu0 0.0
      %6106 = vmatpush2.msra.mxu0 0.0
      %6107 = vmatprep.subr.mxu0 0.0
      %6108 = vmatpush2.msra.mxu0 0.0
      %6109 = vmatprep.subr.mxu0 0.0
      %6110 = vmatpush2.msra.mxu0 0.0
      %6111 = vmatprep.subr.mxu0 0.0
      %6112 = vmatpush2.msra.mxu0 0.0
      %6113 = vmatprep.subr.mxu0 0.0
      %6114 = vmatpush2.msra.mxu0 0.0
      %6115 = vmatprep.subr.mxu0 0.0
      %6116 = vmatpush2.msra.mxu0 0.0
      %6117 = vmatprep.subr.mxu0 0.0
      %6118 = vmatpush2.msra.mxu0 0.0
      %6119 = vmatprep.subr.mxu0 0.0
      %6120 = vmatpush2.msra.mxu0 0.0
      %6121 = vmatprep.subr.mxu0 0.0
      %6122 = vmatpush2.msra.mxu0 0.0
      %6123 = vmatprep.subr.mxu0 0.0
      %6124 = vmatpush2.msra.mxu0 0.0
      %6125 = vmatprep.subr.mxu0 0.0
      %6126 = vmatpush2.msra.mxu0 0.0
      %6127 = vmatprep.mubr.f32.mxu0 0.0
      %6128 = vmatmul.mubr.f32.gmra.mxu0 %v6059
      %v6129 = vpop.f32.mrf.mxu0
      %v6130 = vadd.f32 0.0, %v6129
      %v6131 = vpop.f32.mrf.mxu0
      %6132 = vdwg.mxu0
      %6133 = vrot.lane.b32.xlu0 %v5777, 64
      %v6134 = vpop.permute.xlu0 %6133
      %v6136 = vsel %vm1100, %v5901, 0
      %v6138 = vsel %vm1104, %v6134, 0
      %6140 = vmatprep.subr.mxu0 0.0
      %6141 = vmatpush1.msra.mxu0 0.0
      %6142 = vmatprep.subr.mxu0 0.0
      %6143 = vmatpush1.msra.mxu0 0.0
      %6144 = vmatprep.subr.mxu0 0.0
      %6145 = vmatpush1.msra.mxu0 0.0
      %6146 = vmatprep.subr.mxu0 0.0
      %6147 = vmatpush1.msra.mxu0 0.0
      %6148 = vmatprep.subr.mxu0 0.0
      %6149 = vmatpush1.msra.mxu0 0.0
      %6150 = vmatprep.subr.mxu0 0.0
      %6151 = vmatpush1.msra.mxu0 0.0
      %6152 = vmatprep.subr.mxu0 0.0
      %6153 = vmatpush1.msra.mxu0 0.0
      %6154 = vmatprep.subr.mxu0 0.0
      %6155 = vmatpush1.msra.mxu0 0.0
      %6156 = vmatprep.subr.mxu0 0.0
      %6157 = vmatpush1.msra.mxu0 0.0
      %6158 = vmatprep.subr.mxu0 0.0
      %6159 = vmatpush1.msra.mxu0 0.0
      %6160 = vmatprep.subr.mxu0 0.0
      %6161 = vmatpush1.msra.mxu0 0.0
      %6162 = vmatprep.subr.mxu0 0.0
      %6163 = vmatpush1.msra.mxu0 0.0
      %6164 = vmatprep.subr.mxu0 0.0
      %6165 = vmatpush1.msra.mxu0 0.0
      %6166 = vmatprep.subr.mxu0 0.0
      %6167 = vmatpush1.msra.mxu0 0.0
      %6168 = vmatprep.subr.mxu0 0.0
      %6169 = vmatpush1.msra.mxu0 0.0
      %6170 = vmatprep.subr.mxu0 0.0
      %6171 = vmatpush1.msra.mxu0 %v6138
      %6172 = vmatprep.subr.mxu0 0.0
      %6173 = vmatpush2.msra.mxu0 0.0
      %6174 = vmatprep.subr.mxu0 0.0
      %6175 = vmatpush2.msra.mxu0 0.0
      %6176 = vmatprep.subr.mxu0 0.0
      %6177 = vmatpush2.msra.mxu0 0.0
      %6178 = vmatprep.subr.mxu0 0.0
      %6179 = vmatpush2.msra.mxu0 0.0
      %6180 = vmatprep.subr.mxu0 0.0
      %6181 = vmatpush2.msra.mxu0 0.0
      %6182 = vmatprep.subr.mxu0 0.0
      %6183 = vmatpush2.msra.mxu0 0.0
      %6184 = vmatprep.subr.mxu0 0.0
      %6185 = vmatpush2.msra.mxu0 0.0
      %6186 = vmatprep.subr.mxu0 0.0
      %6187 = vmatpush2.msra.mxu0 0.0
      %6188 = vmatprep.subr.mxu0 0.0
      %6189 = vmatpush2.msra.mxu0 0.0
      %6190 = vmatprep.subr.mxu0 0.0
      %6191 = vmatpush2.msra.mxu0 0.0
      %6192 = vmatprep.subr.mxu0 0.0
      %6193 = vmatpush2.msra.mxu0 0.0
      %6194 = vmatprep.subr.mxu0 0.0
      %6195 = vmatpush2.msra.mxu0 0.0
      %6196 = vmatprep.subr.mxu0 0.0
      %6197 = vmatpush2.msra.mxu0 0.0
      %6198 = vmatprep.subr.mxu0 0.0
      %6199 = vmatpush2.msra.mxu0 0.0
      %6200 = vmatprep.subr.mxu0 0.0
      %6201 = vmatpush2.msra.mxu0 0.0
      %6202 = vmatprep.subr.mxu0 0.0
      %6203 = vmatpush2.msra.mxu0 0.0
      %6204 = vmatprep.mubr.f32.mxu0 0.0
      %6205 = vmatmul.mubr.f32.gmra.mxu0 %v6136
      %v6206 = vpop.f32.mrf.mxu0
      %v6207 = vadd.f32 0.0, %v6206
      %v6208 = vpop.f32.mrf.mxu0
      %6209 = vdwg.mxu0
      %6210 = vrot.lane.b32.xlu0 %v5528, 120
      %v6211 = vpop.permute.xlu0 %6210
      %6212 = vrot.lane.b32.xlu0 %v5528, 88
      %v6213 = vpop.permute.xlu0 %6212
      %v6214 = vsel %vm725, %v6211, 0
      %v6216 = vsel %vm725, %v6213, 0
      %6218 = vmatprep.subr.mxu0 0.0
      %6219 = vmatpush1.xpose.msra.mxu0 0.0
      %6220 = vmatprep.subr.mxu0 0.0
      %6221 = vmatpush1.xpose.msra.mxu0 0.0
      %6222 = vmatprep.subr.mxu0 0.0
      %6223 = vmatpush1.xpose.msra.mxu0 0.0
      %6224 = vmatprep.subr.mxu0 0.0
      %6225 = vmatpush1.xpose.msra.mxu0 0.0
      %6226 = vmatprep.subr.mxu0 0.0
      %6227 = vmatpush1.xpose.msra.mxu0 0.0
      %6228 = vmatprep.subr.mxu0 0.0
      %6229 = vmatpush1.xpose.msra.mxu0 0.0
      %6230 = vmatprep.subr.mxu0 0.0
      %6231 = vmatpush1.xpose.msra.mxu0 0.0
      %6232 = vmatprep.subr.mxu0 0.0
      %6233 = vmatpush1.xpose.msra.mxu0 0.0
      %6234 = vmatprep.subr.mxu0 0.0
      %6235 = vmatpush1.xpose.msra.mxu0 0.0
      %6236 = vmatprep.subr.mxu0 0.0
      %6237 = vmatpush1.xpose.msra.mxu0 0.0
      %6238 = vmatprep.subr.mxu0 0.0
      %6239 = vmatpush1.xpose.msra.mxu0 0.0
      %6240 = vmatprep.subr.mxu0 0.0
      %6241 = vmatpush1.xpose.msra.mxu0 0.0
      %6242 = vmatprep.subr.mxu0 0.0
      %6243 = vmatpush1.xpose.msra.mxu0 0.0
      %6244 = vmatprep.subr.mxu0 0.0
      %6245 = vmatpush1.xpose.msra.mxu0 0.0
      %6246 = vmatprep.subr.mxu0 0.0
      %6247 = vmatpush1.xpose.msra.mxu0 0.0
      %6248 = vmatprep.subr.mxu0 0.0
      %6249 = vmatpush1.xpose.msra.mxu0 %v6216
      %6250 = vmatprep.subr.mxu0 0.0
      %6251 = vmatpush2.xpose.msra.mxu0 0.0
      %6252 = vmatprep.subr.mxu0 0.0
      %6253 = vmatpush2.xpose.msra.mxu0 0.0
      %6254 = vmatprep.subr.mxu0 0.0
      %6255 = vmatpush2.xpose.msra.mxu0 0.0
      %6256 = vmatprep.subr.mxu0 0.0
      %6257 = vmatpush2.xpose.msra.mxu0 0.0
      %6258 = vmatprep.subr.mxu0 0.0
      %6259 = vmatpush2.xpose.msra.mxu0 0.0
      %6260 = vmatprep.subr.mxu0 0.0
      %6261 = vmatpush2.xpose.msra.mxu0 0.0
      %6262 = vmatprep.subr.mxu0 0.0
      %6263 = vmatpush2.xpose.msra.mxu0 0.0
      %6264 = vmatprep.subr.mxu0 0.0
      %6265 = vmatpush2.xpose.msra.mxu0 0.0
      %6266 = vmatprep.subr.mxu0 0.0
      %6267 = vmatpush2.xpose.msra.mxu0 0.0
      %6268 = vmatprep.subr.mxu0 0.0
      %6269 = vmatpush2.xpose.msra.mxu0 0.0
      %6270 = vmatprep.subr.mxu0 0.0
      %6271 = vmatpush2.xpose.msra.mxu0 0.0
      %6272 = vmatprep.subr.mxu0 0.0
      %6273 = vmatpush2.xpose.msra.mxu0 0.0
      %6274 = vmatprep.subr.mxu0 0.0
      %6275 = vmatpush2.xpose.msra.mxu0 0.0
      %6276 = vmatprep.subr.mxu0 0.0
      %6277 = vmatpush2.xpose.msra.mxu0 0.0
      %6278 = vmatprep.subr.mxu0 0.0
      %6279 = vmatpush2.xpose.msra.mxu0 0.0
      %6280 = vmatprep.subr.mxu0 0.0
      %6281 = vmatpush2.xpose.msra.mxu0 0.0
      %6282 = vmatprep.mubr.f32.mxu0 0.0
      %6283 = vmatmul.mubr.f32.gmra.mxu0 %v6214
      %v6284 = vpop.f32.mrf.mxu0
      %v6285 = vadd.f32 0.0, %v6284
      %v6286 = vpop.f32.mrf.mxu0
      %6287 = vdwg.mxu0
      %6288 = vrot.lane.b32.xlu0 %v5611, 120
      %v6289 = vpop.permute.xlu0 %6288
      %6290 = vrot.lane.b32.xlu0 %v5611, 88
      %v6291 = vpop.permute.xlu0 %6290
      %v6292 = vsel %vm725, %v6289, 0
      %v6294 = vsel %vm725, %v6291, 0
      %6296 = vmatprep.subr.mxu0 0.0
      %6297 = vmatpush1.xpose.msra.mxu0 0.0
      %6298 = vmatprep.subr.mxu0 0.0
      %6299 = vmatpush1.xpose.msra.mxu0 0.0
      %6300 = vmatprep.subr.mxu0 0.0
      %6301 = vmatpush1.xpose.msra.mxu0 0.0
      %6302 = vmatprep.subr.mxu0 0.0
      %6303 = vmatpush1.xpose.msra.mxu0 0.0
      %6304 = vmatprep.subr.mxu0 0.0
      %6305 = vmatpush1.xpose.msra.mxu0 0.0
      %6306 = vmatprep.subr.mxu0 0.0
      %6307 = vmatpush1.xpose.msra.mxu0 0.0
      %6308 = vmatprep.subr.mxu0 0.0
      %6309 = vmatpush1.xpose.msra.mxu0 0.0
      %6310 = vmatprep.subr.mxu0 0.0
      %6311 = vmatpush1.xpose.msra.mxu0 0.0
      %6312 = vmatprep.subr.mxu0 0.0
      %6313 = vmatpush1.xpose.msra.mxu0 0.0
      %6314 = vmatprep.subr.mxu0 0.0
      %6315 = vmatpush1.xpose.msra.mxu0 0.0
      %6316 = vmatprep.subr.mxu0 0.0
      %6317 = vmatpush1.xpose.msra.mxu0 0.0
      %6318 = vmatprep.subr.mxu0 0.0
      %6319 = vmatpush1.xpose.msra.mxu0 0.0
      %6320 = vmatprep.subr.mxu0 0.0
      %6321 = vmatpush1.xpose.msra.mxu0 0.0
      %6322 = vmatprep.subr.mxu0 0.0
      %6323 = vmatpush1.xpose.msra.mxu0 0.0
      %6324 = vmatprep.subr.mxu0 0.0
      %6325 = vmatpush1.xpose.msra.mxu0 0.0
      %6326 = vmatprep.subr.mxu0 0.0
      %6327 = vmatpush1.xpose.msra.mxu0 %v6294
      %6328 = vmatprep.subr.mxu0 0.0
      %6329 = vmatpush2.xpose.msra.mxu0 0.0
      %6330 = vmatprep.subr.mxu0 0.0
      %6331 = vmatpush2.xpose.msra.mxu0 0.0
      %6332 = vmatprep.subr.mxu0 0.0
      %6333 = vmatpush2.xpose.msra.mxu0 0.0
      %6334 = vmatprep.subr.mxu0 0.0
      %6335 = vmatpush2.xpose.msra.mxu0 0.0
      %6336 = vmatprep.subr.mxu0 0.0
      %6337 = vmatpush2.xpose.msra.mxu0 0.0
      %6338 = vmatprep.subr.mxu0 0.0
      %6339 = vmatpush2.xpose.msra.mxu0 0.0
      %6340 = vmatprep.subr.mxu0 0.0
      %6341 = vmatpush2.xpose.msra.mxu0 0.0
      %6342 = vmatprep.subr.mxu0 0.0
      %6343 = vmatpush2.xpose.msra.mxu0 0.0
      %6344 = vmatprep.subr.mxu0 0.0
      %6345 = vmatpush2.xpose.msra.mxu0 0.0
      %6346 = vmatprep.subr.mxu0 0.0
      %6347 = vmatpush2.xpose.msra.mxu0 0.0
      %6348 = vmatprep.subr.mxu0 0.0
      %6349 = vmatpush2.xpose.msra.mxu0 0.0
      %6350 = vmatprep.subr.mxu0 0.0
      %6351 = vmatpush2.xpose.msra.mxu0 0.0
      %6352 = vmatprep.subr.mxu0 0.0
      %6353 = vmatpush2.xpose.msra.mxu0 0.0
      %6354 = vmatprep.subr.mxu0 0.0
      %6355 = vmatpush2.xpose.msra.mxu0 0.0
      %6356 = vmatprep.subr.mxu0 0.0
      %6357 = vmatpush2.xpose.msra.mxu0 0.0
      %6358 = vmatprep.subr.mxu0 0.0
      %6359 = vmatpush2.xpose.msra.mxu0 0.0
      %6360 = vmatprep.mubr.f32.mxu0 0.0
      %6361 = vmatmul.mubr.f32.gmra.mxu0 %v6292
      %v6362 = vpop.f32.mrf.mxu0
      %v6363 = vadd.f32 0.0, %v6362
      %v6364 = vpop.f32.mrf.mxu0
      %6365 = vdwg.mxu0
      %6366 = vrot.lane.b32.xlu0 %v5694, 120
      %v6367 = vpop.permute.xlu0 %6366
      %6368 = vrot.lane.b32.xlu0 %v5694, 88
      %v6369 = vpop.permute.xlu0 %6368
      %v6370 = vsel %vm725, %v6367, 0
      %v6372 = vsel %vm725, %v6369, 0
      %6374 = vmatprep.subr.mxu0 0.0
      %6375 = vmatpush1.xpose.msra.mxu0 0.0
      %6376 = vmatprep.subr.mxu0 0.0
      %6377 = vmatpush1.xpose.msra.mxu0 0.0
      %6378 = vmatprep.subr.mxu0 0.0
      %6379 = vmatpush1.xpose.msra.mxu0 0.0
      %6380 = vmatprep.subr.mxu0 0.0
      %6381 = vmatpush1.xpose.msra.mxu0 0.0
      %6382 = vmatprep.subr.mxu0 0.0
      %6383 = vmatpush1.xpose.msra.mxu0 0.0
      %6384 = vmatprep.subr.mxu0 0.0
      %6385 = vmatpush1.xpose.msra.mxu0 0.0
      %6386 = vmatprep.subr.mxu0 0.0
      %6387 = vmatpush1.xpose.msra.mxu0 0.0
      %6388 = vmatprep.subr.mxu0 0.0
      %6389 = vmatpush1.xpose.msra.mxu0 0.0
      %6390 = vmatprep.subr.mxu0 0.0
      %6391 = vmatpush1.xpose.msra.mxu0 0.0
      %6392 = vmatprep.subr.mxu0 0.0
      %6393 = vmatpush1.xpose.msra.mxu0 0.0
      %6394 = vmatprep.subr.mxu0 0.0
      %6395 = vmatpush1.xpose.msra.mxu0 0.0
      %6396 = vmatprep.subr.mxu0 0.0
      %6397 = vmatpush1.xpose.msra.mxu0 0.0
      %6398 = vmatprep.subr.mxu0 0.0
      %6399 = vmatpush1.xpose.msra.mxu0 0.0
      %6400 = vmatprep.subr.mxu0 0.0
      %6401 = vmatpush1.xpose.msra.mxu0 0.0
      %6402 = vmatprep.subr.mxu0 0.0
      %6403 = vmatpush1.xpose.msra.mxu0 0.0
      %6404 = vmatprep.subr.mxu0 0.0
      %6405 = vmatpush1.xpose.msra.mxu0 %v6372
      %6406 = vmatprep.subr.mxu0 0.0
      %6407 = vmatpush2.xpose.msra.mxu0 0.0
      %6408 = vmatprep.subr.mxu0 0.0
      %6409 = vmatpush2.xpose.msra.mxu0 0.0
      %6410 = vmatprep.subr.mxu0 0.0
      %6411 = vmatpush2.xpose.msra.mxu0 0.0
      %6412 = vmatprep.subr.mxu0 0.0
      %6413 = vmatpush2.xpose.msra.mxu0 0.0
      %6414 = vmatprep.subr.mxu0 0.0
      %6415 = vmatpush2.xpose.msra.mxu0 0.0
      %6416 = vmatprep.subr.mxu0 0.0
      %6417 = vmatpush2.xpose.msra.mxu0 0.0
      %6418 = vmatprep.subr.mxu0 0.0
      %6419 = vmatpush2.xpose.msra.mxu0 0.0
      %6420 = vmatprep.subr.mxu0 0.0
      %6421 = vmatpush2.xpose.msra.mxu0 0.0
      %6422 = vmatprep.subr.mxu0 0.0
      %6423 = vmatpush2.xpose.msra.mxu0 0.0
      %6424 = vmatprep.subr.mxu0 0.0
      %6425 = vmatpush2.xpose.msra.mxu0 0.0
      %6426 = vmatprep.subr.mxu0 0.0
      %6427 = vmatpush2.xpose.msra.mxu0 0.0
      %6428 = vmatprep.subr.mxu0 0.0
      %6429 = vmatpush2.xpose.msra.mxu0 0.0
      %6430 = vmatprep.subr.mxu0 0.0
      %6431 = vmatpush2.xpose.msra.mxu0 0.0
      %6432 = vmatprep.subr.mxu0 0.0
      %6433 = vmatpush2.xpose.msra.mxu0 0.0
      %6434 = vmatprep.subr.mxu0 0.0
      %6435 = vmatpush2.xpose.msra.mxu0 0.0
      %6436 = vmatprep.subr.mxu0 0.0
      %6437 = vmatpush2.xpose.msra.mxu0 0.0
      %6438 = vmatprep.mubr.f32.mxu0 0.0
      %6439 = vmatmul.mubr.f32.gmra.mxu0 %v6370
      %v6440 = vpop.f32.mrf.mxu0
      %v6441 = vadd.f32 0.0, %v6440
      %v6442 = vpop.f32.mrf.mxu0
      %6443 = vdwg.mxu0
      %6444 = vrot.lane.b32.xlu0 %v5777, 120
      %v6445 = vpop.permute.xlu0 %6444
      %6446 = vrot.lane.b32.xlu0 %v5777, 88
      %v6447 = vpop.permute.xlu0 %6446
      %v6448 = vsel %vm725, %v6445, 0
      %v6450 = vsel %vm725, %v6447, 0
      %6452 = vmatprep.subr.mxu0 0.0
      %6453 = vmatpush1.xpose.msra.mxu0 0.0
      %6454 = vmatprep.subr.mxu0 0.0
      %6455 = vmatpush1.xpose.msra.mxu0 0.0
      %6456 = vmatprep.subr.mxu0 0.0
      %6457 = vmatpush1.xpose.msra.mxu0 0.0
      %6458 = vmatprep.subr.mxu0 0.0
      %6459 = vmatpush1.xpose.msra.mxu0 0.0
      %6460 = vmatprep.subr.mxu0 0.0
      %6461 = vmatpush1.xpose.msra.mxu0 0.0
      %6462 = vmatprep.subr.mxu0 0.0
      %6463 = vmatpush1.xpose.msra.mxu0 0.0
      %6464 = vmatprep.subr.mxu0 0.0
      %6465 = vmatpush1.xpose.msra.mxu0 0.0
      %6466 = vmatprep.subr.mxu0 0.0
      %6467 = vmatpush1.xpose.msra.mxu0 0.0
      %6468 = vmatprep.subr.mxu0 0.0
      %6469 = vmatpush1.xpose.msra.mxu0 0.0
      %6470 = vmatprep.subr.mxu0 0.0
      %6471 = vmatpush1.xpose.msra.mxu0 0.0
      %6472 = vmatprep.subr.mxu0 0.0
      %6473 = vmatpush1.xpose.msra.mxu0 0.0
      %6474 = vmatprep.subr.mxu0 0.0
      %6475 = vmatpush1.xpose.msra.mxu0 0.0
      %6476 = vmatprep.subr.mxu0 0.0
      %6477 = vmatpush1.xpose.msra.mxu0 0.0
      %6478 = vmatprep.subr.mxu0 0.0
      %6479 = vmatpush1.xpose.msra.mxu0 0.0
      %6480 = vmatprep.subr.mxu0 0.0
      %6481 = vmatpush1.xpose.msra.mxu0 0.0
      %6482 = vmatprep.subr.mxu0 0.0
      %6483 = vmatpush1.xpose.msra.mxu0 %v6450
      %6484 = vmatprep.subr.mxu0 0.0
      %6485 = vmatpush2.xpose.msra.mxu0 0.0
      %6486 = vmatprep.subr.mxu0 0.0
      %6487 = vmatpush2.xpose.msra.mxu0 0.0
      %6488 = vmatprep.subr.mxu0 0.0
      %6489 = vmatpush2.xpose.msra.mxu0 0.0
      %6490 = vmatprep.subr.mxu0 0.0
      %6491 = vmatpush2.xpose.msra.mxu0 0.0
      %6492 = vmatprep.subr.mxu0 0.0
      %6493 = vmatpush2.xpose.msra.mxu0 0.0
      %6494 = vmatprep.subr.mxu0 0.0
      %6495 = vmatpush2.xpose.msra.mxu0 0.0
      %6496 = vmatprep.subr.mxu0 0.0
      %6497 = vmatpush2.xpose.msra.mxu0 0.0
      %6498 = vmatprep.subr.mxu0 0.0
      %6499 = vmatpush2.xpose.msra.mxu0 0.0
      %6500 = vmatprep.subr.mxu0 0.0
      %6501 = vmatpush2.xpose.msra.mxu0 0.0
      %6502 = vmatprep.subr.mxu0 0.0
      %6503 = vmatpush2.xpose.msra.mxu0 0.0
      %6504 = vmatprep.subr.mxu0 0.0
      %6505 = vmatpush2.xpose.msra.mxu0 0.0
      %6506 = vmatprep.subr.mxu0 0.0
      %6507 = vmatpush2.xpose.msra.mxu0 0.0
      %6508 = vmatprep.subr.mxu0 0.0
      %6509 = vmatpush2.xpose.msra.mxu0 0.0
      %6510 = vmatprep.subr.mxu0 0.0
      %6511 = vmatpush2.xpose.msra.mxu0 0.0
      %6512 = vmatprep.subr.mxu0 0.0
      %6513 = vmatpush2.xpose.msra.mxu0 0.0
      %6514 = vmatprep.subr.mxu0 0.0
      %6515 = vmatpush2.xpose.msra.mxu0 0.0
      %6516 = vmatprep.mubr.f32.mxu0 0.0
      %6517 = vmatmul.mubr.f32.gmra.mxu0 %v6448
      %v6518 = vpop.f32.mrf.mxu0
      %v6519 = vadd.f32 0.0, %v6518
      %v6520 = vpop.f32.mrf.mxu0
      %6521 = vdwg.mxu0
      %v6522 = vmul.f32 %v6285, 0.35355338
      %v6523 = vmul.f32 %v6363, 0.35355338
      %v6524 = vmul.f32 %v6441, 0.35355338
      %v6525 = vmul.f32 %v6519, 0.35355338
      %v6526 = vsel %vm1053, %v6522, -inf
      %6527 = vmax.xlane.f32.xlu0 %v6526
      %v6528 = vpop.xlane.xlu0 %6527
      %v6529 = vsel %vm1053, %v6523, -inf
      %6530 = vmax.xlane.f32.xlu0 %v6529
      %v6531 = vpop.xlane.xlu0 %6530
      %v6532 = vsel %vm1053, %v6524, -inf
      %6533 = vmax.xlane.f32.xlu0 %v6532
      %v6534 = vpop.xlane.xlu0 %6533
      %v6535 = vsel %vm1053, %v6525, -inf
      %6536 = vmax.xlane.f32.xlu0 %v6535
      %v6537 = vpop.xlane.xlu0 %6536
      %v6538 = vsub.f32 %v6522, %v6528
      %v6539 = vsub.f32 %v6523, %v6531
      %v6540 = vsub.f32 %v6524, %v6534
      %v6541 = vsub.f32 %v6525, %v6537
      %v6542 = vmul.f32 %v6538, 1.442695
      %v6543 = vpow.pop %v6542
      %v6544 = vmul.f32 %v6539, 1.442695
      %v6545 = vpow.pop %v6544
      %v6546 = vmul.f32 %v6540, 1.442695
      %v6547 = vpow.pop %v6546
      %v6548 = vmul.f32 %v6541, 1.442695
      %v6549 = vpow.pop %v6548
      %v6550 = vsel %vm1053, %v6543, 0.0
      %6551 = vadd.xlane.f32.xlu0 %v6550
      %v6552 = vpop.xlane.xlu0 %6551
      %v6553 = vsel %vm1053, %v6545, 0.0
      %6554 = vadd.xlane.f32.xlu0 %v6553
      %v6555 = vpop.xlane.xlu0 %6554
      %v6556 = vsel %vm1053, %v6547, 0.0
      %6557 = vadd.xlane.f32.xlu0 %v6556
      %v6558 = vpop.xlane.xlu0 %6557
      %v6559 = vsel %vm1053, %v6549, 0.0
      %6560 = vadd.xlane.f32.xlu0 %v6559
      %v6561 = vpop.xlane.xlu0 %6560
      %v6562 = vrcp.pop %v6552
      %v6563 = vmul.f32 %v6543, %v6562
      %v6564 = vrcp.pop %v6555
      %v6565 = vmul.f32 %v6545, %v6564
      %v6566 = vrcp.pop %v6558
      %v6567 = vmul.f32 %v6547, %v6566
      %v6568 = vrcp.pop %v6561
      %v6569 = vmul.f32 %v6549, %v6568
      %6570 = vrot.lane.b32.xlu0 %v5528, 56
      %v6571 = vpop.permute.xlu0 %6570
      %v6573 = vsel %vm1100, %v6563, 0
      %v6575 = vsel %vm1104, %v6571, 0
      %6577 = vmatprep.subr.mxu0 0.0
      %6578 = vmatpush1.msra.mxu0 0.0
      %6579 = vmatprep.subr.mxu0 0.0
      %6580 = vmatpush1.msra.mxu0 0.0
      %6581 = vmatprep.subr.mxu0 0.0
      %6582 = vmatpush1.msra.mxu0 0.0
      %6583 = vmatprep.subr.mxu0 0.0
      %6584 = vmatpush1.msra.mxu0 0.0
      %6585 = vmatprep.subr.mxu0 0.0
      %6586 = vmatpush1.msra.mxu0 0.0
      %6587 = vmatprep.subr.mxu0 0.0
      %6588 = vmatpush1.msra.mxu0 0.0
      %6589 = vmatprep.subr.mxu0 0.0
      %6590 = vmatpush1.msra.mxu0 0.0
      %6591 = vmatprep.subr.mxu0 0.0
      %6592 = vmatpush1.msra.mxu0 0.0
      %6593 = vmatprep.subr.mxu0 0.0
      %6594 = vmatpush1.msra.mxu0 0.0
      %6595 = vmatprep.subr.mxu0 0.0
      %6596 = vmatpush1.msra.mxu0 0.0
      %6597 = vmatprep.subr.mxu0 0.0
      %6598 = vmatpush1.msra.mxu0 0.0
      %6599 = vmatprep.subr.mxu0 0.0
      %6600 = vmatpush1.msra.mxu0 0.0
      %6601 = vmatprep.subr.mxu0 0.0
      %6602 = vmatpush1.msra.mxu0 0.0
      %6603 = vmatprep.subr.mxu0 0.0
      %6604 = vmatpush1.msra.mxu0 0.0
      %6605 = vmatprep.subr.mxu0 0.0
      %6606 = vmatpush1.msra.mxu0 0.0
      %6607 = vmatprep.subr.mxu0 0.0
      %6608 = vmatpush1.msra.mxu0 %v6575
      %6609 = vmatprep.subr.mxu0 0.0
      %6610 = vmatpush2.msra.mxu0 0.0
      %6611 = vmatprep.subr.mxu0 0.0
      %6612 = vmatpush2.msra.mxu0 0.0
      %6613 = vmatprep.subr.mxu0 0.0
      %6614 = vmatpush2.msra.mxu0 0.0
      %6615 = vmatprep.subr.mxu0 0.0
      %6616 = vmatpush2.msra.mxu0 0.0
      %6617 = vmatprep.subr.mxu0 0.0
      %6618 = vmatpush2.msra.mxu0 0.0
      %6619 = vmatprep.subr.mxu0 0.0
      %6620 = vmatpush2.msra.mxu0 0.0
      %6621 = vmatprep.subr.mxu0 0.0
      %6622 = vmatpush2.msra.mxu0 0.0
      %6623 = vmatprep.subr.mxu0 0.0
      %6624 = vmatpush2.msra.mxu0 0.0
      %6625 = vmatprep.subr.mxu0 0.0
      %6626 = vmatpush2.msra.mxu0 0.0
      %6627 = vmatprep.subr.mxu0 0.0
      %6628 = vmatpush2.msra.mxu0 0.0
      %6629 = vmatprep.subr.mxu0 0.0
      %6630 = vmatpush2.msra.mxu0 0.0
      %6631 = vmatprep.subr.mxu0 0.0
      %6632 = vmatpush2.msra.mxu0 0.0
      %6633 = vmatprep.subr.mxu0 0.0
      %6634 = vmatpush2.msra.mxu0 0.0
      %6635 = vmatprep.subr.mxu0 0.0
      %6636 = vmatpush2.msra.mxu0 0.0
      %6637 = vmatprep.subr.mxu0 0.0
      %6638 = vmatpush2.msra.mxu0 0.0
      %6639 = vmatprep.subr.mxu0 0.0
      %6640 = vmatpush2.msra.mxu0 0.0
      %6641 = vmatprep.mubr.f32.mxu0 0.0
      %6642 = vmatmul.mubr.f32.gmra.mxu0 %v6573
      %v6643 = vpop.f32.mrf.mxu0
      %v6644 = vadd.f32 0.0, %v6643
      %v6645 = vpop.f32.mrf.mxu0
      %6646 = vdwg.mxu0
      %6647 = vrot.lane.b32.xlu0 %v5611, 56
      %v6648 = vpop.permute.xlu0 %6647
      %v6650 = vsel %vm1100, %v6565, 0
      %v6652 = vsel %vm1104, %v6648, 0
      %6654 = vmatprep.subr.mxu0 0.0
      %6655 = vmatpush1.msra.mxu0 0.0
      %6656 = vmatprep.subr.mxu0 0.0
      %6657 = vmatpush1.msra.mxu0 0.0
      %6658 = vmatprep.subr.mxu0 0.0
      %6659 = vmatpush1.msra.mxu0 0.0
      %6660 = vmatprep.subr.mxu0 0.0
      %6661 = vmatpush1.msra.mxu0 0.0
      %6662 = vmatprep.subr.mxu0 0.0
      %6663 = vmatpush1.msra.mxu0 0.0
      %6664 = vmatprep.subr.mxu0 0.0
      %6665 = vmatpush1.msra.mxu0 0.0
      %6666 = vmatprep.subr.mxu0 0.0
      %6667 = vmatpush1.msra.mxu0 0.0
      %6668 = vmatprep.subr.mxu0 0.0
      %6669 = vmatpush1.msra.mxu0 0.0
      %6670 = vmatprep.subr.mxu0 0.0
      %6671 = vmatpush1.msra.mxu0 0.0
      %6672 = vmatprep.subr.mxu0 0.0
      %6673 = vmatpush1.msra.mxu0 0.0
      %6674 = vmatprep.subr.mxu0 0.0
      %6675 = vmatpush1.msra.mxu0 0.0
      %6676 = vmatprep.subr.mxu0 0.0
      %6677 = vmatpush1.msra.mxu0 0.0
      %6678 = vmatprep.subr.mxu0 0.0
      %6679 = vmatpush1.msra.mxu0 0.0
      %6680 = vmatprep.subr.mxu0 0.0
      %6681 = vmatpush1.msra.mxu0 0.0
      %6682 = vmatprep.subr.mxu0 0.0
      %6683 = vmatpush1.msra.mxu0 0.0
      %6684 = vmatprep.subr.mxu0 0.0
      %6685 = vmatpush1.msra.mxu0 %v6652
      %6686 = vmatprep.subr.mxu0 0.0
      %6687 = vmatpush2.msra.mxu0 0.0
      %6688 = vmatprep.subr.mxu0 0.0
      %6689 = vmatpush2.msra.mxu0 0.0
      %6690 = vmatprep.subr.mxu0 0.0
      %6691 = vmatpush2.msra.mxu0 0.0
      %6692 = vmatprep.subr.mxu0 0.0
      %6693 = vmatpush2.msra.mxu0 0.0
      %6694 = vmatprep.subr.mxu0 0.0
      %6695 = vmatpush2.msra.mxu0 0.0
      %6696 = vmatprep.subr.mxu0 0.0
      %6697 = vmatpush2.msra.mxu0 0.0
      %6698 = vmatprep.subr.mxu0 0.0
      %6699 = vmatpush2.msra.mxu0 0.0
      %6700 = vmatprep.subr.mxu0 0.0
      %6701 = vmatpush2.msra.mxu0 0.0
      %6702 = vmatprep.subr.mxu0 0.0
      %6703 = vmatpush2.msra.mxu0 0.0
      %6704 = vmatprep.subr.mxu0 0.0
      %6705 = vmatpush2.msra.mxu0 0.0
      %6706 = vmatprep.subr.mxu0 0.0
      %6707 = vmatpush2.msra.mxu0 0.0
      %6708 = vmatprep.subr.mxu0 0.0
      %6709 = vmatpush2.msra.mxu0 0.0
      %6710 = vmatprep.subr.mxu0 0.0
      %6711 = vmatpush2.msra.mxu0 0.0
      %6712 = vmatprep.subr.mxu0 0.0
      %6713 = vmatpush2.msra.mxu0 0.0
      %6714 = vmatprep.subr.mxu0 0.0
      %6715 = vmatpush2.msra.mxu0 0.0
      %6716 = vmatprep.subr.mxu0 0.0
      %6717 = vmatpush2.msra.mxu0 0.0
      %6718 = vmatprep.mubr.f32.mxu0 0.0
      %6719 = vmatmul.mubr.f32.gmra.mxu0 %v6650
      %v6720 = vpop.f32.mrf.mxu0
      %v6721 = vadd.f32 0.0, %v6720
      %v6722 = vpop.f32.mrf.mxu0
      %6723 = vdwg.mxu0
      %6724 = vrot.lane.b32.xlu0 %v5694, 56
      %v6725 = vpop.permute.xlu0 %6724
      %v6727 = vsel %vm1100, %v6567, 0
      %v6729 = vsel %vm1104, %v6725, 0
      %6731 = vmatprep.subr.mxu0 0.0
      %6732 = vmatpush1.msra.mxu0 0.0
      %6733 = vmatprep.subr.mxu0 0.0
      %6734 = vmatpush1.msra.mxu0 0.0
      %6735 = vmatprep.subr.mxu0 0.0
      %6736 = vmatpush1.msra.mxu0 0.0
      %6737 = vmatprep.subr.mxu0 0.0
      %6738 = vmatpush1.msra.mxu0 0.0
      %6739 = vmatprep.subr.mxu0 0.0
      %6740 = vmatpush1.msra.mxu0 0.0
      %6741 = vmatprep.subr.mxu0 0.0
      %6742 = vmatpush1.msra.mxu0 0.0
      %6743 = vmatprep.subr.mxu0 0.0
      %6744 = vmatpush1.msra.mxu0 0.0
      %6745 = vmatprep.subr.mxu0 0.0
      %6746 = vmatpush1.msra.mxu0 0.0
      %6747 = vmatprep.subr.mxu0 0.0
      %6748 = vmatpush1.msra.mxu0 0.0
      %6749 = vmatprep.subr.mxu0 0.0
      %6750 = vmatpush1.msra.mxu0 0.0
      %6751 = vmatprep.subr.mxu0 0.0
      %6752 = vmatpush1.msra.mxu0 0.0
      %6753 = vmatprep.subr.mxu0 0.0
      %6754 = vmatpush1.msra.mxu0 0.0
      %6755 = vmatprep.subr.mxu0 0.0
      %6756 = vmatpush1.msra.mxu0 0.0
      %6757 = vmatprep.subr.mxu0 0.0
      %6758 = vmatpush1.msra.mxu0 0.0
      %6759 = vmatprep.subr.mxu0 0.0
      %6760 = vmatpush1.msra.mxu0 0.0
      %6761 = vmatprep.subr.mxu0 0.0
      %6762 = vmatpush1.msra.mxu0 %v6729
      %6763 = vmatprep.subr.mxu0 0.0
      %6764 = vmatpush2.msra.mxu0 0.0
      %6765 = vmatprep.subr.mxu0 0.0
      %6766 = vmatpush2.msra.mxu0 0.0
      %6767 = vmatprep.subr.mxu0 0.0
      %6768 = vmatpush2.msra.mxu0 0.0
      %6769 = vmatprep.subr.mxu0 0.0
      %6770 = vmatpush2.msra.mxu0 0.0
      %6771 = vmatprep.subr.mxu0 0.0
      %6772 = vmatpush2.msra.mxu0 0.0
      %6773 = vmatprep.subr.mxu0 0.0
      %6774 = vmatpush2.msra.mxu0 0.0
      %6775 = vmatprep.subr.mxu0 0.0
      %6776 = vmatpush2.msra.mxu0 0.0
      %6777 = vmatprep.subr.mxu0 0.0
      %6778 = vmatpush2.msra.mxu0 0.0
      %6779 = vmatprep.subr.mxu0 0.0
      %6780 = vmatpush2.msra.mxu0 0.0
      %6781 = vmatprep.subr.mxu0 0.0
      %6782 = vmatpush2.msra.mxu0 0.0
      %6783 = vmatprep.subr.mxu0 0.0
      %6784 = vmatpush2.msra.mxu0 0.0
      %6785 = vmatprep.subr.mxu0 0.0
      %6786 = vmatpush2.msra.mxu0 0.0
      %6787 = vmatprep.subr.mxu0 0.0
      %6788 = vmatpush2.msra.mxu0 0.0
      %6789 = vmatprep.subr.mxu0 0.0
      %6790 = vmatpush2.msra.mxu0 0.0
      %6791 = vmatprep.subr.mxu0 0.0
      %6792 = vmatpush2.msra.mxu0 0.0
      %6793 = vmatprep.subr.mxu0 0.0
      %6794 = vmatpush2.msra.mxu0 0.0
      %6795 = vmatprep.mubr.f32.mxu0 0.0
      %6796 = vmatmul.mubr.f32.gmra.mxu0 %v6727
      %v6797 = vpop.f32.mrf.mxu0
      %v6798 = vadd.f32 0.0, %v6797
      %v6799 = vpop.f32.mrf.mxu0
      %6800 = vdwg.mxu0
      %6801 = vrot.lane.b32.xlu0 %v5777, 56
      %v6802 = vpop.permute.xlu0 %6801
      %v6804 = vsel %vm1100, %v6569, 0
      %v6806 = vsel %vm1104, %v6802, 0
      %6808 = vmatprep.subr.mxu0 0.0
      %6809 = vmatpush1.msra.mxu0 0.0
      %6810 = vmatprep.subr.mxu0 0.0
      %6811 = vmatpush1.msra.mxu0 0.0
      %6812 = vmatprep.subr.mxu0 0.0
      %6813 = vmatpush1.msra.mxu0 0.0
      %6814 = vmatprep.subr.mxu0 0.0
      %6815 = vmatpush1.msra.mxu0 0.0
      %6816 = vmatprep.subr.mxu0 0.0
      %6817 = vmatpush1.msra.mxu0 0.0
      %6818 = vmatprep.subr.mxu0 0.0
      %6819 = vmatpush1.msra.mxu0 0.0
      %6820 = vmatprep.subr.mxu0 0.0
      %6821 = vmatpush1.msra.mxu0 0.0
      %6822 = vmatprep.subr.mxu0 0.0
      %6823 = vmatpush1.msra.mxu0 0.0
      %6824 = vmatprep.subr.mxu0 0.0
      %6825 = vmatpush1.msra.mxu0 0.0
      %6826 = vmatprep.subr.mxu0 0.0
      %6827 = vmatpush1.msra.mxu0 0.0
      %6828 = vmatprep.subr.mxu0 0.0
      %6829 = vmatpush1.msra.mxu0 0.0
      %6830 = vmatprep.subr.mxu0 0.0
      %6831 = vmatpush1.msra.mxu0 0.0
      %6832 = vmatprep.subr.mxu0 0.0
      %6833 = vmatpush1.msra.mxu0 0.0
      %6834 = vmatprep.subr.mxu0 0.0
      %6835 = vmatpush1.msra.mxu0 0.0
      %6836 = vmatprep.subr.mxu0 0.0
      %6837 = vmatpush1.msra.mxu0 0.0
      %6838 = vmatprep.subr.mxu0 0.0
      %6839 = vmatpush1.msra.mxu0 %v6806
      %6840 = vmatprep.subr.mxu0 0.0
      %6841 = vmatpush2.msra.mxu0 0.0
      %6842 = vmatprep.subr.mxu0 0.0
      %6843 = vmatpush2.msra.mxu0 0.0
      %6844 = vmatprep.subr.mxu0 0.0
      %6845 = vmatpush2.msra.mxu0 0.0
      %6846 = vmatprep.subr.mxu0 0.0
      %6847 = vmatpush2.msra.mxu0 0.0
      %6848 = vmatprep.subr.mxu0 0.0
      %6849 = vmatpush2.msra.mxu0 0.0
      %6850 = vmatprep.subr.mxu0 0.0
      %6851 = vmatpush2.msra.mxu0 0.0
      %6852 = vmatprep.subr.mxu0 0.0
      %6853 = vmatpush2.msra.mxu0 0.0
      %6854 = vmatprep.subr.mxu0 0.0
      %6855 = vmatpush2.msra.mxu0 0.0
      %6856 = vmatprep.subr.mxu0 0.0
      %6857 = vmatpush2.msra.mxu0 0.0
      %6858 = vmatprep.subr.mxu0 0.0
      %6859 = vmatpush2.msra.mxu0 0.0
      %6860 = vmatprep.subr.mxu0 0.0
      %6861 = vmatpush2.msra.mxu0 0.0
      %6862 = vmatprep.subr.mxu0 0.0
      %6863 = vmatpush2.msra.mxu0 0.0
      %6864 = vmatprep.subr.mxu0 0.0
      %6865 = vmatpush2.msra.mxu0 0.0
      %6866 = vmatprep.subr.mxu0 0.0
      %6867 = vmatpush2.msra.mxu0 0.0
      %6868 = vmatprep.subr.mxu0 0.0
      %6869 = vmatpush2.msra.mxu0 0.0
      %6870 = vmatprep.subr.mxu0 0.0
      %6871 = vmatpush2.msra.mxu0 0.0
      %6872 = vmatprep.mubr.f32.mxu0 0.0
      %6873 = vmatmul.mubr.f32.gmra.mxu0 %v6804
      %v6874 = vpop.f32.mrf.mxu0
      %v6875 = vadd.f32 0.0, %v6874
      %v6876 = vpop.f32.mrf.mxu0
      %6877 = vdwg.mxu0
      %v6882 = vcombine.low %v6644, %v6721
      %v6883 = vcombine.low %v6798, %v6875
      %v6885 = vunpack.c.l.s4 1983009808
      %v6886 = vunpack.c.0.s8 %v6885
      %v6887 = vlaneseq
      %v6888 = vshrl.u32 %v6887, 7
      %v6889 = vsub.s32 %v6886, %v6888
      %v6890 = vrot.slane %v6882, %v6889
      %v6892 = vunpack.c.l.s4 1983009808
      %v6893 = vunpack.c.0.s8 %v6892
      %v6894 = vlaneseq
      %v6895 = vshrl.u32 %v6894, 7
      %v6896 = vsub.s32 %v6893, %v6895
      %v6897 = vrot.slane %v6883, %v6896
      %v6898 = vcombine.low %v6890, %v6897
      %v6899 = vsel %vm725, %v6898, 0
      %6901 = vmatprep.subr.mxu0 0.0
      %6902 = vmatpush1.msra.mxu0 0.0
      %6903 = vmatprep.subr.mxu0 0.0
      %6904 = vmatpush1.msra.mxu0 0.0
      %6905 = vmatprep.subr.mxu0 0.0
      %6906 = vmatpush1.msra.mxu0 0.0
      %6907 = vmatprep.subr.mxu0 0.0
      %6908 = vmatpush1.msra.mxu0 0.0
      %6909 = vmatprep.subr.mxu0 0.0
      %6910 = vmatpush1.msra.mxu0 0.0
      %6911 = vmatprep.subr.mxu0 0.0
      %6912 = vmatpush1.msra.mxu0 0.0
      %6913 = vmatprep.subr.mxu0 0.0
      %6914 = vmatpush1.msra.mxu0 0.0
      %6915 = vmatprep.subr.mxu0 0.0
      %6916 = vmatpush1.msra.mxu0 0.0
      %6917 = vmatprep.subr.mxu0 0.0
      %6918 = vmatpush1.msra.mxu0 0.0
      %6919 = vmatprep.subr.mxu0 0.0
      %6920 = vmatpush1.msra.mxu0 0.0
      %6921 = vmatprep.subr.mxu0 0.0
      %6922 = vmatpush1.msra.mxu0 0.0
      %6923 = vmatprep.subr.mxu0 0.0
      %6924 = vmatpush1.msra.mxu0 0.0
      %6925 = vmatprep.subr.mxu0 0.0
      %6926 = vmatpush1.msra.mxu0 0.0
      %6927 = vmatprep.subr.mxu0 0.0
      %6928 = vmatpush1.msra.mxu0 0.0
      %6929 = vmatprep.subr.mxu0 0.0
      %6930 = vmatpush1.msra.mxu0 0.0
      %6931 = vmatprep.subr.mxu0 0.0
      %6932 = vmatpush1.msra.mxu0 %v5519
      %6933 = vmatprep.subr.mxu0 0.0
      %6934 = vmatpush2.msra.mxu0 0.0
      %6935 = vmatprep.subr.mxu0 0.0
      %6936 = vmatpush2.msra.mxu0 0.0
      %6937 = vmatprep.subr.mxu0 0.0
      %6938 = vmatpush2.msra.mxu0 0.0
      %6939 = vmatprep.subr.mxu0 0.0
      %6940 = vmatpush2.msra.mxu0 0.0
      %6941 = vmatprep.subr.mxu0 0.0
      %6942 = vmatpush2.msra.mxu0 0.0
      %6943 = vmatprep.subr.mxu0 0.0
      %6944 = vmatpush2.msra.mxu0 0.0
      %6945 = vmatprep.subr.mxu0 0.0
      %6946 = vmatpush2.msra.mxu0 0.0
      %6947 = vmatprep.subr.mxu0 0.0
      %6948 = vmatpush2.msra.mxu0 0.0
      %6949 = vmatprep.subr.mxu0 0.0
      %6950 = vmatpush2.msra.mxu0 0.0
      %6951 = vmatprep.subr.mxu0 0.0
      %6952 = vmatpush2.msra.mxu0 0.0
      %6953 = vmatprep.subr.mxu0 0.0
      %6954 = vmatpush2.msra.mxu0 0.0
      %6955 = vmatprep.subr.mxu0 0.0
      %6956 = vmatpush2.msra.mxu0 0.0
      %6957 = vmatprep.subr.mxu0 0.0
      %6958 = vmatpush2.msra.mxu0 0.0
      %6959 = vmatprep.subr.mxu0 0.0
      %6960 = vmatpush2.msra.mxu0 0.0
      %6961 = vmatprep.subr.mxu0 0.0
      %6962 = vmatpush2.msra.mxu0 0.0
      %6963 = vmatprep.subr.mxu0 0.0
      %6964 = vmatpush2.msra.mxu0 0.0
      %6965 = vmatprep.mubr.f32.mxu0 0.0
      %6966 = vmatmul.mubr.f32.gmra.mxu0 %v6899
      %v6967 = vpop.f32.mrf.mxu0
      %v6968 = vadd.f32 0.0, %v6967
      %v6969 = vpop.f32.mrf.mxu0
      %6970 = vdwg.mxu0
      %v6975 = vcombine.low %v5976, %v6053
      %v6976 = vcombine.low %v6130, %v6207
      %v6978 = vunpack.c.l.s4 1983009808
      %v6979 = vunpack.c.0.s8 %v6978
      %v6980 = vlaneseq
      %v6981 = vshrl.u32 %v6980, 7
      %v6982 = vsub.s32 %v6979, %v6981
      %v6983 = vrot.slane %v6975, %v6982
      %v6985 = vunpack.c.l.s4 1983009808
      %v6986 = vunpack.c.0.s8 %v6985
      %v6987 = vlaneseq
      %v6988 = vshrl.u32 %v6987, 7
      %v6989 = vsub.s32 %v6986, %v6988
      %v6990 = vrot.slane %v6976, %v6989
      %v6991 = vcombine.low %v6983, %v6990
      %v6992 = vsel %vm725, %v6991, 0
      %6994 = vmatprep.subr.mxu0 0.0
      %6995 = vmatpush1.msra.mxu0 0.0
      %6996 = vmatprep.subr.mxu0 0.0
      %6997 = vmatpush1.msra.mxu0 0.0
      %6998 = vmatprep.subr.mxu0 0.0
      %6999 = vmatpush1.msra.mxu0 0.0
      %7000 = vmatprep.subr.mxu0 0.0
      %7001 = vmatpush1.msra.mxu0 0.0
      %7002 = vmatprep.subr.mxu0 0.0
      %7003 = vmatpush1.msra.mxu0 0.0
      %7004 = vmatprep.subr.mxu0 0.0
      %7005 = vmatpush1.msra.mxu0 0.0
      %7006 = vmatprep.subr.mxu0 0.0
      %7007 = vmatpush1.msra.mxu0 0.0
      %7008 = vmatprep.subr.mxu0 0.0
      %7009 = vmatpush1.msra.mxu0 0.0
      %7010 = vmatprep.subr.mxu0 0.0
      %7011 = vmatpush1.msra.mxu0 0.0
      %7012 = vmatprep.subr.mxu0 0.0
      %7013 = vmatpush1.msra.mxu0 0.0
      %7014 = vmatprep.subr.mxu0 0.0
      %7015 = vmatpush1.msra.mxu0 0.0
      %7016 = vmatprep.subr.mxu0 0.0
      %7017 = vmatpush1.msra.mxu0 0.0
      %7018 = vmatprep.subr.mxu0 0.0
      %7019 = vmatpush1.msra.mxu0 0.0
      %7020 = vmatprep.subr.mxu0 0.0
      %7021 = vmatpush1.msra.mxu0 0.0
      %7022 = vmatprep.subr.mxu0 0.0
      %7023 = vmatpush1.msra.mxu0 0.0
      %7024 = vmatprep.subr.mxu0 0.0
      %7025 = vmatpush1.msra.mxu0 %v5518
      %7026 = vmatprep.subr.mxu0 0.0
      %7027 = vmatpush2.msra.mxu0 0.0
      %7028 = vmatprep.subr.mxu0 0.0
      %7029 = vmatpush2.msra.mxu0 0.0
      %7030 = vmatprep.subr.mxu0 0.0
      %7031 = vmatpush2.msra.mxu0 0.0
      %7032 = vmatprep.subr.mxu0 0.0
      %7033 = vmatpush2.msra.mxu0 0.0
      %7034 = vmatprep.subr.mxu0 0.0
      %7035 = vmatpush2.msra.mxu0 0.0
      %7036 = vmatprep.subr.mxu0 0.0
      %7037 = vmatpush2.msra.mxu0 0.0
      %7038 = vmatprep.subr.mxu0 0.0
      %7039 = vmatpush2.msra.mxu0 0.0
      %7040 = vmatprep.subr.mxu0 0.0
      %7041 = vmatpush2.msra.mxu0 0.0
      %7042 = vmatprep.subr.mxu0 0.0
      %7043 = vmatpush2.msra.mxu0 0.0
      %7044 = vmatprep.subr.mxu0 0.0
      %7045 = vmatpush2.msra.mxu0 0.0
      %7046 = vmatprep.subr.mxu0 0.0
      %7047 = vmatpush2.msra.mxu0 0.0
      %7048 = vmatprep.subr.mxu0 0.0
      %7049 = vmatpush2.msra.mxu0 0.0
      %7050 = vmatprep.subr.mxu0 0.0
      %7051 = vmatpush2.msra.mxu0 0.0
      %7052 = vmatprep.subr.mxu0 0.0
      %7053 = vmatpush2.msra.mxu0 0.0
      %7054 = vmatprep.subr.mxu0 0.0
      %7055 = vmatpush2.msra.mxu0 0.0
      %7056 = vmatprep.subr.mxu0 0.0
      %7057 = vmatpush2.msra.mxu0 0.0
      %7058 = vmatprep.mubr.f32.mxu0 0.0
      %7059 = vmatmul.mubr.f32.gmra.mxu0 %v6992
      %v7060 = vpop.f32.mrf.mxu0
      %v7061 = vadd.f32 %v6968, %v7060
      %v7062 = vpop.f32.mrf.mxu0
      %7063 = vdwg.mxu0
      %7064 = vrot.lane.b32.xlu0 %v5528, 112
      %v7065 = vpop.permute.xlu0 %7064
      %7066 = vrot.lane.b32.xlu0 %v5528, 80
      %v7067 = vpop.permute.xlu0 %7066
      %v7068 = vsel %vm725, %v7065, 0
      %v7070 = vsel %vm725, %v7067, 0
      %7072 = vmatprep.subr.mxu0 0.0
      %7073 = vmatpush1.xpose.msra.mxu0 0.0
      %7074 = vmatprep.subr.mxu0 0.0
      %7075 = vmatpush1.xpose.msra.mxu0 0.0
      %7076 = vmatprep.subr.mxu0 0.0
      %7077 = vmatpush1.xpose.msra.mxu0 0.0
      %7078 = vmatprep.subr.mxu0 0.0
      %7079 = vmatpush1.xpose.msra.mxu0 0.0
      %7080 = vmatprep.subr.mxu0 0.0
      %7081 = vmatpush1.xpose.msra.mxu0 0.0
      %7082 = vmatprep.subr.mxu0 0.0
      %7083 = vmatpush1.xpose.msra.mxu0 0.0
      %7084 = vmatprep.subr.mxu0 0.0
      %7085 = vmatpush1.xpose.msra.mxu0 0.0
      %7086 = vmatprep.subr.mxu0 0.0
      %7087 = vmatpush1.xpose.msra.mxu0 0.0
      %7088 = vmatprep.subr.mxu0 0.0
      %7089 = vmatpush1.xpose.msra.mxu0 0.0
      %7090 = vmatprep.subr.mxu0 0.0
      %7091 = vmatpush1.xpose.msra.mxu0 0.0
      %7092 = vmatprep.subr.mxu0 0.0
      %7093 = vmatpush1.xpose.msra.mxu0 0.0
      %7094 = vmatprep.subr.mxu0 0.0
      %7095 = vmatpush1.xpose.msra.mxu0 0.0
      %7096 = vmatprep.subr.mxu0 0.0
      %7097 = vmatpush1.xpose.msra.mxu0 0.0
      %7098 = vmatprep.subr.mxu0 0.0
      %7099 = vmatpush1.xpose.msra.mxu0 0.0
      %7100 = vmatprep.subr.mxu0 0.0
      %7101 = vmatpush1.xpose.msra.mxu0 0.0
      %7102 = vmatprep.subr.mxu0 0.0
      %7103 = vmatpush1.xpose.msra.mxu0 %v7070
      %7104 = vmatprep.subr.mxu0 0.0
      %7105 = vmatpush2.xpose.msra.mxu0 0.0
      %7106 = vmatprep.subr.mxu0 0.0
      %7107 = vmatpush2.xpose.msra.mxu0 0.0
      %7108 = vmatprep.subr.mxu0 0.0
      %7109 = vmatpush2.xpose.msra.mxu0 0.0
      %7110 = vmatprep.subr.mxu0 0.0
      %7111 = vmatpush2.xpose.msra.mxu0 0.0
      %7112 = vmatprep.subr.mxu0 0.0
      %7113 = vmatpush2.xpose.msra.mxu0 0.0
      %7114 = vmatprep.subr.mxu0 0.0
      %7115 = vmatpush2.xpose.msra.mxu0 0.0
      %7116 = vmatprep.subr.mxu0 0.0
      %7117 = vmatpush2.xpose.msra.mxu0 0.0
      %7118 = vmatprep.subr.mxu0 0.0
      %7119 = vmatpush2.xpose.msra.mxu0 0.0
      %7120 = vmatprep.subr.mxu0 0.0
      %7121 = vmatpush2.xpose.msra.mxu0 0.0
      %7122 = vmatprep.subr.mxu0 0.0
      %7123 = vmatpush2.xpose.msra.mxu0 0.0
      %7124 = vmatprep.subr.mxu0 0.0
      %7125 = vmatpush2.xpose.msra.mxu0 0.0
      %7126 = vmatprep.subr.mxu0 0.0
      %7127 = vmatpush2.xpose.msra.mxu0 0.0
      %7128 = vmatprep.subr.mxu0 0.0
      %7129 = vmatpush2.xpose.msra.mxu0 0.0
      %7130 = vmatprep.subr.mxu0 0.0
      %7131 = vmatpush2.xpose.msra.mxu0 0.0
      %7132 = vmatprep.subr.mxu0 0.0
      %7133 = vmatpush2.xpose.msra.mxu0 0.0
      %7134 = vmatprep.subr.mxu0 0.0
      %7135 = vmatpush2.xpose.msra.mxu0 0.0
      %7136 = vmatprep.mubr.f32.mxu0 0.0
      %7137 = vmatmul.mubr.f32.gmra.mxu0 %v7068
      %v7138 = vpop.f32.mrf.mxu0
      %v7139 = vadd.f32 0.0, %v7138
      %v7140 = vpop.f32.mrf.mxu0
      %7141 = vdwg.mxu0
      %7142 = vrot.lane.b32.xlu0 %v5611, 112
      %v7143 = vpop.permute.xlu0 %7142
      %7144 = vrot.lane.b32.xlu0 %v5611, 80
      %v7145 = vpop.permute.xlu0 %7144
      %v7146 = vsel %vm725, %v7143, 0
      %v7148 = vsel %vm725, %v7145, 0
      %7150 = vmatprep.subr.mxu0 0.0
      %7151 = vmatpush1.xpose.msra.mxu0 0.0
      %7152 = vmatprep.subr.mxu0 0.0
      %7153 = vmatpush1.xpose.msra.mxu0 0.0
      %7154 = vmatprep.subr.mxu0 0.0
      %7155 = vmatpush1.xpose.msra.mxu0 0.0
      %7156 = vmatprep.subr.mxu0 0.0
      %7157 = vmatpush1.xpose.msra.mxu0 0.0
      %7158 = vmatprep.subr.mxu0 0.0
      %7159 = vmatpush1.xpose.msra.mxu0 0.0
      %7160 = vmatprep.subr.mxu0 0.0
      %7161 = vmatpush1.xpose.msra.mxu0 0.0
      %7162 = vmatprep.subr.mxu0 0.0
      %7163 = vmatpush1.xpose.msra.mxu0 0.0
      %7164 = vmatprep.subr.mxu0 0.0
      %7165 = vmatpush1.xpose.msra.mxu0 0.0
      %7166 = vmatprep.subr.mxu0 0.0
      %7167 = vmatpush1.xpose.msra.mxu0 0.0
      %7168 = vmatprep.subr.mxu0 0.0
      %7169 = vmatpush1.xpose.msra.mxu0 0.0
      %7170 = vmatprep.subr.mxu0 0.0
      %7171 = vmatpush1.xpose.msra.mxu0 0.0
      %7172 = vmatprep.subr.mxu0 0.0
      %7173 = vmatpush1.xpose.msra.mxu0 0.0
      %7174 = vmatprep.subr.mxu0 0.0
      %7175 = vmatpush1.xpose.msra.mxu0 0.0
      %7176 = vmatprep.subr.mxu0 0.0
      %7177 = vmatpush1.xpose.msra.mxu0 0.0
      %7178 = vmatprep.subr.mxu0 0.0
      %7179 = vmatpush1.xpose.msra.mxu0 0.0
      %7180 = vmatprep.subr.mxu0 0.0
      %7181 = vmatpush1.xpose.msra.mxu0 %v7148
      %7182 = vmatprep.subr.mxu0 0.0
      %7183 = vmatpush2.xpose.msra.mxu0 0.0
      %7184 = vmatprep.subr.mxu0 0.0
      %7185 = vmatpush2.xpose.msra.mxu0 0.0
      %7186 = vmatprep.subr.mxu0 0.0
      %7187 = vmatpush2.xpose.msra.mxu0 0.0
      %7188 = vmatprep.subr.mxu0 0.0
      %7189 = vmatpush2.xpose.msra.mxu0 0.0
      %7190 = vmatprep.subr.mxu0 0.0
      %7191 = vmatpush2.xpose.msra.mxu0 0.0
      %7192 = vmatprep.subr.mxu0 0.0
      %7193 = vmatpush2.xpose.msra.mxu0 0.0
      %7194 = vmatprep.subr.mxu0 0.0
      %7195 = vmatpush2.xpose.msra.mxu0 0.0
      %7196 = vmatprep.subr.mxu0 0.0
      %7197 = vmatpush2.xpose.msra.mxu0 0.0
      %7198 = vmatprep.subr.mxu0 0.0
      %7199 = vmatpush2.xpose.msra.mxu0 0.0
      %7200 = vmatprep.subr.mxu0 0.0
      %7201 = vmatpush2.xpose.msra.mxu0 0.0
      %7202 = vmatprep.subr.mxu0 0.0
      %7203 = vmatpush2.xpose.msra.mxu0 0.0
      %7204 = vmatprep.subr.mxu0 0.0
      %7205 = vmatpush2.xpose.msra.mxu0 0.0
      %7206 = vmatprep.subr.mxu0 0.0
      %7207 = vmatpush2.xpose.msra.mxu0 0.0
      %7208 = vmatprep.subr.mxu0 0.0
      %7209 = vmatpush2.xpose.msra.mxu0 0.0
      %7210 = vmatprep.subr.mxu0 0.0
      %7211 = vmatpush2.xpose.msra.mxu0 0.0
      %7212 = vmatprep.subr.mxu0 0.0
      %7213 = vmatpush2.xpose.msra.mxu0 0.0
      %7214 = vmatprep.mubr.f32.mxu0 0.0
      %7215 = vmatmul.mubr.f32.gmra.mxu0 %v7146
      %v7216 = vpop.f32.mrf.mxu0
      %v7217 = vadd.f32 0.0, %v7216
      %v7218 = vpop.f32.mrf.mxu0
      %7219 = vdwg.mxu0
      %7220 = vrot.lane.b32.xlu0 %v5694, 112
      %v7221 = vpop.permute.xlu0 %7220
      %7222 = vrot.lane.b32.xlu0 %v5694, 80
      %v7223 = vpop.permute.xlu0 %7222
      %v7224 = vsel %vm725, %v7221, 0
      %v7226 = vsel %vm725, %v7223, 0
      %7228 = vmatprep.subr.mxu0 0.0
      %7229 = vmatpush1.xpose.msra.mxu0 0.0
      %7230 = vmatprep.subr.mxu0 0.0
      %7231 = vmatpush1.xpose.msra.mxu0 0.0
      %7232 = vmatprep.subr.mxu0 0.0
      %7233 = vmatpush1.xpose.msra.mxu0 0.0
      %7234 = vmatprep.subr.mxu0 0.0
      %7235 = vmatpush1.xpose.msra.mxu0 0.0
      %7236 = vmatprep.subr.mxu0 0.0
      %7237 = vmatpush1.xpose.msra.mxu0 0.0
      %7238 = vmatprep.subr.mxu0 0.0
      %7239 = vmatpush1.xpose.msra.mxu0 0.0
      %7240 = vmatprep.subr.mxu0 0.0
      %7241 = vmatpush1.xpose.msra.mxu0 0.0
      %7242 = vmatprep.subr.mxu0 0.0
      %7243 = vmatpush1.xpose.msra.mxu0 0.0
      %7244 = vmatprep.subr.mxu0 0.0
      %7245 = vmatpush1.xpose.msra.mxu0 0.0
      %7246 = vmatprep.subr.mxu0 0.0
      %7247 = vmatpush1.xpose.msra.mxu0 0.0
      %7248 = vmatprep.subr.mxu0 0.0
      %7249 = vmatpush1.xpose.msra.mxu0 0.0
      %7250 = vmatprep.subr.mxu0 0.0
      %7251 = vmatpush1.xpose.msra.mxu0 0.0
      %7252 = vmatprep.subr.mxu0 0.0
      %7253 = vmatpush1.xpose.msra.mxu0 0.0
      %7254 = vmatprep.subr.mxu0 0.0
      %7255 = vmatpush1.xpose.msra.mxu0 0.0
      %7256 = vmatprep.subr.mxu0 0.0
      %7257 = vmatpush1.xpose.msra.mxu0 0.0
      %7258 = vmatprep.subr.mxu0 0.0
      %7259 = vmatpush1.xpose.msra.mxu0 %v7226
      %7260 = vmatprep.subr.mxu0 0.0
      %7261 = vmatpush2.xpose.msra.mxu0 0.0
      %7262 = vmatprep.subr.mxu0 0.0
      %7263 = vmatpush2.xpose.msra.mxu0 0.0
      %7264 = vmatprep.subr.mxu0 0.0
      %7265 = vmatpush2.xpose.msra.mxu0 0.0
      %7266 = vmatprep.subr.mxu0 0.0
      %7267 = vmatpush2.xpose.msra.mxu0 0.0
      %7268 = vmatprep.subr.mxu0 0.0
      %7269 = vmatpush2.xpose.msra.mxu0 0.0
      %7270 = vmatprep.subr.mxu0 0.0
      %7271 = vmatpush2.xpose.msra.mxu0 0.0
      %7272 = vmatprep.subr.mxu0 0.0
      %7273 = vmatpush2.xpose.msra.mxu0 0.0
      %7274 = vmatprep.subr.mxu0 0.0
      %7275 = vmatpush2.xpose.msra.mxu0 0.0
      %7276 = vmatprep.subr.mxu0 0.0
      %7277 = vmatpush2.xpose.msra.mxu0 0.0
      %7278 = vmatprep.subr.mxu0 0.0
      %7279 = vmatpush2.xpose.msra.mxu0 0.0
      %7280 = vmatprep.subr.mxu0 0.0
      %7281 = vmatpush2.xpose.msra.mxu0 0.0
      %7282 = vmatprep.subr.mxu0 0.0
      %7283 = vmatpush2.xpose.msra.mxu0 0.0
      %7284 = vmatprep.subr.mxu0 0.0
      %7285 = vmatpush2.xpose.msra.mxu0 0.0
      %7286 = vmatprep.subr.mxu0 0.0
      %7287 = vmatpush2.xpose.msra.mxu0 0.0
      %7288 = vmatprep.subr.mxu0 0.0
      %7289 = vmatpush2.xpose.msra.mxu0 0.0
      %7290 = vmatprep.subr.mxu0 0.0
      %7291 = vmatpush2.xpose.msra.mxu0 0.0
      %7292 = vmatprep.mubr.f32.mxu0 0.0
      %7293 = vmatmul.mubr.f32.gmra.mxu0 %v7224
      %v7294 = vpop.f32.mrf.mxu0
      %v7295 = vadd.f32 0.0, %v7294
      %v7296 = vpop.f32.mrf.mxu0
      %7297 = vdwg.mxu0
      %7298 = vrot.lane.b32.xlu0 %v5777, 112
      %v7299 = vpop.permute.xlu0 %7298
      %7300 = vrot.lane.b32.xlu0 %v5777, 80
      %v7301 = vpop.permute.xlu0 %7300
      %v7302 = vsel %vm725, %v7299, 0
      %v7304 = vsel %vm725, %v7301, 0
      %7306 = vmatprep.subr.mxu0 0.0
      %7307 = vmatpush1.xpose.msra.mxu0 0.0
      %7308 = vmatprep.subr.mxu0 0.0
      %7309 = vmatpush1.xpose.msra.mxu0 0.0
      %7310 = vmatprep.subr.mxu0 0.0
      %7311 = vmatpush1.xpose.msra.mxu0 0.0
      %7312 = vmatprep.subr.mxu0 0.0
      %7313 = vmatpush1.xpose.msra.mxu0 0.0
      %7314 = vmatprep.subr.mxu0 0.0
      %7315 = vmatpush1.xpose.msra.mxu0 0.0
      %7316 = vmatprep.subr.mxu0 0.0
      %7317 = vmatpush1.xpose.msra.mxu0 0.0
      %7318 = vmatprep.subr.mxu0 0.0
      %7319 = vmatpush1.xpose.msra.mxu0 0.0
      %7320 = vmatprep.subr.mxu0 0.0
      %7321 = vmatpush1.xpose.msra.mxu0 0.0
      %7322 = vmatprep.subr.mxu0 0.0
      %7323 = vmatpush1.xpose.msra.mxu0 0.0
      %7324 = vmatprep.subr.mxu0 0.0
      %7325 = vmatpush1.xpose.msra.mxu0 0.0
      %7326 = vmatprep.subr.mxu0 0.0
      %7327 = vmatpush1.xpose.msra.mxu0 0.0
      %7328 = vmatprep.subr.mxu0 0.0
      %7329 = vmatpush1.xpose.msra.mxu0 0.0
      %7330 = vmatprep.subr.mxu0 0.0
      %7331 = vmatpush1.xpose.msra.mxu0 0.0
      %7332 = vmatprep.subr.mxu0 0.0
      %7333 = vmatpush1.xpose.msra.mxu0 0.0
      %7334 = vmatprep.subr.mxu0 0.0
      %7335 = vmatpush1.xpose.msra.mxu0 0.0
      %7336 = vmatprep.subr.mxu0 0.0
      %7337 = vmatpush1.xpose.msra.mxu0 %v7304
      %7338 = vmatprep.subr.mxu0 0.0
      %7339 = vmatpush2.xpose.msra.mxu0 0.0
      %7340 = vmatprep.subr.mxu0 0.0
      %7341 = vmatpush2.xpose.msra.mxu0 0.0
      %7342 = vmatprep.subr.mxu0 0.0
      %7343 = vmatpush2.xpose.msra.mxu0 0.0
      %7344 = vmatprep.subr.mxu0 0.0
      %7345 = vmatpush2.xpose.msra.mxu0 0.0
      %7346 = vmatprep.subr.mxu0 0.0
      %7347 = vmatpush2.xpose.msra.mxu0 0.0
      %7348 = vmatprep.subr.mxu0 0.0
      %7349 = vmatpush2.xpose.msra.mxu0 0.0
      %7350 = vmatprep.subr.mxu0 0.0
      %7351 = vmatpush2.xpose.msra.mxu0 0.0
      %7352 = vmatprep.subr.mxu0 0.0
      %7353 = vmatpush2.xpose.msra.mxu0 0.0
      %7354 = vmatprep.subr.mxu0 0.0
      %7355 = vmatpush2.xpose.msra.mxu0 0.0
      %7356 = vmatprep.subr.mxu0 0.0
      %7357 = vmatpush2.xpose.msra.mxu0 0.0
      %7358 = vmatprep.subr.mxu0 0.0
      %7359 = vmatpush2.xpose.msra.mxu0 0.0
      %7360 = vmatprep.subr.mxu0 0.0
      %7361 = vmatpush2.xpose.msra.mxu0 0.0
      %7362 = vmatprep.subr.mxu0 0.0
      %7363 = vmatpush2.xpose.msra.mxu0 0.0
      %7364 = vmatprep.subr.mxu0 0.0
      %7365 = vmatpush2.xpose.msra.mxu0 0.0
      %7366 = vmatprep.subr.mxu0 0.0
      %7367 = vmatpush2.xpose.msra.mxu0 0.0
      %7368 = vmatprep.subr.mxu0 0.0
      %7369 = vmatpush2.xpose.msra.mxu0 0.0
      %7370 = vmatprep.mubr.f32.mxu0 0.0
      %7371 = vmatmul.mubr.f32.gmra.mxu0 %v7302
      %v7372 = vpop.f32.mrf.mxu0
      %v7373 = vadd.f32 0.0, %v7372
      %v7374 = vpop.f32.mrf.mxu0
      %7375 = vdwg.mxu0
      %v7376 = vmul.f32 %v7139, 0.35355338
      %v7377 = vmul.f32 %v7217, 0.35355338
      %v7378 = vmul.f32 %v7295, 0.35355338
      %v7379 = vmul.f32 %v7373, 0.35355338
      %v7380 = vsel %vm1053, %v7376, -inf
      %7381 = vmax.xlane.f32.xlu0 %v7380
      %v7382 = vpop.xlane.xlu0 %7381
      %v7383 = vsel %vm1053, %v7377, -inf
      %7384 = vmax.xlane.f32.xlu0 %v7383
      %v7385 = vpop.xlane.xlu0 %7384
      %v7386 = vsel %vm1053, %v7378, -inf
      %7387 = vmax.xlane.f32.xlu0 %v7386
      %v7388 = vpop.xlane.xlu0 %7387
      %v7389 = vsel %vm1053, %v7379, -inf
      %7390 = vmax.xlane.f32.xlu0 %v7389
      %v7391 = vpop.xlane.xlu0 %7390
      %v7392 = vsub.f32 %v7376, %v7382
      %v7393 = vsub.f32 %v7377, %v7385
      %v7394 = vsub.f32 %v7378, %v7388
      %v7395 = vsub.f32 %v7379, %v7391
      %v7396 = vmul.f32 %v7392, 1.442695
      %v7397 = vpow.pop %v7396
      %v7398 = vmul.f32 %v7393, 1.442695
      %v7399 = vpow.pop %v7398
      %v7400 = vmul.f32 %v7394, 1.442695
      %v7401 = vpow.pop %v7400
      %v7402 = vmul.f32 %v7395, 1.442695
      %v7403 = vpow.pop %v7402
      %v7404 = vsel %vm1053, %v7397, 0.0
      %7405 = vadd.xlane.f32.xlu0 %v7404
      %v7406 = vpop.xlane.xlu0 %7405
      %v7407 = vsel %vm1053, %v7399, 0.0
      %7408 = vadd.xlane.f32.xlu0 %v7407
      %v7409 = vpop.xlane.xlu0 %7408
      %v7410 = vsel %vm1053, %v7401, 0.0
      %7411 = vadd.xlane.f32.xlu0 %v7410
      %v7412 = vpop.xlane.xlu0 %7411
      %v7413 = vsel %vm1053, %v7403, 0.0
      %7414 = vadd.xlane.f32.xlu0 %v7413
      %v7415 = vpop.xlane.xlu0 %7414
      %v7416 = vrcp.pop %v7406
      %v7417 = vmul.f32 %v7397, %v7416
      %v7418 = vrcp.pop %v7409
      %v7419 = vmul.f32 %v7399, %v7418
      %v7420 = vrcp.pop %v7412
      %v7421 = vmul.f32 %v7401, %v7420
      %v7422 = vrcp.pop %v7415
      %v7423 = vmul.f32 %v7403, %v7422
      %7424 = vrot.lane.b32.xlu0 %v5528, 48
      %v7425 = vpop.permute.xlu0 %7424
      %v7427 = vsel %vm1100, %v7417, 0
      %v7429 = vsel %vm1104, %v7425, 0
      %7431 = vmatprep.subr.mxu0 0.0
      %7432 = vmatpush1.msra.mxu0 0.0
      %7433 = vmatprep.subr.mxu0 0.0
      %7434 = vmatpush1.msra.mxu0 0.0
      %7435 = vmatprep.subr.mxu0 0.0
      %7436 = vmatpush1.msra.mxu0 0.0
      %7437 = vmatprep.subr.mxu0 0.0
      %7438 = vmatpush1.msra.mxu0 0.0
      %7439 = vmatprep.subr.mxu0 0.0
      %7440 = vmatpush1.msra.mxu0 0.0
      %7441 = vmatprep.subr.mxu0 0.0
      %7442 = vmatpush1.msra.mxu0 0.0
      %7443 = vmatprep.subr.mxu0 0.0
      %7444 = vmatpush1.msra.mxu0 0.0
      %7445 = vmatprep.subr.mxu0 0.0
      %7446 = vmatpush1.msra.mxu0 0.0
      %7447 = vmatprep.subr.mxu0 0.0
      %7448 = vmatpush1.msra.mxu0 0.0
      %7449 = vmatprep.subr.mxu0 0.0
      %7450 = vmatpush1.msra.mxu0 0.0
      %7451 = vmatprep.subr.mxu0 0.0
      %7452 = vmatpush1.msra.mxu0 0.0
      %7453 = vmatprep.subr.mxu0 0.0
      %7454 = vmatpush1.msra.mxu0 0.0
      %7455 = vmatprep.subr.mxu0 0.0
      %7456 = vmatpush1.msra.mxu0 0.0
      %7457 = vmatprep.subr.mxu0 0.0
      %7458 = vmatpush1.msra.mxu0 0.0
      %7459 = vmatprep.subr.mxu0 0.0
      %7460 = vmatpush1.msra.mxu0 0.0
      %7461 = vmatprep.subr.mxu0 0.0
      %7462 = vmatpush1.msra.mxu0 %v7429
      %7463 = vmatprep.subr.mxu0 0.0
      %7464 = vmatpush2.msra.mxu0 0.0
      %7465 = vmatprep.subr.mxu0 0.0
      %7466 = vmatpush2.msra.mxu0 0.0
      %7467 = vmatprep.subr.mxu0 0.0
      %7468 = vmatpush2.msra.mxu0 0.0
      %7469 = vmatprep.subr.mxu0 0.0
      %7470 = vmatpush2.msra.mxu0 0.0
      %7471 = vmatprep.subr.mxu0 0.0
      %7472 = vmatpush2.msra.mxu0 0.0
      %7473 = vmatprep.subr.mxu0 0.0
      %7474 = vmatpush2.msra.mxu0 0.0
      %7475 = vmatprep.subr.mxu0 0.0
      %7476 = vmatpush2.msra.mxu0 0.0
      %7477 = vmatprep.subr.mxu0 0.0
      %7478 = vmatpush2.msra.mxu0 0.0
      %7479 = vmatprep.subr.mxu0 0.0
      %7480 = vmatpush2.msra.mxu0 0.0
      %7481 = vmatprep.subr.mxu0 0.0
      %7482 = vmatpush2.msra.mxu0 0.0
      %7483 = vmatprep.subr.mxu0 0.0
      %7484 = vmatpush2.msra.mxu0 0.0
      %7485 = vmatprep.subr.mxu0 0.0
      %7486 = vmatpush2.msra.mxu0 0.0
      %7487 = vmatprep.subr.mxu0 0.0
      %7488 = vmatpush2.msra.mxu0 0.0
      %7489 = vmatprep.subr.mxu0 0.0
      %7490 = vmatpush2.msra.mxu0 0.0
      %7491 = vmatprep.subr.mxu0 0.0
      %7492 = vmatpush2.msra.mxu0 0.0
      %7493 = vmatprep.subr.mxu0 0.0
      %7494 = vmatpush2.msra.mxu0 0.0
      %7495 = vmatprep.mubr.f32.mxu0 0.0
      %7496 = vmatmul.mubr.f32.gmra.mxu0 %v7427
      %v7497 = vpop.f32.mrf.mxu0
      %v7498 = vadd.f32 0.0, %v7497
      %v7499 = vpop.f32.mrf.mxu0
      %7500 = vdwg.mxu0
      %7501 = vrot.lane.b32.xlu0 %v5611, 48
      %v7502 = vpop.permute.xlu0 %7501
      %v7504 = vsel %vm1100, %v7419, 0
      %v7506 = vsel %vm1104, %v7502, 0
      %7508 = vmatprep.subr.mxu0 0.0
      %7509 = vmatpush1.msra.mxu0 0.0
      %7510 = vmatprep.subr.mxu0 0.0
      %7511 = vmatpush1.msra.mxu0 0.0
      %7512 = vmatprep.subr.mxu0 0.0
      %7513 = vmatpush1.msra.mxu0 0.0
      %7514 = vmatprep.subr.mxu0 0.0
      %7515 = vmatpush1.msra.mxu0 0.0
      %7516 = vmatprep.subr.mxu0 0.0
      %7517 = vmatpush1.msra.mxu0 0.0
      %7518 = vmatprep.subr.mxu0 0.0
      %7519 = vmatpush1.msra.mxu0 0.0
      %7520 = vmatprep.subr.mxu0 0.0
      %7521 = vmatpush1.msra.mxu0 0.0
      %7522 = vmatprep.subr.mxu0 0.0
      %7523 = vmatpush1.msra.mxu0 0.0
      %7524 = vmatprep.subr.mxu0 0.0
      %7525 = vmatpush1.msra.mxu0 0.0
      %7526 = vmatprep.subr.mxu0 0.0
      %7527 = vmatpush1.msra.mxu0 0.0
      %7528 = vmatprep.subr.mxu0 0.0
      %7529 = vmatpush1.msra.mxu0 0.0
      %7530 = vmatprep.subr.mxu0 0.0
      %7531 = vmatpush1.msra.mxu0 0.0
      %7532 = vmatprep.subr.mxu0 0.0
      %7533 = vmatpush1.msra.mxu0 0.0
      %7534 = vmatprep.subr.mxu0 0.0
      %7535 = vmatpush1.msra.mxu0 0.0
      %7536 = vmatprep.subr.mxu0 0.0
      %7537 = vmatpush1.msra.mxu0 0.0
      %7538 = vmatprep.subr.mxu0 0.0
      %7539 = vmatpush1.msra.mxu0 %v7506
      %7540 = vmatprep.subr.mxu0 0.0
      %7541 = vmatpush2.msra.mxu0 0.0
      %7542 = vmatprep.subr.mxu0 0.0
      %7543 = vmatpush2.msra.mxu0 0.0
      %7544 = vmatprep.subr.mxu0 0.0
      %7545 = vmatpush2.msra.mxu0 0.0
      %7546 = vmatprep.subr.mxu0 0.0
      %7547 = vmatpush2.msra.mxu0 0.0
      %7548 = vmatprep.subr.mxu0 0.0
      %7549 = vmatpush2.msra.mxu0 0.0
      %7550 = vmatprep.subr.mxu0 0.0
      %7551 = vmatpush2.msra.mxu0 0.0
      %7552 = vmatprep.subr.mxu0 0.0
      %7553 = vmatpush2.msra.mxu0 0.0
      %7554 = vmatprep.subr.mxu0 0.0
      %7555 = vmatpush2.msra.mxu0 0.0
      %7556 = vmatprep.subr.mxu0 0.0
      %7557 = vmatpush2.msra.mxu0 0.0
      %7558 = vmatprep.subr.mxu0 0.0
      %7559 = vmatpush2.msra.mxu0 0.0
      %7560 = vmatprep.subr.mxu0 0.0
      %7561 = vmatpush2.msra.mxu0 0.0
      %7562 = vmatprep.subr.mxu0 0.0
      %7563 = vmatpush2.msra.mxu0 0.0
      %7564 = vmatprep.subr.mxu0 0.0
      %7565 = vmatpush2.msra.mxu0 0.0
      %7566 = vmatprep.subr.mxu0 0.0
      %7567 = vmatpush2.msra.mxu0 0.0
      %7568 = vmatprep.subr.mxu0 0.0
      %7569 = vmatpush2.msra.mxu0 0.0
      %7570 = vmatprep.subr.mxu0 0.0
      %7571 = vmatpush2.msra.mxu0 0.0
      %7572 = vmatprep.mubr.f32.mxu0 0.0
      %7573 = vmatmul.mubr.f32.gmra.mxu0 %v7504
      %v7574 = vpop.f32.mrf.mxu0
      %v7575 = vadd.f32 0.0, %v7574
      %v7576 = vpop.f32.mrf.mxu0
      %7577 = vdwg.mxu0
      %7578 = vrot.lane.b32.xlu0 %v5694, 48
      %v7579 = vpop.permute.xlu0 %7578
      %v7581 = vsel %vm1100, %v7421, 0
      %v7583 = vsel %vm1104, %v7579, 0
      %7585 = vmatprep.subr.mxu0 0.0
      %7586 = vmatpush1.msra.mxu0 0.0
      %7587 = vmatprep.subr.mxu0 0.0
      %7588 = vmatpush1.msra.mxu0 0.0
      %7589 = vmatprep.subr.mxu0 0.0
      %7590 = vmatpush1.msra.mxu0 0.0
      %7591 = vmatprep.subr.mxu0 0.0
      %7592 = vmatpush1.msra.mxu0 0.0
      %7593 = vmatprep.subr.mxu0 0.0
      %7594 = vmatpush1.msra.mxu0 0.0
      %7595 = vmatprep.subr.mxu0 0.0
      %7596 = vmatpush1.msra.mxu0 0.0
      %7597 = vmatprep.subr.mxu0 0.0
      %7598 = vmatpush1.msra.mxu0 0.0
      %7599 = vmatprep.subr.mxu0 0.0
      %7600 = vmatpush1.msra.mxu0 0.0
      %7601 = vmatprep.subr.mxu0 0.0
      %7602 = vmatpush1.msra.mxu0 0.0
      %7603 = vmatprep.subr.mxu0 0.0
      %7604 = vmatpush1.msra.mxu0 0.0
      %7605 = vmatprep.subr.mxu0 0.0
      %7606 = vmatpush1.msra.mxu0 0.0
      %7607 = vmatprep.subr.mxu0 0.0
      %7608 = vmatpush1.msra.mxu0 0.0
      %7609 = vmatprep.subr.mxu0 0.0
      %7610 = vmatpush1.msra.mxu0 0.0
      %7611 = vmatprep.subr.mxu0 0.0
      %7612 = vmatpush1.msra.mxu0 0.0
      %7613 = vmatprep.subr.mxu0 0.0
      %7614 = vmatpush1.msra.mxu0 0.0
      %7615 = vmatprep.subr.mxu0 0.0
      %7616 = vmatpush1.msra.mxu0 %v7583
      %7617 = vmatprep.subr.mxu0 0.0
      %7618 = vmatpush2.msra.mxu0 0.0
      %7619 = vmatprep.subr.mxu0 0.0
      %7620 = vmatpush2.msra.mxu0 0.0
      %7621 = vmatprep.subr.mxu0 0.0
      %7622 = vmatpush2.msra.mxu0 0.0
      %7623 = vmatprep.subr.mxu0 0.0
      %7624 = vmatpush2.msra.mxu0 0.0
      %7625 = vmatprep.subr.mxu0 0.0
      %7626 = vmatpush2.msra.mxu0 0.0
      %7627 = vmatprep.subr.mxu0 0.0
      %7628 = vmatpush2.msra.mxu0 0.0
      %7629 = vmatprep.subr.mxu0 0.0
      %7630 = vmatpush2.msra.mxu0 0.0
      %7631 = vmatprep.subr.mxu0 0.0
      %7632 = vmatpush2.msra.mxu0 0.0
      %7633 = vmatprep.subr.mxu0 0.0
      %7634 = vmatpush2.msra.mxu0 0.0
      %7635 = vmatprep.subr.mxu0 0.0
      %7636 = vmatpush2.msra.mxu0 0.0
      %7637 = vmatprep.subr.mxu0 0.0
      %7638 = vmatpush2.msra.mxu0 0.0
      %7639 = vmatprep.subr.mxu0 0.0
      %7640 = vmatpush2.msra.mxu0 0.0
      %7641 = vmatprep.subr.mxu0 0.0
      %7642 = vmatpush2.msra.mxu0 0.0
      %7643 = vmatprep.subr.mxu0 0.0
      %7644 = vmatpush2.msra.mxu0 0.0
      %7645 = vmatprep.subr.mxu0 0.0
      %7646 = vmatpush2.msra.mxu0 0.0
      %7647 = vmatprep.subr.mxu0 0.0
      %7648 = vmatpush2.msra.mxu0 0.0
      %7649 = vmatprep.mubr.f32.mxu0 0.0
      %7650 = vmatmul.mubr.f32.gmra.mxu0 %v7581
      %v7651 = vpop.f32.mrf.mxu0
      %v7652 = vadd.f32 0.0, %v7651
      %v7653 = vpop.f32.mrf.mxu0
      %7654 = vdwg.mxu0
      %7655 = vrot.lane.b32.xlu0 %v5777, 48
      %v7656 = vpop.permute.xlu0 %7655
      %v7658 = vsel %vm1100, %v7423, 0
      %v7660 = vsel %vm1104, %v7656, 0
      %7662 = vmatprep.subr.mxu0 0.0
      %7663 = vmatpush1.msra.mxu0 0.0
      %7664 = vmatprep.subr.mxu0 0.0
      %7665 = vmatpush1.msra.mxu0 0.0
      %7666 = vmatprep.subr.mxu0 0.0
      %7667 = vmatpush1.msra.mxu0 0.0
      %7668 = vmatprep.subr.mxu0 0.0
      %7669 = vmatpush1.msra.mxu0 0.0
      %7670 = vmatprep.subr.mxu0 0.0
      %7671 = vmatpush1.msra.mxu0 0.0
      %7672 = vmatprep.subr.mxu0 0.0
      %7673 = vmatpush1.msra.mxu0 0.0
      %7674 = vmatprep.subr.mxu0 0.0
      %7675 = vmatpush1.msra.mxu0 0.0
      %7676 = vmatprep.subr.mxu0 0.0
      %7677 = vmatpush1.msra.mxu0 0.0
      %7678 = vmatprep.subr.mxu0 0.0
      %7679 = vmatpush1.msra.mxu0 0.0
      %7680 = vmatprep.subr.mxu0 0.0
      %7681 = vmatpush1.msra.mxu0 0.0
      %7682 = vmatprep.subr.mxu0 0.0
      %7683 = vmatpush1.msra.mxu0 0.0
      %7684 = vmatprep.subr.mxu0 0.0
      %7685 = vmatpush1.msra.mxu0 0.0
      %7686 = vmatprep.subr.mxu0 0.0
      %7687 = vmatpush1.msra.mxu0 0.0
      %7688 = vmatprep.subr.mxu0 0.0
      %7689 = vmatpush1.msra.mxu0 0.0
      %7690 = vmatprep.subr.mxu0 0.0
      %7691 = vmatpush1.msra.mxu0 0.0
      %7692 = vmatprep.subr.mxu0 0.0
      %7693 = vmatpush1.msra.mxu0 %v7660
      %7694 = vmatprep.subr.mxu0 0.0
      %7695 = vmatpush2.msra.mxu0 0.0
      %7696 = vmatprep.subr.mxu0 0.0
      %7697 = vmatpush2.msra.mxu0 0.0
      %7698 = vmatprep.subr.mxu0 0.0
      %7699 = vmatpush2.msra.mxu0 0.0
      %7700 = vmatprep.subr.mxu0 0.0
      %7701 = vmatpush2.msra.mxu0 0.0
      %7702 = vmatprep.subr.mxu0 0.0
      %7703 = vmatpush2.msra.mxu0 0.0
      %7704 = vmatprep.subr.mxu0 0.0
      %7705 = vmatpush2.msra.mxu0 0.0
      %7706 = vmatprep.subr.mxu0 0.0
      %7707 = vmatpush2.msra.mxu0 0.0
      %7708 = vmatprep.subr.mxu0 0.0
      %7709 = vmatpush2.msra.mxu0 0.0
      %7710 = vmatprep.subr.mxu0 0.0
      %7711 = vmatpush2.msra.mxu0 0.0
      %7712 = vmatprep.subr.mxu0 0.0
      %7713 = vmatpush2.msra.mxu0 0.0
      %7714 = vmatprep.subr.mxu0 0.0
      %7715 = vmatpush2.msra.mxu0 0.0
      %7716 = vmatprep.subr.mxu0 0.0
      %7717 = vmatpush2.msra.mxu0 0.0
      %7718 = vmatprep.subr.mxu0 0.0
      %7719 = vmatpush2.msra.mxu0 0.0
      %7720 = vmatprep.subr.mxu0 0.0
      %7721 = vmatpush2.msra.mxu0 0.0
      %7722 = vmatprep.subr.mxu0 0.0
      %7723 = vmatpush2.msra.mxu0 0.0
      %7724 = vmatprep.subr.mxu0 0.0
      %7725 = vmatpush2.msra.mxu0 0.0
      %7726 = vmatprep.mubr.f32.mxu0 0.0
      %7727 = vmatmul.mubr.f32.gmra.mxu0 %v7658
      %v7728 = vpop.f32.mrf.mxu0
      %v7729 = vadd.f32 0.0, %v7728
      %v7730 = vpop.f32.mrf.mxu0
      %7731 = vdwg.mxu0
      %v7736 = vcombine.low %v7498, %v7575
      %v7737 = vcombine.low %v7652, %v7729
      %v7739 = vunpack.c.l.s4 1983009808
      %v7740 = vunpack.c.0.s8 %v7739
      %v7741 = vlaneseq
      %v7742 = vshrl.u32 %v7741, 7
      %v7743 = vsub.s32 %v7740, %v7742
      %v7744 = vrot.slane %v7736, %v7743
      %v7746 = vunpack.c.l.s4 1983009808
      %v7747 = vunpack.c.0.s8 %v7746
      %v7748 = vlaneseq
      %v7749 = vshrl.u32 %v7748, 7
      %v7750 = vsub.s32 %v7747, %v7749
      %v7751 = vrot.slane %v7737, %v7750
      %v7752 = vcombine.low %v7744, %v7751
      %v7753 = vsel %vm725, %v7752, 0
      %7755 = vmatprep.subr.mxu0 0.0
      %7756 = vmatpush1.msra.mxu0 0.0
      %7757 = vmatprep.subr.mxu0 0.0
      %7758 = vmatpush1.msra.mxu0 0.0
      %7759 = vmatprep.subr.mxu0 0.0
      %7760 = vmatpush1.msra.mxu0 0.0
      %7761 = vmatprep.subr.mxu0 0.0
      %7762 = vmatpush1.msra.mxu0 0.0
      %7763 = vmatprep.subr.mxu0 0.0
      %7764 = vmatpush1.msra.mxu0 0.0
      %7765 = vmatprep.subr.mxu0 0.0
      %7766 = vmatpush1.msra.mxu0 0.0
      %7767 = vmatprep.subr.mxu0 0.0
      %7768 = vmatpush1.msra.mxu0 0.0
      %7769 = vmatprep.subr.mxu0 0.0
      %7770 = vmatpush1.msra.mxu0 0.0
      %7771 = vmatprep.subr.mxu0 0.0
      %7772 = vmatpush1.msra.mxu0 0.0
      %7773 = vmatprep.subr.mxu0 0.0
      %7774 = vmatpush1.msra.mxu0 0.0
      %7775 = vmatprep.subr.mxu0 0.0
      %7776 = vmatpush1.msra.mxu0 0.0
      %7777 = vmatprep.subr.mxu0 0.0
      %7778 = vmatpush1.msra.mxu0 0.0
      %7779 = vmatprep.subr.mxu0 0.0
      %7780 = vmatpush1.msra.mxu0 0.0
      %7781 = vmatprep.subr.mxu0 0.0
      %7782 = vmatpush1.msra.mxu0 0.0
      %7783 = vmatprep.subr.mxu0 0.0
      %7784 = vmatpush1.msra.mxu0 0.0
      %7785 = vmatprep.subr.mxu0 0.0
      %7786 = vmatpush1.msra.mxu0 %v5520
      %7787 = vmatprep.subr.mxu0 0.0
      %7788 = vmatpush2.msra.mxu0 0.0
      %7789 = vmatprep.subr.mxu0 0.0
      %7790 = vmatpush2.msra.mxu0 0.0
      %7791 = vmatprep.subr.mxu0 0.0
      %7792 = vmatpush2.msra.mxu0 0.0
      %7793 = vmatprep.subr.mxu0 0.0
      %7794 = vmatpush2.msra.mxu0 0.0
      %7795 = vmatprep.subr.mxu0 0.0
      %7796 = vmatpush2.msra.mxu0 0.0
      %7797 = vmatprep.subr.mxu0 0.0
      %7798 = vmatpush2.msra.mxu0 0.0
      %7799 = vmatprep.subr.mxu0 0.0
      %7800 = vmatpush2.msra.mxu0 0.0
      %7801 = vmatprep.subr.mxu0 0.0
      %7802 = vmatpush2.msra.mxu0 0.0
      %7803 = vmatprep.subr.mxu0 0.0
      %7804 = vmatpush2.msra.mxu0 0.0
      %7805 = vmatprep.subr.mxu0 0.0
      %7806 = vmatpush2.msra.mxu0 0.0
      %7807 = vmatprep.subr.mxu0 0.0
      %7808 = vmatpush2.msra.mxu0 0.0
      %7809 = vmatprep.subr.mxu0 0.0
      %7810 = vmatpush2.msra.mxu0 0.0
      %7811 = vmatprep.subr.mxu0 0.0
      %7812 = vmatpush2.msra.mxu0 0.0
      %7813 = vmatprep.subr.mxu0 0.0
      %7814 = vmatpush2.msra.mxu0 0.0
      %7815 = vmatprep.subr.mxu0 0.0
      %7816 = vmatpush2.msra.mxu0 0.0
      %7817 = vmatprep.subr.mxu0 0.0
      %7818 = vmatpush2.msra.mxu0 0.0
      %7819 = vmatprep.mubr.f32.mxu0 0.0
      %7820 = vmatmul.mubr.f32.gmra.mxu0 %v7753
      %v7821 = vpop.f32.mrf.mxu0
      %v7822 = vadd.f32 0.0, %v7821
      %v7823 = vpop.f32.mrf.mxu0
      %7824 = vdwg.mxu0
      %v7825 = vadd.f32 %v7061, %v7822
      %7826 = vrot.lane.b32.xlu0 %v5528, 104
      %v7827 = vpop.permute.xlu0 %7826
      %7828 = vrot.lane.b32.xlu0 %v5528, 72
      %v7829 = vpop.permute.xlu0 %7828
      %v7830 = vsel %vm725, %v7827, 0
      %v7832 = vsel %vm725, %v7829, 0
      %7834 = vmatprep.subr.mxu0 0.0
      %7835 = vmatpush1.xpose.msra.mxu0 0.0
      %7836 = vmatprep.subr.mxu0 0.0
      %7837 = vmatpush1.xpose.msra.mxu0 0.0
      %7838 = vmatprep.subr.mxu0 0.0
      %7839 = vmatpush1.xpose.msra.mxu0 0.0
      %7840 = vmatprep.subr.mxu0 0.0
      %7841 = vmatpush1.xpose.msra.mxu0 0.0
      %7842 = vmatprep.subr.mxu0 0.0
      %7843 = vmatpush1.xpose.msra.mxu0 0.0
      %7844 = vmatprep.subr.mxu0 0.0
      %7845 = vmatpush1.xpose.msra.mxu0 0.0
      %7846 = vmatprep.subr.mxu0 0.0
      %7847 = vmatpush1.xpose.msra.mxu0 0.0
      %7848 = vmatprep.subr.mxu0 0.0
      %7849 = vmatpush1.xpose.msra.mxu0 0.0
      %7850 = vmatprep.subr.mxu0 0.0
      %7851 = vmatpush1.xpose.msra.mxu0 0.0
      %7852 = vmatprep.subr.mxu0 0.0
      %7853 = vmatpush1.xpose.msra.mxu0 0.0
      %7854 = vmatprep.subr.mxu0 0.0
      %7855 = vmatpush1.xpose.msra.mxu0 0.0
      %7856 = vmatprep.subr.mxu0 0.0
      %7857 = vmatpush1.xpose.msra.mxu0 0.0
      %7858 = vmatprep.subr.mxu0 0.0
      %7859 = vmatpush1.xpose.msra.mxu0 0.0
      %7860 = vmatprep.subr.mxu0 0.0
      %7861 = vmatpush1.xpose.msra.mxu0 0.0
      %7862 = vmatprep.subr.mxu0 0.0
      %7863 = vmatpush1.xpose.msra.mxu0 0.0
      %7864 = vmatprep.subr.mxu0 0.0
      %7865 = vmatpush1.xpose.msra.mxu0 %v7832
      %7866 = vmatprep.subr.mxu0 0.0
      %7867 = vmatpush2.xpose.msra.mxu0 0.0
      %7868 = vmatprep.subr.mxu0 0.0
      %7869 = vmatpush2.xpose.msra.mxu0 0.0
      %7870 = vmatprep.subr.mxu0 0.0
      %7871 = vmatpush2.xpose.msra.mxu0 0.0
      %7872 = vmatprep.subr.mxu0 0.0
      %7873 = vmatpush2.xpose.msra.mxu0 0.0
      %7874 = vmatprep.subr.mxu0 0.0
      %7875 = vmatpush2.xpose.msra.mxu0 0.0
      %7876 = vmatprep.subr.mxu0 0.0
      %7877 = vmatpush2.xpose.msra.mxu0 0.0
      %7878 = vmatprep.subr.mxu0 0.0
      %7879 = vmatpush2.xpose.msra.mxu0 0.0
      %7880 = vmatprep.subr.mxu0 0.0
      %7881 = vmatpush2.xpose.msra.mxu0 0.0
      %7882 = vmatprep.subr.mxu0 0.0
      %7883 = vmatpush2.xpose.msra.mxu0 0.0
      %7884 = vmatprep.subr.mxu0 0.0
      %7885 = vmatpush2.xpose.msra.mxu0 0.0
      %7886 = vmatprep.subr.mxu0 0.0
      %7887 = vmatpush2.xpose.msra.mxu0 0.0
      %7888 = vmatprep.subr.mxu0 0.0
      %7889 = vmatpush2.xpose.msra.mxu0 0.0
      %7890 = vmatprep.subr.mxu0 0.0
      %7891 = vmatpush2.xpose.msra.mxu0 0.0
      %7892 = vmatprep.subr.mxu0 0.0
      %7893 = vmatpush2.xpose.msra.mxu0 0.0
      %7894 = vmatprep.subr.mxu0 0.0
      %7895 = vmatpush2.xpose.msra.mxu0 0.0
      %7896 = vmatprep.subr.mxu0 0.0
      %7897 = vmatpush2.xpose.msra.mxu0 0.0
      %7898 = vmatprep.mubr.f32.mxu0 0.0
      %7899 = vmatmul.mubr.f32.gmra.mxu0 %v7830
      %v7900 = vpop.f32.mrf.mxu0
      %v7901 = vadd.f32 0.0, %v7900
      %v7902 = vpop.f32.mrf.mxu0
      %7903 = vdwg.mxu0
      %7904 = vrot.lane.b32.xlu0 %v5611, 104
      %v7905 = vpop.permute.xlu0 %7904
      %7906 = vrot.lane.b32.xlu0 %v5611, 72
      %v7907 = vpop.permute.xlu0 %7906
      %v7908 = vsel %vm725, %v7905, 0
      %v7910 = vsel %vm725, %v7907, 0
      %7912 = vmatprep.subr.mxu0 0.0
      %7913 = vmatpush1.xpose.msra.mxu0 0.0
      %7914 = vmatprep.subr.mxu0 0.0
      %7915 = vmatpush1.xpose.msra.mxu0 0.0
      %7916 = vmatprep.subr.mxu0 0.0
      %7917 = vmatpush1.xpose.msra.mxu0 0.0
      %7918 = vmatprep.subr.mxu0 0.0
      %7919 = vmatpush1.xpose.msra.mxu0 0.0
      %7920 = vmatprep.subr.mxu0 0.0
      %7921 = vmatpush1.xpose.msra.mxu0 0.0
      %7922 = vmatprep.subr.mxu0 0.0
      %7923 = vmatpush1.xpose.msra.mxu0 0.0
      %7924 = vmatprep.subr.mxu0 0.0
      %7925 = vmatpush1.xpose.msra.mxu0 0.0
      %7926 = vmatprep.subr.mxu0 0.0
      %7927 = vmatpush1.xpose.msra.mxu0 0.0
      %7928 = vmatprep.subr.mxu0 0.0
      %7929 = vmatpush1.xpose.msra.mxu0 0.0
      %7930 = vmatprep.subr.mxu0 0.0
      %7931 = vmatpush1.xpose.msra.mxu0 0.0
      %7932 = vmatprep.subr.mxu0 0.0
      %7933 = vmatpush1.xpose.msra.mxu0 0.0
      %7934 = vmatprep.subr.mxu0 0.0
      %7935 = vmatpush1.xpose.msra.mxu0 0.0
      %7936 = vmatprep.subr.mxu0 0.0
      %7937 = vmatpush1.xpose.msra.mxu0 0.0
      %7938 = vmatprep.subr.mxu0 0.0
      %7939 = vmatpush1.xpose.msra.mxu0 0.0
      %7940 = vmatprep.subr.mxu0 0.0
      %7941 = vmatpush1.xpose.msra.mxu0 0.0
      %7942 = vmatprep.subr.mxu0 0.0
      %7943 = vmatpush1.xpose.msra.mxu0 %v7910
      %7944 = vmatprep.subr.mxu0 0.0
      %7945 = vmatpush2.xpose.msra.mxu0 0.0
      %7946 = vmatprep.subr.mxu0 0.0
      %7947 = vmatpush2.xpose.msra.mxu0 0.0
      %7948 = vmatprep.subr.mxu0 0.0
      %7949 = vmatpush2.xpose.msra.mxu0 0.0
      %7950 = vmatprep.subr.mxu0 0.0
      %7951 = vmatpush2.xpose.msra.mxu0 0.0
      %7952 = vmatprep.subr.mxu0 0.0
      %7953 = vmatpush2.xpose.msra.mxu0 0.0
      %7954 = vmatprep.subr.mxu0 0.0
      %7955 = vmatpush2.xpose.msra.mxu0 0.0
      %7956 = vmatprep.subr.mxu0 0.0
      %7957 = vmatpush2.xpose.msra.mxu0 0.0
      %7958 = vmatprep.subr.mxu0 0.0
      %7959 = vmatpush2.xpose.msra.mxu0 0.0
      %7960 = vmatprep.subr.mxu0 0.0
      %7961 = vmatpush2.xpose.msra.mxu0 0.0
      %7962 = vmatprep.subr.mxu0 0.0
      %7963 = vmatpush2.xpose.msra.mxu0 0.0
      %7964 = vmatprep.subr.mxu0 0.0
      %7965 = vmatpush2.xpose.msra.mxu0 0.0
      %7966 = vmatprep.subr.mxu0 0.0
      %7967 = vmatpush2.xpose.msra.mxu0 0.0
      %7968 = vmatprep.subr.mxu0 0.0
      %7969 = vmatpush2.xpose.msra.mxu0 0.0
      %7970 = vmatprep.subr.mxu0 0.0
      %7971 = vmatpush2.xpose.msra.mxu0 0.0
      %7972 = vmatprep.subr.mxu0 0.0
      %7973 = vmatpush2.xpose.msra.mxu0 0.0
      %7974 = vmatprep.subr.mxu0 0.0
      %7975 = vmatpush2.xpose.msra.mxu0 0.0
      %7976 = vmatprep.mubr.f32.mxu0 0.0
      %7977 = vmatmul.mubr.f32.gmra.mxu0 %v7908
      %v7978 = vpop.f32.mrf.mxu0
      %v7979 = vadd.f32 0.0, %v7978
      %v7980 = vpop.f32.mrf.mxu0
      %7981 = vdwg.mxu0
      %7982 = vrot.lane.b32.xlu0 %v5694, 104
      %v7983 = vpop.permute.xlu0 %7982
      %7984 = vrot.lane.b32.xlu0 %v5694, 72
      %v7985 = vpop.permute.xlu0 %7984
      %v7986 = vsel %vm725, %v7983, 0
      %v7988 = vsel %vm725, %v7985, 0
      %7990 = vmatprep.subr.mxu0 0.0
      %7991 = vmatpush1.xpose.msra.mxu0 0.0
      %7992 = vmatprep.subr.mxu0 0.0
      %7993 = vmatpush1.xpose.msra.mxu0 0.0
      %7994 = vmatprep.subr.mxu0 0.0
      %7995 = vmatpush1.xpose.msra.mxu0 0.0
      %7996 = vmatprep.subr.mxu0 0.0
      %7997 = vmatpush1.xpose.msra.mxu0 0.0
      %7998 = vmatprep.subr.mxu0 0.0
      %7999 = vmatpush1.xpose.msra.mxu0 0.0
      %8000 = vmatprep.subr.mxu0 0.0
      %8001 = vmatpush1.xpose.msra.mxu0 0.0
      %8002 = vmatprep.subr.mxu0 0.0
      %8003 = vmatpush1.xpose.msra.mxu0 0.0
      %8004 = vmatprep.subr.mxu0 0.0
      %8005 = vmatpush1.xpose.msra.mxu0 0.0
      %8006 = vmatprep.subr.mxu0 0.0
      %8007 = vmatpush1.xpose.msra.mxu0 0.0
      %8008 = vmatprep.subr.mxu0 0.0
      %8009 = vmatpush1.xpose.msra.mxu0 0.0
      %8010 = vmatprep.subr.mxu0 0.0
      %8011 = vmatpush1.xpose.msra.mxu0 0.0
      %8012 = vmatprep.subr.mxu0 0.0
      %8013 = vmatpush1.xpose.msra.mxu0 0.0
      %8014 = vmatprep.subr.mxu0 0.0
      %8015 = vmatpush1.xpose.msra.mxu0 0.0
      %8016 = vmatprep.subr.mxu0 0.0
      %8017 = vmatpush1.xpose.msra.mxu0 0.0
      %8018 = vmatprep.subr.mxu0 0.0
      %8019 = vmatpush1.xpose.msra.mxu0 0.0
      %8020 = vmatprep.subr.mxu0 0.0
      %8021 = vmatpush1.xpose.msra.mxu0 %v7988
      %8022 = vmatprep.subr.mxu0 0.0
      %8023 = vmatpush2.xpose.msra.mxu0 0.0
      %8024 = vmatprep.subr.mxu0 0.0
      %8025 = vmatpush2.xpose.msra.mxu0 0.0
      %8026 = vmatprep.subr.mxu0 0.0
      %8027 = vmatpush2.xpose.msra.mxu0 0.0
      %8028 = vmatprep.subr.mxu0 0.0
      %8029 = vmatpush2.xpose.msra.mxu0 0.0
      %8030 = vmatprep.subr.mxu0 0.0
      %8031 = vmatpush2.xpose.msra.mxu0 0.0
      %8032 = vmatprep.subr.mxu0 0.0
      %8033 = vmatpush2.xpose.msra.mxu0 0.0
      %8034 = vmatprep.subr.mxu0 0.0
      %8035 = vmatpush2.xpose.msra.mxu0 0.0
      %8036 = vmatprep.subr.mxu0 0.0
      %8037 = vmatpush2.xpose.msra.mxu0 0.0
      %8038 = vmatprep.subr.mxu0 0.0
      %8039 = vmatpush2.xpose.msra.mxu0 0.0
      %8040 = vmatprep.subr.mxu0 0.0
      %8041 = vmatpush2.xpose.msra.mxu0 0.0
      %8042 = vmatprep.subr.mxu0 0.0
      %8043 = vmatpush2.xpose.msra.mxu0 0.0
      %8044 = vmatprep.subr.mxu0 0.0
      %8045 = vmatpush2.xpose.msra.mxu0 0.0
      %8046 = vmatprep.subr.mxu0 0.0
      %8047 = vmatpush2.xpose.msra.mxu0 0.0
      %8048 = vmatprep.subr.mxu0 0.0
      %8049 = vmatpush2.xpose.msra.mxu0 0.0
      %8050 = vmatprep.subr.mxu0 0.0
      %8051 = vmatpush2.xpose.msra.mxu0 0.0
      %8052 = vmatprep.subr.mxu0 0.0
      %8053 = vmatpush2.xpose.msra.mxu0 0.0
      %8054 = vmatprep.mubr.f32.mxu0 0.0
      %8055 = vmatmul.mubr.f32.gmra.mxu0 %v7986
      %v8056 = vpop.f32.mrf.mxu0
      %v8057 = vadd.f32 0.0, %v8056
      %v8058 = vpop.f32.mrf.mxu0
      %8059 = vdwg.mxu0
      %8060 = vrot.lane.b32.xlu0 %v5777, 104
      %v8061 = vpop.permute.xlu0 %8060
      %8062 = vrot.lane.b32.xlu0 %v5777, 72
      %v8063 = vpop.permute.xlu0 %8062
      %v8064 = vsel %vm725, %v8061, 0
      %v8066 = vsel %vm725, %v8063, 0
      %8068 = vmatprep.subr.mxu0 0.0
      %8069 = vmatpush1.xpose.msra.mxu0 0.0
      %8070 = vmatprep.subr.mxu0 0.0
      %8071 = vmatpush1.xpose.msra.mxu0 0.0
      %8072 = vmatprep.subr.mxu0 0.0
      %8073 = vmatpush1.xpose.msra.mxu0 0.0
      %8074 = vmatprep.subr.mxu0 0.0
      %8075 = vmatpush1.xpose.msra.mxu0 0.0
      %8076 = vmatprep.subr.mxu0 0.0
      %8077 = vmatpush1.xpose.msra.mxu0 0.0
      %8078 = vmatprep.subr.mxu0 0.0
      %8079 = vmatpush1.xpose.msra.mxu0 0.0
      %8080 = vmatprep.subr.mxu0 0.0
      %8081 = vmatpush1.xpose.msra.mxu0 0.0
      %8082 = vmatprep.subr.mxu0 0.0
      %8083 = vmatpush1.xpose.msra.mxu0 0.0
      %8084 = vmatprep.subr.mxu0 0.0
      %8085 = vmatpush1.xpose.msra.mxu0 0.0
      %8086 = vmatprep.subr.mxu0 0.0
      %8087 = vmatpush1.xpose.msra.mxu0 0.0
      %8088 = vmatprep.subr.mxu0 0.0
      %8089 = vmatpush1.xpose.msra.mxu0 0.0
      %8090 = vmatprep.subr.mxu0 0.0
      %8091 = vmatpush1.xpose.msra.mxu0 0.0
      %8092 = vmatprep.subr.mxu0 0.0
      %8093 = vmatpush1.xpose.msra.mxu0 0.0
      %8094 = vmatprep.subr.mxu0 0.0
      %8095 = vmatpush1.xpose.msra.mxu0 0.0
      %8096 = vmatprep.subr.mxu0 0.0
      %8097 = vmatpush1.xpose.msra.mxu0 0.0
      %8098 = vmatprep.subr.mxu0 0.0
      %8099 = vmatpush1.xpose.msra.mxu0 %v8066
      %8100 = vmatprep.subr.mxu0 0.0
      %8101 = vmatpush2.xpose.msra.mxu0 0.0
      %8102 = vmatprep.subr.mxu0 0.0
      %8103 = vmatpush2.xpose.msra.mxu0 0.0
      %8104 = vmatprep.subr.mxu0 0.0
      %8105 = vmatpush2.xpose.msra.mxu0 0.0
      %8106 = vmatprep.subr.mxu0 0.0
      %8107 = vmatpush2.xpose.msra.mxu0 0.0
      %8108 = vmatprep.subr.mxu0 0.0
      %8109 = vmatpush2.xpose.msra.mxu0 0.0
      %8110 = vmatprep.subr.mxu0 0.0
      %8111 = vmatpush2.xpose.msra.mxu0 0.0
      %8112 = vmatprep.subr.mxu0 0.0
      %8113 = vmatpush2.xpose.msra.mxu0 0.0
      %8114 = vmatprep.subr.mxu0 0.0
      %8115 = vmatpush2.xpose.msra.mxu0 0.0
      %8116 = vmatprep.subr.mxu0 0.0
      %8117 = vmatpush2.xpose.msra.mxu0 0.0
      %8118 = vmatprep.subr.mxu0 0.0
      %8119 = vmatpush2.xpose.msra.mxu0 0.0
      %8120 = vmatprep.subr.mxu0 0.0
      %8121 = vmatpush2.xpose.msra.mxu0 0.0
      %8122 = vmatprep.subr.mxu0 0.0
      %8123 = vmatpush2.xpose.msra.mxu0 0.0
      %8124 = vmatprep.subr.mxu0 0.0
      %8125 = vmatpush2.xpose.msra.mxu0 0.0
      %8126 = vmatprep.subr.mxu0 0.0
      %8127 = vmatpush2.xpose.msra.mxu0 0.0
      %8128 = vmatprep.subr.mxu0 0.0
      %8129 = vmatpush2.xpose.msra.mxu0 0.0
      %8130 = vmatprep.subr.mxu0 0.0
      %8131 = vmatpush2.xpose.msra.mxu0 0.0
      %8132 = vmatprep.mubr.f32.mxu0 0.0
      %8133 = vmatmul.mubr.f32.gmra.mxu0 %v8064
      %v8134 = vpop.f32.mrf.mxu0
      %v8135 = vadd.f32 0.0, %v8134
      %v8136 = vpop.f32.mrf.mxu0
      %8137 = vdwg.mxu0
      %v8138 = vmul.f32 %v7901, 0.35355338
      %v8139 = vmul.f32 %v7979, 0.35355338
      %v8140 = vmul.f32 %v8057, 0.35355338
      %v8141 = vmul.f32 %v8135, 0.35355338
      %v8142 = vsel %vm1053, %v8138, -inf
      %8143 = vmax.xlane.f32.xlu0 %v8142
      %v8144 = vpop.xlane.xlu0 %8143
      %v8145 = vsel %vm1053, %v8139, -inf
      %8146 = vmax.xlane.f32.xlu0 %v8145
      %v8147 = vpop.xlane.xlu0 %8146
      %v8148 = vsel %vm1053, %v8140, -inf
      %8149 = vmax.xlane.f32.xlu0 %v8148
      %v8150 = vpop.xlane.xlu0 %8149
      %v8151 = vsel %vm1053, %v8141, -inf
      %8152 = vmax.xlane.f32.xlu0 %v8151
      %v8153 = vpop.xlane.xlu0 %8152
      %v8154 = vsub.f32 %v8138, %v8144
      %v8155 = vsub.f32 %v8139, %v8147
      %v8156 = vsub.f32 %v8140, %v8150
      %v8157 = vsub.f32 %v8141, %v8153
      %v8158 = vmul.f32 %v8154, 1.442695
      %v8159 = vpow.pop %v8158
      %v8160 = vmul.f32 %v8155, 1.442695
      %v8161 = vpow.pop %v8160
      %v8162 = vmul.f32 %v8156, 1.442695
      %v8163 = vpow.pop %v8162
      %v8164 = vmul.f32 %v8157, 1.442695
      %v8165 = vpow.pop %v8164
      %v8166 = vsel %vm1053, %v8159, 0.0
      %8167 = vadd.xlane.f32.xlu0 %v8166
      %v8168 = vpop.xlane.xlu0 %8167
      %v8169 = vsel %vm1053, %v8161, 0.0
      %8170 = vadd.xlane.f32.xlu0 %v8169
      %v8171 = vpop.xlane.xlu0 %8170
      %v8172 = vsel %vm1053, %v8163, 0.0
      %8173 = vadd.xlane.f32.xlu0 %v8172
      %v8174 = vpop.xlane.xlu0 %8173
      %v8175 = vsel %vm1053, %v8165, 0.0
      %8176 = vadd.xlane.f32.xlu0 %v8175
      %v8177 = vpop.xlane.xlu0 %8176
      %v8178 = vrcp.pop %v8168
      %v8179 = vmul.f32 %v8159, %v8178
      %v8180 = vrcp.pop %v8171
      %v8181 = vmul.f32 %v8161, %v8180
      %v8182 = vrcp.pop %v8174
      %v8183 = vmul.f32 %v8163, %v8182
      %v8184 = vrcp.pop %v8177
      %v8185 = vmul.f32 %v8165, %v8184
      %8186 = vrot.lane.b32.xlu0 %v5528, 40
      %v8187 = vpop.permute.xlu0 %8186
      %v8189 = vsel %vm1100, %v8179, 0
      %v8191 = vsel %vm1104, %v8187, 0
      %8193 = vmatprep.subr.mxu0 0.0
      %8194 = vmatpush1.msra.mxu0 0.0
      %8195 = vmatprep.subr.mxu0 0.0
      %8196 = vmatpush1.msra.mxu0 0.0
      %8197 = vmatprep.subr.mxu0 0.0
      %8198 = vmatpush1.msra.mxu0 0.0
      %8199 = vmatprep.subr.mxu0 0.0
      %8200 = vmatpush1.msra.mxu0 0.0
      %8201 = vmatprep.subr.mxu0 0.0
      %8202 = vmatpush1.msra.mxu0 0.0
      %8203 = vmatprep.subr.mxu0 0.0
      %8204 = vmatpush1.msra.mxu0 0.0
      %8205 = vmatprep.subr.mxu0 0.0
      %8206 = vmatpush1.msra.mxu0 0.0
      %8207 = vmatprep.subr.mxu0 0.0
      %8208 = vmatpush1.msra.mxu0 0.0
      %8209 = vmatprep.subr.mxu0 0.0
      %8210 = vmatpush1.msra.mxu0 0.0
      %8211 = vmatprep.subr.mxu0 0.0
      %8212 = vmatpush1.msra.mxu0 0.0
      %8213 = vmatprep.subr.mxu0 0.0
      %8214 = vmatpush1.msra.mxu0 0.0
      %8215 = vmatprep.subr.mxu0 0.0
      %8216 = vmatpush1.msra.mxu0 0.0
      %8217 = vmatprep.subr.mxu0 0.0
      %8218 = vmatpush1.msra.mxu0 0.0
      %8219 = vmatprep.subr.mxu0 0.0
      %8220 = vmatpush1.msra.mxu0 0.0
      %8221 = vmatprep.subr.mxu0 0.0
      %8222 = vmatpush1.msra.mxu0 0.0
      %8223 = vmatprep.subr.mxu0 0.0
      %8224 = vmatpush1.msra.mxu0 %v8191
      %8225 = vmatprep.subr.mxu0 0.0
      %8226 = vmatpush2.msra.mxu0 0.0
      %8227 = vmatprep.subr.mxu0 0.0
      %8228 = vmatpush2.msra.mxu0 0.0
      %8229 = vmatprep.subr.mxu0 0.0
      %8230 = vmatpush2.msra.mxu0 0.0
      %8231 = vmatprep.subr.mxu0 0.0
      %8232 = vmatpush2.msra.mxu0 0.0
      %8233 = vmatprep.subr.mxu0 0.0
      %8234 = vmatpush2.msra.mxu0 0.0
      %8235 = vmatprep.subr.mxu0 0.0
      %8236 = vmatpush2.msra.mxu0 0.0
      %8237 = vmatprep.subr.mxu0 0.0
      %8238 = vmatpush2.msra.mxu0 0.0
      %8239 = vmatprep.subr.mxu0 0.0
      %8240 = vmatpush2.msra.mxu0 0.0
      %8241 = vmatprep.subr.mxu0 0.0
      %8242 = vmatpush2.msra.mxu0 0.0
      %8243 = vmatprep.subr.mxu0 0.0
      %8244 = vmatpush2.msra.mxu0 0.0
      %8245 = vmatprep.subr.mxu0 0.0
      %8246 = vmatpush2.msra.mxu0 0.0
      %8247 = vmatprep.subr.mxu0 0.0
      %8248 = vmatpush2.msra.mxu0 0.0
      %8249 = vmatprep.subr.mxu0 0.0
      %8250 = vmatpush2.msra.mxu0 0.0
      %8251 = vmatprep.subr.mxu0 0.0
      %8252 = vmatpush2.msra.mxu0 0.0
      %8253 = vmatprep.subr.mxu0 0.0
      %8254 = vmatpush2.msra.mxu0 0.0
      %8255 = vmatprep.subr.mxu0 0.0
      %8256 = vmatpush2.msra.mxu0 0.0
      %8257 = vmatprep.mubr.f32.mxu0 0.0
      %8258 = vmatmul.mubr.f32.gmra.mxu0 %v8189
      %v8259 = vpop.f32.mrf.mxu0
      %v8260 = vadd.f32 0.0, %v8259
      %v8261 = vpop.f32.mrf.mxu0
      %8262 = vdwg.mxu0
      %8263 = vrot.lane.b32.xlu0 %v5611, 40
      %v8264 = vpop.permute.xlu0 %8263
      %v8266 = vsel %vm1100, %v8181, 0
      %v8268 = vsel %vm1104, %v8264, 0
      %8270 = vmatprep.subr.mxu0 0.0
      %8271 = vmatpush1.msra.mxu0 0.0
      %8272 = vmatprep.subr.mxu0 0.0
      %8273 = vmatpush1.msra.mxu0 0.0
      %8274 = vmatprep.subr.mxu0 0.0
      %8275 = vmatpush1.msra.mxu0 0.0
      %8276 = vmatprep.subr.mxu0 0.0
      %8277 = vmatpush1.msra.mxu0 0.0
      %8278 = vmatprep.subr.mxu0 0.0
      %8279 = vmatpush1.msra.mxu0 0.0
      %8280 = vmatprep.subr.mxu0 0.0
      %8281 = vmatpush1.msra.mxu0 0.0
      %8282 = vmatprep.subr.mxu0 0.0
      %8283 = vmatpush1.msra.mxu0 0.0
      %8284 = vmatprep.subr.mxu0 0.0
      %8285 = vmatpush1.msra.mxu0 0.0
      %8286 = vmatprep.subr.mxu0 0.0
      %8287 = vmatpush1.msra.mxu0 0.0
      %8288 = vmatprep.subr.mxu0 0.0
      %8289 = vmatpush1.msra.mxu0 0.0
      %8290 = vmatprep.subr.mxu0 0.0
      %8291 = vmatpush1.msra.mxu0 0.0
      %8292 = vmatprep.subr.mxu0 0.0
      %8293 = vmatpush1.msra.mxu0 0.0
      %8294 = vmatprep.subr.mxu0 0.0
      %8295 = vmatpush1.msra.mxu0 0.0
      %8296 = vmatprep.subr.mxu0 0.0
      %8297 = vmatpush1.msra.mxu0 0.0
      %8298 = vmatprep.subr.mxu0 0.0
      %8299 = vmatpush1.msra.mxu0 0.0
      %8300 = vmatprep.subr.mxu0 0.0
      %8301 = vmatpush1.msra.mxu0 %v8268
      %8302 = vmatprep.subr.mxu0 0.0
      %8303 = vmatpush2.msra.mxu0 0.0
      %8304 = vmatprep.subr.mxu0 0.0
      %8305 = vmatpush2.msra.mxu0 0.0
      %8306 = vmatprep.subr.mxu0 0.0
      %8307 = vmatpush2.msra.mxu0 0.0
      %8308 = vmatprep.subr.mxu0 0.0
      %8309 = vmatpush2.msra.mxu0 0.0
      %8310 = vmatprep.subr.mxu0 0.0
      %8311 = vmatpush2.msra.mxu0 0.0
      %8312 = vmatprep.subr.mxu0 0.0
      %8313 = vmatpush2.msra.mxu0 0.0
      %8314 = vmatprep.subr.mxu0 0.0
      %8315 = vmatpush2.msra.mxu0 0.0
      %8316 = vmatprep.subr.mxu0 0.0
      %8317 = vmatpush2.msra.mxu0 0.0
      %8318 = vmatprep.subr.mxu0 0.0
      %8319 = vmatpush2.msra.mxu0 0.0
      %8320 = vmatprep.subr.mxu0 0.0
      %8321 = vmatpush2.msra.mxu0 0.0
      %8322 = vmatprep.subr.mxu0 0.0
      %8323 = vmatpush2.msra.mxu0 0.0
      %8324 = vmatprep.subr.mxu0 0.0
      %8325 = vmatpush2.msra.mxu0 0.0
      %8326 = vmatprep.subr.mxu0 0.0
      %8327 = vmatpush2.msra.mxu0 0.0
      %8328 = vmatprep.subr.mxu0 0.0
      %8329 = vmatpush2.msra.mxu0 0.0
      %8330 = vmatprep.subr.mxu0 0.0
      %8331 = vmatpush2.msra.mxu0 0.0
      %8332 = vmatprep.subr.mxu0 0.0
      %8333 = vmatpush2.msra.mxu0 0.0
      %8334 = vmatprep.mubr.f32.mxu0 0.0
      %8335 = vmatmul.mubr.f32.gmra.mxu0 %v8266
      %v8336 = vpop.f32.mrf.mxu0
      %v8337 = vadd.f32 0.0, %v8336
      %v8338 = vpop.f32.mrf.mxu0
      %8339 = vdwg.mxu0
      %8340 = vrot.lane.b32.xlu0 %v5694, 40
      %v8341 = vpop.permute.xlu0 %8340
      %v8343 = vsel %vm1100, %v8183, 0
      %v8345 = vsel %vm1104, %v8341, 0
      %8347 = vmatprep.subr.mxu0 0.0
      %8348 = vmatpush1.msra.mxu0 0.0
      %8349 = vmatprep.subr.mxu0 0.0
      %8350 = vmatpush1.msra.mxu0 0.0
      %8351 = vmatprep.subr.mxu0 0.0
      %8352 = vmatpush1.msra.mxu0 0.0
      %8353 = vmatprep.subr.mxu0 0.0
      %8354 = vmatpush1.msra.mxu0 0.0
      %8355 = vmatprep.subr.mxu0 0.0
      %8356 = vmatpush1.msra.mxu0 0.0
      %8357 = vmatprep.subr.mxu0 0.0
      %8358 = vmatpush1.msra.mxu0 0.0
      %8359 = vmatprep.subr.mxu0 0.0
      %8360 = vmatpush1.msra.mxu0 0.0
      %8361 = vmatprep.subr.mxu0 0.0
      %8362 = vmatpush1.msra.mxu0 0.0
      %8363 = vmatprep.subr.mxu0 0.0
      %8364 = vmatpush1.msra.mxu0 0.0
      %8365 = vmatprep.subr.mxu0 0.0
      %8366 = vmatpush1.msra.mxu0 0.0
      %8367 = vmatprep.subr.mxu0 0.0
      %8368 = vmatpush1.msra.mxu0 0.0
      %8369 = vmatprep.subr.mxu0 0.0
      %8370 = vmatpush1.msra.mxu0 0.0
      %8371 = vmatprep.subr.mxu0 0.0
      %8372 = vmatpush1.msra.mxu0 0.0
      %8373 = vmatprep.subr.mxu0 0.0
      %8374 = vmatpush1.msra.mxu0 0.0
      %8375 = vmatprep.subr.mxu0 0.0
      %8376 = vmatpush1.msra.mxu0 0.0
      %8377 = vmatprep.subr.mxu0 0.0
      %8378 = vmatpush1.msra.mxu0 %v8345
      %8379 = vmatprep.subr.mxu0 0.0
      %8380 = vmatpush2.msra.mxu0 0.0
      %8381 = vmatprep.subr.mxu0 0.0
      %8382 = vmatpush2.msra.mxu0 0.0
      %8383 = vmatprep.subr.mxu0 0.0
      %8384 = vmatpush2.msra.mxu0 0.0
      %8385 = vmatprep.subr.mxu0 0.0
      %8386 = vmatpush2.msra.mxu0 0.0
      %8387 = vmatprep.subr.mxu0 0.0
      %8388 = vmatpush2.msra.mxu0 0.0
      %8389 = vmatprep.subr.mxu0 0.0
      %8390 = vmatpush2.msra.mxu0 0.0
      %8391 = vmatprep.subr.mxu0 0.0
      %8392 = vmatpush2.msra.mxu0 0.0
      %8393 = vmatprep.subr.mxu0 0.0
      %8394 = vmatpush2.msra.mxu0 0.0
      %8395 = vmatprep.subr.mxu0 0.0
      %8396 = vmatpush2.msra.mxu0 0.0
      %8397 = vmatprep.subr.mxu0 0.0
      %8398 = vmatpush2.msra.mxu0 0.0
      %8399 = vmatprep.subr.mxu0 0.0
      %8400 = vmatpush2.msra.mxu0 0.0
      %8401 = vmatprep.subr.mxu0 0.0
      %8402 = vmatpush2.msra.mxu0 0.0
      %8403 = vmatprep.subr.mxu0 0.0
      %8404 = vmatpush2.msra.mxu0 0.0
      %8405 = vmatprep.subr.mxu0 0.0
      %8406 = vmatpush2.msra.mxu0 0.0
      %8407 = vmatprep.subr.mxu0 0.0
      %8408 = vmatpush2.msra.mxu0 0.0
      %8409 = vmatprep.subr.mxu0 0.0
      %8410 = vmatpush2.msra.mxu0 0.0
      %8411 = vmatprep.mubr.f32.mxu0 0.0
      %8412 = vmatmul.mubr.f32.gmra.mxu0 %v8343
      %v8413 = vpop.f32.mrf.mxu0
      %v8414 = vadd.f32 0.0, %v8413
      %v8415 = vpop.f32.mrf.mxu0
      %8416 = vdwg.mxu0
      %8417 = vrot.lane.b32.xlu0 %v5777, 40
      %v8418 = vpop.permute.xlu0 %8417
      %v8420 = vsel %vm1100, %v8185, 0
      %v8422 = vsel %vm1104, %v8418, 0
      %8424 = vmatprep.subr.mxu0 0.0
      %8425 = vmatpush1.msra.mxu0 0.0
      %8426 = vmatprep.subr.mxu0 0.0
      %8427 = vmatpush1.msra.mxu0 0.0
      %8428 = vmatprep.subr.mxu0 0.0
      %8429 = vmatpush1.msra.mxu0 0.0
      %8430 = vmatprep.subr.mxu0 0.0
      %8431 = vmatpush1.msra.mxu0 0.0
      %8432 = vmatprep.subr.mxu0 0.0
      %8433 = vmatpush1.msra.mxu0 0.0
      %8434 = vmatprep.subr.mxu0 0.0
      %8435 = vmatpush1.msra.mxu0 0.0
      %8436 = vmatprep.subr.mxu0 0.0
      %8437 = vmatpush1.msra.mxu0 0.0
      %8438 = vmatprep.subr.mxu0 0.0
      %8439 = vmatpush1.msra.mxu0 0.0
      %8440 = vmatprep.subr.mxu0 0.0
      %8441 = vmatpush1.msra.mxu0 0.0
      %8442 = vmatprep.subr.mxu0 0.0
      %8443 = vmatpush1.msra.mxu0 0.0
      %8444 = vmatprep.subr.mxu0 0.0
      %8445 = vmatpush1.msra.mxu0 0.0
      %8446 = vmatprep.subr.mxu0 0.0
      %8447 = vmatpush1.msra.mxu0 0.0
      %8448 = vmatprep.subr.mxu0 0.0
      %8449 = vmatpush1.msra.mxu0 0.0
      %8450 = vmatprep.subr.mxu0 0.0
      %8451 = vmatpush1.msra.mxu0 0.0
      %8452 = vmatprep.subr.mxu0 0.0
      %8453 = vmatpush1.msra.mxu0 0.0
      %8454 = vmatprep.subr.mxu0 0.0
      %8455 = vmatpush1.msra.mxu0 %v8422
      %8456 = vmatprep.subr.mxu0 0.0
      %8457 = vmatpush2.msra.mxu0 0.0
      %8458 = vmatprep.subr.mxu0 0.0
      %8459 = vmatpush2.msra.mxu0 0.0
      %8460 = vmatprep.subr.mxu0 0.0
      %8461 = vmatpush2.msra.mxu0 0.0
      %8462 = vmatprep.subr.mxu0 0.0
      %8463 = vmatpush2.msra.mxu0 0.0
      %8464 = vmatprep.subr.mxu0 0.0
      %8465 = vmatpush2.msra.mxu0 0.0
      %8466 = vmatprep.subr.mxu0 0.0
      %8467 = vmatpush2.msra.mxu0 0.0
      %8468 = vmatprep.subr.mxu0 0.0
      %8469 = vmatpush2.msra.mxu0 0.0
      %8470 = vmatprep.subr.mxu0 0.0
      %8471 = vmatpush2.msra.mxu0 0.0
      %8472 = vmatprep.subr.mxu0 0.0
      %8473 = vmatpush2.msra.mxu0 0.0
      %8474 = vmatprep.subr.mxu0 0.0
      %8475 = vmatpush2.msra.mxu0 0.0
      %8476 = vmatprep.subr.mxu0 0.0
      %8477 = vmatpush2.msra.mxu0 0.0
      %8478 = vmatprep.subr.mxu0 0.0
      %8479 = vmatpush2.msra.mxu0 0.0
      %8480 = vmatprep.subr.mxu0 0.0
      %8481 = vmatpush2.msra.mxu0 0.0
      %8482 = vmatprep.subr.mxu0 0.0
      %8483 = vmatpush2.msra.mxu0 0.0
      %8484 = vmatprep.subr.mxu0 0.0
      %8485 = vmatpush2.msra.mxu0 0.0
      %8486 = vmatprep.subr.mxu0 0.0
      %8487 = vmatpush2.msra.mxu0 0.0
      %8488 = vmatprep.mubr.f32.mxu0 0.0
      %8489 = vmatmul.mubr.f32.gmra.mxu0 %v8420
      %v8490 = vpop.f32.mrf.mxu0
      %v8491 = vadd.f32 0.0, %v8490
      %v8492 = vpop.f32.mrf.mxu0
      %8493 = vdwg.mxu0
      %v8498 = vcombine.low %v8260, %v8337
      %v8499 = vcombine.low %v8414, %v8491
      %v8501 = vunpack.c.l.s4 1983009808
      %v8502 = vunpack.c.0.s8 %v8501
      %v8503 = vlaneseq
      %v8504 = vshrl.u32 %v8503, 7
      %v8505 = vsub.s32 %v8502, %v8504
      %v8506 = vrot.slane %v8498, %v8505
      %v8508 = vunpack.c.l.s4 1983009808
      %v8509 = vunpack.c.0.s8 %v8508
      %v8510 = vlaneseq
      %v8511 = vshrl.u32 %v8510, 7
      %v8512 = vsub.s32 %v8509, %v8511
      %v8513 = vrot.slane %v8499, %v8512
      %v8514 = vcombine.low %v8506, %v8513
      %v8515 = vsel %vm725, %v8514, 0
      %8517 = vmatprep.subr.mxu0 0.0
      %8518 = vmatpush1.msra.mxu0 0.0
      %8519 = vmatprep.subr.mxu0 0.0
      %8520 = vmatpush1.msra.mxu0 0.0
      %8521 = vmatprep.subr.mxu0 0.0
      %8522 = vmatpush1.msra.mxu0 0.0
      %8523 = vmatprep.subr.mxu0 0.0
      %8524 = vmatpush1.msra.mxu0 0.0
      %8525 = vmatprep.subr.mxu0 0.0
      %8526 = vmatpush1.msra.mxu0 0.0
      %8527 = vmatprep.subr.mxu0 0.0
      %8528 = vmatpush1.msra.mxu0 0.0
      %8529 = vmatprep.subr.mxu0 0.0
      %8530 = vmatpush1.msra.mxu0 0.0
      %8531 = vmatprep.subr.mxu0 0.0
      %8532 = vmatpush1.msra.mxu0 0.0
      %8533 = vmatprep.subr.mxu0 0.0
      %8534 = vmatpush1.msra.mxu0 0.0
      %8535 = vmatprep.subr.mxu0 0.0
      %8536 = vmatpush1.msra.mxu0 0.0
      %8537 = vmatprep.subr.mxu0 0.0
      %8538 = vmatpush1.msra.mxu0 0.0
      %8539 = vmatprep.subr.mxu0 0.0
      %8540 = vmatpush1.msra.mxu0 0.0
      %8541 = vmatprep.subr.mxu0 0.0
      %8542 = vmatpush1.msra.mxu0 0.0
      %8543 = vmatprep.subr.mxu0 0.0
      %8544 = vmatpush1.msra.mxu0 0.0
      %8545 = vmatprep.subr.mxu0 0.0
      %8546 = vmatpush1.msra.mxu0 0.0
      %8547 = vmatprep.subr.mxu0 0.0
      %8548 = vmatpush1.msra.mxu0 %v5521
      %8549 = vmatprep.subr.mxu0 0.0
      %8550 = vmatpush2.msra.mxu0 0.0
      %8551 = vmatprep.subr.mxu0 0.0
      %8552 = vmatpush2.msra.mxu0 0.0
      %8553 = vmatprep.subr.mxu0 0.0
      %8554 = vmatpush2.msra.mxu0 0.0
      %8555 = vmatprep.subr.mxu0 0.0
      %8556 = vmatpush2.msra.mxu0 0.0
      %8557 = vmatprep.subr.mxu0 0.0
      %8558 = vmatpush2.msra.mxu0 0.0
      %8559 = vmatprep.subr.mxu0 0.0
      %8560 = vmatpush2.msra.mxu0 0.0
      %8561 = vmatprep.subr.mxu0 0.0
      %8562 = vmatpush2.msra.mxu0 0.0
      %8563 = vmatprep.subr.mxu0 0.0
      %8564 = vmatpush2.msra.mxu0 0.0
      %8565 = vmatprep.subr.mxu0 0.0
      %8566 = vmatpush2.msra.mxu0 0.0
      %8567 = vmatprep.subr.mxu0 0.0
      %8568 = vmatpush2.msra.mxu0 0.0
      %8569 = vmatprep.subr.mxu0 0.0
      %8570 = vmatpush2.msra.mxu0 0.0
      %8571 = vmatprep.subr.mxu0 0.0
      %8572 = vmatpush2.msra.mxu0 0.0
      %8573 = vmatprep.subr.mxu0 0.0
      %8574 = vmatpush2.msra.mxu0 0.0
      %8575 = vmatprep.subr.mxu0 0.0
      %8576 = vmatpush2.msra.mxu0 0.0
      %8577 = vmatprep.subr.mxu0 0.0
      %8578 = vmatpush2.msra.mxu0 0.0
      %8579 = vmatprep.subr.mxu0 0.0
      %8580 = vmatpush2.msra.mxu0 0.0
      %8581 = vmatprep.mubr.f32.mxu0 0.0
      %8582 = vmatmul.mubr.f32.gmra.mxu0 %v8515
      %v8583 = vpop.f32.mrf.mxu0
      %v8584 = vadd.f32 0.0, %v8583
      %v8585 = vpop.f32.mrf.mxu0
      %8586 = vdwg.mxu0
      %v8587 = vadd.f32 %v7825, %v8584
      %s8588 = scalar_lea.vmem %s6, 1
      %v8589 = vld [vmem:[%s8588] sm:$0x1]
      %v8591 = vlaneseq
      %v8592 = vshrl.u32 %v8591, 7
      %v8593 = vsub.s32 0, %v8592
      %v8594 = vrot.slane %v8589, %v8593
      %v8596 = vadd.f32 %v8587, %v8594
      %v8597 = vadd.f32 %v5412, %v8596
      %s8598 = scalar_lea.vmem %s7, 1
      %v8599 = vld [vmem:[%s8598] sm:$0x1]
      %s8600 = scalar_lea.vmem %s8, 1
      %v8601 = vld [vmem:[%s8600] sm:$0x1]
      %v8602 = vsel %vm620, %v8597, 0.0
      %8603 = vadd.xlane.f32.xlu0 %v8602
      %v8604 = vpop.xlane.xlu0 %8603
      %v8605 = vmul.f32 %v8604, %v3800
      %v8606 = vsub.f32 %v8597, %v8605
      %v8607 = vmul.f32 %v8606, %v8606
      %v8608 = vsel %vm620, %v8607, 0.0
      %8609 = vadd.xlane.f32.xlu0 %v8608
      %v8610 = vpop.xlane.xlu0 %8609
      %v8611 = vmul.f32 %v8610, %v3800
      %v8612 = vadd.f32 %v8611, 1e-05
      %v8613 = vrsqrt.pop %v8612
      %v8614 = vmul.f32 %v8606, %v8613
      %v8616 = vlaneseq
      %v8617 = vshrl.u32 %v8616, 7
      %v8618 = vsub.s32 0, %v8617
      %v8619 = vrot.slane %v8599, %v8618
      %v8621 = vmul.f32 %v8614, %v8619
      %v8623 = vlaneseq
      %v8624 = vshrl.u32 %v8623, 7
      %v8625 = vsub.s32 0, %v8624
      %v8626 = vrot.slane %v8601, %v8625
      %v8628 = vadd.f32 %v8621, %v8626
      %s8629 = scalar_lea.vmem %s9, 512
      %v8630 = vld [vmem:[%s8629] sm:$0xff]
      %v8631 = vld [vmem:[%s8629 + $0x8] sm:$0xff]
      %v8632 = vld [vmem:[%s8629 + $0x10] sm:$0xff]
      %v8633 = vld [vmem:[%s8629 + $0x18] sm:$0xff]
      %v8634 = vld [vmem:[%s8629 + $0x20] sm:$0xff]
      %v8635 = vld [vmem:[%s8629 + $0x28] sm:$0xff]
      %v8636 = vld [vmem:[%s8629 + $0x30] sm:$0xff]
      %v8637 = vld [vmem:[%s8629 + $0x38] sm:$0xff]
      %v8638 = vld [vmem:[%s8629 + $0x40] sm:$0xff]
      %v8639 = vld [vmem:[%s8629 + $0x48] sm:$0xff]
      %v8640 = vld [vmem:[%s8629 + $0x50] sm:$0xff]
      %v8641 = vld [vmem:[%s8629 + $0x58] sm:$0xff]
      %v8642 = vld [vmem:[%s8629 + $0x60] sm:$0xff]
      %v8643 = vld [vmem:[%s8629 + $0x68] sm:$0xff]
      %v8644 = vld [vmem:[%s8629 + $0x70] sm:$0xff]
      %v8645 = vld [vmem:[%s8629 + $0x78] sm:$0xff]
      %v8646 = vld [vmem:[%s8629 + $0x80] sm:$0xff]
      %v8647 = vld [vmem:[%s8629 + $0x88] sm:$0xff]
      %v8648 = vld [vmem:[%s8629 + $0x90] sm:$0xff]
      %v8649 = vld [vmem:[%s8629 + $0x98] sm:$0xff]
      %v8650 = vld [vmem:[%s8629 + $0xa0] sm:$0xff]
      %v8651 = vld [vmem:[%s8629 + $0xa8] sm:$0xff]
      %v8652 = vld [vmem:[%s8629 + $0xb0] sm:$0xff]
      %v8653 = vld [vmem:[%s8629 + $0xb8] sm:$0xff]
      %v8654 = vld [vmem:[%s8629 + $0xc0] sm:$0xff]
      %v8655 = vld [vmem:[%s8629 + $0xc8] sm:$0xff]
      %v8656 = vld [vmem:[%s8629 + $0xd0] sm:$0xff]
      %v8657 = vld [vmem:[%s8629 + $0xd8] sm:$0xff]
      %v8658 = vld [vmem:[%s8629 + $0xe0] sm:$0xff]
      %v8659 = vld [vmem:[%s8629 + $0xe8] sm:$0xff]
      %v8660 = vld [vmem:[%s8629 + $0xf0] sm:$0xff]
      %v8661 = vld [vmem:[%s8629 + $0xf8] sm:$0xff]
      %v8662 = vld [vmem:[%s8629 + $0x100] sm:$0xff]
      %v8663 = vld [vmem:[%s8629 + $0x108] sm:$0xff]
      %v8664 = vld [vmem:[%s8629 + $0x110] sm:$0xff]
      %v8665 = vld [vmem:[%s8629 + $0x118] sm:$0xff]
      %v8666 = vld [vmem:[%s8629 + $0x120] sm:$0xff]
      %v8667 = vld [vmem:[%s8629 + $0x128] sm:$0xff]
      %v8668 = vld [vmem:[%s8629 + $0x130] sm:$0xff]
      %v8669 = vld [vmem:[%s8629 + $0x138] sm:$0xff]
      %v8670 = vld [vmem:[%s8629 + $0x140] sm:$0xff]
      %v8671 = vld [vmem:[%s8629 + $0x148] sm:$0xff]
      %v8672 = vld [vmem:[%s8629 + $0x150] sm:$0xff]
      %v8673 = vld [vmem:[%s8629 + $0x158] sm:$0xff]
      %v8674 = vld [vmem:[%s8629 + $0x160] sm:$0xff]
      %v8675 = vld [vmem:[%s8629 + $0x168] sm:$0xff]
      %v8676 = vld [vmem:[%s8629 + $0x170] sm:$0xff]
      %v8677 = vld [vmem:[%s8629 + $0x178] sm:$0xff]
      %v8678 = vld [vmem:[%s8629 + $0x180] sm:$0xff]
      %v8679 = vld [vmem:[%s8629 + $0x188] sm:$0xff]
      %v8680 = vld [vmem:[%s8629 + $0x190] sm:$0xff]
      %v8681 = vld [vmem:[%s8629 + $0x198] sm:$0xff]
      %v8682 = vld [vmem:[%s8629 + $0x1a0] sm:$0xff]
      %v8683 = vld [vmem:[%s8629 + $0x1a8] sm:$0xff]
      %v8684 = vld [vmem:[%s8629 + $0x1b0] sm:$0xff]
      %v8685 = vld [vmem:[%s8629 + $0x1b8] sm:$0xff]
      %v8686 = vld [vmem:[%s8629 + $0x1c0] sm:$0xff]
      %v8687 = vld [vmem:[%s8629 + $0x1c8] sm:$0xff]
      %v8688 = vld [vmem:[%s8629 + $0x1d0] sm:$0xff]
      %v8689 = vld [vmem:[%s8629 + $0x1d8] sm:$0xff]
      %v8690 = vld [vmem:[%s8629 + $0x1e0] sm:$0xff]
      %v8691 = vld [vmem:[%s8629 + $0x1e8] sm:$0xff]
      %v8692 = vld [vmem:[%s8629 + $0x1f0] sm:$0xff]
      %v8693 = vld [vmem:[%s8629 + $0x1f8] sm:$0xff]
      %s8694 = scalar_lea.vmem %s10, 16
      %v8695 = vld [vmem:[%s8694] sm:$0xff]
      %v8696 = vld [vmem:[%s8694 + $0x8] sm:$0xff]
      %v8699 = vlaneseq
      %v8700 = vshrl.u32 %v8699, 7
      %v8701 = vsub.s32 0, %v8700
      %v8702 = vrot.slane %v8695, %v8701
      %v8703 = vlaneseq
      %v8704 = vshrl.u32 %v8703, 7
      %v8705 = vsub.s32 1, %v8704
      %v8706 = vrot.slane %v8695, %v8705
      %v8707 = vlaneseq
      %v8708 = vshrl.u32 %v8707, 7
      %v8709 = vsub.s32 2, %v8708
      %v8710 = vrot.slane %v8695, %v8709
      %v8711 = vlaneseq
      %v8712 = vshrl.u32 %v8711, 7
      %v8713 = vsub.s32 3, %v8712
      %v8714 = vrot.slane %v8695, %v8713
      %v8715 = vlaneseq
      %v8716 = vshrl.u32 %v8715, 7
      %v8717 = vsub.s32 4, %v8716
      %v8718 = vrot.slane %v8695, %v8717
      %v8719 = vlaneseq
      %v8720 = vshrl.u32 %v8719, 7
      %v8721 = vsub.s32 5, %v8720
      %v8722 = vrot.slane %v8695, %v8721
      %v8723 = vlaneseq
      %v8724 = vshrl.u32 %v8723, 7
      %v8725 = vsub.s32 6, %v8724
      %v8726 = vrot.slane %v8695, %v8725
      %v8727 = vlaneseq
      %v8728 = vshrl.u32 %v8727, 7
      %v8729 = vsub.s32 7, %v8728
      %v8730 = vrot.slane %v8695, %v8729
      %v8731 = vlaneseq
      %v8732 = vshrl.u32 %v8731, 7
      %v8733 = vsub.s32 0, %v8732
      %v8734 = vrot.slane %v8696, %v8733
      %v8735 = vlaneseq
      %v8736 = vshrl.u32 %v8735, 7
      %v8737 = vsub.s32 1, %v8736
      %v8738 = vrot.slane %v8696, %v8737
      %v8739 = vlaneseq
      %v8740 = vshrl.u32 %v8739, 7
      %v8741 = vsub.s32 2, %v8740
      %v8742 = vrot.slane %v8696, %v8741
      %v8743 = vlaneseq
      %v8744 = vshrl.u32 %v8743, 7
      %v8745 = vsub.s32 3, %v8744
      %v8746 = vrot.slane %v8696, %v8745
      %v8747 = vlaneseq
      %v8748 = vshrl.u32 %v8747, 7
      %v8749 = vsub.s32 4, %v8748
      %v8750 = vrot.slane %v8696, %v8749
      %v8751 = vlaneseq
      %v8752 = vshrl.u32 %v8751, 7
      %v8753 = vsub.s32 5, %v8752
      %v8754 = vrot.slane %v8696, %v8753
      %v8755 = vlaneseq
      %v8756 = vshrl.u32 %v8755, 7
      %v8757 = vsub.s32 6, %v8756
      %v8758 = vrot.slane %v8696, %v8757
      %v8759 = vlaneseq
      %v8760 = vshrl.u32 %v8759, 7
      %v8761 = vsub.s32 7, %v8760
      %v8762 = vrot.slane %v8696, %v8761
      %v8780 = vsel %vm620, %v8628, 0
      %8782 = vmatprep.subr.mxu0 0.0
      %8783 = vmatpush1.msra.mxu0 0.0
      %8784 = vmatprep.subr.mxu0 0.0
      %8785 = vmatpush1.msra.mxu0 0.0
      %8786 = vmatprep.subr.mxu0 0.0
      %8787 = vmatpush1.msra.mxu0 0.0
      %8788 = vmatprep.subr.mxu0 0.0
      %8789 = vmatpush1.msra.mxu0 0.0
      %8790 = vmatprep.subr.mxu0 0.0
      %8791 = vmatpush1.msra.mxu0 0.0
      %8792 = vmatprep.subr.mxu0 0.0
      %8793 = vmatpush1.msra.mxu0 0.0
      %8794 = vmatprep.subr.mxu0 0.0
      %8795 = vmatpush1.msra.mxu0 0.0
      %8796 = vmatprep.subr.mxu0 0.0
      %8797 = vmatpush1.msra.mxu0 0.0
      %8798 = vmatprep.subr.mxu0 0.0
      %8799 = vmatpush1.msra.mxu0 0.0
      %8800 = vmatprep.subr.mxu0 0.0
      %8801 = vmatpush1.msra.mxu0 0.0
      %8802 = vmatprep.subr.mxu0 0.0
      %8803 = vmatpush1.msra.mxu0 0.0
      %8804 = vmatprep.subr.mxu0 0.0
      %8805 = vmatpush1.msra.mxu0 0.0
      %8806 = vmatprep.subr.mxu0 %v8679
      %8807 = vmatpush1.msra.mxu0 %v8678
      %8808 = vmatprep.subr.mxu0 %v8663
      %8809 = vmatpush1.msra.mxu0 %v8662
      %8810 = vmatprep.subr.mxu0 %v8647
      %8811 = vmatpush1.msra.mxu0 %v8646
      %8812 = vmatprep.subr.mxu0 %v8631
      %8813 = vmatpush1.msra.mxu0 %v8630
      %8814 = vmatprep.subr.mxu0 0.0
      %8815 = vmatpush2.msra.mxu0 0.0
      %8816 = vmatprep.subr.mxu0 0.0
      %8817 = vmatpush2.msra.mxu0 0.0
      %8818 = vmatprep.subr.mxu0 0.0
      %8819 = vmatpush2.msra.mxu0 0.0
      %8820 = vmatprep.subr.mxu0 0.0
      %8821 = vmatpush2.msra.mxu0 0.0
      %8822 = vmatprep.subr.mxu0 0.0
      %8823 = vmatpush2.msra.mxu0 0.0
      %8824 = vmatprep.subr.mxu0 0.0
      %8825 = vmatpush2.msra.mxu0 0.0
      %8826 = vmatprep.subr.mxu0 0.0
      %8827 = vmatpush2.msra.mxu0 0.0
      %8828 = vmatprep.subr.mxu0 0.0
      %8829 = vmatpush2.msra.mxu0 0.0
      %8830 = vmatprep.subr.mxu0 0.0
      %8831 = vmatpush2.msra.mxu0 0.0
      %8832 = vmatprep.subr.mxu0 0.0
      %8833 = vmatpush2.msra.mxu0 0.0
      %8834 = vmatprep.subr.mxu0 0.0
      %8835 = vmatpush2.msra.mxu0 0.0
      %8836 = vmatprep.subr.mxu0 0.0
      %8837 = vmatpush2.msra.mxu0 0.0
      %8838 = vmatprep.subr.mxu0 0.0
      %8839 = vmatpush2.msra.mxu0 0.0
      %8840 = vmatprep.subr.mxu0 0.0
      %8841 = vmatpush2.msra.mxu0 0.0
      %8842 = vmatprep.subr.mxu0 0.0
      %8843 = vmatpush2.msra.mxu0 0.0
      %8844 = vmatprep.subr.mxu0 0.0
      %8845 = vmatpush2.msra.mxu0 0.0
      %8846 = vmatprep.mubr.f32.mxu0 0.0
      %8847 = vmatmul.mubr.f32.gmra.mxu0 %v8780
      %v8848 = vpop.f32.mrf.mxu0
      %v8849 = vadd.f32 %v8702, %v8848
      %v8850 = vpop.f32.mrf.mxu0
      %v8851 = vadd.f32 %v8706, %v8850
      %8852 = vdwg.mxu0
      %8853 = vmatprep.subr.mxu0 0.0
      %8854 = vmatpush1.msra.mxu0 0.0
      %8855 = vmatprep.subr.mxu0 0.0
      %8856 = vmatpush1.msra.mxu0 0.0
      %8857 = vmatprep.subr.mxu0 0.0
      %8858 = vmatpush1.msra.mxu0 0.0
      %8859 = vmatprep.subr.mxu0 0.0
      %8860 = vmatpush1.msra.mxu0 0.0
      %8861 = vmatprep.subr.mxu0 0.0
      %8862 = vmatpush1.msra.mxu0 0.0
      %8863 = vmatprep.subr.mxu0 0.0
      %8864 = vmatpush1.msra.mxu0 0.0
      %8865 = vmatprep.subr.mxu0 0.0
      %8866 = vmatpush1.msra.mxu0 0.0
      %8867 = vmatprep.subr.mxu0 0.0
      %8868 = vmatpush1.msra.mxu0 0.0
      %8869 = vmatprep.subr.mxu0 0.0
      %8870 = vmatpush1.msra.mxu0 0.0
      %8871 = vmatprep.subr.mxu0 0.0
      %8872 = vmatpush1.msra.mxu0 0.0
      %8873 = vmatprep.subr.mxu0 0.0
      %8874 = vmatpush1.msra.mxu0 0.0
      %8875 = vmatprep.subr.mxu0 0.0
      %8876 = vmatpush1.msra.mxu0 0.0
      %8877 = vmatprep.subr.mxu0 %v8681
      %8878 = vmatpush1.msra.mxu0 %v8680
      %8879 = vmatprep.subr.mxu0 %v8665
      %8880 = vmatpush1.msra.mxu0 %v8664
      %8881 = vmatprep.subr.mxu0 %v8649
      %8882 = vmatpush1.msra.mxu0 %v8648
      %8883 = vmatprep.subr.mxu0 %v8633
      %8884 = vmatpush1.msra.mxu0 %v8632
      %8885 = vmatprep.subr.mxu0 0.0
      %8886 = vmatpush2.msra.mxu0 0.0
      %8887 = vmatprep.subr.mxu0 0.0
      %8888 = vmatpush2.msra.mxu0 0.0
      %8889 = vmatprep.subr.mxu0 0.0
      %8890 = vmatpush2.msra.mxu0 0.0
      %8891 = vmatprep.subr.mxu0 0.0
      %8892 = vmatpush2.msra.mxu0 0.0
      %8893 = vmatprep.subr.mxu0 0.0
      %8894 = vmatpush2.msra.mxu0 0.0
      %8895 = vmatprep.subr.mxu0 0.0
      %8896 = vmatpush2.msra.mxu0 0.0
      %8897 = vmatprep.subr.mxu0 0.0
      %8898 = vmatpush2.msra.mxu0 0.0
      %8899 = vmatprep.subr.mxu0 0.0
      %8900 = vmatpush2.msra.mxu0 0.0
      %8901 = vmatprep.subr.mxu0 0.0
      %8902 = vmatpush2.msra.mxu0 0.0
      %8903 = vmatprep.subr.mxu0 0.0
      %8904 = vmatpush2.msra.mxu0 0.0
      %8905 = vmatprep.subr.mxu0 0.0
      %8906 = vmatpush2.msra.mxu0 0.0
      %8907 = vmatprep.subr.mxu0 0.0
      %8908 = vmatpush2.msra.mxu0 0.0
      %8909 = vmatprep.subr.mxu0 0.0
      %8910 = vmatpush2.msra.mxu0 0.0
      %8911 = vmatprep.subr.mxu0 0.0
      %8912 = vmatpush2.msra.mxu0 0.0
      %8913 = vmatprep.subr.mxu0 0.0
      %8914 = vmatpush2.msra.mxu0 0.0
      %8915 = vmatprep.subr.mxu0 0.0
      %8916 = vmatpush2.msra.mxu0 0.0
      %8917 = vmatprep.mubr.f32.mxu0 0.0
      %8918 = vmatmul.mubr.f32.gmra.mxu0 %v8780
      %v8919 = vpop.f32.mrf.mxu0
      %v8920 = vadd.f32 %v8710, %v8919
      %v8921 = vpop.f32.mrf.mxu0
      %v8922 = vadd.f32 %v8714, %v8921
      %8923 = vdwg.mxu0
      %8924 = vmatprep.subr.mxu0 0.0
      %8925 = vmatpush1.msra.mxu0 0.0
      %8926 = vmatprep.subr.mxu0 0.0
      %8927 = vmatpush1.msra.mxu0 0.0
      %8928 = vmatprep.subr.mxu0 0.0
      %8929 = vmatpush1.msra.mxu0 0.0
      %8930 = vmatprep.subr.mxu0 0.0
      %8931 = vmatpush1.msra.mxu0 0.0
      %8932 = vmatprep.subr.mxu0 0.0
      %8933 = vmatpush1.msra.mxu0 0.0
      %8934 = vmatprep.subr.mxu0 0.0
      %8935 = vmatpush1.msra.mxu0 0.0
      %8936 = vmatprep.subr.mxu0 0.0
      %8937 = vmatpush1.msra.mxu0 0.0
      %8938 = vmatprep.subr.mxu0 0.0
      %8939 = vmatpush1.msra.mxu0 0.0
      %8940 = vmatprep.subr.mxu0 0.0
      %8941 = vmatpush1.msra.mxu0 0.0
      %8942 = vmatprep.subr.mxu0 0.0
      %8943 = vmatpush1.msra.mxu0 0.0
      %8944 = vmatprep.subr.mxu0 0.0
      %8945 = vmatpush1.msra.mxu0 0.0
      %8946 = vmatprep.subr.mxu0 0.0
      %8947 = vmatpush1.msra.mxu0 0.0
      %8948 = vmatprep.subr.mxu0 %v8683
      %8949 = vmatpush1.msra.mxu0 %v8682
      %8950 = vmatprep.subr.mxu0 %v8667
      %8951 = vmatpush1.msra.mxu0 %v8666
      %8952 = vmatprep.subr.mxu0 %v8651
      %8953 = vmatpush1.msra.mxu0 %v8650
      %8954 = vmatprep.subr.mxu0 %v8635
      %8955 = vmatpush1.msra.mxu0 %v8634
      %8956 = vmatprep.subr.mxu0 0.0
      %8957 = vmatpush2.msra.mxu0 0.0
      %8958 = vmatprep.subr.mxu0 0.0
      %8959 = vmatpush2.msra.mxu0 0.0
      %8960 = vmatprep.subr.mxu0 0.0
      %8961 = vmatpush2.msra.mxu0 0.0
      %8962 = vmatprep.subr.mxu0 0.0
      %8963 = vmatpush2.msra.mxu0 0.0
      %8964 = vmatprep.subr.mxu0 0.0
      %8965 = vmatpush2.msra.mxu0 0.0
      %8966 = vmatprep.subr.mxu0 0.0
      %8967 = vmatpush2.msra.mxu0 0.0
      %8968 = vmatprep.subr.mxu0 0.0
      %8969 = vmatpush2.msra.mxu0 0.0
      %8970 = vmatprep.subr.mxu0 0.0
      %8971 = vmatpush2.msra.mxu0 0.0
      %8972 = vmatprep.subr.mxu0 0.0
      %8973 = vmatpush2.msra.mxu0 0.0
      %8974 = vmatprep.subr.mxu0 0.0
      %8975 = vmatpush2.msra.mxu0 0.0
      %8976 = vmatprep.subr.mxu0 0.0
      %8977 = vmatpush2.msra.mxu0 0.0
      %8978 = vmatprep.subr.mxu0 0.0
      %8979 = vmatpush2.msra.mxu0 0.0
      %8980 = vmatprep.subr.mxu0 0.0
      %8981 = vmatpush2.msra.mxu0 0.0
      %8982 = vmatprep.subr.mxu0 0.0
      %8983 = vmatpush2.msra.mxu0 0.0
      %8984 = vmatprep.subr.mxu0 0.0
      %8985 = vmatpush2.msra.mxu0 0.0
      %8986 = vmatprep.subr.mxu0 0.0
      %8987 = vmatpush2.msra.mxu0 0.0
      %8988 = vmatprep.mubr.f32.mxu0 0.0
      %8989 = vmatmul.mubr.f32.gmra.mxu0 %v8780
      %v8990 = vpop.f32.mrf.mxu0
      %v8991 = vadd.f32 %v8718, %v8990
      %v8992 = vpop.f32.mrf.mxu0
      %v8993 = vadd.f32 %v8722, %v8992
      %8994 = vdwg.mxu0
      %8995 = vmatprep.subr.mxu0 0.0
      %8996 = vmatpush1.msra.mxu0 0.0
      %8997 = vmatprep.subr.mxu0 0.0
      %8998 = vmatpush1.msra.mxu0 0.0
      %8999 = vmatprep.subr.mxu0 0.0
      %9000 = vmatpush1.msra.mxu0 0.0
      %9001 = vmatprep.subr.mxu0 0.0
      %9002 = vmatpush1.msra.mxu0 0.0
      %9003 = vmatprep.subr.mxu0 0.0
      %9004 = vmatpush1.msra.mxu0 0.0
      %9005 = vmatprep.subr.mxu0 0.0
      %9006 = vmatpush1.msra.mxu0 0.0
      %9007 = vmatprep.subr.mxu0 0.0
      %9008 = vmatpush1.msra.mxu0 0.0
      %9009 = vmatprep.subr.mxu0 0.0
      %9010 = vmatpush1.msra.mxu0 0.0
      %9011 = vmatprep.subr.mxu0 0.0
      %9012 = vmatpush1.msra.mxu0 0.0
      %9013 = vmatprep.subr.mxu0 0.0
      %9014 = vmatpush1.msra.mxu0 0.0
      %9015 = vmatprep.subr.mxu0 0.0
      %9016 = vmatpush1.msra.mxu0 0.0
      %9017 = vmatprep.subr.mxu0 0.0
      %9018 = vmatpush1.msra.mxu0 0.0
      %9019 = vmatprep.subr.mxu0 %v8685
      %9020 = vmatpush1.msra.mxu0 %v8684
      %9021 = vmatprep.subr.mxu0 %v8669
      %9022 = vmatpush1.msra.mxu0 %v8668
      %9023 = vmatprep.subr.mxu0 %v8653
      %9024 = vmatpush1.msra.mxu0 %v8652
      %9025 = vmatprep.subr.mxu0 %v8637
      %9026 = vmatpush1.msra.mxu0 %v8636
      %9027 = vmatprep.subr.mxu0 0.0
      %9028 = vmatpush2.msra.mxu0 0.0
      %9029 = vmatprep.subr.mxu0 0.0
      %9030 = vmatpush2.msra.mxu0 0.0
      %9031 = vmatprep.subr.mxu0 0.0
      %9032 = vmatpush2.msra.mxu0 0.0
      %9033 = vmatprep.subr.mxu0 0.0
      %9034 = vmatpush2.msra.mxu0 0.0
      %9035 = vmatprep.subr.mxu0 0.0
      %9036 = vmatpush2.msra.mxu0 0.0
      %9037 = vmatprep.subr.mxu0 0.0
      %9038 = vmatpush2.msra.mxu0 0.0
      %9039 = vmatprep.subr.mxu0 0.0
      %9040 = vmatpush2.msra.mxu0 0.0
      %9041 = vmatprep.subr.mxu0 0.0
      %9042 = vmatpush2.msra.mxu0 0.0
      %9043 = vmatprep.subr.mxu0 0.0
      %9044 = vmatpush2.msra.mxu0 0.0
      %9045 = vmatprep.subr.mxu0 0.0
      %9046 = vmatpush2.msra.mxu0 0.0
      %9047 = vmatprep.subr.mxu0 0.0
      %9048 = vmatpush2.msra.mxu0 0.0
      %9049 = vmatprep.subr.mxu0 0.0
      %9050 = vmatpush2.msra.mxu0 0.0
      %9051 = vmatprep.subr.mxu0 0.0
      %9052 = vmatpush2.msra.mxu0 0.0
      %9053 = vmatprep.subr.mxu0 0.0
      %9054 = vmatpush2.msra.mxu0 0.0
      %9055 = vmatprep.subr.mxu0 0.0
      %9056 = vmatpush2.msra.mxu0 0.0
      %9057 = vmatprep.subr.mxu0 0.0
      %9058 = vmatpush2.msra.mxu0 0.0
      %9059 = vmatprep.mubr.f32.mxu0 0.0
      %9060 = vmatmul.mubr.f32.gmra.mxu0 %v8780
      %v9061 = vpop.f32.mrf.mxu0
      %v9062 = vadd.f32 %v8726, %v9061
      %v9063 = vpop.f32.mrf.mxu0
      %v9064 = vadd.f32 %v8730, %v9063
      %9065 = vdwg.mxu0
      %9066 = vmatprep.subr.mxu0 0.0
      %9067 = vmatpush1.msra.mxu0 0.0
      %9068 = vmatprep.subr.mxu0 0.0
      %9069 = vmatpush1.msra.mxu0 0.0
      %9070 = vmatprep.subr.mxu0 0.0
      %9071 = vmatpush1.msra.mxu0 0.0
      %9072 = vmatprep.subr.mxu0 0.0
      %9073 = vmatpush1.msra.mxu0 0.0
      %9074 = vmatprep.subr.mxu0 0.0
      %9075 = vmatpush1.msra.mxu0 0.0
      %9076 = vmatprep.subr.mxu0 0.0
      %9077 = vmatpush1.msra.mxu0 0.0
      %9078 = vmatprep.subr.mxu0 0.0
      %9079 = vmatpush1.msra.mxu0 0.0
      %9080 = vmatprep.subr.mxu0 0.0
      %9081 = vmatpush1.msra.mxu0 0.0
      %9082 = vmatprep.subr.mxu0 0.0
      %9083 = vmatpush1.msra.mxu0 0.0
      %9084 = vmatprep.subr.mxu0 0.0
      %9085 = vmatpush1.msra.mxu0 0.0
      %9086 = vmatprep.subr.mxu0 0.0
      %9087 = vmatpush1.msra.mxu0 0.0
      %9088 = vmatprep.subr.mxu0 0.0
      %9089 = vmatpush1.msra.mxu0 0.0
      %9090 = vmatprep.subr.mxu0 %v8687
      %9091 = vmatpush1.msra.mxu0 %v8686
      %9092 = vmatprep.subr.mxu0 %v8671
      %9093 = vmatpush1.msra.mxu0 %v8670
      %9094 = vmatprep.subr.mxu0 %v8655
      %9095 = vmatpush1.msra.mxu0 %v8654
      %9096 = vmatprep.subr.mxu0 %v8639
      %9097 = vmatpush1.msra.mxu0 %v8638
      %9098 = vmatprep.subr.mxu0 0.0
      %9099 = vmatpush2.msra.mxu0 0.0
      %9100 = vmatprep.subr.mxu0 0.0
      %9101 = vmatpush2.msra.mxu0 0.0
      %9102 = vmatprep.subr.mxu0 0.0
      %9103 = vmatpush2.msra.mxu0 0.0
      %9104 = vmatprep.subr.mxu0 0.0
      %9105 = vmatpush2.msra.mxu0 0.0
      %9106 = vmatprep.subr.mxu0 0.0
      %9107 = vmatpush2.msra.mxu0 0.0
      %9108 = vmatprep.subr.mxu0 0.0
      %9109 = vmatpush2.msra.mxu0 0.0
      %9110 = vmatprep.subr.mxu0 0.0
      %9111 = vmatpush2.msra.mxu0 0.0
      %9112 = vmatprep.subr.mxu0 0.0
      %9113 = vmatpush2.msra.mxu0 0.0
      %9114 = vmatprep.subr.mxu0 0.0
      %9115 = vmatpush2.msra.mxu0 0.0
      %9116 = vmatprep.subr.mxu0 0.0
      %9117 = vmatpush2.msra.mxu0 0.0
      %9118 = vmatprep.subr.mxu0 0.0
      %9119 = vmatpush2.msra.mxu0 0.0
      %9120 = vmatprep.subr.mxu0 0.0
      %9121 = vmatpush2.msra.mxu0 0.0
      %9122 = vmatprep.subr.mxu0 0.0
      %9123 = vmatpush2.msra.mxu0 0.0
      %9124 = vmatprep.subr.mxu0 0.0
      %9125 = vmatpush2.msra.mxu0 0.0
      %9126 = vmatprep.subr.mxu0 0.0
      %9127 = vmatpush2.msra.mxu0 0.0
      %9128 = vmatprep.subr.mxu0 0.0
      %9129 = vmatpush2.msra.mxu0 0.0
      %9130 = vmatprep.mubr.f32.mxu0 0.0
      %9131 = vmatmul.mubr.f32.gmra.mxu0 %v8780
      %v9132 = vpop.f32.mrf.mxu0
      %v9133 = vadd.f32 %v8734, %v9132
      %v9134 = vpop.f32.mrf.mxu0
      %v9135 = vadd.f32 %v8738, %v9134
      %9136 = vdwg.mxu0
      %9137 = vmatprep.subr.mxu0 0.0
      %9138 = vmatpush1.msra.mxu0 0.0
      %9139 = vmatprep.subr.mxu0 0.0
      %9140 = vmatpush1.msra.mxu0 0.0
      %9141 = vmatprep.subr.mxu0 0.0
      %9142 = vmatpush1.msra.mxu0 0.0
      %9143 = vmatprep.subr.mxu0 0.0
      %9144 = vmatpush1.msra.mxu0 0.0
      %9145 = vmatprep.subr.mxu0 0.0
      %9146 = vmatpush1.msra.mxu0 0.0
      %9147 = vmatprep.subr.mxu0 0.0
      %9148 = vmatpush1.msra.mxu0 0.0
      %9149 = vmatprep.subr.mxu0 0.0
      %9150 = vmatpush1.msra.mxu0 0.0
      %9151 = vmatprep.subr.mxu0 0.0
      %9152 = vmatpush1.msra.mxu0 0.0
      %9153 = vmatprep.subr.mxu0 0.0
      %9154 = vmatpush1.msra.mxu0 0.0
      %9155 = vmatprep.subr.mxu0 0.0
      %9156 = vmatpush1.msra.mxu0 0.0
      %9157 = vmatprep.subr.mxu0 0.0
      %9158 = vmatpush1.msra.mxu0 0.0
      %9159 = vmatprep.subr.mxu0 0.0
      %9160 = vmatpush1.msra.mxu0 0.0
      %9161 = vmatprep.subr.mxu0 %v8689
      %9162 = vmatpush1.msra.mxu0 %v8688
      %9163 = vmatprep.subr.mxu0 %v8673
      %9164 = vmatpush1.msra.mxu0 %v8672
      %9165 = vmatprep.subr.mxu0 %v8657
      %9166 = vmatpush1.msra.mxu0 %v8656
      %9167 = vmatprep.subr.mxu0 %v8641
      %9168 = vmatpush1.msra.mxu0 %v8640
      %9169 = vmatprep.subr.mxu0 0.0
      %9170 = vmatpush2.msra.mxu0 0.0
      %9171 = vmatprep.subr.mxu0 0.0
      %9172 = vmatpush2.msra.mxu0 0.0
      %9173 = vmatprep.subr.mxu0 0.0
      %9174 = vmatpush2.msra.mxu0 0.0
      %9175 = vmatprep.subr.mxu0 0.0
      %9176 = vmatpush2.msra.mxu0 0.0
      %9177 = vmatprep.subr.mxu0 0.0
      %9178 = vmatpush2.msra.mxu0 0.0
      %9179 = vmatprep.subr.mxu0 0.0
      %9180 = vmatpush2.msra.mxu0 0.0
      %9181 = vmatprep.subr.mxu0 0.0
      %9182 = vmatpush2.msra.mxu0 0.0
      %9183 = vmatprep.subr.mxu0 0.0
      %9184 = vmatpush2.msra.mxu0 0.0
      %9185 = vmatprep.subr.mxu0 0.0
      %9186 = vmatpush2.msra.mxu0 0.0
      %9187 = vmatprep.subr.mxu0 0.0
      %9188 = vmatpush2.msra.mxu0 0.0
      %9189 = vmatprep.subr.mxu0 0.0
      %9190 = vmatpush2.msra.mxu0 0.0
      %9191 = vmatprep.subr.mxu0 0.0
      %9192 = vmatpush2.msra.mxu0 0.0
      %9193 = vmatprep.subr.mxu0 0.0
      %9194 = vmatpush2.msra.mxu0 0.0
      %9195 = vmatprep.subr.mxu0 0.0
      %9196 = vmatpush2.msra.mxu0 0.0
      %9197 = vmatprep.subr.mxu0 0.0
      %9198 = vmatpush2.msra.mxu0 0.0
      %9199 = vmatprep.subr.mxu0 0.0
      %9200 = vmatpush2.msra.mxu0 0.0
      %9201 = vmatprep.mubr.f32.mxu0 0.0
      %9202 = vmatmul.mubr.f32.gmra.mxu0 %v8780
      %v9203 = vpop.f32.mrf.mxu0
      %v9204 = vadd.f32 %v8742, %v9203
      %v9205 = vpop.f32.mrf.mxu0
      %v9206 = vadd.f32 %v8746, %v9205
      %9207 = vdwg.mxu0
      %9208 = vmatprep.subr.mxu0 0.0
      %9209 = vmatpush1.msra.mxu0 0.0
      %9210 = vmatprep.subr.mxu0 0.0
      %9211 = vmatpush1.msra.mxu0 0.0
      %9212 = vmatprep.subr.mxu0 0.0
      %9213 = vmatpush1.msra.mxu0 0.0
      %9214 = vmatprep.subr.mxu0 0.0
      %9215 = vmatpush1.msra.mxu0 0.0
      %9216 = vmatprep.subr.mxu0 0.0
      %9217 = vmatpush1.msra.mxu0 0.0
      %9218 = vmatprep.subr.mxu0 0.0
      %9219 = vmatpush1.msra.mxu0 0.0
      %9220 = vmatprep.subr.mxu0 0.0
      %9221 = vmatpush1.msra.mxu0 0.0
      %9222 = vmatprep.subr.mxu0 0.0
      %9223 = vmatpush1.msra.mxu0 0.0
      %9224 = vmatprep.subr.mxu0 0.0
      %9225 = vmatpush1.msra.mxu0 0.0
      %9226 = vmatprep.subr.mxu0 0.0
      %9227 = vmatpush1.msra.mxu0 0.0
      %9228 = vmatprep.subr.mxu0 0.0
      %9229 = vmatpush1.msra.mxu0 0.0
      %9230 = vmatprep.subr.mxu0 0.0
      %9231 = vmatpush1.msra.mxu0 0.0
      %9232 = vmatprep.subr.mxu0 %v8691
      %9233 = vmatpush1.msra.mxu0 %v8690
      %9234 = vmatprep.subr.mxu0 %v8675
      %9235 = vmatpush1.msra.mxu0 %v8674
      %9236 = vmatprep.subr.mxu0 %v8659
      %9237 = vmatpush1.msra.mxu0 %v8658
      %9238 = vmatprep.subr.mxu0 %v8643
      %9239 = vmatpush1.msra.mxu0 %v8642
      %9240 = vmatprep.subr.mxu0 0.0
      %9241 = vmatpush2.msra.mxu0 0.0
      %9242 = vmatprep.subr.mxu0 0.0
      %9243 = vmatpush2.msra.mxu0 0.0
      %9244 = vmatprep.subr.mxu0 0.0
      %9245 = vmatpush2.msra.mxu0 0.0
      %9246 = vmatprep.subr.mxu0 0.0
      %9247 = vmatpush2.msra.mxu0 0.0
      %9248 = vmatprep.subr.mxu0 0.0
      %9249 = vmatpush2.msra.mxu0 0.0
      %9250 = vmatprep.subr.mxu0 0.0
      %9251 = vmatpush2.msra.mxu0 0.0
      %9252 = vmatprep.subr.mxu0 0.0
      %9253 = vmatpush2.msra.mxu0 0.0
      %9254 = vmatprep.subr.mxu0 0.0
      %9255 = vmatpush2.msra.mxu0 0.0
      %9256 = vmatprep.subr.mxu0 0.0
      %9257 = vmatpush2.msra.mxu0 0.0
      %9258 = vmatprep.subr.mxu0 0.0
      %9259 = vmatpush2.msra.mxu0 0.0
      %9260 = vmatprep.subr.mxu0 0.0
      %9261 = vmatpush2.msra.mxu0 0.0
      %9262 = vmatprep.subr.mxu0 0.0
      %9263 = vmatpush2.msra.mxu0 0.0
      %9264 = vmatprep.subr.mxu0 0.0
      %9265 = vmatpush2.msra.mxu0 0.0
      %9266 = vmatprep.subr.mxu0 0.0
      %9267 = vmatpush2.msra.mxu0 0.0
      %9268 = vmatprep.subr.mxu0 0.0
      %9269 = vmatpush2.msra.mxu0 0.0
      %9270 = vmatprep.subr.mxu0 0.0
      %9271 = vmatpush2.msra.mxu0 0.0
      %9272 = vmatprep.mubr.f32.mxu0 0.0
      %9273 = vmatmul.mubr.f32.gmra.mxu0 %v8780
      %v9274 = vpop.f32.mrf.mxu0
      %v9275 = vadd.f32 %v8750, %v9274
      %v9276 = vpop.f32.mrf.mxu0
      %v9277 = vadd.f32 %v8754, %v9276
      %9278 = vdwg.mxu0
      %9279 = vmatprep.subr.mxu0 0.0
      %9280 = vmatpush1.msra.mxu0 0.0
      %9281 = vmatprep.subr.mxu0 0.0
      %9282 = vmatpush1.msra.mxu0 0.0
      %9283 = vmatprep.subr.mxu0 0.0
      %9284 = vmatpush1.msra.mxu0 0.0
      %9285 = vmatprep.subr.mxu0 0.0
      %9286 = vmatpush1.msra.mxu0 0.0
      %9287 = vmatprep.subr.mxu0 0.0
      %9288 = vmatpush1.msra.mxu0 0.0
      %9289 = vmatprep.subr.mxu0 0.0
      %9290 = vmatpush1.msra.mxu0 0.0
      %9291 = vmatprep.subr.mxu0 0.0
      %9292 = vmatpush1.msra.mxu0 0.0
      %9293 = vmatprep.subr.mxu0 0.0
      %9294 = vmatpush1.msra.mxu0 0.0
      %9295 = vmatprep.subr.mxu0 0.0
      %9296 = vmatpush1.msra.mxu0 0.0
      %9297 = vmatprep.subr.mxu0 0.0
      %9298 = vmatpush1.msra.mxu0 0.0
      %9299 = vmatprep.subr.mxu0 0.0
      %9300 = vmatpush1.msra.mxu0 0.0
      %9301 = vmatprep.subr.mxu0 0.0
      %9302 = vmatpush1.msra.mxu0 0.0
      %9303 = vmatprep.subr.mxu0 %v8693
      %9304 = vmatpush1.msra.mxu0 %v8692
      %9305 = vmatprep.subr.mxu0 %v8677
      %9306 = vmatpush1.msra.mxu0 %v8676
      %9307 = vmatprep.subr.mxu0 %v8661
      %9308 = vmatpush1.msra.mxu0 %v8660
      %9309 = vmatprep.subr.mxu0 %v8645
      %9310 = vmatpush1.msra.mxu0 %v8644
      %9311 = vmatprep.subr.mxu0 0.0
      %9312 = vmatpush2.msra.mxu0 0.0
      %9313 = vmatprep.subr.mxu0 0.0
      %9314 = vmatpush2.msra.mxu0 0.0
      %9315 = vmatprep.subr.mxu0 0.0
      %9316 = vmatpush2.msra.mxu0 0.0
      %9317 = vmatprep.subr.mxu0 0.0
      %9318 = vmatpush2.msra.mxu0 0.0
      %9319 = vmatprep.subr.mxu0 0.0
      %9320 = vmatpush2.msra.mxu0 0.0
      %9321 = vmatprep.subr.mxu0 0.0
      %9322 = vmatpush2.msra.mxu0 0.0
      %9323 = vmatprep.subr.mxu0 0.0
      %9324 = vmatpush2.msra.mxu0 0.0
      %9325 = vmatprep.subr.mxu0 0.0
      %9326 = vmatpush2.msra.mxu0 0.0
      %9327 = vmatprep.subr.mxu0 0.0
      %9328 = vmatpush2.msra.mxu0 0.0
      %9329 = vmatprep.subr.mxu0 0.0
      %9330 = vmatpush2.msra.mxu0 0.0
      %9331 = vmatprep.subr.mxu0 0.0
      %9332 = vmatpush2.msra.mxu0 0.0
      %9333 = vmatprep.subr.mxu0 0.0
      %9334 = vmatpush2.msra.mxu0 0.0
      %9335 = vmatprep.subr.mxu0 0.0
      %9336 = vmatpush2.msra.mxu0 0.0
      %9337 = vmatprep.subr.mxu0 0.0
      %9338 = vmatpush2.msra.mxu0 0.0
      %9339 = vmatprep.subr.mxu0 0.0
      %9340 = vmatpush2.msra.mxu0 0.0
      %9341 = vmatprep.subr.mxu0 0.0
      %9342 = vmatpush2.msra.mxu0 0.0
      %9343 = vmatprep.mubr.f32.mxu0 0.0
      %9344 = vmatmul.mubr.f32.gmra.mxu0 %v8780
      %v9345 = vpop.f32.mrf.mxu0
      %v9346 = vadd.f32 %v8758, %v9345
      %v9347 = vpop.f32.mrf.mxu0
      %v9348 = vadd.f32 %v8762, %v9347
      %9349 = vdwg.mxu0
      %v9350 = vmax.f32 %v8849, 0.0
      %v9351 = vmax.f32 %v8851, 0.0
      %v9352 = vmax.f32 %v8920, 0.0
      %v9353 = vmax.f32 %v8922, 0.0
      %v9354 = vmax.f32 %v8991, 0.0
      %v9355 = vmax.f32 %v8993, 0.0
      %v9356 = vmax.f32 %v9062, 0.0
      %v9357 = vmax.f32 %v9064, 0.0
      %v9358 = vmax.f32 %v9133, 0.0
      %v9359 = vmax.f32 %v9135, 0.0
      %v9360 = vmax.f32 %v9204, 0.0
      %v9361 = vmax.f32 %v9206, 0.0
      %v9362 = vmax.f32 %v9275, 0.0
      %v9363 = vmax.f32 %v9277, 0.0
      %v9364 = vmax.f32 %v9346, 0.0
      %v9365 = vmax.f32 %v9348, 0.0
      %s9366 = scalar_lea.vmem %s11, 2048
      %v9367 = vld [vmem:[%s9366] sm:$0xff]
      %v9368 = vld [vmem:[%s9366 + $0x8] sm:$0xff]
      %v9369 = vld [vmem:[%s9366 + $0x10] sm:$0xff]
      %v9370 = vld [vmem:[%s9366 + $0x18] sm:$0xff]
      %v9371 = vld [vmem:[%s9366 + $0x20] sm:$0xff]
      %v9372 = vld [vmem:[%s9366 + $0x28] sm:$0xff]
      %v9373 = vld [vmem:[%s9366 + $0x30] sm:$0xff]
      %v9374 = vld [vmem:[%s9366 + $0x38] sm:$0xff]
      %v9375 = vld [vmem:[%s9366 + $0x40] sm:$0xff]
      %v9376 = vld [vmem:[%s9366 + $0x48] sm:$0xff]
      %v9377 = vld [vmem:[%s9366 + $0x50] sm:$0xff]
      %v9378 = vld [vmem:[%s9366 + $0x58] sm:$0xff]
      %v9379 = vld [vmem:[%s9366 + $0x60] sm:$0xff]
      %v9380 = vld [vmem:[%s9366 + $0x68] sm:$0xff]
      %v9381 = vld [vmem:[%s9366 + $0x70] sm:$0xff]
      %v9382 = vld [vmem:[%s9366 + $0x78] sm:$0xff]
      %v9383 = vld [vmem:[%s9366 + $0x80] sm:$0xff]
      %v9384 = vld [vmem:[%s9366 + $0x88] sm:$0xff]
      %v9385 = vld [vmem:[%s9366 + $0x90] sm:$0xff]
      %v9386 = vld [vmem:[%s9366 + $0x98] sm:$0xff]
      %v9387 = vld [vmem:[%s9366 + $0xa0] sm:$0xff]
      %v9388 = vld [vmem:[%s9366 + $0xa8] sm:$0xff]
      %v9389 = vld [vmem:[%s9366 + $0xb0] sm:$0xff]
      %v9390 = vld [vmem:[%s9366 + $0xb8] sm:$0xff]
      %v9391 = vld [vmem:[%s9366 + $0xc0] sm:$0xff]
      %v9392 = vld [vmem:[%s9366 + $0xc8] sm:$0xff]
      %v9393 = vld [vmem:[%s9366 + $0xd0] sm:$0xff]
      %v9394 = vld [vmem:[%s9366 + $0xd8] sm:$0xff]
      %v9395 = vld [vmem:[%s9366 + $0xe0] sm:$0xff]
      %v9396 = vld [vmem:[%s9366 + $0xe8] sm:$0xff]
      %v9397 = vld [vmem:[%s9366 + $0xf0] sm:$0xff]
      %v9398 = vld [vmem:[%s9366 + $0xf8] sm:$0xff]
      %v9399 = vld [vmem:[%s9366 + $0x100] sm:$0xff]
      %v9400 = vld [vmem:[%s9366 + $0x108] sm:$0xff]
      %v9401 = vld [vmem:[%s9366 + $0x110] sm:$0xff]
      %v9402 = vld [vmem:[%s9366 + $0x118] sm:$0xff]
      %v9403 = vld [vmem:[%s9366 + $0x120] sm:$0xff]
      %v9404 = vld [vmem:[%s9366 + $0x128] sm:$0xff]
      %v9405 = vld [vmem:[%s9366 + $0x130] sm:$0xff]
      %v9406 = vld [vmem:[%s9366 + $0x138] sm:$0xff]
      %v9407 = vld [vmem:[%s9366 + $0x140] sm:$0xff]
      %v9408 = vld [vmem:[%s9366 + $0x148] sm:$0xff]
      %v9409 = vld [vmem:[%s9366 + $0x150] sm:$0xff]
      %v9410 = vld [vmem:[%s9366 + $0x158] sm:$0xff]
      %v9411 = vld [vmem:[%s9366 + $0x160] sm:$0xff]
      %v9412 = vld [vmem:[%s9366 + $0x168] sm:$0xff]
      %v9413 = vld [vmem:[%s9366 + $0x170] sm:$0xff]
      %v9414 = vld [vmem:[%s9366 + $0x178] sm:$0xff]
      %v9415 = vld [vmem:[%s9366 + $0x180] sm:$0xff]
      %v9416 = vld [vmem:[%s9366 + $0x188] sm:$0xff]
      %v9417 = vld [vmem:[%s9366 + $0x190] sm:$0xff]
      %v9418 = vld [vmem:[%s9366 + $0x198] sm:$0xff]
      %v9419 = vld [vmem:[%s9366 + $0x1a0] sm:$0xff]
      %v9420 = vld [vmem:[%s9366 + $0x1a8] sm:$0xff]
      %v9421 = vld [vmem:[%s9366 + $0x1b0] sm:$0xff]
      %v9422 = vld [vmem:[%s9366 + $0x1b8] sm:$0xff]
      %v9423 = vld [vmem:[%s9366 + $0x1c0] sm:$0xff]
      %v9424 = vld [vmem:[%s9366 + $0x1c8] sm:$0xff]
      %v9425 = vld [vmem:[%s9366 + $0x1d0] sm:$0xff]
      %v9426 = vld [vmem:[%s9366 + $0x1d8] sm:$0xff]
      %v9427 = vld [vmem:[%s9366 + $0x1e0] sm:$0xff]
      %v9428 = vld [vmem:[%s9366 + $0x1e8] sm:$0xff]
      %v9429 = vld [vmem:[%s9366 + $0x1f0] sm:$0xff]
      %v9430 = vld [vmem:[%s9366 + $0x1f8] sm:$0xff]
      %v9431 = vld [vmem:[%s9366 + $0x200] sm:$0xff]
      %v9432 = vld [vmem:[%s9366 + $0x208] sm:$0xff]
      %v9433 = vld [vmem:[%s9366 + $0x210] sm:$0xff]
      %v9434 = vld [vmem:[%s9366 + $0x218] sm:$0xff]
      %v9435 = vld [vmem:[%s9366 + $0x220] sm:$0xff]
      %v9436 = vld [vmem:[%s9366 + $0x228] sm:$0xff]
      %v9437 = vld [vmem:[%s9366 + $0x230] sm:$0xff]
      %v9438 = vld [vmem:[%s9366 + $0x238] sm:$0xff]
      %v9439 = vld [vmem:[%s9366 + $0x240] sm:$0xff]
      %v9440 = vld [vmem:[%s9366 + $0x248] sm:$0xff]
      %v9441 = vld [vmem:[%s9366 + $0x250] sm:$0xff]
      %v9442 = vld [vmem:[%s9366 + $0x258] sm:$0xff]
      %v9443 = vld [vmem:[%s9366 + $0x260] sm:$0xff]
      %v9444 = vld [vmem:[%s9366 + $0x268] sm:$0xff]
      %v9445 = vld [vmem:[%s9366 + $0x270] sm:$0xff]
      %v9446 = vld [vmem:[%s9366 + $0x278] sm:$0xff]
      %v9447 = vld [vmem:[%s9366 + $0x280] sm:$0xff]
      %v9448 = vld [vmem:[%s9366 + $0x288] sm:$0xff]
      %v9449 = vld [vmem:[%s9366 + $0x290] sm:$0xff]
      %v9450 = vld [vmem:[%s9366 + $0x298] sm:$0xff]
      %v9451 = vld [vmem:[%s9366 + $0x2a0] sm:$0xff]
      %v9452 = vld [vmem:[%s9366 + $0x2a8] sm:$0xff]
      %v9453 = vld [vmem:[%s9366 + $0x2b0] sm:$0xff]
      %v9454 = vld [vmem:[%s9366 + $0x2b8] sm:$0xff]
      %v9455 = vld [vmem:[%s9366 + $0x2c0] sm:$0xff]
      %v9456 = vld [vmem:[%s9366 + $0x2c8] sm:$0xff]
      %v9457 = vld [vmem:[%s9366 + $0x2d0] sm:$0xff]
      %v9458 = vld [vmem:[%s9366 + $0x2d8] sm:$0xff]
      %v9459 = vld [vmem:[%s9366 + $0x2e0] sm:$0xff]
      %v9460 = vld [vmem:[%s9366 + $0x2e8] sm:$0xff]
      %v9461 = vld [vmem:[%s9366 + $0x2f0] sm:$0xff]
      %v9462 = vld [vmem:[%s9366 + $0x2f8] sm:$0xff]
      %v9463 = vld [vmem:[%s9366 + $0x300] sm:$0xff]
      %v9464 = vld [vmem:[%s9366 + $0x308] sm:$0xff]
      %v9465 = vld [vmem:[%s9366 + $0x310] sm:$0xff]
      %v9466 = vld [vmem:[%s9366 + $0x318] sm:$0xff]
      %v9467 = vld [vmem:[%s9366 + $0x320] sm:$0xff]
      %v9468 = vld [vmem:[%s9366 + $0x328] sm:$0xff]
      %v9469 = vld [vmem:[%s9366 + $0x330] sm:$0xff]
      %v9470 = vld [vmem:[%s9366 + $0x338] sm:$0xff]
      %v9471 = vld [vmem:[%s9366 + $0x340] sm:$0xff]
      %v9472 = vld [vmem:[%s9366 + $0x348] sm:$0xff]
      %v9473 = vld [vmem:[%s9366 + $0x350] sm:$0xff]
      %v9474 = vld [vmem:[%s9366 + $0x358] sm:$0xff]
      %v9475 = vld [vmem:[%s9366 + $0x360] sm:$0xff]
      %v9476 = vld [vmem:[%s9366 + $0x368] sm:$0xff]
      %v9477 = vld [vmem:[%s9366 + $0x370] sm:$0xff]
      %v9478 = vld [vmem:[%s9366 + $0x378] sm:$0xff]
      %v9479 = vld [vmem:[%s9366 + $0x380] sm:$0xff]
      %v9480 = vld [vmem:[%s9366 + $0x388] sm:$0xff]
      %v9481 = vld [vmem:[%s9366 + $0x390] sm:$0xff]
      %v9482 = vld [vmem:[%s9366 + $0x398] sm:$0xff]
      %v9483 = vld [vmem:[%s9366 + $0x3a0] sm:$0xff]
      %v9484 = vld [vmem:[%s9366 + $0x3a8] sm:$0xff]
      %v9485 = vld [vmem:[%s9366 + $0x3b0] sm:$0xff]
      %v9486 = vld [vmem:[%s9366 + $0x3b8] sm:$0xff]
      %v9487 = vld [vmem:[%s9366 + $0x3c0] sm:$0xff]
      %v9488 = vld [vmem:[%s9366 + $0x3c8] sm:$0xff]
      %v9489 = vld [vmem:[%s9366 + $0x3d0] sm:$0xff]
      %v9490 = vld [vmem:[%s9366 + $0x3d8] sm:$0xff]
      %v9491 = vld [vmem:[%s9366 + $0x3e0] sm:$0xff]
      %v9492 = vld [vmem:[%s9366 + $0x3e8] sm:$0xff]
      %v9493 = vld [vmem:[%s9366 + $0x3f0] sm:$0xff]
      %v9494 = vld [vmem:[%s9366 + $0x3f8] sm:$0xff]
      %v9495 = vld [vmem:[%s9366 + $0x400] sm:$0xff]
      %v9496 = vld [vmem:[%s9366 + $0x408] sm:$0xff]
      %v9497 = vld [vmem:[%s9366 + $0x410] sm:$0xff]
      %v9498 = vld [vmem:[%s9366 + $0x418] sm:$0xff]
      %v9499 = vld [vmem:[%s9366 + $0x420] sm:$0xff]
      %v9500 = vld [vmem:[%s9366 + $0x428] sm:$0xff]
      %v9501 = vld [vmem:[%s9366 + $0x430] sm:$0xff]
      %v9502 = vld [vmem:[%s9366 + $0x438] sm:$0xff]
      %v9503 = vld [vmem:[%s9366 + $0x440] sm:$0xff]
      %v9504 = vld [vmem:[%s9366 + $0x448] sm:$0xff]
      %v9505 = vld [vmem:[%s9366 + $0x450] sm:$0xff]
      %v9506 = vld [vmem:[%s9366 + $0x458] sm:$0xff]
      %v9507 = vld [vmem:[%s9366 + $0x460] sm:$0xff]
      %v9508 = vld [vmem:[%s9366 + $0x468] sm:$0xff]
      %v9509 = vld [vmem:[%s9366 + $0x470] sm:$0xff]
      %v9510 = vld [vmem:[%s9366 + $0x478] sm:$0xff]
      %v9511 = vld [vmem:[%s9366 + $0x480] sm:$0xff]
      %v9512 = vld [vmem:[%s9366 + $0x488] sm:$0xff]
      %v9513 = vld [vmem:[%s9366 + $0x490] sm:$0xff]
      %v9514 = vld [vmem:[%s9366 + $0x498] sm:$0xff]
      %v9515 = vld [vmem:[%s9366 + $0x4a0] sm:$0xff]
      %v9516 = vld [vmem:[%s9366 + $0x4a8] sm:$0xff]
      %v9517 = vld [vmem:[%s9366 + $0x4b0] sm:$0xff]
      %v9518 = vld [vmem:[%s9366 + $0x4b8] sm:$0xff]
      %v9519 = vld [vmem:[%s9366 + $0x4c0] sm:$0xff]
      %v9520 = vld [vmem:[%s9366 + $0x4c8] sm:$0xff]
      %v9521 = vld [vmem:[%s9366 + $0x4d0] sm:$0xff]
      %v9522 = vld [vmem:[%s9366 + $0x4d8] sm:$0xff]
      %v9523 = vld [vmem:[%s9366 + $0x4e0] sm:$0xff]
      %v9524 = vld [vmem:[%s9366 + $0x4e8] sm:$0xff]
      %v9525 = vld [vmem:[%s9366 + $0x4f0] sm:$0xff]
      %v9526 = vld [vmem:[%s9366 + $0x4f8] sm:$0xff]
      %v9527 = vld [vmem:[%s9366 + $0x500] sm:$0xff]
      %v9528 = vld [vmem:[%s9366 + $0x508] sm:$0xff]
      %v9529 = vld [vmem:[%s9366 + $0x510] sm:$0xff]
      %v9530 = vld [vmem:[%s9366 + $0x518] sm:$0xff]
      %v9531 = vld [vmem:[%s9366 + $0x520] sm:$0xff]
      %v9532 = vld [vmem:[%s9366 + $0x528] sm:$0xff]
      %v9533 = vld [vmem:[%s9366 + $0x530] sm:$0xff]
      %v9534 = vld [vmem:[%s9366 + $0x538] sm:$0xff]
      %v9535 = vld [vmem:[%s9366 + $0x540] sm:$0xff]
      %v9536 = vld [vmem:[%s9366 + $0x548] sm:$0xff]
      %v9537 = vld [vmem:[%s9366 + $0x550] sm:$0xff]
      %v9538 = vld [vmem:[%s9366 + $0x558] sm:$0xff]
      %v9539 = vld [vmem:[%s9366 + $0x560] sm:$0xff]
      %v9540 = vld [vmem:[%s9366 + $0x568] sm:$0xff]
      %v9541 = vld [vmem:[%s9366 + $0x570] sm:$0xff]
      %v9542 = vld [vmem:[%s9366 + $0x578] sm:$0xff]
      %v9543 = vld [vmem:[%s9366 + $0x580] sm:$0xff]
      %v9544 = vld [vmem:[%s9366 + $0x588] sm:$0xff]
      %v9545 = vld [vmem:[%s9366 + $0x590] sm:$0xff]
      %v9546 = vld [vmem:[%s9366 + $0x598] sm:$0xff]
      %v9547 = vld [vmem:[%s9366 + $0x5a0] sm:$0xff]
      %v9548 = vld [vmem:[%s9366 + $0x5a8] sm:$0xff]
      %v9549 = vld [vmem:[%s9366 + $0x5b0] sm:$0xff]
      %v9550 = vld [vmem:[%s9366 + $0x5b8] sm:$0xff]
      %v9551 = vld [vmem:[%s9366 + $0x5c0] sm:$0xff]
      %v9552 = vld [vmem:[%s9366 + $0x5c8] sm:$0xff]
      %v9553 = vld [vmem:[%s9366 + $0x5d0] sm:$0xff]
      %v9554 = vld [vmem:[%s9366 + $0x5d8] sm:$0xff]
      %v9555 = vld [vmem:[%s9366 + $0x5e0] sm:$0xff]
      %v9556 = vld [vmem:[%s9366 + $0x5e8] sm:$0xff]
      %v9557 = vld [vmem:[%s9366 + $0x5f0] sm:$0xff]
      %v9558 = vld [vmem:[%s9366 + $0x5f8] sm:$0xff]
      %v9559 = vld [vmem:[%s9366 + $0x600] sm:$0xff]
      %v9560 = vld [vmem:[%s9366 + $0x608] sm:$0xff]
      %v9561 = vld [vmem:[%s9366 + $0x610] sm:$0xff]
      %v9562 = vld [vmem:[%s9366 + $0x618] sm:$0xff]
      %v9563 = vld [vmem:[%s9366 + $0x620] sm:$0xff]
      %v9564 = vld [vmem:[%s9366 + $0x628] sm:$0xff]
      %v9565 = vld [vmem:[%s9366 + $0x630] sm:$0xff]
      %v9566 = vld [vmem:[%s9366 + $0x638] sm:$0xff]
      %v9567 = vld [vmem:[%s9366 + $0x640] sm:$0xff]
      %v9568 = vld [vmem:[%s9366 + $0x648] sm:$0xff]
      %v9569 = vld [vmem:[%s9366 + $0x650] sm:$0xff]
      %v9570 = vld [vmem:[%s9366 + $0x658] sm:$0xff]
      %v9571 = vld [vmem:[%s9366 + $0x660] sm:$0xff]
      %v9572 = vld [vmem:[%s9366 + $0x668] sm:$0xff]
      %v9573 = vld [vmem:[%s9366 + $0x670] sm:$0xff]
      %v9574 = vld [vmem:[%s9366 + $0x678] sm:$0xff]
      %v9575 = vld [vmem:[%s9366 + $0x680] sm:$0xff]
      %v9576 = vld [vmem:[%s9366 + $0x688] sm:$0xff]
      %v9577 = vld [vmem:[%s9366 + $0x690] sm:$0xff]
      %v9578 = vld [vmem:[%s9366 + $0x698] sm:$0xff]
      %v9579 = vld [vmem:[%s9366 + $0x6a0] sm:$0xff]
      %v9580 = vld [vmem:[%s9366 + $0x6a8] sm:$0xff]
      %v9581 = vld [vmem:[%s9366 + $0x6b0] sm:$0xff]
      %v9582 = vld [vmem:[%s9366 + $0x6b8] sm:$0xff]
      %v9583 = vld [vmem:[%s9366 + $0x6c0] sm:$0xff]
      %v9584 = vld [vmem:[%s9366 + $0x6c8] sm:$0xff]
      %v9585 = vld [vmem:[%s9366 + $0x6d0] sm:$0xff]
      %v9586 = vld [vmem:[%s9366 + $0x6d8] sm:$0xff]
      %v9587 = vld [vmem:[%s9366 + $0x6e0] sm:$0xff]
      %v9588 = vld [vmem:[%s9366 + $0x6e8] sm:$0xff]
      %v9589 = vld [vmem:[%s9366 + $0x6f0] sm:$0xff]
      %v9590 = vld [vmem:[%s9366 + $0x6f8] sm:$0xff]
      %v9591 = vld [vmem:[%s9366 + $0x700] sm:$0xff]
      %v9592 = vld [vmem:[%s9366 + $0x708] sm:$0xff]
      %v9593 = vld [vmem:[%s9366 + $0x710] sm:$0xff]
      %v9594 = vld [vmem:[%s9366 + $0x718] sm:$0xff]
      %v9595 = vld [vmem:[%s9366 + $0x720] sm:$0xff]
      %v9596 = vld [vmem:[%s9366 + $0x728] sm:$0xff]
      %v9597 = vld [vmem:[%s9366 + $0x730] sm:$0xff]
      %v9598 = vld [vmem:[%s9366 + $0x738] sm:$0xff]
      %v9599 = vld [vmem:[%s9366 + $0x740] sm:$0xff]
      %v9600 = vld [vmem:[%s9366 + $0x748] sm:$0xff]
      %v9601 = vld [vmem:[%s9366 + $0x750] sm:$0xff]
      %v9602 = vld [vmem:[%s9366 + $0x758] sm:$0xff]
      %v9603 = vld [vmem:[%s9366 + $0x760] sm:$0xff]
      %v9604 = vld [vmem:[%s9366 + $0x768] sm:$0xff]
      %v9605 = vld [vmem:[%s9366 + $0x770] sm:$0xff]
      %v9606 = vld [vmem:[%s9366 + $0x778] sm:$0xff]
      %v9607 = vld [vmem:[%s9366 + $0x780] sm:$0xff]
      %v9608 = vld [vmem:[%s9366 + $0x788] sm:$0xff]
      %v9609 = vld [vmem:[%s9366 + $0x790] sm:$0xff]
      %v9610 = vld [vmem:[%s9366 + $0x798] sm:$0xff]
      %v9611 = vld [vmem:[%s9366 + $0x7a0] sm:$0xff]
      %v9612 = vld [vmem:[%s9366 + $0x7a8] sm:$0xff]
      %v9613 = vld [vmem:[%s9366 + $0x7b0] sm:$0xff]
      %v9614 = vld [vmem:[%s9366 + $0x7b8] sm:$0xff]
      %v9615 = vld [vmem:[%s9366 + $0x7c0] sm:$0xff]
      %v9616 = vld [vmem:[%s9366 + $0x7c8] sm:$0xff]
      %v9617 = vld [vmem:[%s9366 + $0x7d0] sm:$0xff]
      %v9618 = vld [vmem:[%s9366 + $0x7d8] sm:$0xff]
      %v9619 = vld [vmem:[%s9366 + $0x7e0] sm:$0xff]
      %v9620 = vld [vmem:[%s9366 + $0x7e8] sm:$0xff]
      %v9621 = vld [vmem:[%s9366 + $0x7f0] sm:$0xff]
      %v9622 = vld [vmem:[%s9366 + $0x7f8] sm:$0xff]
      %s9623 = scalar_lea.vmem %s12, 1
      %v9624 = vld [vmem:[%s9623] sm:$0x1]
      %v9626 = vlaneseq
      %v9627 = vshrl.u32 %v9626, 7
      %v9628 = vsub.s32 0, %v9627
      %v9629 = vrot.slane %v9624, %v9628
      %9631 = vmatprep.subr.mxu0 0.0
      %9632 = vmatpush1.msra.mxu0 %v9382
      %9633 = vmatprep.subr.mxu0 0.0
      %9634 = vmatpush1.msra.mxu0 %v9381
      %9635 = vmatprep.subr.mxu0 0.0
      %9636 = vmatpush1.msra.mxu0 %v9380
      %9637 = vmatprep.subr.mxu0 0.0
      %9638 = vmatpush1.msra.mxu0 %v9379
      %9639 = vmatprep.subr.mxu0 0.0
      %9640 = vmatpush1.msra.mxu0 %v9378
      %9641 = vmatprep.subr.mxu0 0.0
      %9642 = vmatpush1.msra.mxu0 %v9377
      %9643 = vmatprep.subr.mxu0 0.0
      %9644 = vmatpush1.msra.mxu0 %v9376
      %9645 = vmatprep.subr.mxu0 0.0
      %9646 = vmatpush1.msra.mxu0 %v9375
      %9647 = vmatprep.subr.mxu0 0.0
      %9648 = vmatpush1.msra.mxu0 %v9374
      %9649 = vmatprep.subr.mxu0 0.0
      %9650 = vmatpush1.msra.mxu0 %v9373
      %9651 = vmatprep.subr.mxu0 0.0
      %9652 = vmatpush1.msra.mxu0 %v9372
      %9653 = vmatprep.subr.mxu0 0.0
      %9654 = vmatpush1.msra.mxu0 %v9371
      %9655 = vmatprep.subr.mxu0 0.0
      %9656 = vmatpush1.msra.mxu0 %v9370
      %9657 = vmatprep.subr.mxu0 0.0
      %9658 = vmatpush1.msra.mxu0 %v9369
      %9659 = vmatprep.subr.mxu0 0.0
      %9660 = vmatpush1.msra.mxu0 %v9368
      %9661 = vmatprep.subr.mxu0 0.0
      %9662 = vmatpush1.msra.mxu0 %v9367
      %9663 = vmatprep.subr.mxu0 0.0
      %9664 = vmatpush2.msra.mxu0 %v9398
      %9665 = vmatprep.subr.mxu0 0.0
      %9666 = vmatpush2.msra.mxu0 %v9397
      %9667 = vmatprep.subr.mxu0 0.0
      %9668 = vmatpush2.msra.mxu0 %v9396
      %9669 = vmatprep.subr.mxu0 0.0
      %9670 = vmatpush2.msra.mxu0 %v9395
      %9671 = vmatprep.subr.mxu0 0.0
      %9672 = vmatpush2.msra.mxu0 %v9394
      %9673 = vmatprep.subr.mxu0 0.0
      %9674 = vmatpush2.msra.mxu0 %v9393
      %9675 = vmatprep.subr.mxu0 0.0
      %9676 = vmatpush2.msra.mxu0 %v9392
      %9677 = vmatprep.subr.mxu0 0.0
      %9678 = vmatpush2.msra.mxu0 %v9391
      %9679 = vmatprep.subr.mxu0 0.0
      %9680 = vmatpush2.msra.mxu0 %v9390
      %9681 = vmatprep.subr.mxu0 0.0
      %9682 = vmatpush2.msra.mxu0 %v9389
      %9683 = vmatprep.subr.mxu0 0.0
      %9684 = vmatpush2.msra.mxu0 %v9388
      %9685 = vmatprep.subr.mxu0 0.0
      %9686 = vmatpush2.msra.mxu0 %v9387
      %9687 = vmatprep.subr.mxu0 0.0
      %9688 = vmatpush2.msra.mxu0 %v9386
      %9689 = vmatprep.subr.mxu0 0.0
      %9690 = vmatpush2.msra.mxu0 %v9385
      %9691 = vmatprep.subr.mxu0 0.0
      %9692 = vmatpush2.msra.mxu0 %v9384
      %9693 = vmatprep.subr.mxu0 0.0
      %9694 = vmatpush2.msra.mxu0 %v9383
      %9695 = vmatprep.mubr.f32.mxu0 %v9351
      %9696 = vmatmul.mubr.f32.gmra.mxu0 %v9350
      %v9697 = vpop.f32.mrf.mxu0
      %v9698 = vadd.f32 %v9629, %v9697
      %v9699 = vpop.f32.mrf.mxu0
      %9700 = vdwg.mxu0
      %9701 = vmatprep.subr.mxu0 0.0
      %9702 = vmatpush1.msra.mxu0 %v9414
      %9703 = vmatprep.subr.mxu0 0.0
      %9704 = vmatpush1.msra.mxu0 %v9413
      %9705 = vmatprep.subr.mxu0 0.0
      %9706 = vmatpush1.msra.mxu0 %v9412
      %9707 = vmatprep.subr.mxu0 0.0
      %9708 = vmatpush1.msra.mxu0 %v9411
      %9709 = vmatprep.subr.mxu0 0.0
      %9710 = vmatpush1.msra.mxu0 %v9410
      %9711 = vmatprep.subr.mxu0 0.0
      %9712 = vmatpush1.msra.mxu0 %v9409
      %9713 = vmatprep.subr.mxu0 0.0
      %9714 = vmatpush1.msra.mxu0 %v9408
      %9715 = vmatprep.subr.mxu0 0.0
      %9716 = vmatpush1.msra.mxu0 %v9407
      %9717 = vmatprep.subr.mxu0 0.0
      %9718 = vmatpush1.msra.mxu0 %v9406
      %9719 = vmatprep.subr.mxu0 0.0
      %9720 = vmatpush1.msra.mxu0 %v9405
      %9721 = vmatprep.subr.mxu0 0.0
      %9722 = vmatpush1.msra.mxu0 %v9404
      %9723 = vmatprep.subr.mxu0 0.0
      %9724 = vmatpush1.msra.mxu0 %v9403
      %9725 = vmatprep.subr.mxu0 0.0
      %9726 = vmatpush1.msra.mxu0 %v9402
      %9727 = vmatprep.subr.mxu0 0.0
      %9728 = vmatpush1.msra.mxu0 %v9401
      %9729 = vmatprep.subr.mxu0 0.0
      %9730 = vmatpush1.msra.mxu0 %v9400
      %9731 = vmatprep.subr.mxu0 0.0
      %9732 = vmatpush1.msra.mxu0 %v9399
      %9733 = vmatprep.subr.mxu0 0.0
      %9734 = vmatpush2.msra.mxu0 %v9430
      %9735 = vmatprep.subr.mxu0 0.0
      %9736 = vmatpush2.msra.mxu0 %v9429
      %9737 = vmatprep.subr.mxu0 0.0
      %9738 = vmatpush2.msra.mxu0 %v9428
      %9739 = vmatprep.subr.mxu0 0.0
      %9740 = vmatpush2.msra.mxu0 %v9427
      %9741 = vmatprep.subr.mxu0 0.0
      %9742 = vmatpush2.msra.mxu0 %v9426
      %9743 = vmatprep.subr.mxu0 0.0
      %9744 = vmatpush2.msra.mxu0 %v9425
      %9745 = vmatprep.subr.mxu0 0.0
      %9746 = vmatpush2.msra.mxu0 %v9424
      %9747 = vmatprep.subr.mxu0 0.0
      %9748 = vmatpush2.msra.mxu0 %v9423
      %9749 = vmatprep.subr.mxu0 0.0
      %9750 = vmatpush2.msra.mxu0 %v9422
      %9751 = vmatprep.subr.mxu0 0.0
      %9752 = vmatpush2.msra.mxu0 %v9421
      %9753 = vmatprep.subr.mxu0 0.0
      %9754 = vmatpush2.msra.mxu0 %v9420
      %9755 = vmatprep.subr.mxu0 0.0
      %9756 = vmatpush2.msra.mxu0 %v9419
      %9757 = vmatprep.subr.mxu0 0.0
      %9758 = vmatpush2.msra.mxu0 %v9418
      %9759 = vmatprep.subr.mxu0 0.0
      %9760 = vmatpush2.msra.mxu0 %v9417
      %9761 = vmatprep.subr.mxu0 0.0
      %9762 = vmatpush2.msra.mxu0 %v9416
      %9763 = vmatprep.subr.mxu0 0.0
      %9764 = vmatpush2.msra.mxu0 %v9415
      %9765 = vmatprep.mubr.f32.mxu0 %v9353
      %9766 = vmatmul.mubr.f32.gmra.mxu0 %v9352
      %v9767 = vpop.f32.mrf.mxu0
      %v9768 = vadd.f32 %v9698, %v9767
      %v9769 = vpop.f32.mrf.mxu0
      %9770 = vdwg.mxu0
      %9771 = vmatprep.subr.mxu0 0.0
      %9772 = vmatpush1.msra.mxu0 %v9446
      %9773 = vmatprep.subr.mxu0 0.0
      %9774 = vmatpush1.msra.mxu0 %v9445
      %9775 = vmatprep.subr.mxu0 0.0
      %9776 = vmatpush1.msra.mxu0 %v9444
      %9777 = vmatprep.subr.mxu0 0.0
      %9778 = vmatpush1.msra.mxu0 %v9443
      %9779 = vmatprep.subr.mxu0 0.0
      %9780 = vmatpush1.msra.mxu0 %v9442
      %9781 = vmatprep.subr.mxu0 0.0
      %9782 = vmatpush1.msra.mxu0 %v9441
      %9783 = vmatprep.subr.mxu0 0.0
      %9784 = vmatpush1.msra.mxu0 %v9440
      %9785 = vmatprep.subr.mxu0 0.0
      %9786 = vmatpush1.msra.mxu0 %v9439
      %9787 = vmatprep.subr.mxu0 0.0
      %9788 = vmatpush1.msra.mxu0 %v9438
      %9789 = vmatprep.subr.mxu0 0.0
      %9790 = vmatpush1.msra.mxu0 %v9437
      %9791 = vmatprep.subr.mxu0 0.0
      %9792 = vmatpush1.msra.mxu0 %v9436
      %9793 = vmatprep.subr.mxu0 0.0
      %9794 = vmatpush1.msra.mxu0 %v9435
      %9795 = vmatprep.subr.mxu0 0.0
      %9796 = vmatpush1.msra.mxu0 %v9434
      %9797 = vmatprep.subr.mxu0 0.0
      %9798 = vmatpush1.msra.mxu0 %v9433
      %9799 = vmatprep.subr.mxu0 0.0
      %9800 = vmatpush1.msra.mxu0 %v9432
      %9801 = vmatprep.subr.mxu0 0.0
      %9802 = vmatpush1.msra.mxu0 %v9431
      %9803 = vmatprep.subr.mxu0 0.0
      %9804 = vmatpush2.msra.mxu0 %v9462
      %9805 = vmatprep.subr.mxu0 0.0
      %9806 = vmatpush2.msra.mxu0 %v9461
      %9807 = vmatprep.subr.mxu0 0.0
      %9808 = vmatpush2.msra.mxu0 %v9460
      %9809 = vmatprep.subr.mxu0 0.0
      %9810 = vmatpush2.msra.mxu0 %v9459
      %9811 = vmatprep.subr.mxu0 0.0
      %9812 = vmatpush2.msra.mxu0 %v9458
      %9813 = vmatprep.subr.mxu0 0.0
      %9814 = vmatpush2.msra.mxu0 %v9457
      %9815 = vmatprep.subr.mxu0 0.0
      %9816 = vmatpush2.msra.mxu0 %v9456
      %9817 = vmatprep.subr.mxu0 0.0
      %9818 = vmatpush2.msra.mxu0 %v9455
      %9819 = vmatprep.subr.mxu0 0.0
      %9820 = vmatpush2.msra.mxu0 %v9454
      %9821 = vmatprep.subr.mxu0 0.0
      %9822 = vmatpush2.msra.mxu0 %v9453
      %9823 = vmatprep.subr.mxu0 0.0
      %9824 = vmatpush2.msra.mxu0 %v9452
      %9825 = vmatprep.subr.mxu0 0.0
      %9826 = vmatpush2.msra.mxu0 %v9451
      %9827 = vmatprep.subr.mxu0 0.0
      %9828 = vmatpush2.msra.mxu0 %v9450
      %9829 = vmatprep.subr.mxu0 0.0
      %9830 = vmatpush2.msra.mxu0 %v9449
      %9831 = vmatprep.subr.mxu0 0.0
      %9832 = vmatpush2.msra.mxu0 %v9448
      %9833 = vmatprep.subr.mxu0 0.0
      %9834 = vmatpush2.msra.mxu0 %v9447
      %9835 = vmatprep.mubr.f32.mxu0 %v9355
      %9836 = vmatmul.mubr.f32.gmra.mxu0 %v9354
      %v9837 = vpop.f32.mrf.mxu0
      %v9838 = vadd.f32 %v9768, %v9837
      %v9839 = vpop.f32.mrf.mxu0
      %9840 = vdwg.mxu0
      %9841 = vmatprep.subr.mxu0 0.0
      %9842 = vmatpush1.msra.mxu0 %v9478
      %9843 = vmatprep.subr.mxu0 0.0
      %9844 = vmatpush1.msra.mxu0 %v9477
      %9845 = vmatprep.subr.mxu0 0.0
      %9846 = vmatpush1.msra.mxu0 %v9476
      %9847 = vmatprep.subr.mxu0 0.0
      %9848 = vmatpush1.msra.mxu0 %v9475
      %9849 = vmatprep.subr.mxu0 0.0
      %9850 = vmatpush1.msra.mxu0 %v9474
      %9851 = vmatprep.subr.mxu0 0.0
      %9852 = vmatpush1.msra.mxu0 %v9473
      %9853 = vmatprep.subr.mxu0 0.0
      %9854 = vmatpush1.msra.mxu0 %v9472
      %9855 = vmatprep.subr.mxu0 0.0
      %9856 = vmatpush1.msra.mxu0 %v9471
      %9857 = vmatprep.subr.mxu0 0.0
      %9858 = vmatpush1.msra.mxu0 %v9470
      %9859 = vmatprep.subr.mxu0 0.0
      %9860 = vmatpush1.msra.mxu0 %v9469
      %9861 = vmatprep.subr.mxu0 0.0
      %9862 = vmatpush1.msra.mxu0 %v9468
      %9863 = vmatprep.subr.mxu0 0.0
      %9864 = vmatpush1.msra.mxu0 %v9467
      %9865 = vmatprep.subr.mxu0 0.0
      %9866 = vmatpush1.msra.mxu0 %v9466
      %9867 = vmatprep.subr.mxu0 0.0
      %9868 = vmatpush1.msra.mxu0 %v9465
      %9869 = vmatprep.subr.mxu0 0.0
      %9870 = vmatpush1.msra.mxu0 %v9464
      %9871 = vmatprep.subr.mxu0 0.0
      %9872 = vmatpush1.msra.mxu0 %v9463
      %9873 = vmatprep.subr.mxu0 0.0
      %9874 = vmatpush2.msra.mxu0 %v9494
      %9875 = vmatprep.subr.mxu0 0.0
      %9876 = vmatpush2.msra.mxu0 %v9493
      %9877 = vmatprep.subr.mxu0 0.0
      %9878 = vmatpush2.msra.mxu0 %v9492
      %9879 = vmatprep.subr.mxu0 0.0
      %9880 = vmatpush2.msra.mxu0 %v9491
      %9881 = vmatprep.subr.mxu0 0.0
      %9882 = vmatpush2.msra.mxu0 %v9490
      %9883 = vmatprep.subr.mxu0 0.0
      %9884 = vmatpush2.msra.mxu0 %v9489
      %9885 = vmatprep.subr.mxu0 0.0
      %9886 = vmatpush2.msra.mxu0 %v9488
      %9887 = vmatprep.subr.mxu0 0.0
      %9888 = vmatpush2.msra.mxu0 %v9487
      %9889 = vmatprep.subr.mxu0 0.0
      %9890 = vmatpush2.msra.mxu0 %v9486
      %9891 = vmatprep.subr.mxu0 0.0
      %9892 = vmatpush2.msra.mxu0 %v9485
      %9893 = vmatprep.subr.mxu0 0.0
      %9894 = vmatpush2.msra.mxu0 %v9484
      %9895 = vmatprep.subr.mxu0 0.0
      %9896 = vmatpush2.msra.mxu0 %v9483
      %9897 = vmatprep.subr.mxu0 0.0
      %9898 = vmatpush2.msra.mxu0 %v9482
      %9899 = vmatprep.subr.mxu0 0.0
      %9900 = vmatpush2.msra.mxu0 %v9481
      %9901 = vmatprep.subr.mxu0 0.0
      %9902 = vmatpush2.msra.mxu0 %v9480
      %9903 = vmatprep.subr.mxu0 0.0
      %9904 = vmatpush2.msra.mxu0 %v9479
      %9905 = vmatprep.mubr.f32.mxu0 %v9357
      %9906 = vmatmul.mubr.f32.gmra.mxu0 %v9356
      %v9907 = vpop.f32.mrf.mxu0
      %v9908 = vadd.f32 %v9838, %v9907
      %v9909 = vpop.f32.mrf.mxu0
      %9910 = vdwg.mxu0
      %9911 = vmatprep.subr.mxu0 0.0
      %9912 = vmatpush1.msra.mxu0 %v9510
      %9913 = vmatprep.subr.mxu0 0.0
      %9914 = vmatpush1.msra.mxu0 %v9509
      %9915 = vmatprep.subr.mxu0 0.0
      %9916 = vmatpush1.msra.mxu0 %v9508
      %9917 = vmatprep.subr.mxu0 0.0
      %9918 = vmatpush1.msra.mxu0 %v9507
      %9919 = vmatprep.subr.mxu0 0.0
      %9920 = vmatpush1.msra.mxu0 %v9506
      %9921 = vmatprep.subr.mxu0 0.0
      %9922 = vmatpush1.msra.mxu0 %v9505
      %9923 = vmatprep.subr.mxu0 0.0
      %9924 = vmatpush1.msra.mxu0 %v9504
      %9925 = vmatprep.subr.mxu0 0.0
      %9926 = vmatpush1.msra.mxu0 %v9503
      %9927 = vmatprep.subr.mxu0 0.0
      %9928 = vmatpush1.msra.mxu0 %v9502
      %9929 = vmatprep.subr.mxu0 0.0
      %9930 = vmatpush1.msra.mxu0 %v9501
      %9931 = vmatprep.subr.mxu0 0.0
      %9932 = vmatpush1.msra.mxu0 %v9500
      %9933 = vmatprep.subr.mxu0 0.0
      %9934 = vmatpush1.msra.mxu0 %v9499
      %9935 = vmatprep.subr.mxu0 0.0
      %9936 = vmatpush1.msra.mxu0 %v9498
      %9937 = vmatprep.subr.mxu0 0.0
      %9938 = vmatpush1.msra.mxu0 %v9497
      %9939 = vmatprep.subr.mxu0 0.0
      %9940 = vmatpush1.msra.mxu0 %v9496
      %9941 = vmatprep.subr.mxu0 0.0
      %9942 = vmatpush1.msra.mxu0 %v9495
      %9943 = vmatprep.subr.mxu0 0.0
      %9944 = vmatpush2.msra.mxu0 %v9526
      %9945 = vmatprep.subr.mxu0 0.0
      %9946 = vmatpush2.msra.mxu0 %v9525
      %9947 = vmatprep.subr.mxu0 0.0
      %9948 = vmatpush2.msra.mxu0 %v9524
      %9949 = vmatprep.subr.mxu0 0.0
      %9950 = vmatpush2.msra.mxu0 %v9523
      %9951 = vmatprep.subr.mxu0 0.0
      %9952 = vmatpush2.msra.mxu0 %v9522
      %9953 = vmatprep.subr.mxu0 0.0
      %9954 = vmatpush2.msra.mxu0 %v9521
      %9955 = vmatprep.subr.mxu0 0.0
      %9956 = vmatpush2.msra.mxu0 %v9520
      %9957 = vmatprep.subr.mxu0 0.0
      %9958 = vmatpush2.msra.mxu0 %v9519
      %9959 = vmatprep.subr.mxu0 0.0
      %9960 = vmatpush2.msra.mxu0 %v9518
      %9961 = vmatprep.subr.mxu0 0.0
      %9962 = vmatpush2.msra.mxu0 %v9517
      %9963 = vmatprep.subr.mxu0 0.0
      %9964 = vmatpush2.msra.mxu0 %v9516
      %9965 = vmatprep.subr.mxu0 0.0
      %9966 = vmatpush2.msra.mxu0 %v9515
      %9967 = vmatprep.subr.mxu0 0.0
      %9968 = vmatpush2.msra.mxu0 %v9514
      %9969 = vmatprep.subr.mxu0 0.0
      %9970 = vmatpush2.msra.mxu0 %v9513
      %9971 = vmatprep.subr.mxu0 0.0
      %9972 = vmatpush2.msra.mxu0 %v9512
      %9973 = vmatprep.subr.mxu0 0.0
      %9974 = vmatpush2.msra.mxu0 %v9511
      %9975 = vmatprep.mubr.f32.mxu0 %v9359
      %9976 = vmatmul.mubr.f32.gmra.mxu0 %v9358
      %v9977 = vpop.f32.mrf.mxu0
      %v9978 = vadd.f32 %v9908, %v9977
      %v9979 = vpop.f32.mrf.mxu0
      %9980 = vdwg.mxu0
      %9981 = vmatprep.subr.mxu0 0.0
      %9982 = vmatpush1.msra.mxu0 %v9542
      %9983 = vmatprep.subr.mxu0 0.0
      %9984 = vmatpush1.msra.mxu0 %v9541
      %9985 = vmatprep.subr.mxu0 0.0
      %9986 = vmatpush1.msra.mxu0 %v9540
      %9987 = vmatprep.subr.mxu0 0.0
      %9988 = vmatpush1.msra.mxu0 %v9539
      %9989 = vmatprep.subr.mxu0 0.0
      %9990 = vmatpush1.msra.mxu0 %v9538
      %9991 = vmatprep.subr.mxu0 0.0
      %9992 = vmatpush1.msra.mxu0 %v9537
      %9993 = vmatprep.subr.mxu0 0.0
      %9994 = vmatpush1.msra.mxu0 %v9536
      %9995 = vmatprep.subr.mxu0 0.0
      %9996 = vmatpush1.msra.mxu0 %v9535
      %9997 = vmatprep.subr.mxu0 0.0
      %9998 = vmatpush1.msra.mxu0 %v9534
      %9999 = vmatprep.subr.mxu0 0.0
      %10000 = vmatpush1.msra.mxu0 %v9533
      %10001 = vmatprep.subr.mxu0 0.0
      %10002 = vmatpush1.msra.mxu0 %v9532
      %10003 = vmatprep.subr.mxu0 0.0
      %10004 = vmatpush1.msra.mxu0 %v9531
      %10005 = vmatprep.subr.mxu0 0.0
      %10006 = vmatpush1.msra.mxu0 %v9530
      %10007 = vmatprep.subr.mxu0 0.0
      %10008 = vmatpush1.msra.mxu0 %v9529
      %10009 = vmatprep.subr.mxu0 0.0
      %10010 = vmatpush1.msra.mxu0 %v9528
      %10011 = vmatprep.subr.mxu0 0.0
      %10012 = vmatpush1.msra.mxu0 %v9527
      %10013 = vmatprep.subr.mxu0 0.0
      %10014 = vmatpush2.msra.mxu0 %v9558
      %10015 = vmatprep.subr.mxu0 0.0
      %10016 = vmatpush2.msra.mxu0 %v9557
      %10017 = vmatprep.subr.mxu0 0.0
      %10018 = vmatpush2.msra.mxu0 %v9556
      %10019 = vmatprep.subr.mxu0 0.0
      %10020 = vmatpush2.msra.mxu0 %v9555
      %10021 = vmatprep.subr.mxu0 0.0
      %10022 = vmatpush2.msra.mxu0 %v9554
      %10023 = vmatprep.subr.mxu0 0.0
      %10024 = vmatpush2.msra.mxu0 %v9553
      %10025 = vmatprep.subr.mxu0 0.0
      %10026 = vmatpush2.msra.mxu0 %v9552
      %10027 = vmatprep.subr.mxu0 0.0
      %10028 = vmatpush2.msra.mxu0 %v9551
      %10029 = vmatprep.subr.mxu0 0.0
      %10030 = vmatpush2.msra.mxu0 %v9550
      %10031 = vmatprep.subr.mxu0 0.0
      %10032 = vmatpush2.msra.mxu0 %v9549
      %10033 = vmatprep.subr.mxu0 0.0
      %10034 = vmatpush2.msra.mxu0 %v9548
      %10035 = vmatprep.subr.mxu0 0.0
      %10036 = vmatpush2.msra.mxu0 %v9547
      %10037 = vmatprep.subr.mxu0 0.0
      %10038 = vmatpush2.msra.mxu0 %v9546
      %10039 = vmatprep.subr.mxu0 0.0
      %10040 = vmatpush2.msra.mxu0 %v9545
      %10041 = vmatprep.subr.mxu0 0.0
      %10042 = vmatpush2.msra.mxu0 %v9544
      %10043 = vmatprep.subr.mxu0 0.0
      %10044 = vmatpush2.msra.mxu0 %v9543
      %10045 = vmatprep.mubr.f32.mxu0 %v9361
      %10046 = vmatmul.mubr.f32.gmra.mxu0 %v9360
      %v10047 = vpop.f32.mrf.mxu0
      %v10048 = vadd.f32 %v9978, %v10047
      %v10049 = vpop.f32.mrf.mxu0
      %10050 = vdwg.mxu0
      %10051 = vmatprep.subr.mxu0 0.0
      %10052 = vmatpush1.msra.mxu0 %v9574
      %10053 = vmatprep.subr.mxu0 0.0
      %10054 = vmatpush1.msra.mxu0 %v9573
      %10055 = vmatprep.subr.mxu0 0.0
      %10056 = vmatpush1.msra.mxu0 %v9572
      %10057 = vmatprep.subr.mxu0 0.0
      %10058 = vmatpush1.msra.mxu0 %v9571
      %10059 = vmatprep.subr.mxu0 0.0
      %10060 = vmatpush1.msra.mxu0 %v9570
      %10061 = vmatprep.subr.mxu0 0.0
      %10062 = vmatpush1.msra.mxu0 %v9569
      %10063 = vmatprep.subr.mxu0 0.0
      %10064 = vmatpush1.msra.mxu0 %v9568
      %10065 = vmatprep.subr.mxu0 0.0
      %10066 = vmatpush1.msra.mxu0 %v9567
      %10067 = vmatprep.subr.mxu0 0.0
      %10068 = vmatpush1.msra.mxu0 %v9566
      %10069 = vmatprep.subr.mxu0 0.0
      %10070 = vmatpush1.msra.mxu0 %v9565
      %10071 = vmatprep.subr.mxu0 0.0
      %10072 = vmatpush1.msra.mxu0 %v9564
      %10073 = vmatprep.subr.mxu0 0.0
      %10074 = vmatpush1.msra.mxu0 %v9563
      %10075 = vmatprep.subr.mxu0 0.0
      %10076 = vmatpush1.msra.mxu0 %v9562
      %10077 = vmatprep.subr.mxu0 0.0
      %10078 = vmatpush1.msra.mxu0 %v9561
      %10079 = vmatprep.subr.mxu0 0.0
      %10080 = vmatpush1.msra.mxu0 %v9560
      %10081 = vmatprep.subr.mxu0 0.0
      %10082 = vmatpush1.msra.mxu0 %v9559
      %10083 = vmatprep.subr.mxu0 0.0
      %10084 = vmatpush2.msra.mxu0 %v9590
      %10085 = vmatprep.subr.mxu0 0.0
      %10086 = vmatpush2.msra.mxu0 %v9589
      %10087 = vmatprep.subr.mxu0 0.0
      %10088 = vmatpush2.msra.mxu0 %v9588
      %10089 = vmatprep.subr.mxu0 0.0
      %10090 = vmatpush2.msra.mxu0 %v9587
      %10091 = vmatprep.subr.mxu0 0.0
      %10092 = vmatpush2.msra.mxu0 %v9586
      %10093 = vmatprep.subr.mxu0 0.0
      %10094 = vmatpush2.msra.mxu0 %v9585
      %10095 = vmatprep.subr.mxu0 0.0
      %10096 = vmatpush2.msra.mxu0 %v9584
      %10097 = vmatprep.subr.mxu0 0.0
      %10098 = vmatpush2.msra.mxu0 %v9583
      %10099 = vmatprep.subr.mxu0 0.0
      %10100 = vmatpush2.msra.mxu0 %v9582
      %10101 = vmatprep.subr.mxu0 0.0
      %10102 = vmatpush2.msra.mxu0 %v9581
      %10103 = vmatprep.subr.mxu0 0.0
      %10104 = vmatpush2.msra.mxu0 %v9580
      %10105 = vmatprep.subr.mxu0 0.0
      %10106 = vmatpush2.msra.mxu0 %v9579
      %10107 = vmatprep.subr.mxu0 0.0
      %10108 = vmatpush2.msra.mxu0 %v9578
      %10109 = vmatprep.subr.mxu0 0.0
      %10110 = vmatpush2.msra.mxu0 %v9577
      %10111 = vmatprep.subr.mxu0 0.0
      %10112 = vmatpush2.msra.mxu0 %v9576
      %10113 = vmatprep.subr.mxu0 0.0
      %10114 = vmatpush2.msra.mxu0 %v9575
      %10115 = vmatprep.mubr.f32.mxu0 %v9363
      %10116 = vmatmul.mubr.f32.gmra.mxu0 %v9362
      %v10117 = vpop.f32.mrf.mxu0
      %v10118 = vadd.f32 %v10048, %v10117
      %v10119 = vpop.f32.mrf.mxu0
      %10120 = vdwg.mxu0
      %10121 = vmatprep.subr.mxu0 0.0
      %10122 = vmatpush1.msra.mxu0 %v9606
      %10123 = vmatprep.subr.mxu0 0.0
      %10124 = vmatpush1.msra.mxu0 %v9605
      %10125 = vmatprep.subr.mxu0 0.0
      %10126 = vmatpush1.msra.mxu0 %v9604
      %10127 = vmatprep.subr.mxu0 0.0
      %10128 = vmatpush1.msra.mxu0 %v9603
      %10129 = vmatprep.subr.mxu0 0.0
      %10130 = vmatpush1.msra.mxu0 %v9602
      %10131 = vmatprep.subr.mxu0 0.0
      %10132 = vmatpush1.msra.mxu0 %v9601
      %10133 = vmatprep.subr.mxu0 0.0
      %10134 = vmatpush1.msra.mxu0 %v9600
      %10135 = vmatprep.subr.mxu0 0.0
      %10136 = vmatpush1.msra.mxu0 %v9599
      %10137 = vmatprep.subr.mxu0 0.0
      %10138 = vmatpush1.msra.mxu0 %v9598
      %10139 = vmatprep.subr.mxu0 0.0
      %10140 = vmatpush1.msra.mxu0 %v9597
      %10141 = vmatprep.subr.mxu0 0.0
      %10142 = vmatpush1.msra.mxu0 %v9596
      %10143 = vmatprep.subr.mxu0 0.0
      %10144 = vmatpush1.msra.mxu0 %v9595
      %10145 = vmatprep.subr.mxu0 0.0
      %10146 = vmatpush1.msra.mxu0 %v9594
      %10147 = vmatprep.subr.mxu0 0.0
      %10148 = vmatpush1.msra.mxu0 %v9593
      %10149 = vmatprep.subr.mxu0 0.0
      %10150 = vmatpush1.msra.mxu0 %v9592
      %10151 = vmatprep.subr.mxu0 0.0
      %10152 = vmatpush1.msra.mxu0 %v9591
      %10153 = vmatprep.subr.mxu0 0.0
      %10154 = vmatpush2.msra.mxu0 %v9622
      %10155 = vmatprep.subr.mxu0 0.0
      %10156 = vmatpush2.msra.mxu0 %v9621
      %10157 = vmatprep.subr.mxu0 0.0
      %10158 = vmatpush2.msra.mxu0 %v9620
      %10159 = vmatprep.subr.mxu0 0.0
      %10160 = vmatpush2.msra.mxu0 %v9619
      %10161 = vmatprep.subr.mxu0 0.0
      %10162 = vmatpush2.msra.mxu0 %v9618
      %10163 = vmatprep.subr.mxu0 0.0
      %10164 = vmatpush2.msra.mxu0 %v9617
      %10165 = vmatprep.subr.mxu0 0.0
      %10166 = vmatpush2.msra.mxu0 %v9616
      %10167 = vmatprep.subr.mxu0 0.0
      %10168 = vmatpush2.msra.mxu0 %v9615
      %10169 = vmatprep.subr.mxu0 0.0
      %10170 = vmatpush2.msra.mxu0 %v9614
      %10171 = vmatprep.subr.mxu0 0.0
      %10172 = vmatpush2.msra.mxu0 %v9613
      %10173 = vmatprep.subr.mxu0 0.0
      %10174 = vmatpush2.msra.mxu0 %v9612
      %10175 = vmatprep.subr.mxu0 0.0
      %10176 = vmatpush2.msra.mxu0 %v9611
      %10177 = vmatprep.subr.mxu0 0.0
      %10178 = vmatpush2.msra.mxu0 %v9610
      %10179 = vmatprep.subr.mxu0 0.0
      %10180 = vmatpush2.msra.mxu0 %v9609
      %10181 = vmatprep.subr.mxu0 0.0
      %10182 = vmatpush2.msra.mxu0 %v9608
      %10183 = vmatprep.subr.mxu0 0.0
      %10184 = vmatpush2.msra.mxu0 %v9607
      %10185 = vmatprep.mubr.f32.mxu0 %v9365
      %10186 = vmatmul.mubr.f32.gmra.mxu0 %v9364
      %v10187 = vpop.f32.mrf.mxu0
      %v10188 = vadd.f32 %v10118, %v10187
      %v10189 = vpop.f32.mrf.mxu0
      %10190 = vdwg.mxu0
      %v10191 = vadd.f32 %v8628, %v10188
      %s10192 = scalar_lea.vmem %s13, 1
      %v10193 = vld [vmem:[%s10192] sm:$0x1]
      %s10194 = scalar_lea.vmem %s14, 1
      %v10195 = vld [vmem:[%s10194] sm:$0x1]
      %v10196 = vsel %vm620, %v10191, 0.0
      %10197 = vadd.xlane.f32.xlu0 %v10196
      %v10198 = vpop.xlane.xlu0 %10197
      %v10199 = vmul.f32 %v10198, %v3800
      %v10200 = vsub.f32 %v10191, %v10199
      %v10201 = vmul.f32 %v10200, %v10200
      %v10202 = vsel %vm620, %v10201, 0.0
      %10203 = vadd.xlane.f32.xlu0 %v10202
      %v10204 = vpop.xlane.xlu0 %10203
      %v10205 = vmul.f32 %v10204, %v3800
      %v10206 = vadd.f32 %v10205, 1e-05
      %v10207 = vrsqrt.pop %v10206
      %v10208 = vmul.f32 %v10200, %v10207
      %v10210 = vlaneseq
      %v10211 = vshrl.u32 %v10210, 7
      %v10212 = vsub.s32 0, %v10211
      %v10213 = vrot.slane %v10193, %v10212
      %v10215 = vmul.f32 %v10208, %v10213
      %v10217 = vlaneseq
      %v10218 = vshrl.u32 %v10217, 7
      %v10219 = vsub.s32 0, %v10218
      %v10220 = vrot.slane %v10195, %v10219
      %v10222 = vadd.f32 %v10215, %v10220
      %v10224 = vcombine.high %v10222, %v10222
      %v10226 = vunpack.c.l.s4 1983009808
      %v10227 = vunpack.c.0.s8 %v10226
      %v10228 = vlaneseq
      %v10229 = vshrl.u32 %v10228, 7
      %v10230 = vsub.s32 %v10227, %v10229
      %v10231 = vrot.slane %v10222, %v10230
      %v10233 = vunpack.c.l.s4 1983009808
      %v10234 = vunpack.c.0.s8 %v10233
      %v10235 = vlaneseq
      %v10236 = vshrl.u32 %v10235, 7
      %v10237 = vsub.s32 %v10234, %v10236
      %v10238 = vrot.slane %v10224, %v10237
      %v10239 = vcombine.high %v10231, %v10231
      %v10240 = vcombine.high %v10238, %v10238
      %vm10245 = vcmask 254976
      %10246 = vst.msk [vmem:[%s496] sm:$0x3] %vm10245, %v10231
      %10247 = vst.msk [vmem:[%s496 + $0x2] sm:$0x3] %vm10245, %v10239
      %10248 = vst.msk [vmem:[%s496 + $0x4] sm:$0x3] %vm10245, %v10238
      %10249 = vst.msk [vmem:[%s496 + $0x6] sm:$0x3] %vm10245, %v10240
      %s10250 = smul.u32 4, %s26
      %p10251 = scmp.lt.s32.totalorder %s10250, 7
      %s10252 = scalar_select %p10251, %s10250, 7
      %s10253 = smul.addr %s10252, 2
      %s10254 = scalar_lea.vmem %s15, %s10253
      // Predicated region
      $region81: #{force_block_forward.1} parent=79 // pred_check
        %p10255 = pneg %p364
      $region82: #{force_block_forward.1} parent=79 // pred_check_branch
        %10257 = sbr.rel (%p10255) target = $region84
      $region83: #{force_block_forward.1} parent=79 // pred_region
        %s10258 = smul.u32 4, %s26
      $region84: #{force_block_forward.1} parent=79 // pred_fallthru
        _
    $region80: #{force_block_forward.1} parent=5 // pred_fallthru
      _
    %p10259 = scmp.le.s32.totalorder 2, %s21
    // Predicated region
    $region85: #{force_block_forward.1} parent=5 // pred_check
      %p10260 = pneg %p10259
    $region86: #{force_block_forward.1} parent=5 // pred_check_branch
      %10262 = sbr.rel (%p10260) target = $region88
    $region87: #{force_block_forward.1} parent=5 // pred_region
      %s10263 = ssub.s32 %s21, 2
      // Predicated region
      $region89: #{force_block_forward.1} parent=87 // pred_check
        %p10264 = pneg %p370
      $region90: #{force_block_forward.1} parent=87 // pred_check_branch
        %10266 = sbr.rel (%p10264) target = $region92
      $region91: #{force_block_forward.1} parent=87 // pred_region
        %s10267 = smul.u32 4, %s27
        %p10268 = scmp.lt.s32.totalorder %s10267, 7
        %s10269 = scalar_select %p10268, %s10267, 7
        %s10270 = smul.addr %s10269, 2
        %s10271 = scalar_lea.vmem %s15, %s10270
      $region92: #{force_block_forward.1} parent=87 // pred_fallthru
        _
    $region88: #{force_block_forward.1} parent=5 // pred_fallthru
      _
  $region6: #{force_block_forward.1} parent=0 // loop_footer
    %s25 = sadd.s32 1, %s21
  $region7: #{force_block_forward.1} parent=0 // loop_footer_branch
    %20 = sbr.rel target = $region3
  $region8: #{force_block_forward.1} parent=0 // loop_exit
    _

</llo_original>
